<compile_context>
chip_gen: v7x
topology: tpu7x:2x2x1
jax: 0.10.0
libtpu: 0.0.40
codegen_flags: <defaults>
</compile_context>

<pallas_src>
import jax
import jax.numpy as jnp
from jax.experimental import pallas as pl
from jax.experimental.pallas import tpu as pltpu


# ---------------------------------------------------------------------------
# Problem constants (implied by CGEVariant.__init__ / fc1 = Linear(200*256 + 200, 10))
# ---------------------------------------------------------------------------
C1 = 200            # conv1 / conv2 output channels
LG = 256            # graph signal length
LP = 3              # pattern length
CP = 3              # pattern input channels
H = 10              # fc1 width
O = 2               # fc2 width
K_GRAPH = C1 * LG   # 51200 flattened graph features (torch.flatten order: c*LG + t)

# Kernel tiling
BT = 8              # batch tile (sublane aligned)
CT = 50             # conv1 channels handled per fc1-reduction grid step
KT = CT * LG        # 12800-lane slice of the 51200-wide fc1 graph reduction
assert C1 % CT == 0 and K_GRAPH % KT == 0

# contract the last dim of both operands (A @ B.T) -> MXU-native transposed-RHS matmul
NT_DIM_NUMBERS = (((1,), (1,)), ((), ()))


# ---------------------------------------------------------------------------
# Fused kernel: conv1+ReLU, conv2+ReLU+MaxPool, concat, fc1+ReLU, fc2
# ---------------------------------------------------------------------------
def fused_kernel(xg_ref, p3_ref, c1w0_ref, c1w1_ref, c1w2_ref, c1b_ref,
                 w1g_ref, w1p_ref, b1_ref, w2ft_ref, b2c_ref, w2t_ref, b2_ref,
                 o_ref, acc_ref, act_ref):
    """Grid = (batch tiles i, fc1-reduction tiles j).

    xg_ref  : (3, BT, 256)  shifted graph signal (taps of the 'same'-padded input)
    p3_ref  : (3, BT, 9)    conv2 im2col patches, one slab per output position t
    c1w*_ref: (200,) SMEM   conv1 per-channel taps / bias
    w1g_ref : (10, KT)      lane-dense fc1 weight slice for this channel tile
    w1p_ref : (200, 10)     fc1 weight for the pooled pattern features
    w2ft_ref: (9, 200)      conv2 weight (im2col layout, transposed)
    o_ref   : (BT, 2)       prediction
    acc_ref : (BT, 10) f32  fc1 pre-activation accumulator (persists across j)
    act_ref : (BT, KT) f32  conv1 activation tile in flattened (c*256 + t) layout
    """
    j = pl.program_id(1)
    nk = pl.num_programs(1)

    # -- j == 0: start the accumulator with the tiny pattern branch:
    #    conv2(3->200, k=3, 'same') + ReLU + MaxPool1d(3,3) over L=3, then its fc1 part.
    @pl.when(j == 0)
    def _init():
        m = None
        for t in range(LP):
            a = jnp.dot(p3_ref[t], w2ft_ref[...], preferred_element_type=jnp.float32)
            a = jnp.maximum(a + b2c_ref[...], 0.0)            # (BT, 200)
            m = a if m is None else jnp.maximum(m, a)         # max over the 3 positions
        acc_ref[...] = jnp.dot(m, w1p_ref[...], preferred_element_type=jnp.float32)

    # -- conv1 + ReLU for the CT channels of this step, written directly in the
    #    torch.flatten(x, 1) ordering (channel-major, lane-dense) -> no HBM round trip.
    x0 = xg_ref[0]                                            # (BT, 256)
    x1 = xg_ref[1]
    x2 = xg_ref[2]
    c0 = j * CT
    for r in range(CT):
        c = c0 + r
        g = jnp.maximum(
            x0 * c1w0_ref[c] + x1 * c1w1_ref[c] + x2 * c1w2_ref[c] + c1b_ref[c], 0.0)
        act_ref[:, r * LG:(r + 1) * LG] = g

    # -- partial fc1 contraction for this 12800-wide slice of the graph features.
    acc_ref[...] += jax.lax.dot_general(
        act_ref[...], w1g_ref[...], NT_DIM_NUMBERS, preferred_element_type=jnp.float32)

    # -- last step: fc1 bias + ReLU, then fc2.
    @pl.when(j == nk - 1)
    def _finish():
        h = jnp.maximum(acc_ref[...] + b1_ref[...], 0.0)      # (BT, 10)
        o_ref[...] = (jnp.dot(h, w2t_ref[...], preferred_element_type=jnp.float32)
                      + b2_ref[...]).astype(o_ref.dtype)


# ---------------------------------------------------------------------------
# Parameter preparation (one-time reshapes / slices of the PyTorch-layout weights)
# ---------------------------------------------------------------------------
def prepare_params(params):
    c1w = jnp.asarray(params["con1_w"], jnp.float32)                    # (200, 1, 3)
    fc1w = jnp.asarray(params["fc1_w"], jnp.float32)                    # (10, 51400)
    return {
        "c1w0": c1w[:, 0, 0],                                           # (200,)
        "c1w1": c1w[:, 0, 1],
        "c1w2": c1w[:, 0, 2],
        "c1b": jnp.asarray(params["con1_b"], jnp.float32),              # (200,)
        "w2ft": jnp.asarray(params["con2_w"], jnp.float32).reshape(C1, CP * 3).T,  # (9, 200)
        "b2c": jnp.asarray(params["con2_b"], jnp.float32).reshape(1, C1),
        "w1g": fc1w[:, :K_GRAPH],                                       # (10, 51200) lane-dense
        "w1p": fc1w[:, K_GRAPH:].T,                                     # (200, 10)
        "b1": jnp.asarray(params["fc1_b"], jnp.float32).reshape(1, H),
        "w2t": jnp.asarray(params["fc2_w"], jnp.float32).T,             # (10, 2)
        "b2": jnp.asarray(params["fc2_b"], jnp.float32).reshape(1, O),
    }


# ---------------------------------------------------------------------------
# Forward wrapper
# ---------------------------------------------------------------------------
@jax.jit
def cge_variant_forward(graph_train, pattern_train, prepped):
    """graph_train: (B, 1, 256) f32, pattern_train: (B, 3, 3) f32 -> (B, 2) f32."""
    B = graph_train.shape[0]
    assert graph_train.shape[1:] == (1, LG) and pattern_train.shape[1:] == (CP, LP)
    B_pad = ((B + BT - 1) // BT) * BT
    nb = B_pad // BT
    nk = C1 // CT

    # conv1 'same' padding: three shifted views of the zero-padded graph signal (tiny).
    g = graph_train.reshape(B, LG).astype(jnp.float32)
    g = jnp.pad(g, ((0, B_pad - B), (1, 1)))                            # (B_pad, 258)
    xg = jnp.stack([g[:, k:k + LG] for k in range(3)], axis=0)          # (3, B_pad, 256)

    # conv2 im2col patches: one (B_pad, 9) slab per output position t (tiny).
    p = jnp.pad(pattern_train.astype(jnp.float32),
                ((0, B_pad - B), (0, 0), (1, 1)))                       # (B_pad, 3, 5)
    p3 = jnp.stack([p[:, :, t:t + 3].reshape(B_pad, CP * 3) for t in range(LP)],
                   axis=0)                                              # (3, B_pad, 9)

    out = pl.pallas_call(
        fused_kernel,
        out_shape=jax.ShapeDtypeStruct((B_pad, O), jnp.float32),
        grid=(nb, nk),
        in_specs=[
            pl.BlockSpec((3, BT, LG), lambda i, j: (0, i, 0)),          # xg
            pl.BlockSpec((3, BT, CP * 3), lambda i, j: (0, i, 0)),      # p3
            pl.BlockSpec(memory_space=pltpu.MemorySpace.SMEM),          # c1w0
            pl.BlockSpec(memory_space=pltpu.MemorySpace.SMEM),          # c1w1
            pl.BlockSpec(memory_space=pltpu.MemorySpace.SMEM),          # c1w2
            pl.BlockSpec(memory_space=pltpu.MemorySpace.SMEM),          # c1b
            pl.BlockSpec((H, KT), lambda i, j: (0, j)),                 # w1g (K-tiled stream)
            pl.BlockSpec((C1, H), lambda i, j: (0, 0)),                 # w1p
            pl.BlockSpec((1, H), lambda i, j: (0, 0)),                  # b1
            pl.BlockSpec((CP * 3, C1), lambda i, j: (0, 0)),            # w2ft
            pl.BlockSpec((1, C1), lambda i, j: (0, 0)),                 # b2c
            pl.BlockSpec((H, O), lambda i, j: (0, 0)),                  # w2t
            pl.BlockSpec((1, O), lambda i, j: (0, 0)),                  # b2
        ],
        out_specs=pl.BlockSpec((BT, O), lambda i, j: (i, 0)),
        scratch_shapes=[
            pltpu.VMEM((BT, H), jnp.float32),     # fc1 accumulator
            pltpu.VMEM((BT, KT), jnp.float32),    # conv1 activation tile (flattened)
        ],
        compiler_params=pltpu.CompilerParams(
            dimension_semantics=("parallel", "arbitrary"),
            # real footprint ~2.5 MiB (2x819 KiB w1g buffers + 410 KiB act + small);
            # 16 MiB leaves headroom yet fits every generation (v5e/v6e/v7x).
            vmem_limit_bytes=16 * 1024 * 1024,
        ),
    )(xg, p3, prepped["c1w0"], prepped["c1w1"], prepped["c1w2"], prepped["c1b"],
      prepped["w1g"], prepped["w1p"], prepped["b1"], prepped["w2ft"], prepped["b2c"],
      prepped["w2t"], prepped["b2"])
    return out[:B]


# ---------------------------------------------------------------------------
# Pure-JAX reference (correctness check only)
# ---------------------------------------------------------------------------
def reference_forward(graph_train, pattern_train, params):
    hp = jax.lax.Precision.HIGHEST

    def conv1d_same(x, w, b):
        y = jax.lax.conv_general_dilated(
            x, w, window_strides=(1,), padding=((1, 1),),
            dimension_numbers=("NCH", "OIH", "NCH"), precision=hp)
        return y + b[None, :, None]

    g = jax.nn.relu(conv1d_same(graph_train, params["con1_w"], params["con1_b"]))
    p = jax.nn.relu(conv1d_same(pattern_train, params["con2_w"], params["con2_b"]))
    p = jnp.max(p, axis=-1, keepdims=True)
    merge = jnp.concatenate(
        [g.reshape(g.shape[0], -1), p.reshape(p.shape[0], -1)], axis=1)
    h = jax.nn.relu(jnp.dot(merge, params["fc1_w"].T, precision=hp) + params["fc1_b"])
    return jnp.dot(h, params["fc2_w"].T, precision=hp) + params["fc2_b"]


# ---------------------------------------------------------------------------
# Main
# ---------------------------------------------------------------------------
if __name__ == "__main__":
    B = 2
    key = jax.random.PRNGKey(0)
    ks = jax.random.split(key, 10)

    # Deterministic synthetic parameters (shapes from CGEVariant.__init__)
    params = {
        "con1_w": 0.10 * jax.random.normal(ks[0], (C1, 1, 3), jnp.float32),
        "con1_b": 0.10 * jax.random.normal(ks[1], (C1,), jnp.float32),
        "con2_w": 0.10 * jax.random.normal(ks[2], (C1, CP, 3), jnp.float32),
        "con2_b": 0.10 * jax.random.normal(ks[3], (C1,), jnp.float32),
        "fc1_w": 0.01 * jax.random.normal(ks[4], (H, K_GRAPH + C1), jnp.float32),
        "fc1_b": 0.01 * jax.random.normal(ks[5], (H,), jnp.float32),
        "fc2_w": 0.10 * jax.random.normal(ks[6], (O, H), jnp.float32),
        "fc2_b": 0.10 * jax.random.normal(ks[7], (O,), jnp.float32),
    }

    # Inputs implied by fc1: graph (B, 1, 256), pattern (B, 3, 3)
    graph_train = jax.random.normal(ks[8], (B, 1, LG), jnp.float32)
    pattern_train = jax.random.normal(ks[9], (B, CP, LP), jnp.float32)

    prepped = prepare_params(params)
    out = cge_variant_forward(graph_train, pattern_train, prepped)
    out = jax.block_until_ready(out)
    assert out.shape == (B, O) and out.dtype == jnp.float32

    ref = jax.block_until_ready(reference_forward(graph_train, pattern_train, params))
    if not jnp.allclose(out, ref, rtol=1e-2, atol=1e-2):
        raise AssertionError(f"mismatch: pallas={out} ref={ref}")

    print("KERNEL_OK")
</pallas_src>

<mosaic_0001>
module attributes {stable_mosaic.version = 11 : i64} {
  func.func @fused_kernel(%arg0: i32, %arg1: i32, %arg2: memref<3x8x256xf32, #tpu.memory_space<vmem>>, %arg3: memref<3x8x9xf32, #tpu.memory_space<vmem>>, %arg4: memref<200xf32, #tpu.memory_space<smem>>, %arg5: memref<200xf32, #tpu.memory_space<smem>>, %arg6: memref<200xf32, #tpu.memory_space<smem>>, %arg7: memref<200xf32, #tpu.memory_space<smem>>, %arg8: memref<10x12800xf32, #tpu.memory_space<vmem>>, %arg9: memref<200x10xf32, #tpu.memory_space<vmem>>, %arg10: memref<1x10xf32, #tpu.memory_space<vmem>>, %arg11: memref<9x200xf32, #tpu.memory_space<vmem>>, %arg12: memref<1x200xf32, #tpu.memory_space<vmem>>, %arg13: memref<10x2xf32, #tpu.memory_space<vmem>>, %arg14: memref<1x2xf32, #tpu.memory_space<vmem>>, %arg15: memref<8x2xf32, #tpu.memory_space<vmem>>, %arg16: memref<8x10xf32, #tpu.memory_space<vmem>>, %arg17: memref<8x12800xf32, #tpu.memory_space<vmem>>) attributes {dimension_semantics = [#tpu.dimension_semantics<parallel>, #tpu.dimension_semantics<arbitrary>], iteration_bounds = array<i64: 1, 4>, scalar_prefetch = 0 : i64, scratch_operands = 2 : i64, tpu.core_type = #tpu.core_type<tc>, window_params = [{transform_indices = @transform_0, window_bounds = array<i64: 3, 8, 256>}, {transform_indices = @transform_1, window_bounds = array<i64: 3, 8, 9>}, {transform_indices = @transform_2, window_bounds = array<i64: 200>}, {transform_indices = @transform_3, window_bounds = array<i64: 200>}, {transform_indices = @transform_4, window_bounds = array<i64: 200>}, {transform_indices = @transform_5, window_bounds = array<i64: 200>}, {transform_indices = @transform_6, window_bounds = array<i64: 10, 12800>}, {pipeline_mode = #tpu.pipeline_mode<synchronous>, transform_indices = @transform_7, window_bounds = array<i64: 200, 10>}, {pipeline_mode = #tpu.pipeline_mode<synchronous>, transform_indices = @transform_8, window_bounds = array<i64: 1, 10>}, {pipeline_mode = #tpu.pipeline_mode<synchronous>, transform_indices = @transform_9, window_bounds = array<i64: 9, 200>}, {pipeline_mode = #tpu.pipeline_mode<synchronous>, transform_indices = @transform_10, window_bounds = array<i64: 1, 200>}, {pipeline_mode = #tpu.pipeline_mode<synchronous>, transform_indices = @transform_11, window_bounds = array<i64: 10, 2>}, {pipeline_mode = #tpu.pipeline_mode<synchronous>, transform_indices = @transform_12, window_bounds = array<i64: 1, 2>}, {transform_indices = @transform_13, window_bounds = array<i64: 8, 2>}]} {
    %c0_i32 = arith.constant 0 : i32
    %0 = arith.cmpi eq, %arg1, %c0_i32 : i32
    %1 = arith.extui %0 : i1 to i32
    %c0_i32_0 = arith.constant 0 : i32
    %2 = arith.cmpi ne, %1, %c0_i32_0 : i32
    scf.if %2 {
      %c0_119 = arith.constant 0 : index
      %c0_120 = arith.constant 0 : index
      %c0_121 = arith.constant 0 : index
      %1119 = vector.load %arg3[%c0_119, %c0_120, %c0_121] : memref<3x8x9xf32, #tpu.memory_space<vmem>>, vector<1x8x9xf32>
      %1120 = vector.shape_cast %1119 : vector<1x8x9xf32> to vector<8x9xf32>
      %c0_122 = arith.constant 0 : index
      %c0_123 = arith.constant 0 : index
      %1121 = vector.load %arg11[%c0_122, %c0_123] : memref<9x200xf32, #tpu.memory_space<vmem>>, vector<9x200xf32>
      %cst_124 = arith.constant dense<0.000000e+00> : vector<8x200xf32>
      %1122 = tpu.matmul %1120, %1121, %cst_124 {dimension_numbers = #tpu.dot_dimension_numbers<[1], [0], [0], [1], [0, 0, 1, 1], [], []>} : vector<8x9xf32>, vector<9x200xf32>, vector<8x200xf32> -> vector<8x200xf32>
      %c0_125 = arith.constant 0 : index
      %c0_126 = arith.constant 0 : index
      %1123 = vector.load %arg12[%c0_125, %c0_126] : memref<1x200xf32, #tpu.memory_space<vmem>>, vector<1x200xf32>
      %1124 = vector.broadcast %1123 : vector<1x200xf32> to vector<8x200xf32>
      %1125 = arith.addf %1122, %1124 : vector<8x200xf32>
      %cst_127 = arith.constant 0.000000e+00 : f32
      %1126 = vector.broadcast %cst_127 : f32 to vector<8x200xf32>
      %1127 = arith.maximumf %1125, %1126 : vector<8x200xf32>
      %c1_128 = arith.constant 1 : index
      %c0_129 = arith.constant 0 : index
      %c0_130 = arith.constant 0 : index
      %1128 = vector.load %arg3[%c1_128, %c0_129, %c0_130] : memref<3x8x9xf32, #tpu.memory_space<vmem>>, vector<1x8x9xf32>
      %1129 = vector.shape_cast %1128 : vector<1x8x9xf32> to vector<8x9xf32>
      %c0_131 = arith.constant 0 : index
      %c0_132 = arith.constant 0 : index
      %1130 = vector.load %arg11[%c0_131, %c0_132] : memref<9x200xf32, #tpu.memory_space<vmem>>, vector<9x200xf32>
      %cst_133 = arith.constant dense<0.000000e+00> : vector<8x200xf32>
      %1131 = tpu.matmul %1129, %1130, %cst_133 {dimension_numbers = #tpu.dot_dimension_numbers<[1], [0], [0], [1], [0, 0, 1, 1], [], []>} : vector<8x9xf32>, vector<9x200xf32>, vector<8x200xf32> -> vector<8x200xf32>
      %c0_134 = arith.constant 0 : index
      %c0_135 = arith.constant 0 : index
      %1132 = vector.load %arg12[%c0_134, %c0_135] : memref<1x200xf32, #tpu.memory_space<vmem>>, vector<1x200xf32>
      %1133 = vector.broadcast %1132 : vector<1x200xf32> to vector<8x200xf32>
      %1134 = arith.addf %1131, %1133 : vector<8x200xf32>
      %cst_136 = arith.constant 0.000000e+00 : f32
      %1135 = vector.broadcast %cst_136 : f32 to vector<8x200xf32>
      %1136 = arith.maximumf %1134, %1135 : vector<8x200xf32>
      %1137 = arith.maximumf %1127, %1136 : vector<8x200xf32>
      %c2_137 = arith.constant 2 : index
      %c0_138 = arith.constant 0 : index
      %c0_139 = arith.constant 0 : index
      %1138 = vector.load %arg3[%c2_137, %c0_138, %c0_139] : memref<3x8x9xf32, #tpu.memory_space<vmem>>, vector<1x8x9xf32>
      %1139 = vector.shape_cast %1138 : vector<1x8x9xf32> to vector<8x9xf32>
      %c0_140 = arith.constant 0 : index
      %c0_141 = arith.constant 0 : index
      %1140 = vector.load %arg11[%c0_140, %c0_141] : memref<9x200xf32, #tpu.memory_space<vmem>>, vector<9x200xf32>
      %cst_142 = arith.constant dense<0.000000e+00> : vector<8x200xf32>
      %1141 = tpu.matmul %1139, %1140, %cst_142 {dimension_numbers = #tpu.dot_dimension_numbers<[1], [0], [0], [1], [0, 0, 1, 1], [], []>} : vector<8x9xf32>, vector<9x200xf32>, vector<8x200xf32> -> vector<8x200xf32>
      %c0_143 = arith.constant 0 : index
      %c0_144 = arith.constant 0 : index
      %1142 = vector.load %arg12[%c0_143, %c0_144] : memref<1x200xf32, #tpu.memory_space<vmem>>, vector<1x200xf32>
      %1143 = vector.broadcast %1142 : vector<1x200xf32> to vector<8x200xf32>
      %1144 = arith.addf %1141, %1143 : vector<8x200xf32>
      %cst_145 = arith.constant 0.000000e+00 : f32
      %1145 = vector.broadcast %cst_145 : f32 to vector<8x200xf32>
      %1146 = arith.maximumf %1144, %1145 : vector<8x200xf32>
      %1147 = arith.maximumf %1137, %1146 : vector<8x200xf32>
      %c0_146 = arith.constant 0 : index
      %c0_147 = arith.constant 0 : index
      %1148 = vector.load %arg9[%c0_146, %c0_147] : memref<200x10xf32, #tpu.memory_space<vmem>>, vector<200x10xf32>
      %cst_148 = arith.constant dense<0.000000e+00> : vector<8x10xf32>
      %1149 = tpu.matmul %1147, %1148, %cst_148 {dimension_numbers = #tpu.dot_dimension_numbers<[1], [0], [0], [1], [0, 0, 1, 1], [], []>} : vector<8x200xf32>, vector<200x10xf32>, vector<8x10xf32> -> vector<8x10xf32>
      %c0_149 = arith.constant 0 : index
      %c0_150 = arith.constant 0 : index
      %1150 = vector.load %arg16[%c0_149, %c0_150] : memref<8x10xf32, #tpu.memory_space<vmem>>, vector<8x10xf32>
      tpu.vector_store %arg16[%c0_149, %c0_150], %1149 {strides = array<i32>} : memref<8x10xf32, #tpu.memory_space<vmem>>, vector<8x10xf32>,
    } else {
    }
    %c0 = arith.constant 0 : index
    %c0_1 = arith.constant 0 : index
    %c0_2 = arith.constant 0 : index
    %3 = vector.load %arg2[%c0, %c0_1, %c0_2] : memref<3x8x256xf32, #tpu.memory_space<vmem>>, vector<1x8x256xf32>
    %4 = vector.shape_cast %3 : vector<1x8x256xf32> to vector<8x256xf32>
    %c1 = arith.constant 1 : index
    %c0_3 = arith.constant 0 : index
    %c0_4 = arith.constant 0 : index
    %5 = vector.load %arg2[%c1, %c0_3, %c0_4] : memref<3x8x256xf32, #tpu.memory_space<vmem>>, vector<1x8x256xf32>
    %6 = vector.shape_cast %5 : vector<1x8x256xf32> to vector<8x256xf32>
    %c2 = arith.constant 2 : index
    %c0_5 = arith.constant 0 : index
    %c0_6 = arith.constant 0 : index
    %7 = vector.load %arg2[%c2, %c0_5, %c0_6] : memref<3x8x256xf32, #tpu.memory_space<vmem>>, vector<1x8x256xf32>
    %8 = vector.shape_cast %7 : vector<1x8x256xf32> to vector<8x256xf32>
    %c50_i32 = arith.constant 50 : i32
    %9 = arith.muli %arg1, %c50_i32 : i32
    %c0_i32_7 = arith.constant 0 : i32
    %10 = arith.addi %9, %c0_i32_7 : i32
    %11 = arith.index_cast %10 : i32 to index
    %12 = memref.load %arg4[%11] : memref<200xf32, #tpu.memory_space<smem>>
    %13 = vector.broadcast %12 : f32 to vector<8x256xf32>
    %14 = arith.mulf %4, %13 : vector<8x256xf32>
    %15 = arith.index_cast %10 : i32 to index
    %16 = memref.load %arg5[%15] : memref<200xf32, #tpu.memory_space<smem>>
    %17 = vector.broadcast %16 : f32 to vector<8x256xf32>
    %18 = arith.mulf %6, %17 : vector<8x256xf32>
    %19 = arith.addf %14, %18 : vector<8x256xf32>
    %20 = arith.index_cast %10 : i32 to index
    %21 = memref.load %arg6[%20] : memref<200xf32, #tpu.memory_space<smem>>
    %22 = vector.broadcast %21 : f32 to vector<8x256xf32>
    %23 = arith.mulf %8, %22 : vector<8x256xf32>
    %24 = arith.addf %19, %23 : vector<8x256xf32>
    %25 = arith.index_cast %10 : i32 to index
    %26 = memref.load %arg7[%25] : memref<200xf32, #tpu.memory_space<smem>>
    %27 = vector.broadcast %26 : f32 to vector<8x256xf32>
    %28 = arith.addf %24, %27 : vector<8x256xf32>
    %cst = arith.constant 0.000000e+00 : f32
    %29 = vector.broadcast %cst : f32 to vector<8x256xf32>
    %30 = arith.maximumf %28, %29 : vector<8x256xf32>
    %c0_8 = arith.constant 0 : index
    %c0_9 = arith.constant 0 : index
    %31 = vector.load %arg17[%c0_8, %c0_9] : memref<8x12800xf32, #tpu.memory_space<vmem>>, vector<8x256xf32>
    tpu.vector_store %arg17[%c0_8, %c0_9], %30 {strides = array<i32>} : memref<8x12800xf32, #tpu.memory_space<vmem>>, vector<8x256xf32>,
    %c1_i32 = arith.constant 1 : i32
    %32 = arith.addi %9, %c1_i32 : i32
    %33 = arith.index_cast %32 : i32 to index
    %34 = memref.load %arg4[%33] : memref<200xf32, #tpu.memory_space<smem>>
    %35 = vector.broadcast %34 : f32 to vector<8x256xf32>
    %36 = arith.mulf %4, %35 : vector<8x256xf32>
    %37 = arith.index_cast %32 : i32 to index
    %38 = memref.load %arg5[%37] : memref<200xf32, #tpu.memory_space<smem>>
    %39 = vector.broadcast %38 : f32 to vector<8x256xf32>
    %40 = arith.mulf %6, %39 : vector<8x256xf32>
    %41 = arith.addf %36, %40 : vector<8x256xf32>
    %42 = arith.index_cast %32 : i32 to index
    %43 = memref.load %arg6[%42] : memref<200xf32, #tpu.memory_space<smem>>
    %44 = vector.broadcast %43 : f32 to vector<8x256xf32>
    %45 = arith.mulf %8, %44 : vector<8x256xf32>
    %46 = arith.addf %41, %45 : vector<8x256xf32>
    %47 = arith.index_cast %32 : i32 to index
    %48 = memref.load %arg7[%47] : memref<200xf32, #tpu.memory_space<smem>>
    %49 = vector.broadcast %48 : f32 to vector<8x256xf32>
    %50 = arith.addf %46, %49 : vector<8x256xf32>
    %cst_10 = arith.constant 0.000000e+00 : f32
    %51 = vector.broadcast %cst_10 : f32 to vector<8x256xf32>
    %52 = arith.maximumf %50, %51 : vector<8x256xf32>
    %c0_11 = arith.constant 0 : index
    %c256 = arith.constant 256 : index
    %53 = vector.load %arg17[%c0_11, %c256] : memref<8x12800xf32, #tpu.memory_space<vmem>>, vector<8x256xf32>
    tpu.vector_store %arg17[%c0_11, %c256], %52 {strides = array<i32>} : memref<8x12800xf32, #tpu.memory_space<vmem>>, vector<8x256xf32>,
    %c2_i32 = arith.constant 2 : i32
    %54 = arith.addi %9, %c2_i32 : i32
    %55 = arith.index_cast %54 : i32 to index
    %56 = memref.load %arg4[%55] : memref<200xf32, #tpu.memory_space<smem>>
    %57 = vector.broadcast %56 : f32 to vector<8x256xf32>
    %58 = arith.mulf %4, %57 : vector<8x256xf32>
    %59 = arith.index_cast %54 : i32 to index
    %60 = memref.load %arg5[%59] : memref<200xf32, #tpu.memory_space<smem>>
    %61 = vector.broadcast %60 : f32 to vector<8x256xf32>
    %62 = arith.mulf %6, %61 : vector<8x256xf32>
    %63 = arith.addf %58, %62 : vector<8x256xf32>
    %64 = arith.index_cast %54 : i32 to index
    %65 = memref.load %arg6[%64] : memref<200xf32, #tpu.memory_space<smem>>
    %66 = vector.broadcast %65 : f32 to vector<8x256xf32>
    %67 = arith.mulf %8, %66 : vector<8x256xf32>
    %68 = arith.addf %63, %67 : vector<8x256xf32>
    %69 = arith.index_cast %54 : i32 to index
    %70 = memref.load %arg7[%69] : memref<200xf32, #tpu.memory_space<smem>>
    %71 = vector.broadcast %70 : f32 to vector<8x256xf32>
    %72 = arith.addf %68, %71 : vector<8x256xf32>
    %cst_12 = arith.constant 0.000000e+00 : f32
    %73 = vector.broadcast %cst_12 : f32 to vector<8x256xf32>
    %74 = arith.maximumf %72, %73 : vector<8x256xf32>
    %c0_13 = arith.constant 0 : index
    %c512 = arith.constant 512 : index
    %75 = vector.load %arg17[%c0_13, %c512] : memref<8x12800xf32, #tpu.memory_space<vmem>>, vector<8x256xf32>
    tpu.vector_store %arg17[%c0_13, %c512], %74 {strides = array<i32>} : memref<8x12800xf32, #tpu.memory_space<vmem>>, vector<8x256xf32>,
    %c3_i32 = arith.constant 3 : i32
    %76 = arith.addi %9, %c3_i32 : i32
    %77 = arith.index_cast %76 : i32 to index
    %78 = memref.load %arg4[%77] : memref<200xf32, #tpu.memory_space<smem>>
    %79 = vector.broadcast %78 : f32 to vector<8x256xf32>
    %80 = arith.mulf %4, %79 : vector<8x256xf32>
    %81 = arith.index_cast %76 : i32 to index
    %82 = memref.load %arg5[%81] : memref<200xf32, #tpu.memory_space<smem>>
    %83 = vector.broadcast %82 : f32 to vector<8x256xf32>
    %84 = arith.mulf %6, %83 : vector<8x256xf32>
    %85 = arith.addf %80, %84 : vector<8x256xf32>
    %86 = arith.index_cast %76 : i32 to index
    %87 = memref.load %arg6[%86] : memref<200xf32, #tpu.memory_space<smem>>
    %88 = vector.broadcast %87 : f32 to vector<8x256xf32>
    %89 = arith.mulf %8, %88 : vector<8x256xf32>
    %90 = arith.addf %85, %89 : vector<8x256xf32>
    %91 = arith.index_cast %76 : i32 to index
    %92 = memref.load %arg7[%91] : memref<200xf32, #tpu.memory_space<smem>>
    %93 = vector.broadcast %92 : f32 to vector<8x256xf32>
    %94 = arith.addf %90, %93 : vector<8x256xf32>
    %cst_14 = arith.constant 0.000000e+00 : f32
    %95 = vector.broadcast %cst_14 : f32 to vector<8x256xf32>
    %96 = arith.maximumf %94, %95 : vector<8x256xf32>
    %c0_15 = arith.constant 0 : index
    %c768 = arith.constant 768 : index
    %97 = vector.load %arg17[%c0_15, %c768] : memref<8x12800xf32, #tpu.memory_space<vmem>>, vector<8x256xf32>
    tpu.vector_store %arg17[%c0_15, %c768], %96 {strides = array<i32>} : memref<8x12800xf32, #tpu.memory_space<vmem>>, vector<8x256xf32>,
    %c4_i32 = arith.constant 4 : i32
    %98 = arith.addi %9, %c4_i32 : i32
    %99 = arith.index_cast %98 : i32 to index
    %100 = memref.load %arg4[%99] : memref<200xf32, #tpu.memory_space<smem>>
    %101 = vector.broadcast %100 : f32 to vector<8x256xf32>
    %102 = arith.mulf %4, %101 : vector<8x256xf32>
    %103 = arith.index_cast %98 : i32 to index
    %104 = memref.load %arg5[%103] : memref<200xf32, #tpu.memory_space<smem>>
    %105 = vector.broadcast %104 : f32 to vector<8x256xf32>
    %106 = arith.mulf %6, %105 : vector<8x256xf32>
    %107 = arith.addf %102, %106 : vector<8x256xf32>
    %108 = arith.index_cast %98 : i32 to index
    %109 = memref.load %arg6[%108] : memref<200xf32, #tpu.memory_space<smem>>
    %110 = vector.broadcast %109 : f32 to vector<8x256xf32>
    %111 = arith.mulf %8, %110 : vector<8x256xf32>
    %112 = arith.addf %107, %111 : vector<8x256xf32>
    %113 = arith.index_cast %98 : i32 to index
    %114 = memref.load %arg7[%113] : memref<200xf32, #tpu.memory_space<smem>>
    %115 = vector.broadcast %114 : f32 to vector<8x256xf32>
    %116 = arith.addf %112, %115 : vector<8x256xf32>
    %cst_16 = arith.constant 0.000000e+00 : f32
    %117 = vector.broadcast %cst_16 : f32 to vector<8x256xf32>
    %118 = arith.maximumf %116, %117 : vector<8x256xf32>
    %c0_17 = arith.constant 0 : index
    %c1024 = arith.constant 1024 : index
    %119 = vector.load %arg17[%c0_17, %c1024] : memref<8x12800xf32, #tpu.memory_space<vmem>>, vector<8x256xf32>
    tpu.vector_store %arg17[%c0_17, %c1024], %118 {strides = array<i32>} : memref<8x12800xf32, #tpu.memory_space<vmem>>, vector<8x256xf32>,
    %c5_i32 = arith.constant 5 : i32
    %120 = arith.addi %9, %c5_i32 : i32
    %121 = arith.index_cast %120 : i32 to index
    %122 = memref.load %arg4[%121] : memref<200xf32, #tpu.memory_space<smem>>
    %123 = vector.broadcast %122 : f32 to vector<8x256xf32>
    %124 = arith.mulf %4, %123 : vector<8x256xf32>
    %125 = arith.index_cast %120 : i32 to index
    %126 = memref.load %arg5[%125] : memref<200xf32, #tpu.memory_space<smem>>
    %127 = vector.broadcast %126 : f32 to vector<8x256xf32>
    %128 = arith.mulf %6, %127 : vector<8x256xf32>
    %129 = arith.addf %124, %128 : vector<8x256xf32>
    %130 = arith.index_cast %120 : i32 to index
    %131 = memref.load %arg6[%130] : memref<200xf32, #tpu.memory_space<smem>>
    %132 = vector.broadcast %131 : f32 to vector<8x256xf32>
    %133 = arith.mulf %8, %132 : vector<8x256xf32>
    %134 = arith.addf %129, %133 : vector<8x256xf32>
    %135 = arith.index_cast %120 : i32 to index
    %136 = memref.load %arg7[%135] : memref<200xf32, #tpu.memory_space<smem>>
    %137 = vector.broadcast %136 : f32 to vector<8x256xf32>
    %138 = arith.addf %134, %137 : vector<8x256xf32>
    %cst_18 = arith.constant 0.000000e+00 : f32
    %139 = vector.broadcast %cst_18 : f32 to vector<8x256xf32>
    %140 = arith.maximumf %138, %139 : vector<8x256xf32>
    %c0_19 = arith.constant 0 : index
    %c1280 = arith.constant 1280 : index
    %141 = vector.load %arg17[%c0_19, %c1280] : memref<8x12800xf32, #tpu.memory_space<vmem>>, vector<8x256xf32>
    tpu.vector_store %arg17[%c0_19, %c1280], %140 {strides = array<i32>} : memref<8x12800xf32, #tpu.memory_space<vmem>>, vector<8x256xf32>,
    %c6_i32 = arith.constant 6 : i32
    %142 = arith.addi %9, %c6_i32 : i32
    %143 = arith.index_cast %142 : i32 to index
    %144 = memref.load %arg4[%143] : memref<200xf32, #tpu.memory_space<smem>>
    %145 = vector.broadcast %144 : f32 to vector<8x256xf32>
    %146 = arith.mulf %4, %145 : vector<8x256xf32>
    %147 = arith.index_cast %142 : i32 to index
    %148 = memref.load %arg5[%147] : memref<200xf32, #tpu.memory_space<smem>>
    %149 = vector.broadcast %148 : f32 to vector<8x256xf32>
    %150 = arith.mulf %6, %149 : vector<8x256xf32>
    %151 = arith.addf %146, %150 : vector<8x256xf32>
    %152 = arith.index_cast %142 : i32 to index
    %153 = memref.load %arg6[%152] : memref<200xf32, #tpu.memory_space<smem>>
    %154 = vector.broadcast %153 : f32 to vector<8x256xf32>
    %155 = arith.mulf %8, %154 : vector<8x256xf32>
    %156 = arith.addf %151, %155 : vector<8x256xf32>
    %157 = arith.index_cast %142 : i32 to index
    %158 = memref.load %arg7[%157] : memref<200xf32, #tpu.memory_space<smem>>
    %159 = vector.broadcast %158 : f32 to vector<8x256xf32>
    %160 = arith.addf %156, %159 : vector<8x256xf32>
    %cst_20 = arith.constant 0.000000e+00 : f32
    %161 = vector.broadcast %cst_20 : f32 to vector<8x256xf32>
    %162 = arith.maximumf %160, %161 : vector<8x256xf32>
    %c0_21 = arith.constant 0 : index
    %c1536 = arith.constant 1536 : index
    %163 = vector.load %arg17[%c0_21, %c1536] : memref<8x12800xf32, #tpu.memory_space<vmem>>, vector<8x256xf32>
    tpu.vector_store %arg17[%c0_21, %c1536], %162 {strides = array<i32>} : memref<8x12800xf32, #tpu.memory_space<vmem>>, vector<8x256xf32>,
    %c7_i32 = arith.constant 7 : i32
    %164 = arith.addi %9, %c7_i32 : i32
    %165 = arith.index_cast %164 : i32 to index
    %166 = memref.load %arg4[%165] : memref<200xf32, #tpu.memory_space<smem>>
    %167 = vector.broadcast %166 : f32 to vector<8x256xf32>
    %168 = arith.mulf %4, %167 : vector<8x256xf32>
    %169 = arith.index_cast %164 : i32 to index
    %170 = memref.load %arg5[%169] : memref<200xf32, #tpu.memory_space<smem>>
    %171 = vector.broadcast %170 : f32 to vector<8x256xf32>
    %172 = arith.mulf %6, %171 : vector<8x256xf32>
    %173 = arith.addf %168, %172 : vector<8x256xf32>
    %174 = arith.index_cast %164 : i32 to index
    %175 = memref.load %arg6[%174] : memref<200xf32, #tpu.memory_space<smem>>
    %176 = vector.broadcast %175 : f32 to vector<8x256xf32>
    %177 = arith.mulf %8, %176 : vector<8x256xf32>
    %178 = arith.addf %173, %177 : vector<8x256xf32>
    %179 = arith.index_cast %164 : i32 to index
    %180 = memref.load %arg7[%179] : memref<200xf32, #tpu.memory_space<smem>>
    %181 = vector.broadcast %180 : f32 to vector<8x256xf32>
    %182 = arith.addf %178, %181 : vector<8x256xf32>
    %cst_22 = arith.constant 0.000000e+00 : f32
    %183 = vector.broadcast %cst_22 : f32 to vector<8x256xf32>
    %184 = arith.maximumf %182, %183 : vector<8x256xf32>
    %c0_23 = arith.constant 0 : index
    %c1792 = arith.constant 1792 : index
    %185 = vector.load %arg17[%c0_23, %c1792] : memref<8x12800xf32, #tpu.memory_space<vmem>>, vector<8x256xf32>
    tpu.vector_store %arg17[%c0_23, %c1792], %184 {strides = array<i32>} : memref<8x12800xf32, #tpu.memory_space<vmem>>, vector<8x256xf32>,
    %c8_i32 = arith.constant 8 : i32
    %186 = arith.addi %9, %c8_i32 : i32
    %187 = arith.index_cast %186 : i32 to index
    %188 = memref.load %arg4[%187] : memref<200xf32, #tpu.memory_space<smem>>
    %189 = vector.broadcast %188 : f32 to vector<8x256xf32>
    %190 = arith.mulf %4, %189 : vector<8x256xf32>
    %191 = arith.index_cast %186 : i32 to index
    %192 = memref.load %arg5[%191] : memref<200xf32, #tpu.memory_space<smem>>
    %193 = vector.broadcast %192 : f32 to vector<8x256xf32>
    %194 = arith.mulf %6, %193 : vector<8x256xf32>
    %195 = arith.addf %190, %194 : vector<8x256xf32>
    %196 = arith.index_cast %186 : i32 to index
    %197 = memref.load %arg6[%196] : memref<200xf32, #tpu.memory_space<smem>>
    %198 = vector.broadcast %197 : f32 to vector<8x256xf32>
    %199 = arith.mulf %8, %198 : vector<8x256xf32>
    %200 = arith.addf %195, %199 : vector<8x256xf32>
    %201 = arith.index_cast %186 : i32 to index
    %202 = memref.load %arg7[%201] : memref<200xf32, #tpu.memory_space<smem>>
    %203 = vector.broadcast %202 : f32 to vector<8x256xf32>
    %204 = arith.addf %200, %203 : vector<8x256xf32>
    %cst_24 = arith.constant 0.000000e+00 : f32
    %205 = vector.broadcast %cst_24 : f32 to vector<8x256xf32>
    %206 = arith.maximumf %204, %205 : vector<8x256xf32>
    %c0_25 = arith.constant 0 : index
    %c2048 = arith.constant 2048 : index
    %207 = vector.load %arg17[%c0_25, %c2048] : memref<8x12800xf32, #tpu.memory_space<vmem>>, vector<8x256xf32>
    tpu.vector_store %arg17[%c0_25, %c2048], %206 {strides = array<i32>} : memref<8x12800xf32, #tpu.memory_space<vmem>>, vector<8x256xf32>,
    %c9_i32 = arith.constant 9 : i32
    %208 = arith.addi %9, %c9_i32 : i32
    %209 = arith.index_cast %208 : i32 to index
    %210 = memref.load %arg4[%209] : memref<200xf32, #tpu.memory_space<smem>>
    %211 = vector.broadcast %210 : f32 to vector<8x256xf32>
    %212 = arith.mulf %4, %211 : vector<8x256xf32>
    %213 = arith.index_cast %208 : i32 to index
    %214 = memref.load %arg5[%213] : memref<200xf32, #tpu.memory_space<smem>>
    %215 = vector.broadcast %214 : f32 to vector<8x256xf32>
    %216 = arith.mulf %6, %215 : vector<8x256xf32>
    %217 = arith.addf %212, %216 : vector<8x256xf32>
    %218 = arith.index_cast %208 : i32 to index
    %219 = memref.load %arg6[%218] : memref<200xf32, #tpu.memory_space<smem>>
    %220 = vector.broadcast %219 : f32 to vector<8x256xf32>
    %221 = arith.mulf %8, %220 : vector<8x256xf32>
    %222 = arith.addf %217, %221 : vector<8x256xf32>
    %223 = arith.index_cast %208 : i32 to index
    %224 = memref.load %arg7[%223] : memref<200xf32, #tpu.memory_space<smem>>
    %225 = vector.broadcast %224 : f32 to vector<8x256xf32>
    %226 = arith.addf %222, %225 : vector<8x256xf32>
    %cst_26 = arith.constant 0.000000e+00 : f32
    %227 = vector.broadcast %cst_26 : f32 to vector<8x256xf32>
    %228 = arith.maximumf %226, %227 : vector<8x256xf32>
    %c0_27 = arith.constant 0 : index
    %c2304 = arith.constant 2304 : index
    %229 = vector.load %arg17[%c0_27, %c2304] : memref<8x12800xf32, #tpu.memory_space<vmem>>, vector<8x256xf32>
    tpu.vector_store %arg17[%c0_27, %c2304], %228 {strides = array<i32>} : memref<8x12800xf32, #tpu.memory_space<vmem>>, vector<8x256xf32>,
    %c10_i32 = arith.constant 10 : i32
    %230 = arith.addi %9, %c10_i32 : i32
    %231 = arith.index_cast %230 : i32 to index
    %232 = memref.load %arg4[%231] : memref<200xf32, #tpu.memory_space<smem>>
    %233 = vector.broadcast %232 : f32 to vector<8x256xf32>
    %234 = arith.mulf %4, %233 : vector<8x256xf32>
    %235 = arith.index_cast %230 : i32 to index
    %236 = memref.load %arg5[%235] : memref<200xf32, #tpu.memory_space<smem>>
    %237 = vector.broadcast %236 : f32 to vector<8x256xf32>
    %238 = arith.mulf %6, %237 : vector<8x256xf32>
    %239 = arith.addf %234, %238 : vector<8x256xf32>
    %240 = arith.index_cast %230 : i32 to index
    %241 = memref.load %arg6[%240] : memref<200xf32, #tpu.memory_space<smem>>
    %242 = vector.broadcast %241 : f32 to vector<8x256xf32>
    %243 = arith.mulf %8, %242 : vector<8x256xf32>
    %244 = arith.addf %239, %243 : vector<8x256xf32>
    %245 = arith.index_cast %230 : i32 to index
    %246 = memref.load %arg7[%245] : memref<200xf32, #tpu.memory_space<smem>>
    %247 = vector.broadcast %246 : f32 to vector<8x256xf32>
    %248 = arith.addf %244, %247 : vector<8x256xf32>
    %cst_28 = arith.constant 0.000000e+00 : f32
    %249 = vector.broadcast %cst_28 : f32 to vector<8x256xf32>
    %250 = arith.maximumf %248, %249 : vector<8x256xf32>
    %c0_29 = arith.constant 0 : index
    %c2560 = arith.constant 2560 : index
    %251 = vector.load %arg17[%c0_29, %c2560] : memref<8x12800xf32, #tpu.memory_space<vmem>>, vector<8x256xf32>
    tpu.vector_store %arg17[%c0_29, %c2560], %250 {strides = array<i32>} : memref<8x12800xf32, #tpu.memory_space<vmem>>, vector<8x256xf32>,
    %c11_i32 = arith.constant 11 : i32
    %252 = arith.addi %9, %c11_i32 : i32
    %253 = arith.index_cast %252 : i32 to index
    %254 = memref.load %arg4[%253] : memref<200xf32, #tpu.memory_space<smem>>
    %255 = vector.broadcast %254 : f32 to vector<8x256xf32>
    %256 = arith.mulf %4, %255 : vector<8x256xf32>
    %257 = arith.index_cast %252 : i32 to index
    %258 = memref.load %arg5[%257] : memref<200xf32, #tpu.memory_space<smem>>
    %259 = vector.broadcast %258 : f32 to vector<8x256xf32>
    %260 = arith.mulf %6, %259 : vector<8x256xf32>
    %261 = arith.addf %256, %260 : vector<8x256xf32>
    %262 = arith.index_cast %252 : i32 to index
    %263 = memref.load %arg6[%262] : memref<200xf32, #tpu.memory_space<smem>>
    %264 = vector.broadcast %263 : f32 to vector<8x256xf32>
    %265 = arith.mulf %8, %264 : vector<8x256xf32>
    %266 = arith.addf %261, %265 : vector<8x256xf32>
    %267 = arith.index_cast %252 : i32 to index
    %268 = memref.load %arg7[%267] : memref<200xf32, #tpu.memory_space<smem>>
    %269 = vector.broadcast %268 : f32 to vector<8x256xf32>
    %270 = arith.addf %266, %269 : vector<8x256xf32>
    %cst_30 = arith.constant 0.000000e+00 : f32
    %271 = vector.broadcast %cst_30 : f32 to vector<8x256xf32>
    %272 = arith.maximumf %270, %271 : vector<8x256xf32>
    %c0_31 = arith.constant 0 : index
    %c2816 = arith.constant 2816 : index
    %273 = vector.load %arg17[%c0_31, %c2816] : memref<8x12800xf32, #tpu.memory_space<vmem>>, vector<8x256xf32>
    tpu.vector_store %arg17[%c0_31, %c2816], %272 {strides = array<i32>} : memref<8x12800xf32, #tpu.memory_space<vmem>>, vector<8x256xf32>,
    %c12_i32 = arith.constant 12 : i32
    %274 = arith.addi %9, %c12_i32 : i32
    %275 = arith.index_cast %274 : i32 to index
    %276 = memref.load %arg4[%275] : memref<200xf32, #tpu.memory_space<smem>>
    %277 = vector.broadcast %276 : f32 to vector<8x256xf32>
    %278 = arith.mulf %4, %277 : vector<8x256xf32>
    %279 = arith.index_cast %274 : i32 to index
    %280 = memref.load %arg5[%279] : memref<200xf32, #tpu.memory_space<smem>>
    %281 = vector.broadcast %280 : f32 to vector<8x256xf32>
    %282 = arith.mulf %6, %281 : vector<8x256xf32>
    %283 = arith.addf %278, %282 : vector<8x256xf32>
    %284 = arith.index_cast %274 : i32 to index
    %285 = memref.load %arg6[%284] : memref<200xf32, #tpu.memory_space<smem>>
    %286 = vector.broadcast %285 : f32 to vector<8x256xf32>
    %287 = arith.mulf %8, %286 : vector<8x256xf32>
    %288 = arith.addf %283, %287 : vector<8x256xf32>
    %289 = arith.index_cast %274 : i32 to index
    %290 = memref.load %arg7[%289] : memref<200xf32, #tpu.memory_space<smem>>
    %291 = vector.broadcast %290 : f32 to vector<8x256xf32>
    %292 = arith.addf %288, %291 : vector<8x256xf32>
    %cst_32 = arith.constant 0.000000e+00 : f32
    %293 = vector.broadcast %cst_32 : f32 to vector<8x256xf32>
    %294 = arith.maximumf %292, %293 : vector<8x256xf32>
    %c0_33 = arith.constant 0 : index
    %c3072 = arith.constant 3072 : index
    %295 = vector.load %arg17[%c0_33, %c3072] : memref<8x12800xf32, #tpu.memory_space<vmem>>, vector<8x256xf32>
    tpu.vector_store %arg17[%c0_33, %c3072], %294 {strides = array<i32>} : memref<8x12800xf32, #tpu.memory_space<vmem>>, vector<8x256xf32>,
    %c13_i32 = arith.constant 13 : i32
    %296 = arith.addi %9, %c13_i32 : i32
    %297 = arith.index_cast %296 : i32 to index
    %298 = memref.load %arg4[%297] : memref<200xf32, #tpu.memory_space<smem>>
    %299 = vector.broadcast %298 : f32 to vector<8x256xf32>
    %300 = arith.mulf %4, %299 : vector<8x256xf32>
    %301 = arith.index_cast %296 : i32 to index
    %302 = memref.load %arg5[%301] : memref<200xf32, #tpu.memory_space<smem>>
    %303 = vector.broadcast %302 : f32 to vector<8x256xf32>
    %304 = arith.mulf %6, %303 : vector<8x256xf32>
    %305 = arith.addf %300, %304 : vector<8x256xf32>
    %306 = arith.index_cast %296 : i32 to index
    %307 = memref.load %arg6[%306] : memref<200xf32, #tpu.memory_space<smem>>
    %308 = vector.broadcast %307 : f32 to vector<8x256xf32>
    %309 = arith.mulf %8, %308 : vector<8x256xf32>
    %310 = arith.addf %305, %309 : vector<8x256xf32>
    %311 = arith.index_cast %296 : i32 to index
    %312 = memref.load %arg7[%311] : memref<200xf32, #tpu.memory_space<smem>>
    %313 = vector.broadcast %312 : f32 to vector<8x256xf32>
    %314 = arith.addf %310, %313 : vector<8x256xf32>
    %cst_34 = arith.constant 0.000000e+00 : f32
    %315 = vector.broadcast %cst_34 : f32 to vector<8x256xf32>
    %316 = arith.maximumf %314, %315 : vector<8x256xf32>
    %c0_35 = arith.constant 0 : index
    %c3328 = arith.constant 3328 : index
    %317 = vector.load %arg17[%c0_35, %c3328] : memref<8x12800xf32, #tpu.memory_space<vmem>>, vector<8x256xf32>
    tpu.vector_store %arg17[%c0_35, %c3328], %316 {strides = array<i32>} : memref<8x12800xf32, #tpu.memory_space<vmem>>, vector<8x256xf32>,
    %c14_i32 = arith.constant 14 : i32
    %318 = arith.addi %9, %c14_i32 : i32
    %319 = arith.index_cast %318 : i32 to index
    %320 = memref.load %arg4[%319] : memref<200xf32, #tpu.memory_space<smem>>
    %321 = vector.broadcast %320 : f32 to vector<8x256xf32>
    %322 = arith.mulf %4, %321 : vector<8x256xf32>
    %323 = arith.index_cast %318 : i32 to index
    %324 = memref.load %arg5[%323] : memref<200xf32, #tpu.memory_space<smem>>
    %325 = vector.broadcast %324 : f32 to vector<8x256xf32>
    %326 = arith.mulf %6, %325 : vector<8x256xf32>
    %327 = arith.addf %322, %326 : vector<8x256xf32>
    %328 = arith.index_cast %318 : i32 to index
    %329 = memref.load %arg6[%328] : memref<200xf32, #tpu.memory_space<smem>>
    %330 = vector.broadcast %329 : f32 to vector<8x256xf32>
    %331 = arith.mulf %8, %330 : vector<8x256xf32>
    %332 = arith.addf %327, %331 : vector<8x256xf32>
    %333 = arith.index_cast %318 : i32 to index
    %334 = memref.load %arg7[%333] : memref<200xf32, #tpu.memory_space<smem>>
    %335 = vector.broadcast %334 : f32 to vector<8x256xf32>
    %336 = arith.addf %332, %335 : vector<8x256xf32>
    %cst_36 = arith.constant 0.000000e+00 : f32
    %337 = vector.broadcast %cst_36 : f32 to vector<8x256xf32>
    %338 = arith.maximumf %336, %337 : vector<8x256xf32>
    %c0_37 = arith.constant 0 : index
    %c3584 = arith.constant 3584 : index
    %339 = vector.load %arg17[%c0_37, %c3584] : memref<8x12800xf32, #tpu.memory_space<vmem>>, vector<8x256xf32>
    tpu.vector_store %arg17[%c0_37, %c3584], %338 {strides = array<i32>} : memref<8x12800xf32, #tpu.memory_space<vmem>>, vector<8x256xf32>,
    %c15_i32 = arith.constant 15 : i32
    %340 = arith.addi %9, %c15_i32 : i32
    %341 = arith.index_cast %340 : i32 to index
    %342 = memref.load %arg4[%341] : memref<200xf32, #tpu.memory_space<smem>>
    %343 = vector.broadcast %342 : f32 to vector<8x256xf32>
    %344 = arith.mulf %4, %343 : vector<8x256xf32>
    %345 = arith.index_cast %340 : i32 to index
    %346 = memref.load %arg5[%345] : memref<200xf32, #tpu.memory_space<smem>>
    %347 = vector.broadcast %346 : f32 to vector<8x256xf32>
    %348 = arith.mulf %6, %347 : vector<8x256xf32>
    %349 = arith.addf %344, %348 : vector<8x256xf32>
    %350 = arith.index_cast %340 : i32 to index
    %351 = memref.load %arg6[%350] : memref<200xf32, #tpu.memory_space<smem>>
    %352 = vector.broadcast %351 : f32 to vector<8x256xf32>
    %353 = arith.mulf %8, %352 : vector<8x256xf32>
    %354 = arith.addf %349, %353 : vector<8x256xf32>
    %355 = arith.index_cast %340 : i32 to index
    %356 = memref.load %arg7[%355] : memref<200xf32, #tpu.memory_space<smem>>
    %357 = vector.broadcast %356 : f32 to vector<8x256xf32>
    %358 = arith.addf %354, %357 : vector<8x256xf32>
    %cst_38 = arith.constant 0.000000e+00 : f32
    %359 = vector.broadcast %cst_38 : f32 to vector<8x256xf32>
    %360 = arith.maximumf %358, %359 : vector<8x256xf32>
    %c0_39 = arith.constant 0 : index
    %c3840 = arith.constant 3840 : index
    %361 = vector.load %arg17[%c0_39, %c3840] : memref<8x12800xf32, #tpu.memory_space<vmem>>, vector<8x256xf32>
    tpu.vector_store %arg17[%c0_39, %c3840], %360 {strides = array<i32>} : memref<8x12800xf32, #tpu.memory_space<vmem>>, vector<8x256xf32>,
    %c16_i32 = arith.constant 16 : i32
    %362 = arith.addi %9, %c16_i32 : i32
    %363 = arith.index_cast %362 : i32 to index
    %364 = memref.load %arg4[%363] : memref<200xf32, #tpu.memory_space<smem>>
    %365 = vector.broadcast %364 : f32 to vector<8x256xf32>
    %366 = arith.mulf %4, %365 : vector<8x256xf32>
    %367 = arith.index_cast %362 : i32 to index
    %368 = memref.load %arg5[%367] : memref<200xf32, #tpu.memory_space<smem>>
    %369 = vector.broadcast %368 : f32 to vector<8x256xf32>
    %370 = arith.mulf %6, %369 : vector<8x256xf32>
    %371 = arith.addf %366, %370 : vector<8x256xf32>
    %372 = arith.index_cast %362 : i32 to index
    %373 = memref.load %arg6[%372] : memref<200xf32, #tpu.memory_space<smem>>
    %374 = vector.broadcast %373 : f32 to vector<8x256xf32>
    %375 = arith.mulf %8, %374 : vector<8x256xf32>
    %376 = arith.addf %371, %375 : vector<8x256xf32>
    %377 = arith.index_cast %362 : i32 to index
    %378 = memref.load %arg7[%377] : memref<200xf32, #tpu.memory_space<smem>>
    %379 = vector.broadcast %378 : f32 to vector<8x256xf32>
    %380 = arith.addf %376, %379 : vector<8x256xf32>
    %cst_40 = arith.constant 0.000000e+00 : f32
    %381 = vector.broadcast %cst_40 : f32 to vector<8x256xf32>
    %382 = arith.maximumf %380, %381 : vector<8x256xf32>
    %c0_41 = arith.constant 0 : index
    %c4096 = arith.constant 4096 : index
    %383 = vector.load %arg17[%c0_41, %c4096] : memref<8x12800xf32, #tpu.memory_space<vmem>>, vector<8x256xf32>
    tpu.vector_store %arg17[%c0_41, %c4096], %382 {strides = array<i32>} : memref<8x12800xf32, #tpu.memory_space<vmem>>, vector<8x256xf32>,
    %c17_i32 = arith.constant 17 : i32
    %384 = arith.addi %9, %c17_i32 : i32
    %385 = arith.index_cast %384 : i32 to index
    %386 = memref.load %arg4[%385] : memref<200xf32, #tpu.memory_space<smem>>
    %387 = vector.broadcast %386 : f32 to vector<8x256xf32>
    %388 = arith.mulf %4, %387 : vector<8x256xf32>
    %389 = arith.index_cast %384 : i32 to index
    %390 = memref.load %arg5[%389] : memref<200xf32, #tpu.memory_space<smem>>
    %391 = vector.broadcast %390 : f32 to vector<8x256xf32>
    %392 = arith.mulf %6, %391 : vector<8x256xf32>
    %393 = arith.addf %388, %392 : vector<8x256xf32>
    %394 = arith.index_cast %384 : i32 to index
    %395 = memref.load %arg6[%394] : memref<200xf32, #tpu.memory_space<smem>>
    %396 = vector.broadcast %395 : f32 to vector<8x256xf32>
    %397 = arith.mulf %8, %396 : vector<8x256xf32>
    %398 = arith.addf %393, %397 : vector<8x256xf32>
    %399 = arith.index_cast %384 : i32 to index
    %400 = memref.load %arg7[%399] : memref<200xf32, #tpu.memory_space<smem>>
    %401 = vector.broadcast %400 : f32 to vector<8x256xf32>
    %402 = arith.addf %398, %401 : vector<8x256xf32>
    %cst_42 = arith.constant 0.000000e+00 : f32
    %403 = vector.broadcast %cst_42 : f32 to vector<8x256xf32>
    %404 = arith.maximumf %402, %403 : vector<8x256xf32>
    %c0_43 = arith.constant 0 : index
    %c4352 = arith.constant 4352 : index
    %405 = vector.load %arg17[%c0_43, %c4352] : memref<8x12800xf32, #tpu.memory_space<vmem>>, vector<8x256xf32>
    tpu.vector_store %arg17[%c0_43, %c4352], %404 {strides = array<i32>} : memref<8x12800xf32, #tpu.memory_space<vmem>>, vector<8x256xf32>,
    %c18_i32 = arith.constant 18 : i32
    %406 = arith.addi %9, %c18_i32 : i32
    %407 = arith.index_cast %406 : i32 to index
    %408 = memref.load %arg4[%407] : memref<200xf32, #tpu.memory_space<smem>>
    %409 = vector.broadcast %408 : f32 to vector<8x256xf32>
    %410 = arith.mulf %4, %409 : vector<8x256xf32>
    %411 = arith.index_cast %406 : i32 to index
    %412 = memref.load %arg5[%411] : memref<200xf32, #tpu.memory_space<smem>>
    %413 = vector.broadcast %412 : f32 to vector<8x256xf32>
    %414 = arith.mulf %6, %413 : vector<8x256xf32>
    %415 = arith.addf %410, %414 : vector<8x256xf32>
    %416 = arith.index_cast %406 : i32 to index
    %417 = memref.load %arg6[%416] : memref<200xf32, #tpu.memory_space<smem>>
    %418 = vector.broadcast %417 : f32 to vector<8x256xf32>
    %419 = arith.mulf %8, %418 : vector<8x256xf32>
    %420 = arith.addf %415, %419 : vector<8x256xf32>
    %421 = arith.index_cast %406 : i32 to index
    %422 = memref.load %arg7[%421] : memref<200xf32, #tpu.memory_space<smem>>
    %423 = vector.broadcast %422 : f32 to vector<8x256xf32>
    %424 = arith.addf %420, %423 : vector<8x256xf32>
    %cst_44 = arith.constant 0.000000e+00 : f32
    %425 = vector.broadcast %cst_44 : f32 to vector<8x256xf32>
    %426 = arith.maximumf %424, %425 : vector<8x256xf32>
    %c0_45 = arith.constant 0 : index
    %c4608 = arith.constant 4608 : index
    %427 = vector.load %arg17[%c0_45, %c4608] : memref<8x12800xf32, #tpu.memory_space<vmem>>, vector<8x256xf32>
    tpu.vector_store %arg17[%c0_45, %c4608], %426 {strides = array<i32>} : memref<8x12800xf32, #tpu.memory_space<vmem>>, vector<8x256xf32>,
    %c19_i32 = arith.constant 19 : i32
    %428 = arith.addi %9, %c19_i32 : i32
    %429 = arith.index_cast %428 : i32 to index
    %430 = memref.load %arg4[%429] : memref<200xf32, #tpu.memory_space<smem>>
    %431 = vector.broadcast %430 : f32 to vector<8x256xf32>
    %432 = arith.mulf %4, %431 : vector<8x256xf32>
    %433 = arith.index_cast %428 : i32 to index
    %434 = memref.load %arg5[%433] : memref<200xf32, #tpu.memory_space<smem>>
    %435 = vector.broadcast %434 : f32 to vector<8x256xf32>
    %436 = arith.mulf %6, %435 : vector<8x256xf32>
    %437 = arith.addf %432, %436 : vector<8x256xf32>
    %438 = arith.index_cast %428 : i32 to index
    %439 = memref.load %arg6[%438] : memref<200xf32, #tpu.memory_space<smem>>
    %440 = vector.broadcast %439 : f32 to vector<8x256xf32>
    %441 = arith.mulf %8, %440 : vector<8x256xf32>
    %442 = arith.addf %437, %441 : vector<8x256xf32>
    %443 = arith.index_cast %428 : i32 to index
    %444 = memref.load %arg7[%443] : memref<200xf32, #tpu.memory_space<smem>>
    %445 = vector.broadcast %444 : f32 to vector<8x256xf32>
    %446 = arith.addf %442, %445 : vector<8x256xf32>
    %cst_46 = arith.constant 0.000000e+00 : f32
    %447 = vector.broadcast %cst_46 : f32 to vector<8x256xf32>
    %448 = arith.maximumf %446, %447 : vector<8x256xf32>
    %c0_47 = arith.constant 0 : index
    %c4864 = arith.constant 4864 : index
    %449 = vector.load %arg17[%c0_47, %c4864] : memref<8x12800xf32, #tpu.memory_space<vmem>>, vector<8x256xf32>
    tpu.vector_store %arg17[%c0_47, %c4864], %448 {strides = array<i32>} : memref<8x12800xf32, #tpu.memory_space<vmem>>, vector<8x256xf32>,
    %c20_i32 = arith.constant 20 : i32
    %450 = arith.addi %9, %c20_i32 : i32
    %451 = arith.index_cast %450 : i32 to index
    %452 = memref.load %arg4[%451] : memref<200xf32, #tpu.memory_space<smem>>
    %453 = vector.broadcast %452 : f32 to vector<8x256xf32>
    %454 = arith.mulf %4, %453 : vector<8x256xf32>
    %455 = arith.index_cast %450 : i32 to index
    %456 = memref.load %arg5[%455] : memref<200xf32, #tpu.memory_space<smem>>
    %457 = vector.broadcast %456 : f32 to vector<8x256xf32>
    %458 = arith.mulf %6, %457 : vector<8x256xf32>
    %459 = arith.addf %454, %458 : vector<8x256xf32>
    %460 = arith.index_cast %450 : i32 to index
    %461 = memref.load %arg6[%460] : memref<200xf32, #tpu.memory_space<smem>>
    %462 = vector.broadcast %461 : f32 to vector<8x256xf32>
    %463 = arith.mulf %8, %462 : vector<8x256xf32>
    %464 = arith.addf %459, %463 : vector<8x256xf32>
    %465 = arith.index_cast %450 : i32 to index
    %466 = memref.load %arg7[%465] : memref<200xf32, #tpu.memory_space<smem>>
    %467 = vector.broadcast %466 : f32 to vector<8x256xf32>
    %468 = arith.addf %464, %467 : vector<8x256xf32>
    %cst_48 = arith.constant 0.000000e+00 : f32
    %469 = vector.broadcast %cst_48 : f32 to vector<8x256xf32>
    %470 = arith.maximumf %468, %469 : vector<8x256xf32>
    %c0_49 = arith.constant 0 : index
    %c5120 = arith.constant 5120 : index
    %471 = vector.load %arg17[%c0_49, %c5120] : memref<8x12800xf32, #tpu.memory_space<vmem>>, vector<8x256xf32>
    tpu.vector_store %arg17[%c0_49, %c5120], %470 {strides = array<i32>} : memref<8x12800xf32, #tpu.memory_space<vmem>>, vector<8x256xf32>,
    %c21_i32 = arith.constant 21 : i32
    %472 = arith.addi %9, %c21_i32 : i32
    %473 = arith.index_cast %472 : i32 to index
    %474 = memref.load %arg4[%473] : memref<200xf32, #tpu.memory_space<smem>>
    %475 = vector.broadcast %474 : f32 to vector<8x256xf32>
    %476 = arith.mulf %4, %475 : vector<8x256xf32>
    %477 = arith.index_cast %472 : i32 to index
    %478 = memref.load %arg5[%477] : memref<200xf32, #tpu.memory_space<smem>>
    %479 = vector.broadcast %478 : f32 to vector<8x256xf32>
    %480 = arith.mulf %6, %479 : vector<8x256xf32>
    %481 = arith.addf %476, %480 : vector<8x256xf32>
    %482 = arith.index_cast %472 : i32 to index
    %483 = memref.load %arg6[%482] : memref<200xf32, #tpu.memory_space<smem>>
    %484 = vector.broadcast %483 : f32 to vector<8x256xf32>
    %485 = arith.mulf %8, %484 : vector<8x256xf32>
    %486 = arith.addf %481, %485 : vector<8x256xf32>
    %487 = arith.index_cast %472 : i32 to index
    %488 = memref.load %arg7[%487] : memref<200xf32, #tpu.memory_space<smem>>
    %489 = vector.broadcast %488 : f32 to vector<8x256xf32>
    %490 = arith.addf %486, %489 : vector<8x256xf32>
    %cst_50 = arith.constant 0.000000e+00 : f32
    %491 = vector.broadcast %cst_50 : f32 to vector<8x256xf32>
    %492 = arith.maximumf %490, %491 : vector<8x256xf32>
    %c0_51 = arith.constant 0 : index
    %c5376 = arith.constant 5376 : index
    %493 = vector.load %arg17[%c0_51, %c5376] : memref<8x12800xf32, #tpu.memory_space<vmem>>, vector<8x256xf32>
    tpu.vector_store %arg17[%c0_51, %c5376], %492 {strides = array<i32>} : memref<8x12800xf32, #tpu.memory_space<vmem>>, vector<8x256xf32>,
    %c22_i32 = arith.constant 22 : i32
    %494 = arith.addi %9, %c22_i32 : i32
    %495 = arith.index_cast %494 : i32 to index
    %496 = memref.load %arg4[%495] : memref<200xf32, #tpu.memory_space<smem>>
    %497 = vector.broadcast %496 : f32 to vector<8x256xf32>
    %498 = arith.mulf %4, %497 : vector<8x256xf32>
    %499 = arith.index_cast %494 : i32 to index
    %500 = memref.load %arg5[%499] : memref<200xf32, #tpu.memory_space<smem>>
    %501 = vector.broadcast %500 : f32 to vector<8x256xf32>
    %502 = arith.mulf %6, %501 : vector<8x256xf32>
    %503 = arith.addf %498, %502 : vector<8x256xf32>
    %504 = arith.index_cast %494 : i32 to index
    %505 = memref.load %arg6[%504] : memref<200xf32, #tpu.memory_space<smem>>
    %506 = vector.broadcast %505 : f32 to vector<8x256xf32>
    %507 = arith.mulf %8, %506 : vector<8x256xf32>
    %508 = arith.addf %503, %507 : vector<8x256xf32>
    %509 = arith.index_cast %494 : i32 to index
    %510 = memref.load %arg7[%509] : memref<200xf32, #tpu.memory_space<smem>>
    %511 = vector.broadcast %510 : f32 to vector<8x256xf32>
    %512 = arith.addf %508, %511 : vector<8x256xf32>
    %cst_52 = arith.constant 0.000000e+00 : f32
    %513 = vector.broadcast %cst_52 : f32 to vector<8x256xf32>
    %514 = arith.maximumf %512, %513 : vector<8x256xf32>
    %c0_53 = arith.constant 0 : index
    %c5632 = arith.constant 5632 : index
    %515 = vector.load %arg17[%c0_53, %c5632] : memref<8x12800xf32, #tpu.memory_space<vmem>>, vector<8x256xf32>
    tpu.vector_store %arg17[%c0_53, %c5632], %514 {strides = array<i32>} : memref<8x12800xf32, #tpu.memory_space<vmem>>, vector<8x256xf32>,
    %c23_i32 = arith.constant 23 : i32
    %516 = arith.addi %9, %c23_i32 : i32
    %517 = arith.index_cast %516 : i32 to index
    %518 = memref.load %arg4[%517] : memref<200xf32, #tpu.memory_space<smem>>
    %519 = vector.broadcast %518 : f32 to vector<8x256xf32>
    %520 = arith.mulf %4, %519 : vector<8x256xf32>
    %521 = arith.index_cast %516 : i32 to index
    %522 = memref.load %arg5[%521] : memref<200xf32, #tpu.memory_space<smem>>
    %523 = vector.broadcast %522 : f32 to vector<8x256xf32>
    %524 = arith.mulf %6, %523 : vector<8x256xf32>
    %525 = arith.addf %520, %524 : vector<8x256xf32>
    %526 = arith.index_cast %516 : i32 to index
    %527 = memref.load %arg6[%526] : memref<200xf32, #tpu.memory_space<smem>>
    %528 = vector.broadcast %527 : f32 to vector<8x256xf32>
    %529 = arith.mulf %8, %528 : vector<8x256xf32>
    %530 = arith.addf %525, %529 : vector<8x256xf32>
    %531 = arith.index_cast %516 : i32 to index
    %532 = memref.load %arg7[%531] : memref<200xf32, #tpu.memory_space<smem>>
    %533 = vector.broadcast %532 : f32 to vector<8x256xf32>
    %534 = arith.addf %530, %533 : vector<8x256xf32>
    %cst_54 = arith.constant 0.000000e+00 : f32
    %535 = vector.broadcast %cst_54 : f32 to vector<8x256xf32>
    %536 = arith.maximumf %534, %535 : vector<8x256xf32>
    %c0_55 = arith.constant 0 : index
    %c5888 = arith.constant 5888 : index
    %537 = vector.load %arg17[%c0_55, %c5888] : memref<8x12800xf32, #tpu.memory_space<vmem>>, vector<8x256xf32>
    tpu.vector_store %arg17[%c0_55, %c5888], %536 {strides = array<i32>} : memref<8x12800xf32, #tpu.memory_space<vmem>>, vector<8x256xf32>,
    %c24_i32 = arith.constant 24 : i32
    %538 = arith.addi %9, %c24_i32 : i32
    %539 = arith.index_cast %538 : i32 to index
    %540 = memref.load %arg4[%539] : memref<200xf32, #tpu.memory_space<smem>>
    %541 = vector.broadcast %540 : f32 to vector<8x256xf32>
    %542 = arith.mulf %4, %541 : vector<8x256xf32>
    %543 = arith.index_cast %538 : i32 to index
    %544 = memref.load %arg5[%543] : memref<200xf32, #tpu.memory_space<smem>>
    %545 = vector.broadcast %544 : f32 to vector<8x256xf32>
    %546 = arith.mulf %6, %545 : vector<8x256xf32>
    %547 = arith.addf %542, %546 : vector<8x256xf32>
    %548 = arith.index_cast %538 : i32 to index
    %549 = memref.load %arg6[%548] : memref<200xf32, #tpu.memory_space<smem>>
    %550 = vector.broadcast %549 : f32 to vector<8x256xf32>
    %551 = arith.mulf %8, %550 : vector<8x256xf32>
    %552 = arith.addf %547, %551 : vector<8x256xf32>
    %553 = arith.index_cast %538 : i32 to index
    %554 = memref.load %arg7[%553] : memref<200xf32, #tpu.memory_space<smem>>
    %555 = vector.broadcast %554 : f32 to vector<8x256xf32>
    %556 = arith.addf %552, %555 : vector<8x256xf32>
    %cst_56 = arith.constant 0.000000e+00 : f32
    %557 = vector.broadcast %cst_56 : f32 to vector<8x256xf32>
    %558 = arith.maximumf %556, %557 : vector<8x256xf32>
    %c0_57 = arith.constant 0 : index
    %c6144 = arith.constant 6144 : index
    %559 = vector.load %arg17[%c0_57, %c6144] : memref<8x12800xf32, #tpu.memory_space<vmem>>, vector<8x256xf32>
    tpu.vector_store %arg17[%c0_57, %c6144], %558 {strides = array<i32>} : memref<8x12800xf32, #tpu.memory_space<vmem>>, vector<8x256xf32>,
    %c25_i32 = arith.constant 25 : i32
    %560 = arith.addi %9, %c25_i32 : i32
    %561 = arith.index_cast %560 : i32 to index
    %562 = memref.load %arg4[%561] : memref<200xf32, #tpu.memory_space<smem>>
    %563 = vector.broadcast %562 : f32 to vector<8x256xf32>
    %564 = arith.mulf %4, %563 : vector<8x256xf32>
    %565 = arith.index_cast %560 : i32 to index
    %566 = memref.load %arg5[%565] : memref<200xf32, #tpu.memory_space<smem>>
    %567 = vector.broadcast %566 : f32 to vector<8x256xf32>
    %568 = arith.mulf %6, %567 : vector<8x256xf32>
    %569 = arith.addf %564, %568 : vector<8x256xf32>
    %570 = arith.index_cast %560 : i32 to index
    %571 = memref.load %arg6[%570] : memref<200xf32, #tpu.memory_space<smem>>
    %572 = vector.broadcast %571 : f32 to vector<8x256xf32>
    %573 = arith.mulf %8, %572 : vector<8x256xf32>
    %574 = arith.addf %569, %573 : vector<8x256xf32>
    %575 = arith.index_cast %560 : i32 to index
    %576 = memref.load %arg7[%575] : memref<200xf32, #tpu.memory_space<smem>>
    %577 = vector.broadcast %576 : f32 to vector<8x256xf32>
    %578 = arith.addf %574, %577 : vector<8x256xf32>
    %cst_58 = arith.constant 0.000000e+00 : f32
    %579 = vector.broadcast %cst_58 : f32 to vector<8x256xf32>
    %580 = arith.maximumf %578, %579 : vector<8x256xf32>
    %c0_59 = arith.constant 0 : index
    %c6400 = arith.constant 6400 : index
    %581 = vector.load %arg17[%c0_59, %c6400] : memref<8x12800xf32, #tpu.memory_space<vmem>>, vector<8x256xf32>
    tpu.vector_store %arg17[%c0_59, %c6400], %580 {strides = array<i32>} : memref<8x12800xf32, #tpu.memory_space<vmem>>, vector<8x256xf32>,
    %c26_i32 = arith.constant 26 : i32
    %582 = arith.addi %9, %c26_i32 : i32
    %583 = arith.index_cast %582 : i32 to index
    %584 = memref.load %arg4[%583] : memref<200xf32, #tpu.memory_space<smem>>
    %585 = vector.broadcast %584 : f32 to vector<8x256xf32>
    %586 = arith.mulf %4, %585 : vector<8x256xf32>
    %587 = arith.index_cast %582 : i32 to index
    %588 = memref.load %arg5[%587] : memref<200xf32, #tpu.memory_space<smem>>
    %589 = vector.broadcast %588 : f32 to vector<8x256xf32>
    %590 = arith.mulf %6, %589 : vector<8x256xf32>
    %591 = arith.addf %586, %590 : vector<8x256xf32>
    %592 = arith.index_cast %582 : i32 to index
    %593 = memref.load %arg6[%592] : memref<200xf32, #tpu.memory_space<smem>>
    %594 = vector.broadcast %593 : f32 to vector<8x256xf32>
    %595 = arith.mulf %8, %594 : vector<8x256xf32>
    %596 = arith.addf %591, %595 : vector<8x256xf32>
    %597 = arith.index_cast %582 : i32 to index
    %598 = memref.load %arg7[%597] : memref<200xf32, #tpu.memory_space<smem>>
    %599 = vector.broadcast %598 : f32 to vector<8x256xf32>
    %600 = arith.addf %596, %599 : vector<8x256xf32>
    %cst_60 = arith.constant 0.000000e+00 : f32
    %601 = vector.broadcast %cst_60 : f32 to vector<8x256xf32>
    %602 = arith.maximumf %600, %601 : vector<8x256xf32>
    %c0_61 = arith.constant 0 : index
    %c6656 = arith.constant 6656 : index
    %603 = vector.load %arg17[%c0_61, %c6656] : memref<8x12800xf32, #tpu.memory_space<vmem>>, vector<8x256xf32>
    tpu.vector_store %arg17[%c0_61, %c6656], %602 {strides = array<i32>} : memref<8x12800xf32, #tpu.memory_space<vmem>>, vector<8x256xf32>,
    %c27_i32 = arith.constant 27 : i32
    %604 = arith.addi %9, %c27_i32 : i32
    %605 = arith.index_cast %604 : i32 to index
    %606 = memref.load %arg4[%605] : memref<200xf32, #tpu.memory_space<smem>>
    %607 = vector.broadcast %606 : f32 to vector<8x256xf32>
    %608 = arith.mulf %4, %607 : vector<8x256xf32>
    %609 = arith.index_cast %604 : i32 to index
    %610 = memref.load %arg5[%609] : memref<200xf32, #tpu.memory_space<smem>>
    %611 = vector.broadcast %610 : f32 to vector<8x256xf32>
    %612 = arith.mulf %6, %611 : vector<8x256xf32>
    %613 = arith.addf %608, %612 : vector<8x256xf32>
    %614 = arith.index_cast %604 : i32 to index
    %615 = memref.load %arg6[%614] : memref<200xf32, #tpu.memory_space<smem>>
    %616 = vector.broadcast %615 : f32 to vector<8x256xf32>
    %617 = arith.mulf %8, %616 : vector<8x256xf32>
    %618 = arith.addf %613, %617 : vector<8x256xf32>
    %619 = arith.index_cast %604 : i32 to index
    %620 = memref.load %arg7[%619] : memref<200xf32, #tpu.memory_space<smem>>
    %621 = vector.broadcast %620 : f32 to vector<8x256xf32>
    %622 = arith.addf %618, %621 : vector<8x256xf32>
    %cst_62 = arith.constant 0.000000e+00 : f32
    %623 = vector.broadcast %cst_62 : f32 to vector<8x256xf32>
    %624 = arith.maximumf %622, %623 : vector<8x256xf32>
    %c0_63 = arith.constant 0 : index
    %c6912 = arith.constant 6912 : index
    %625 = vector.load %arg17[%c0_63, %c6912] : memref<8x12800xf32, #tpu.memory_space<vmem>>, vector<8x256xf32>
    tpu.vector_store %arg17[%c0_63, %c6912], %624 {strides = array<i32>} : memref<8x12800xf32, #tpu.memory_space<vmem>>, vector<8x256xf32>,
    %c28_i32 = arith.constant 28 : i32
    %626 = arith.addi %9, %c28_i32 : i32
    %627 = arith.index_cast %626 : i32 to index
    %628 = memref.load %arg4[%627] : memref<200xf32, #tpu.memory_space<smem>>
    %629 = vector.broadcast %628 : f32 to vector<8x256xf32>
    %630 = arith.mulf %4, %629 : vector<8x256xf32>
    %631 = arith.index_cast %626 : i32 to index
    %632 = memref.load %arg5[%631] : memref<200xf32, #tpu.memory_space<smem>>
    %633 = vector.broadcast %632 : f32 to vector<8x256xf32>
    %634 = arith.mulf %6, %633 : vector<8x256xf32>
    %635 = arith.addf %630, %634 : vector<8x256xf32>
    %636 = arith.index_cast %626 : i32 to index
    %637 = memref.load %arg6[%636] : memref<200xf32, #tpu.memory_space<smem>>
    %638 = vector.broadcast %637 : f32 to vector<8x256xf32>
    %639 = arith.mulf %8, %638 : vector<8x256xf32>
    %640 = arith.addf %635, %639 : vector<8x256xf32>
    %641 = arith.index_cast %626 : i32 to index
    %642 = memref.load %arg7[%641] : memref<200xf32, #tpu.memory_space<smem>>
    %643 = vector.broadcast %642 : f32 to vector<8x256xf32>
    %644 = arith.addf %640, %643 : vector<8x256xf32>
    %cst_64 = arith.constant 0.000000e+00 : f32
    %645 = vector.broadcast %cst_64 : f32 to vector<8x256xf32>
    %646 = arith.maximumf %644, %645 : vector<8x256xf32>
    %c0_65 = arith.constant 0 : index
    %c7168 = arith.constant 7168 : index
    %647 = vector.load %arg17[%c0_65, %c7168] : memref<8x12800xf32, #tpu.memory_space<vmem>>, vector<8x256xf32>
    tpu.vector_store %arg17[%c0_65, %c7168], %646 {strides = array<i32>} : memref<8x12800xf32, #tpu.memory_space<vmem>>, vector<8x256xf32>,
    %c29_i32 = arith.constant 29 : i32
    %648 = arith.addi %9, %c29_i32 : i32
    %649 = arith.index_cast %648 : i32 to index
    %650 = memref.load %arg4[%649] : memref<200xf32, #tpu.memory_space<smem>>
    %651 = vector.broadcast %650 : f32 to vector<8x256xf32>
    %652 = arith.mulf %4, %651 : vector<8x256xf32>
    %653 = arith.index_cast %648 : i32 to index
    %654 = memref.load %arg5[%653] : memref<200xf32, #tpu.memory_space<smem>>
    %655 = vector.broadcast %654 : f32 to vector<8x256xf32>
    %656 = arith.mulf %6, %655 : vector<8x256xf32>
    %657 = arith.addf %652, %656 : vector<8x256xf32>
    %658 = arith.index_cast %648 : i32 to index
    %659 = memref.load %arg6[%658] : memref<200xf32, #tpu.memory_space<smem>>
    %660 = vector.broadcast %659 : f32 to vector<8x256xf32>
    %661 = arith.mulf %8, %660 : vector<8x256xf32>
    %662 = arith.addf %657, %661 : vector<8x256xf32>
    %663 = arith.index_cast %648 : i32 to index
    %664 = memref.load %arg7[%663] : memref<200xf32, #tpu.memory_space<smem>>
    %665 = vector.broadcast %664 : f32 to vector<8x256xf32>
    %666 = arith.addf %662, %665 : vector<8x256xf32>
    %cst_66 = arith.constant 0.000000e+00 : f32
    %667 = vector.broadcast %cst_66 : f32 to vector<8x256xf32>
    %668 = arith.maximumf %666, %667 : vector<8x256xf32>
    %c0_67 = arith.constant 0 : index
    %c7424 = arith.constant 7424 : index
    %669 = vector.load %arg17[%c0_67, %c7424] : memref<8x12800xf32, #tpu.memory_space<vmem>>, vector<8x256xf32>
    tpu.vector_store %arg17[%c0_67, %c7424], %668 {strides = array<i32>} : memref<8x12800xf32, #tpu.memory_space<vmem>>, vector<8x256xf32>,
    %c30_i32 = arith.constant 30 : i32
    %670 = arith.addi %9, %c30_i32 : i32
    %671 = arith.index_cast %670 : i32 to index
    %672 = memref.load %arg4[%671] : memref<200xf32, #tpu.memory_space<smem>>
    %673 = vector.broadcast %672 : f32 to vector<8x256xf32>
    %674 = arith.mulf %4, %673 : vector<8x256xf32>
    %675 = arith.index_cast %670 : i32 to index
    %676 = memref.load %arg5[%675] : memref<200xf32, #tpu.memory_space<smem>>
    %677 = vector.broadcast %676 : f32 to vector<8x256xf32>
    %678 = arith.mulf %6, %677 : vector<8x256xf32>
    %679 = arith.addf %674, %678 : vector<8x256xf32>
    %680 = arith.index_cast %670 : i32 to index
    %681 = memref.load %arg6[%680] : memref<200xf32, #tpu.memory_space<smem>>
    %682 = vector.broadcast %681 : f32 to vector<8x256xf32>
    %683 = arith.mulf %8, %682 : vector<8x256xf32>
    %684 = arith.addf %679, %683 : vector<8x256xf32>
    %685 = arith.index_cast %670 : i32 to index
    %686 = memref.load %arg7[%685] : memref<200xf32, #tpu.memory_space<smem>>
    %687 = vector.broadcast %686 : f32 to vector<8x256xf32>
    %688 = arith.addf %684, %687 : vector<8x256xf32>
    %cst_68 = arith.constant 0.000000e+00 : f32
    %689 = vector.broadcast %cst_68 : f32 to vector<8x256xf32>
    %690 = arith.maximumf %688, %689 : vector<8x256xf32>
    %c0_69 = arith.constant 0 : index
    %c7680 = arith.constant 7680 : index
    %691 = vector.load %arg17[%c0_69, %c7680] : memref<8x12800xf32, #tpu.memory_space<vmem>>, vector<8x256xf32>
    tpu.vector_store %arg17[%c0_69, %c7680], %690 {strides = array<i32>} : memref<8x12800xf32, #tpu.memory_space<vmem>>, vector<8x256xf32>,
    %c31_i32 = arith.constant 31 : i32
    %692 = arith.addi %9, %c31_i32 : i32
    %693 = arith.index_cast %692 : i32 to index
    %694 = memref.load %arg4[%693] : memref<200xf32, #tpu.memory_space<smem>>
    %695 = vector.broadcast %694 : f32 to vector<8x256xf32>
    %696 = arith.mulf %4, %695 : vector<8x256xf32>
    %697 = arith.index_cast %692 : i32 to index
    %698 = memref.load %arg5[%697] : memref<200xf32, #tpu.memory_space<smem>>
    %699 = vector.broadcast %698 : f32 to vector<8x256xf32>
    %700 = arith.mulf %6, %699 : vector<8x256xf32>
    %701 = arith.addf %696, %700 : vector<8x256xf32>
    %702 = arith.index_cast %692 : i32 to index
    %703 = memref.load %arg6[%702] : memref<200xf32, #tpu.memory_space<smem>>
    %704 = vector.broadcast %703 : f32 to vector<8x256xf32>
    %705 = arith.mulf %8, %704 : vector<8x256xf32>
    %706 = arith.addf %701, %705 : vector<8x256xf32>
    %707 = arith.index_cast %692 : i32 to index
    %708 = memref.load %arg7[%707] : memref<200xf32, #tpu.memory_space<smem>>
    %709 = vector.broadcast %708 : f32 to vector<8x256xf32>
    %710 = arith.addf %706, %709 : vector<8x256xf32>
    %cst_70 = arith.constant 0.000000e+00 : f32
    %711 = vector.broadcast %cst_70 : f32 to vector<8x256xf32>
    %712 = arith.maximumf %710, %711 : vector<8x256xf32>
    %c0_71 = arith.constant 0 : index
    %c7936 = arith.constant 7936 : index
    %713 = vector.load %arg17[%c0_71, %c7936] : memref<8x12800xf32, #tpu.memory_space<vmem>>, vector<8x256xf32>
    tpu.vector_store %arg17[%c0_71, %c7936], %712 {strides = array<i32>} : memref<8x12800xf32, #tpu.memory_space<vmem>>, vector<8x256xf32>,
    %c32_i32 = arith.constant 32 : i32
    %714 = arith.addi %9, %c32_i32 : i32
    %715 = arith.index_cast %714 : i32 to index
    %716 = memref.load %arg4[%715] : memref<200xf32, #tpu.memory_space<smem>>
    %717 = vector.broadcast %716 : f32 to vector<8x256xf32>
    %718 = arith.mulf %4, %717 : vector<8x256xf32>
    %719 = arith.index_cast %714 : i32 to index
    %720 = memref.load %arg5[%719] : memref<200xf32, #tpu.memory_space<smem>>
    %721 = vector.broadcast %720 : f32 to vector<8x256xf32>
    %722 = arith.mulf %6, %721 : vector<8x256xf32>
    %723 = arith.addf %718, %722 : vector<8x256xf32>
    %724 = arith.index_cast %714 : i32 to index
    %725 = memref.load %arg6[%724] : memref<200xf32, #tpu.memory_space<smem>>
    %726 = vector.broadcast %725 : f32 to vector<8x256xf32>
    %727 = arith.mulf %8, %726 : vector<8x256xf32>
    %728 = arith.addf %723, %727 : vector<8x256xf32>
    %729 = arith.index_cast %714 : i32 to index
    %730 = memref.load %arg7[%729] : memref<200xf32, #tpu.memory_space<smem>>
    %731 = vector.broadcast %730 : f32 to vector<8x256xf32>
    %732 = arith.addf %728, %731 : vector<8x256xf32>
    %cst_72 = arith.constant 0.000000e+00 : f32
    %733 = vector.broadcast %cst_72 : f32 to vector<8x256xf32>
    %734 = arith.maximumf %732, %733 : vector<8x256xf32>
    %c0_73 = arith.constant 0 : index
    %c8192 = arith.constant 8192 : index
    %735 = vector.load %arg17[%c0_73, %c8192] : memref<8x12800xf32, #tpu.memory_space<vmem>>, vector<8x256xf32>
    tpu.vector_store %arg17[%c0_73, %c8192], %734 {strides = array<i32>} : memref<8x12800xf32, #tpu.memory_space<vmem>>, vector<8x256xf32>,
    %c33_i32 = arith.constant 33 : i32
    %736 = arith.addi %9, %c33_i32 : i32
    %737 = arith.index_cast %736 : i32 to index
    %738 = memref.load %arg4[%737] : memref<200xf32, #tpu.memory_space<smem>>
    %739 = vector.broadcast %738 : f32 to vector<8x256xf32>
    %740 = arith.mulf %4, %739 : vector<8x256xf32>
    %741 = arith.index_cast %736 : i32 to index
    %742 = memref.load %arg5[%741] : memref<200xf32, #tpu.memory_space<smem>>
    %743 = vector.broadcast %742 : f32 to vector<8x256xf32>
    %744 = arith.mulf %6, %743 : vector<8x256xf32>
    %745 = arith.addf %740, %744 : vector<8x256xf32>
    %746 = arith.index_cast %736 : i32 to index
    %747 = memref.load %arg6[%746] : memref<200xf32, #tpu.memory_space<smem>>
    %748 = vector.broadcast %747 : f32 to vector<8x256xf32>
    %749 = arith.mulf %8, %748 : vector<8x256xf32>
    %750 = arith.addf %745, %749 : vector<8x256xf32>
    %751 = arith.index_cast %736 : i32 to index
    %752 = memref.load %arg7[%751] : memref<200xf32, #tpu.memory_space<smem>>
    %753 = vector.broadcast %752 : f32 to vector<8x256xf32>
    %754 = arith.addf %750, %753 : vector<8x256xf32>
    %cst_74 = arith.constant 0.000000e+00 : f32
    %755 = vector.broadcast %cst_74 : f32 to vector<8x256xf32>
    %756 = arith.maximumf %754, %755 : vector<8x256xf32>
    %c0_75 = arith.constant 0 : index
    %c8448 = arith.constant 8448 : index
    %757 = vector.load %arg17[%c0_75, %c8448] : memref<8x12800xf32, #tpu.memory_space<vmem>>, vector<8x256xf32>
    tpu.vector_store %arg17[%c0_75, %c8448], %756 {strides = array<i32>} : memref<8x12800xf32, #tpu.memory_space<vmem>>, vector<8x256xf32>,
    %c34_i32 = arith.constant 34 : i32
    %758 = arith.addi %9, %c34_i32 : i32
    %759 = arith.index_cast %758 : i32 to index
    %760 = memref.load %arg4[%759] : memref<200xf32, #tpu.memory_space<smem>>
    %761 = vector.broadcast %760 : f32 to vector<8x256xf32>
    %762 = arith.mulf %4, %761 : vector<8x256xf32>
    %763 = arith.index_cast %758 : i32 to index
    %764 = memref.load %arg5[%763] : memref<200xf32, #tpu.memory_space<smem>>
    %765 = vector.broadcast %764 : f32 to vector<8x256xf32>
    %766 = arith.mulf %6, %765 : vector<8x256xf32>
    %767 = arith.addf %762, %766 : vector<8x256xf32>
    %768 = arith.index_cast %758 : i32 to index
    %769 = memref.load %arg6[%768] : memref<200xf32, #tpu.memory_space<smem>>
    %770 = vector.broadcast %769 : f32 to vector<8x256xf32>
    %771 = arith.mulf %8, %770 : vector<8x256xf32>
    %772 = arith.addf %767, %771 : vector<8x256xf32>
    %773 = arith.index_cast %758 : i32 to index
    %774 = memref.load %arg7[%773] : memref<200xf32, #tpu.memory_space<smem>>
    %775 = vector.broadcast %774 : f32 to vector<8x256xf32>
    %776 = arith.addf %772, %775 : vector<8x256xf32>
    %cst_76 = arith.constant 0.000000e+00 : f32
    %777 = vector.broadcast %cst_76 : f32 to vector<8x256xf32>
    %778 = arith.maximumf %776, %777 : vector<8x256xf32>
    %c0_77 = arith.constant 0 : index
    %c8704 = arith.constant 8704 : index
    %779 = vector.load %arg17[%c0_77, %c8704] : memref<8x12800xf32, #tpu.memory_space<vmem>>, vector<8x256xf32>
    tpu.vector_store %arg17[%c0_77, %c8704], %778 {strides = array<i32>} : memref<8x12800xf32, #tpu.memory_space<vmem>>, vector<8x256xf32>,
    %c35_i32 = arith.constant 35 : i32
    %780 = arith.addi %9, %c35_i32 : i32
    %781 = arith.index_cast %780 : i32 to index
    %782 = memref.load %arg4[%781] : memref<200xf32, #tpu.memory_space<smem>>
    %783 = vector.broadcast %782 : f32 to vector<8x256xf32>
    %784 = arith.mulf %4, %783 : vector<8x256xf32>
    %785 = arith.index_cast %780 : i32 to index
    %786 = memref.load %arg5[%785] : memref<200xf32, #tpu.memory_space<smem>>
    %787 = vector.broadcast %786 : f32 to vector<8x256xf32>
    %788 = arith.mulf %6, %787 : vector<8x256xf32>
    %789 = arith.addf %784, %788 : vector<8x256xf32>
    %790 = arith.index_cast %780 : i32 to index
    %791 = memref.load %arg6[%790] : memref<200xf32, #tpu.memory_space<smem>>
    %792 = vector.broadcast %791 : f32 to vector<8x256xf32>
    %793 = arith.mulf %8, %792 : vector<8x256xf32>
    %794 = arith.addf %789, %793 : vector<8x256xf32>
    %795 = arith.index_cast %780 : i32 to index
    %796 = memref.load %arg7[%795] : memref<200xf32, #tpu.memory_space<smem>>
    %797 = vector.broadcast %796 : f32 to vector<8x256xf32>
    %798 = arith.addf %794, %797 : vector<8x256xf32>
    %cst_78 = arith.constant 0.000000e+00 : f32
    %799 = vector.broadcast %cst_78 : f32 to vector<8x256xf32>
    %800 = arith.maximumf %798, %799 : vector<8x256xf32>
    %c0_79 = arith.constant 0 : index
    %c8960 = arith.constant 8960 : index
    %801 = vector.load %arg17[%c0_79, %c8960] : memref<8x12800xf32, #tpu.memory_space<vmem>>, vector<8x256xf32>
    tpu.vector_store %arg17[%c0_79, %c8960], %800 {strides = array<i32>} : memref<8x12800xf32, #tpu.memory_space<vmem>>, vector<8x256xf32>,
    %c36_i32 = arith.constant 36 : i32
    %802 = arith.addi %9, %c36_i32 : i32
    %803 = arith.index_cast %802 : i32 to index
    %804 = memref.load %arg4[%803] : memref<200xf32, #tpu.memory_space<smem>>
    %805 = vector.broadcast %804 : f32 to vector<8x256xf32>
    %806 = arith.mulf %4, %805 : vector<8x256xf32>
    %807 = arith.index_cast %802 : i32 to index
    %808 = memref.load %arg5[%807] : memref<200xf32, #tpu.memory_space<smem>>
    %809 = vector.broadcast %808 : f32 to vector<8x256xf32>
    %810 = arith.mulf %6, %809 : vector<8x256xf32>
    %811 = arith.addf %806, %810 : vector<8x256xf32>
    %812 = arith.index_cast %802 : i32 to index
    %813 = memref.load %arg6[%812] : memref<200xf32, #tpu.memory_space<smem>>
    %814 = vector.broadcast %813 : f32 to vector<8x256xf32>
    %815 = arith.mulf %8, %814 : vector<8x256xf32>
    %816 = arith.addf %811, %815 : vector<8x256xf32>
    %817 = arith.index_cast %802 : i32 to index
    %818 = memref.load %arg7[%817] : memref<200xf32, #tpu.memory_space<smem>>
    %819 = vector.broadcast %818 : f32 to vector<8x256xf32>
    %820 = arith.addf %816, %819 : vector<8x256xf32>
    %cst_80 = arith.constant 0.000000e+00 : f32
    %821 = vector.broadcast %cst_80 : f32 to vector<8x256xf32>
    %822 = arith.maximumf %820, %821 : vector<8x256xf32>
    %c0_81 = arith.constant 0 : index
    %c9216 = arith.constant 9216 : index
    %823 = vector.load %arg17[%c0_81, %c9216] : memref<8x12800xf32, #tpu.memory_space<vmem>>, vector<8x256xf32>
    tpu.vector_store %arg17[%c0_81, %c9216], %822 {strides = array<i32>} : memref<8x12800xf32, #tpu.memory_space<vmem>>, vector<8x256xf32>,
    %c37_i32 = arith.constant 37 : i32
    %824 = arith.addi %9, %c37_i32 : i32
    %825 = arith.index_cast %824 : i32 to index
    %826 = memref.load %arg4[%825] : memref<200xf32, #tpu.memory_space<smem>>
    %827 = vector.broadcast %826 : f32 to vector<8x256xf32>
    %828 = arith.mulf %4, %827 : vector<8x256xf32>
    %829 = arith.index_cast %824 : i32 to index
    %830 = memref.load %arg5[%829] : memref<200xf32, #tpu.memory_space<smem>>
    %831 = vector.broadcast %830 : f32 to vector<8x256xf32>
    %832 = arith.mulf %6, %831 : vector<8x256xf32>
    %833 = arith.addf %828, %832 : vector<8x256xf32>
    %834 = arith.index_cast %824 : i32 to index
    %835 = memref.load %arg6[%834] : memref<200xf32, #tpu.memory_space<smem>>
    %836 = vector.broadcast %835 : f32 to vector<8x256xf32>
    %837 = arith.mulf %8, %836 : vector<8x256xf32>
    %838 = arith.addf %833, %837 : vector<8x256xf32>
    %839 = arith.index_cast %824 : i32 to index
    %840 = memref.load %arg7[%839] : memref<200xf32, #tpu.memory_space<smem>>
    %841 = vector.broadcast %840 : f32 to vector<8x256xf32>
    %842 = arith.addf %838, %841 : vector<8x256xf32>
    %cst_82 = arith.constant 0.000000e+00 : f32
    %843 = vector.broadcast %cst_82 : f32 to vector<8x256xf32>
    %844 = arith.maximumf %842, %843 : vector<8x256xf32>
    %c0_83 = arith.constant 0 : index
    %c9472 = arith.constant 9472 : index
    %845 = vector.load %arg17[%c0_83, %c9472] : memref<8x12800xf32, #tpu.memory_space<vmem>>, vector<8x256xf32>
    tpu.vector_store %arg17[%c0_83, %c9472], %844 {strides = array<i32>} : memref<8x12800xf32, #tpu.memory_space<vmem>>, vector<8x256xf32>,
    %c38_i32 = arith.constant 38 : i32
    %846 = arith.addi %9, %c38_i32 : i32
    %847 = arith.index_cast %846 : i32 to index
    %848 = memref.load %arg4[%847] : memref<200xf32, #tpu.memory_space<smem>>
    %849 = vector.broadcast %848 : f32 to vector<8x256xf32>
    %850 = arith.mulf %4, %849 : vector<8x256xf32>
    %851 = arith.index_cast %846 : i32 to index
    %852 = memref.load %arg5[%851] : memref<200xf32, #tpu.memory_space<smem>>
    %853 = vector.broadcast %852 : f32 to vector<8x256xf32>
    %854 = arith.mulf %6, %853 : vector<8x256xf32>
    %855 = arith.addf %850, %854 : vector<8x256xf32>
    %856 = arith.index_cast %846 : i32 to index
    %857 = memref.load %arg6[%856] : memref<200xf32, #tpu.memory_space<smem>>
    %858 = vector.broadcast %857 : f32 to vector<8x256xf32>
    %859 = arith.mulf %8, %858 : vector<8x256xf32>
    %860 = arith.addf %855, %859 : vector<8x256xf32>
    %861 = arith.index_cast %846 : i32 to index
    %862 = memref.load %arg7[%861] : memref<200xf32, #tpu.memory_space<smem>>
    %863 = vector.broadcast %862 : f32 to vector<8x256xf32>
    %864 = arith.addf %860, %863 : vector<8x256xf32>
    %cst_84 = arith.constant 0.000000e+00 : f32
    %865 = vector.broadcast %cst_84 : f32 to vector<8x256xf32>
    %866 = arith.maximumf %864, %865 : vector<8x256xf32>
    %c0_85 = arith.constant 0 : index
    %c9728 = arith.constant 9728 : index
    %867 = vector.load %arg17[%c0_85, %c9728] : memref<8x12800xf32, #tpu.memory_space<vmem>>, vector<8x256xf32>
    tpu.vector_store %arg17[%c0_85, %c9728], %866 {strides = array<i32>} : memref<8x12800xf32, #tpu.memory_space<vmem>>, vector<8x256xf32>,
    %c39_i32 = arith.constant 39 : i32
    %868 = arith.addi %9, %c39_i32 : i32
    %869 = arith.index_cast %868 : i32 to index
    %870 = memref.load %arg4[%869] : memref<200xf32, #tpu.memory_space<smem>>
    %871 = vector.broadcast %870 : f32 to vector<8x256xf32>
    %872 = arith.mulf %4, %871 : vector<8x256xf32>
    %873 = arith.index_cast %868 : i32 to index
    %874 = memref.load %arg5[%873] : memref<200xf32, #tpu.memory_space<smem>>
    %875 = vector.broadcast %874 : f32 to vector<8x256xf32>
    %876 = arith.mulf %6, %875 : vector<8x256xf32>
    %877 = arith.addf %872, %876 : vector<8x256xf32>
    %878 = arith.index_cast %868 : i32 to index
    %879 = memref.load %arg6[%878] : memref<200xf32, #tpu.memory_space<smem>>
    %880 = vector.broadcast %879 : f32 to vector<8x256xf32>
    %881 = arith.mulf %8, %880 : vector<8x256xf32>
    %882 = arith.addf %877, %881 : vector<8x256xf32>
    %883 = arith.index_cast %868 : i32 to index
    %884 = memref.load %arg7[%883] : memref<200xf32, #tpu.memory_space<smem>>
    %885 = vector.broadcast %884 : f32 to vector<8x256xf32>
    %886 = arith.addf %882, %885 : vector<8x256xf32>
    %cst_86 = arith.constant 0.000000e+00 : f32
    %887 = vector.broadcast %cst_86 : f32 to vector<8x256xf32>
    %888 = arith.maximumf %886, %887 : vector<8x256xf32>
    %c0_87 = arith.constant 0 : index
    %c9984 = arith.constant 9984 : index
    %889 = vector.load %arg17[%c0_87, %c9984] : memref<8x12800xf32, #tpu.memory_space<vmem>>, vector<8x256xf32>
    tpu.vector_store %arg17[%c0_87, %c9984], %888 {strides = array<i32>} : memref<8x12800xf32, #tpu.memory_space<vmem>>, vector<8x256xf32>,
    %c40_i32 = arith.constant 40 : i32
    %890 = arith.addi %9, %c40_i32 : i32
    %891 = arith.index_cast %890 : i32 to index
    %892 = memref.load %arg4[%891] : memref<200xf32, #tpu.memory_space<smem>>
    %893 = vector.broadcast %892 : f32 to vector<8x256xf32>
    %894 = arith.mulf %4, %893 : vector<8x256xf32>
    %895 = arith.index_cast %890 : i32 to index
    %896 = memref.load %arg5[%895] : memref<200xf32, #tpu.memory_space<smem>>
    %897 = vector.broadcast %896 : f32 to vector<8x256xf32>
    %898 = arith.mulf %6, %897 : vector<8x256xf32>
    %899 = arith.addf %894, %898 : vector<8x256xf32>
    %900 = arith.index_cast %890 : i32 to index
    %901 = memref.load %arg6[%900] : memref<200xf32, #tpu.memory_space<smem>>
    %902 = vector.broadcast %901 : f32 to vector<8x256xf32>
    %903 = arith.mulf %8, %902 : vector<8x256xf32>
    %904 = arith.addf %899, %903 : vector<8x256xf32>
    %905 = arith.index_cast %890 : i32 to index
    %906 = memref.load %arg7[%905] : memref<200xf32, #tpu.memory_space<smem>>
    %907 = vector.broadcast %906 : f32 to vector<8x256xf32>
    %908 = arith.addf %904, %907 : vector<8x256xf32>
    %cst_88 = arith.constant 0.000000e+00 : f32
    %909 = vector.broadcast %cst_88 : f32 to vector<8x256xf32>
    %910 = arith.maximumf %908, %909 : vector<8x256xf32>
    %c0_89 = arith.constant 0 : index
    %c10240 = arith.constant 10240 : index
    %911 = vector.load %arg17[%c0_89, %c10240] : memref<8x12800xf32, #tpu.memory_space<vmem>>, vector<8x256xf32>
    tpu.vector_store %arg17[%c0_89, %c10240], %910 {strides = array<i32>} : memref<8x12800xf32, #tpu.memory_space<vmem>>, vector<8x256xf32>,
    %c41_i32 = arith.constant 41 : i32
    %912 = arith.addi %9, %c41_i32 : i32
    %913 = arith.index_cast %912 : i32 to index
    %914 = memref.load %arg4[%913] : memref<200xf32, #tpu.memory_space<smem>>
    %915 = vector.broadcast %914 : f32 to vector<8x256xf32>
    %916 = arith.mulf %4, %915 : vector<8x256xf32>
    %917 = arith.index_cast %912 : i32 to index
    %918 = memref.load %arg5[%917] : memref<200xf32, #tpu.memory_space<smem>>
    %919 = vector.broadcast %918 : f32 to vector<8x256xf32>
    %920 = arith.mulf %6, %919 : vector<8x256xf32>
    %921 = arith.addf %916, %920 : vector<8x256xf32>
    %922 = arith.index_cast %912 : i32 to index
    %923 = memref.load %arg6[%922] : memref<200xf32, #tpu.memory_space<smem>>
    %924 = vector.broadcast %923 : f32 to vector<8x256xf32>
    %925 = arith.mulf %8, %924 : vector<8x256xf32>
    %926 = arith.addf %921, %925 : vector<8x256xf32>
    %927 = arith.index_cast %912 : i32 to index
    %928 = memref.load %arg7[%927] : memref<200xf32, #tpu.memory_space<smem>>
    %929 = vector.broadcast %928 : f32 to vector<8x256xf32>
    %930 = arith.addf %926, %929 : vector<8x256xf32>
    %cst_90 = arith.constant 0.000000e+00 : f32
    %931 = vector.broadcast %cst_90 : f32 to vector<8x256xf32>
    %932 = arith.maximumf %930, %931 : vector<8x256xf32>
    %c0_91 = arith.constant 0 : index
    %c10496 = arith.constant 10496 : index
    %933 = vector.load %arg17[%c0_91, %c10496] : memref<8x12800xf32, #tpu.memory_space<vmem>>, vector<8x256xf32>
    tpu.vector_store %arg17[%c0_91, %c10496], %932 {strides = array<i32>} : memref<8x12800xf32, #tpu.memory_space<vmem>>, vector<8x256xf32>,
    %c42_i32 = arith.constant 42 : i32
    %934 = arith.addi %9, %c42_i32 : i32
    %935 = arith.index_cast %934 : i32 to index
    %936 = memref.load %arg4[%935] : memref<200xf32, #tpu.memory_space<smem>>
    %937 = vector.broadcast %936 : f32 to vector<8x256xf32>
    %938 = arith.mulf %4, %937 : vector<8x256xf32>
    %939 = arith.index_cast %934 : i32 to index
    %940 = memref.load %arg5[%939] : memref<200xf32, #tpu.memory_space<smem>>
    %941 = vector.broadcast %940 : f32 to vector<8x256xf32>
    %942 = arith.mulf %6, %941 : vector<8x256xf32>
    %943 = arith.addf %938, %942 : vector<8x256xf32>
    %944 = arith.index_cast %934 : i32 to index
    %945 = memref.load %arg6[%944] : memref<200xf32, #tpu.memory_space<smem>>
    %946 = vector.broadcast %945 : f32 to vector<8x256xf32>
    %947 = arith.mulf %8, %946 : vector<8x256xf32>
    %948 = arith.addf %943, %947 : vector<8x256xf32>
    %949 = arith.index_cast %934 : i32 to index
    %950 = memref.load %arg7[%949] : memref<200xf32, #tpu.memory_space<smem>>
    %951 = vector.broadcast %950 : f32 to vector<8x256xf32>
    %952 = arith.addf %948, %951 : vector<8x256xf32>
    %cst_92 = arith.constant 0.000000e+00 : f32
    %953 = vector.broadcast %cst_92 : f32 to vector<8x256xf32>
    %954 = arith.maximumf %952, %953 : vector<8x256xf32>
    %c0_93 = arith.constant 0 : index
    %c10752 = arith.constant 10752 : index
    %955 = vector.load %arg17[%c0_93, %c10752] : memref<8x12800xf32, #tpu.memory_space<vmem>>, vector<8x256xf32>
    tpu.vector_store %arg17[%c0_93, %c10752], %954 {strides = array<i32>} : memref<8x12800xf32, #tpu.memory_space<vmem>>, vector<8x256xf32>,
    %c43_i32 = arith.constant 43 : i32
    %956 = arith.addi %9, %c43_i32 : i32
    %957 = arith.index_cast %956 : i32 to index
    %958 = memref.load %arg4[%957] : memref<200xf32, #tpu.memory_space<smem>>
    %959 = vector.broadcast %958 : f32 to vector<8x256xf32>
    %960 = arith.mulf %4, %959 : vector<8x256xf32>
    %961 = arith.index_cast %956 : i32 to index
    %962 = memref.load %arg5[%961] : memref<200xf32, #tpu.memory_space<smem>>
    %963 = vector.broadcast %962 : f32 to vector<8x256xf32>
    %964 = arith.mulf %6, %963 : vector<8x256xf32>
    %965 = arith.addf %960, %964 : vector<8x256xf32>
    %966 = arith.index_cast %956 : i32 to index
    %967 = memref.load %arg6[%966] : memref<200xf32, #tpu.memory_space<smem>>
    %968 = vector.broadcast %967 : f32 to vector<8x256xf32>
    %969 = arith.mulf %8, %968 : vector<8x256xf32>
    %970 = arith.addf %965, %969 : vector<8x256xf32>
    %971 = arith.index_cast %956 : i32 to index
    %972 = memref.load %arg7[%971] : memref<200xf32, #tpu.memory_space<smem>>
    %973 = vector.broadcast %972 : f32 to vector<8x256xf32>
    %974 = arith.addf %970, %973 : vector<8x256xf32>
    %cst_94 = arith.constant 0.000000e+00 : f32
    %975 = vector.broadcast %cst_94 : f32 to vector<8x256xf32>
    %976 = arith.maximumf %974, %975 : vector<8x256xf32>
    %c0_95 = arith.constant 0 : index
    %c11008 = arith.constant 11008 : index
    %977 = vector.load %arg17[%c0_95, %c11008] : memref<8x12800xf32, #tpu.memory_space<vmem>>, vector<8x256xf32>
    tpu.vector_store %arg17[%c0_95, %c11008], %976 {strides = array<i32>} : memref<8x12800xf32, #tpu.memory_space<vmem>>, vector<8x256xf32>,
    %c44_i32 = arith.constant 44 : i32
    %978 = arith.addi %9, %c44_i32 : i32
    %979 = arith.index_cast %978 : i32 to index
    %980 = memref.load %arg4[%979] : memref<200xf32, #tpu.memory_space<smem>>
    %981 = vector.broadcast %980 : f32 to vector<8x256xf32>
    %982 = arith.mulf %4, %981 : vector<8x256xf32>
    %983 = arith.index_cast %978 : i32 to index
    %984 = memref.load %arg5[%983] : memref<200xf32, #tpu.memory_space<smem>>
    %985 = vector.broadcast %984 : f32 to vector<8x256xf32>
    %986 = arith.mulf %6, %985 : vector<8x256xf32>
    %987 = arith.addf %982, %986 : vector<8x256xf32>
    %988 = arith.index_cast %978 : i32 to index
    %989 = memref.load %arg6[%988] : memref<200xf32, #tpu.memory_space<smem>>
    %990 = vector.broadcast %989 : f32 to vector<8x256xf32>
    %991 = arith.mulf %8, %990 : vector<8x256xf32>
    %992 = arith.addf %987, %991 : vector<8x256xf32>
    %993 = arith.index_cast %978 : i32 to index
    %994 = memref.load %arg7[%993] : memref<200xf32, #tpu.memory_space<smem>>
    %995 = vector.broadcast %994 : f32 to vector<8x256xf32>
    %996 = arith.addf %992, %995 : vector<8x256xf32>
    %cst_96 = arith.constant 0.000000e+00 : f32
    %997 = vector.broadcast %cst_96 : f32 to vector<8x256xf32>
    %998 = arith.maximumf %996, %997 : vector<8x256xf32>
    %c0_97 = arith.constant 0 : index
    %c11264 = arith.constant 11264 : index
    %999 = vector.load %arg17[%c0_97, %c11264] : memref<8x12800xf32, #tpu.memory_space<vmem>>, vector<8x256xf32>
    tpu.vector_store %arg17[%c0_97, %c11264], %998 {strides = array<i32>} : memref<8x12800xf32, #tpu.memory_space<vmem>>, vector<8x256xf32>,
    %c45_i32 = arith.constant 45 : i32
    %1000 = arith.addi %9, %c45_i32 : i32
    %1001 = arith.index_cast %1000 : i32 to index
    %1002 = memref.load %arg4[%1001] : memref<200xf32, #tpu.memory_space<smem>>
    %1003 = vector.broadcast %1002 : f32 to vector<8x256xf32>
    %1004 = arith.mulf %4, %1003 : vector<8x256xf32>
    %1005 = arith.index_cast %1000 : i32 to index
    %1006 = memref.load %arg5[%1005] : memref<200xf32, #tpu.memory_space<smem>>
    %1007 = vector.broadcast %1006 : f32 to vector<8x256xf32>
    %1008 = arith.mulf %6, %1007 : vector<8x256xf32>
    %1009 = arith.addf %1004, %1008 : vector<8x256xf32>
    %1010 = arith.index_cast %1000 : i32 to index
    %1011 = memref.load %arg6[%1010] : memref<200xf32, #tpu.memory_space<smem>>
    %1012 = vector.broadcast %1011 : f32 to vector<8x256xf32>
    %1013 = arith.mulf %8, %1012 : vector<8x256xf32>
    %1014 = arith.addf %1009, %1013 : vector<8x256xf32>
    %1015 = arith.index_cast %1000 : i32 to index
    %1016 = memref.load %arg7[%1015] : memref<200xf32, #tpu.memory_space<smem>>
    %1017 = vector.broadcast %1016 : f32 to vector<8x256xf32>
    %1018 = arith.addf %1014, %1017 : vector<8x256xf32>
    %cst_98 = arith.constant 0.000000e+00 : f32
    %1019 = vector.broadcast %cst_98 : f32 to vector<8x256xf32>
    %1020 = arith.maximumf %1018, %1019 : vector<8x256xf32>
    %c0_99 = arith.constant 0 : index
    %c11520 = arith.constant 11520 : index
    %1021 = vector.load %arg17[%c0_99, %c11520] : memref<8x12800xf32, #tpu.memory_space<vmem>>, vector<8x256xf32>
    tpu.vector_store %arg17[%c0_99, %c11520], %1020 {strides = array<i32>} : memref<8x12800xf32, #tpu.memory_space<vmem>>, vector<8x256xf32>,
    %c46_i32 = arith.constant 46 : i32
    %1022 = arith.addi %9, %c46_i32 : i32
    %1023 = arith.index_cast %1022 : i32 to index
    %1024 = memref.load %arg4[%1023] : memref<200xf32, #tpu.memory_space<smem>>
    %1025 = vector.broadcast %1024 : f32 to vector<8x256xf32>
    %1026 = arith.mulf %4, %1025 : vector<8x256xf32>
    %1027 = arith.index_cast %1022 : i32 to index
    %1028 = memref.load %arg5[%1027] : memref<200xf32, #tpu.memory_space<smem>>
    %1029 = vector.broadcast %1028 : f32 to vector<8x256xf32>
    %1030 = arith.mulf %6, %1029 : vector<8x256xf32>
    %1031 = arith.addf %1026, %1030 : vector<8x256xf32>
    %1032 = arith.index_cast %1022 : i32 to index
    %1033 = memref.load %arg6[%1032] : memref<200xf32, #tpu.memory_space<smem>>
    %1034 = vector.broadcast %1033 : f32 to vector<8x256xf32>
    %1035 = arith.mulf %8, %1034 : vector<8x256xf32>
    %1036 = arith.addf %1031, %1035 : vector<8x256xf32>
    %1037 = arith.index_cast %1022 : i32 to index
    %1038 = memref.load %arg7[%1037] : memref<200xf32, #tpu.memory_space<smem>>
    %1039 = vector.broadcast %1038 : f32 to vector<8x256xf32>
    %1040 = arith.addf %1036, %1039 : vector<8x256xf32>
    %cst_100 = arith.constant 0.000000e+00 : f32
    %1041 = vector.broadcast %cst_100 : f32 to vector<8x256xf32>
    %1042 = arith.maximumf %1040, %1041 : vector<8x256xf32>
    %c0_101 = arith.constant 0 : index
    %c11776 = arith.constant 11776 : index
    %1043 = vector.load %arg17[%c0_101, %c11776] : memref<8x12800xf32, #tpu.memory_space<vmem>>, vector<8x256xf32>
    tpu.vector_store %arg17[%c0_101, %c11776], %1042 {strides = array<i32>} : memref<8x12800xf32, #tpu.memory_space<vmem>>, vector<8x256xf32>,
    %c47_i32 = arith.constant 47 : i32
    %1044 = arith.addi %9, %c47_i32 : i32
    %1045 = arith.index_cast %1044 : i32 to index
    %1046 = memref.load %arg4[%1045] : memref<200xf32, #tpu.memory_space<smem>>
    %1047 = vector.broadcast %1046 : f32 to vector<8x256xf32>
    %1048 = arith.mulf %4, %1047 : vector<8x256xf32>
    %1049 = arith.index_cast %1044 : i32 to index
    %1050 = memref.load %arg5[%1049] : memref<200xf32, #tpu.memory_space<smem>>
    %1051 = vector.broadcast %1050 : f32 to vector<8x256xf32>
    %1052 = arith.mulf %6, %1051 : vector<8x256xf32>
    %1053 = arith.addf %1048, %1052 : vector<8x256xf32>
    %1054 = arith.index_cast %1044 : i32 to index
    %1055 = memref.load %arg6[%1054] : memref<200xf32, #tpu.memory_space<smem>>
    %1056 = vector.broadcast %1055 : f32 to vector<8x256xf32>
    %1057 = arith.mulf %8, %1056 : vector<8x256xf32>
    %1058 = arith.addf %1053, %1057 : vector<8x256xf32>
    %1059 = arith.index_cast %1044 : i32 to index
    %1060 = memref.load %arg7[%1059] : memref<200xf32, #tpu.memory_space<smem>>
    %1061 = vector.broadcast %1060 : f32 to vector<8x256xf32>
    %1062 = arith.addf %1058, %1061 : vector<8x256xf32>
    %cst_102 = arith.constant 0.000000e+00 : f32
    %1063 = vector.broadcast %cst_102 : f32 to vector<8x256xf32>
    %1064 = arith.maximumf %1062, %1063 : vector<8x256xf32>
    %c0_103 = arith.constant 0 : index
    %c12032 = arith.constant 12032 : index
    %1065 = vector.load %arg17[%c0_103, %c12032] : memref<8x12800xf32, #tpu.memory_space<vmem>>, vector<8x256xf32>
    tpu.vector_store %arg17[%c0_103, %c12032], %1064 {strides = array<i32>} : memref<8x12800xf32, #tpu.memory_space<vmem>>, vector<8x256xf32>,
    %c48_i32 = arith.constant 48 : i32
    %1066 = arith.addi %9, %c48_i32 : i32
    %1067 = arith.index_cast %1066 : i32 to index
    %1068 = memref.load %arg4[%1067] : memref<200xf32, #tpu.memory_space<smem>>
    %1069 = vector.broadcast %1068 : f32 to vector<8x256xf32>
    %1070 = arith.mulf %4, %1069 : vector<8x256xf32>
    %1071 = arith.index_cast %1066 : i32 to index
    %1072 = memref.load %arg5[%1071] : memref<200xf32, #tpu.memory_space<smem>>
    %1073 = vector.broadcast %1072 : f32 to vector<8x256xf32>
    %1074 = arith.mulf %6, %1073 : vector<8x256xf32>
    %1075 = arith.addf %1070, %1074 : vector<8x256xf32>
    %1076 = arith.index_cast %1066 : i32 to index
    %1077 = memref.load %arg6[%1076] : memref<200xf32, #tpu.memory_space<smem>>
    %1078 = vector.broadcast %1077 : f32 to vector<8x256xf32>
    %1079 = arith.mulf %8, %1078 : vector<8x256xf32>
    %1080 = arith.addf %1075, %1079 : vector<8x256xf32>
    %1081 = arith.index_cast %1066 : i32 to index
    %1082 = memref.load %arg7[%1081] : memref<200xf32, #tpu.memory_space<smem>>
    %1083 = vector.broadcast %1082 : f32 to vector<8x256xf32>
    %1084 = arith.addf %1080, %1083 : vector<8x256xf32>
    %cst_104 = arith.constant 0.000000e+00 : f32
    %1085 = vector.broadcast %cst_104 : f32 to vector<8x256xf32>
    %1086 = arith.maximumf %1084, %1085 : vector<8x256xf32>
    %c0_105 = arith.constant 0 : index
    %c12288 = arith.constant 12288 : index
    %1087 = vector.load %arg17[%c0_105, %c12288] : memref<8x12800xf32, #tpu.memory_space<vmem>>, vector<8x256xf32>
    tpu.vector_store %arg17[%c0_105, %c12288], %1086 {strides = array<i32>} : memref<8x12800xf32, #tpu.memory_space<vmem>>, vector<8x256xf32>,
    %c49_i32 = arith.constant 49 : i32
    %1088 = arith.addi %9, %c49_i32 : i32
    %1089 = arith.index_cast %1088 : i32 to index
    %1090 = memref.load %arg4[%1089] : memref<200xf32, #tpu.memory_space<smem>>
    %1091 = vector.broadcast %1090 : f32 to vector<8x256xf32>
    %1092 = arith.mulf %4, %1091 : vector<8x256xf32>
    %1093 = arith.index_cast %1088 : i32 to index
    %1094 = memref.load %arg5[%1093] : memref<200xf32, #tpu.memory_space<smem>>
    %1095 = vector.broadcast %1094 : f32 to vector<8x256xf32>
    %1096 = arith.mulf %6, %1095 : vector<8x256xf32>
    %1097 = arith.addf %1092, %1096 : vector<8x256xf32>
    %1098 = arith.index_cast %1088 : i32 to index
    %1099 = memref.load %arg6[%1098] : memref<200xf32, #tpu.memory_space<smem>>
    %1100 = vector.broadcast %1099 : f32 to vector<8x256xf32>
    %1101 = arith.mulf %8, %1100 : vector<8x256xf32>
    %1102 = arith.addf %1097, %1101 : vector<8x256xf32>
    %1103 = arith.index_cast %1088 : i32 to index
    %1104 = memref.load %arg7[%1103] : memref<200xf32, #tpu.memory_space<smem>>
    %1105 = vector.broadcast %1104 : f32 to vector<8x256xf32>
    %1106 = arith.addf %1102, %1105 : vector<8x256xf32>
    %cst_106 = arith.constant 0.000000e+00 : f32
    %1107 = vector.broadcast %cst_106 : f32 to vector<8x256xf32>
    %1108 = arith.maximumf %1106, %1107 : vector<8x256xf32>
    %c0_107 = arith.constant 0 : index
    %c12544 = arith.constant 12544 : index
    %1109 = vector.load %arg17[%c0_107, %c12544] : memref<8x12800xf32, #tpu.memory_space<vmem>>, vector<8x256xf32>
    tpu.vector_store %arg17[%c0_107, %c12544], %1108 {strides = array<i32>} : memref<8x12800xf32, #tpu.memory_space<vmem>>, vector<8x256xf32>,
    %c0_108 = arith.constant 0 : index
    %c0_109 = arith.constant 0 : index
    %1110 = vector.load %arg16[%c0_108, %c0_109] : memref<8x10xf32, #tpu.memory_space<vmem>>, vector<8x10xf32>
    %c0_110 = arith.constant 0 : index
    %c0_111 = arith.constant 0 : index
    %1111 = vector.load %arg17[%c0_110, %c0_111] : memref<8x12800xf32, #tpu.memory_space<vmem>>, vector<8x12800xf32>
    %c0_112 = arith.constant 0 : index
    %c0_113 = arith.constant 0 : index
    %1112 = vector.load %arg8[%c0_112, %c0_113] : memref<10x12800xf32, #tpu.memory_space<vmem>>, vector<10x12800xf32>
    %cst_114 = arith.constant dense<0.000000e+00> : vector<8x10xf32>
    %1113 = tpu.matmul %1111, %1112, %cst_114 {dimension_numbers = #tpu.dot_dimension_numbers<[1], [1], [0], [0], [0, 0, 1, 0], [], []>} : vector<8x12800xf32>, vector<10x12800xf32>, vector<8x10xf32> -> vector<8x10xf32>
    %1114 = arith.addf %1110, %1113 : vector<8x10xf32>
    %c0_115 = arith.constant 0 : index
    %c0_116 = arith.constant 0 : index
    %1115 = vector.load %arg16[%c0_115, %c0_116] : memref<8x10xf32, #tpu.memory_space<vmem>>, vector<8x10xf32>
    tpu.vector_store %arg16[%c0_115, %c0_116], %1114 {strides = array<i32>} : memref<8x10xf32, #tpu.memory_space<vmem>>, vector<8x10xf32>,
    %c3_i32_117 = arith.constant 3 : i32
    %1116 = arith.cmpi eq, %arg1, %c3_i32_117 : i32
    %1117 = arith.extui %1116 : i1 to i32
    %c0_i32_118 = arith.constant 0 : i32
    %1118 = arith.cmpi ne, %1117, %c0_i32_118 : i32
    scf.if %1118 {
      %c0_119 = arith.constant 0 : index
      %c0_120 = arith.constant 0 : index
      %1119 = vector.load %arg16[%c0_119, %c0_120] : memref<8x10xf32, #tpu.memory_space<vmem>>, vector<8x10xf32>
      %c0_121 = arith.constant 0 : index
      %c0_122 = arith.constant 0 : index
      %1120 = vector.load %arg10[%c0_121, %c0_122] : memref<1x10xf32, #tpu.memory_space<vmem>>, vector<1x10xf32>
      %1121 = vector.broadcast %1120 : vector<1x10xf32> to vector<8x10xf32>
      %1122 = arith.addf %1119, %1121 : vector<8x10xf32>
      %cst_123 = arith.constant 0.000000e+00 : f32
      %1123 = vector.broadcast %cst_123 : f32 to vector<8x10xf32>
      %1124 = arith.maximumf %1122, %1123 : vector<8x10xf32>
      %c0_124 = arith.constant 0 : index
      %c0_125 = arith.constant 0 : index
      %1125 = vector.load %arg13[%c0_124, %c0_125] : memref<10x2xf32, #tpu.memory_space<vmem>>, vector<10x2xf32>
      %cst_126 = arith.constant dense<0.000000e+00> : vector<8x2xf32>
      %1126 = tpu.matmul %1124, %1125, %cst_126 {dimension_numbers = #tpu.dot_dimension_numbers<[1], [0], [0], [1], [0, 0, 1, 1], [], []>} : vector<8x10xf32>, vector<10x2xf32>, vector<8x2xf32> -> vector<8x2xf32>
      %c0_127 = arith.constant 0 : index
      %c0_128 = arith.constant 0 : index
      %1127 = vector.load %arg14[%c0_127, %c0_128] : memref<1x2xf32, #tpu.memory_space<vmem>>, vector<1x2xf32>
      %1128 = vector.broadcast %1127 : vector<1x2xf32> to vector<8x2xf32>
      %1129 = arith.addf %1126, %1128 : vector<8x2xf32>
      %c0_129 = arith.constant 0 : index
      %c0_130 = arith.constant 0 : index
      %1130 = vector.load %arg15[%c0_129, %c0_130] : memref<8x2xf32, #tpu.memory_space<vmem>>, vector<8x2xf32>
      tpu.vector_store %arg15[%c0_129, %c0_130], %1129 {strides = array<i32>} : memref<8x2xf32, #tpu.memory_space<vmem>>, vector<8x2xf32>,
    } else {
    }
    return
  }
  func.func @transform_0(%arg0: i32, %arg1: i32) -> (i32, i32, i32) {
    %c0_i32 = arith.constant 0 : i32
    %c0_i32_0 = arith.constant 0 : i32
    %c0_i32_1 = arith.constant 0 : i32
    return %c0_i32, %arg0, %c0_i32_0 : i32, i32, i32
  }
  func.func @transform_1(%arg0: i32, %arg1: i32) -> (i32, i32, i32) {
    %c0_i32 = arith.constant 0 : i32
    %c0_i32_0 = arith.constant 0 : i32
    %c0_i32_1 = arith.constant 0 : i32
    return %c0_i32, %arg0, %c0_i32_0 : i32, i32, i32
  }
  func.func @transform_2(%arg0: i32, %arg1: i32) -> i32 {
    %c0_i32 = arith.constant 0 : i32
    %c0_i32_0 = arith.constant 0 : i32
    return %c0_i32 : i32
  }
  func.func @transform_3(%arg0: i32, %arg1: i32) -> i32 {
    %c0_i32 = arith.constant 0 : i32
    %c0_i32_0 = arith.constant 0 : i32
    return %c0_i32 : i32
  }
  func.func @transform_4(%arg0: i32, %arg1: i32) -> i32 {
    %c0_i32 = arith.constant 0 : i32
    %c0_i32_0 = arith.constant 0 : i32
    return %c0_i32 : i32
  }
  func.func @transform_5(%arg0: i32, %arg1: i32) -> i32 {
    %c0_i32 = arith.constant 0 : i32
    %c0_i32_0 = arith.constant 0 : i32
    return %c0_i32 : i32
  }
  func.func @transform_6(%arg0: i32, %arg1: i32) -> (i32, i32) {
    %c0_i32 = arith.constant 0 : i32
    %c0_i32_0 = arith.constant 0 : i32
    return %c0_i32, %arg1 : i32, i32
  }
  func.func @transform_7(%arg0: i32, %arg1: i32) -> (i32, i32) {
    %c0_i32 = arith.constant 0 : i32
    %c0_i32_0 = arith.constant 0 : i32
    %c0_i32_1 = arith.constant 0 : i32
    return %c0_i32, %c0_i32_0 : i32, i32
  }
  func.func @transform_8(%arg0: i32, %arg1: i32) -> (i32, i32) {
    %c0_i32 = arith.constant 0 : i32
    %c0_i32_0 = arith.constant 0 : i32
    %c0_i32_1 = arith.constant 0 : i32
    return %c0_i32, %c0_i32_0 : i32, i32
  }
  func.func @transform_9(%arg0: i32, %arg1: i32) -> (i32, i32) {
    %c0_i32 = arith.constant 0 : i32
    %c0_i32_0 = arith.constant 0 : i32
    %c0_i32_1 = arith.constant 0 : i32
    return %c0_i32, %c0_i32_0 : i32, i32
  }
  func.func @transform_10(%arg0: i32, %arg1: i32) -> (i32, i32) {
    %c0_i32 = arith.constant 0 : i32
    %c0_i32_0 = arith.constant 0 : i32
    %c0_i32_1 = arith.constant 0 : i32
    return %c0_i32, %c0_i32_0 : i32, i32
  }
  func.func @transform_11(%arg0: i32, %arg1: i32) -> (i32, i32) {
    %c0_i32 = arith.constant 0 : i32
    %c0_i32_0 = arith.constant 0 : i32
    %c0_i32_1 = arith.constant 0 : i32
    return %c0_i32, %c0_i32_0 : i32, i32
  }
  func.func @transform_12(%arg0: i32, %arg1: i32) -> (i32, i32) {
    %c0_i32 = arith.constant 0 : i32
    %c0_i32_0 = arith.constant 0 : i32
    %c0_i32_1 = arith.constant 0 : i32
    return %c0_i32, %c0_i32_0 : i32, i32
  }
  func.func @transform_13(%arg0: i32, %arg1: i32) -> (i32, i32) {
    %c0_i32 = arith.constant 0 : i32
    %c0_i32_0 = arith.constant 0 : i32
    return %arg0, %c0_i32 : i32, i32
  }
}

</mosaic_0001>

<llo_original>
// kernel: cge_variant_forward.1
$region0: #{cge_variant_forward.1}
  #allocation0 [shape = 'u32[]', space=smem, size = 0x4, offset = 0x4, fixed_abs, tag = 'smem constant byte address 0x4 - core index']
  #allocation1 [shape = 'u32[144,128]{1,0:T(1,128)}', space=vmem, size = 0x12000, scoped, tag = 'internal scratch']
  #allocation2 [shape = 'f32[8,10]{1,0:T(8,128)}', space=vmem, size = 0x1000, scoped, tag = 'scratch operand']
  #allocation3 [shape = 'f32[8,12800]{1,0:T(8,128)}', space=vmem, size = 0x64000, scoped, tag = 'scratch operand']
  %s0 = inlined_call_operand.vmem [shape: f32[3,8,256], index: 0, kind: input, shape index: {}]
  %s1 = inlined_call_operand.vmem [shape: f32[3,8,9], index: 1, kind: input, shape index: {}]
  %s2 = inlined_call_operand.hbm [shape: f32[200], index: 2, kind: input, shape index: {}]
  %s3 = inlined_call_operand.hbm [shape: f32[200], index: 3, kind: input, shape index: {}]
  %s4 = inlined_call_operand.hbm [shape: f32[200], index: 4, kind: input, shape index: {}]
  %s5 = inlined_call_operand.hbm [shape: f32[200], index: 5, kind: input, shape index: {}]
  %s6 = inlined_call_operand.hbm [shape: f32[10,51200], index: 6, kind: input, shape index: {}]
  %s7 = inlined_call_operand.vmem [shape: f32[200,10], index: 7, kind: input, shape index: {}]
  %s8 = inlined_call_operand.hbm [shape: f32[1,10], index: 8, kind: input, shape index: {}]
  %s9 = inlined_call_operand.hbm [shape: f32[9,200], index: 9, kind: input, shape index: {}]
  %s10 = inlined_call_operand.hbm [shape: f32[1,200], index: 10, kind: input, shape index: {}]
  %s11 = inlined_call_operand.vmem [shape: f32[10,2], index: 11, kind: input, shape index: {}]
  %s12 = inlined_call_operand.hbm [shape: f32[1,2], index: 12, kind: input, shape index: {}]
  %s13 = inlined_call_operand.vmem [shape: f32[8,2], index: 13, kind: output, shape index: {}]
  %s14 = sld [smem:[#allocation0]]
  $region129: #{cge_variant_forward.1} parent=0
    _
  %s16 = ssub.s32 1, %s14
  %s17 = scalar_select 0, %s16, %s14
  $region1: #{cge_variant_forward.1} parent=0
    #allocation4 [shape = 'u8[1024]{0}', space=smem, size = 0x400, scoped, tag = 'input window, operand 2, single buffered']
    #allocation5 [shape = 's32[2]{0}', space=sflag, size = 0x8, scoped, tag = 'scoped memory for cge_variant_forward.1']
    #allocation6 [shape = 's32[2]{0}', space=sflag, size = 0x8, scoped, tag = 'scoped memory for cge_variant_forward.1']
    #allocation7 [shape = 'u8[1024]{0}', space=smem, size = 0x400, scoped, tag = 'input window, operand 3, single buffered']
    #allocation8 [shape = 's32[1]{0}', space=sflag, size = 0x4, scoped, tag = 'scoped memory for cge_variant_forward.1']
    #allocation9 [shape = 'u8[1024]{0}', space=smem, size = 0x400, scoped, tag = 'input window, operand 4, single buffered']
    #allocation10 [shape = 'u8[1024]{0}', space=smem, size = 0x400, scoped, tag = 'input window, operand 5, single buffered']
    #allocation11 [shape = 's32[1]{0}', space=sflag, size = 0x4, scoped, tag = 'scoped memory for cge_variant_forward.1']
    #allocation12 [shape = 'u8[1638400]{0}', space=vmem, size = 0x190000, scoped, tag = 'input window, operand 6']
    #allocation13 [shape = 'u8[512]{0}', space=vmem, size = 0x400, scoped, tag = 'input window, operand 8, single buffered']
    #allocation14 [shape = 's32[1]{0}', space=sflag, size = 0x4, scoped, tag = 'scoped memory for cge_variant_forward.1']
    #allocation15 [shape = 'u8[16384]{0}', space=vmem, size = 0x4000, scoped, tag = 'input window, operand 9, single buffered']
    #allocation16 [shape = 'u8[1024]{0}', space=vmem, size = 0x400, scoped, tag = 'input window, operand 10, single buffered']
    #allocation17 [shape = 's32[1]{0}', space=sflag, size = 0x4, scoped, tag = 'scoped memory for cge_variant_forward.1']
    #allocation18 [shape = 'u8[512]{0}', space=vmem, size = 0x400, scoped, tag = 'input window, operand 12, single buffered']
    %18 = vsyncpa [#allocation6], 0
    %19 = vsyncpa [#allocation8], 0
    %20 = vsyncpa [#allocation11], 0
    %21 = vsyncpa [#allocation5], 0
    %s22 = scalar_lea.sflag [#allocation5], 1
    %23 = vsyncpa %s22, 0
    %24 = vsyncpa [#allocation14], 0
    %25 = vsyncpa [#allocation17], 0
    loop: start=0, step=1, limit=6
    $region2: #{cge_variant_forward.1} parent=1 // loop_pre_header
      _
    $region3: #{cge_variant_forward.1} parent=1 // loop_header
      %s27 = sphi 0, %s31
      %p28 = scmp.ge.s32.totalorder %s27, 6
      %s34 = sphi 0, %s46
      %s35 = sphi 0, %s42
      %s36 = sphi 0, %s34
      %s37 = sphi 0, %s35
      %s38 = sphi 0, %s36
      %s39 = sphi 0, %s37
      %s49 = sphi 0, %s51
      %s52 = sphi 0, %s49
      %s53 = sphi 0, %s52
      %s69 = sphi 0, %s53
      %s75 = sphi 0, %s77
      %s78 = sphi 0, %s75
      %s79 = sphi 0, %s78
      %s95 = sphi 0, %s79
      %s99 = sphi 0, %s99
      %s101 = sphi 0, %s99
      %s102 = sphi 0, %s101
      %s116 = sphi 0, %s102
      %s120 = sphi 0, %s120
      %s122 = sphi 0, %s120
      %s123 = sphi 0, %s122
      %s137 = sphi 0, %s123
      %s141 = sphi 0, %s141
      %s143 = sphi 0, %s141
      %s144 = sphi 0, %s143
      %s158 = sphi 0, %s144
      %s162 = sphi 0, %s162
      %s164 = sphi 0, %s162
      %s165 = sphi 0, %s164
      %s179 = sphi 0, %s165
      %s185 = sphi 0, %s187
      %s188 = sphi 0, %s185
      %s189 = sphi 0, %s188
      %s205 = sphi 0, %s189
      %s209 = sphi 0, %s209
      %s211 = sphi 0, %s209
      %s212 = sphi 0, %s211
      %s226 = sphi 0, %s212
      %s230 = sphi 0, %s230
      %s232 = sphi 0, %s230
      %s233 = sphi 0, %s232
      %s247 = sphi 0, %s233
      %s251 = sphi 0, %s251
      %s253 = sphi 0, %s251
      %s254 = sphi 0, %s253
      %s268 = sphi 0, %s254
      %s272 = sphi 0, %s272
      %s274 = sphi 0, %s272
      %s275 = sphi 0, %s274
      %s289 = sphi 0, %s275
      %s293 = sphi 0, %s293
      %s295 = sphi 0, %s293
      %s296 = sphi 0, %s295
      %s310 = sphi 0, %s296
      %s314 = sphi 0, %s314
      %s316 = sphi 0, %s314
      %s317 = sphi 0, %s316
      %s331 = sphi 0, %s317
      %s337 = sphi 0, %s339
      %s340 = sphi 0, %s337
      %s341 = sphi 0, %s340
      %s357 = sphi 0, %s341
    $region4: #{cge_variant_forward.1} parent=1 // loop_header_branch
      %30 = sbr.rel (%p28) target = $region8
    $region5: #{cge_variant_forward.1} parent=1 // loop_body
      %s32 = ssub.s32 %s27, 1
      %s33 = ssub.s32 %s27, 2
      %s40 = sadd.s32 1, %s35
      %p41 = scmp.ge.s32.totalorder %s40, 4
      %s42 = scalar_select %p41, 0, %s40
      %s43 = sadd.s32 1, %s34
      %s44 = scalar_select %p41, %s43, %s34
      %p45 = scmp.ge.s32.totalorder %s44, 1
      %s46 = scalar_select %p45, 0, %s44
      %s47 = ssub.s32 %s34, %s46
      %p48 = scmp.eq.s32.totalorder %s47, 0
      %s50 = sadd.s32 %s49, 1
      %s51 = scalar_select %p48, %s49, %s50
      %p54 = pneg %p48
      %p55 = scmp.eq.s32.totalorder %s27, 3
      %p56 = por %p54, %p55
      %p57 = scmp.ne.s32.totalorder %s49, %s52
      %p58 = scmp.eq.s32.totalorder %s27, 0
      %p59 = por %p57, %p58
      %p60 = scmp.ne.s32.totalorder %s49, %s52
      %p61 = scmp.eq.s32.totalorder %s32, 3
      %p62 = por %p60, %p61
      %p63 = scmp.ne.s32.totalorder %s52, %s53
      %p64 = scmp.eq.s32.totalorder %s32, 0
      %p65 = por %p63, %p64
      %p66 = scmp.ne.s32.totalorder %s52, %s53
      %p67 = scmp.eq.s32.totalorder %s33, 3
      %p68 = por %p66, %p67
      %p70 = scmp.ne.s32.totalorder %s53, %s69
      %p71 = scmp.eq.s32.totalorder %s33, 0
      %p72 = por %p70, %p71
      %s73 = ssub.s32 %s34, %s46
      %p74 = scmp.eq.s32.totalorder %s73, 0
      %s76 = sadd.s32 %s75, 1
      %s77 = scalar_select %p74, %s75, %s76
      %p80 = pneg %p74
      %p81 = scmp.eq.s32.totalorder %s27, 3
      %p82 = por %p80, %p81
      %p83 = scmp.ne.s32.totalorder %s75, %s78
      %p84 = scmp.eq.s32.totalorder %s27, 0
      %p85 = por %p83, %p84
      %p86 = scmp.ne.s32.totalorder %s75, %s78
      %p87 = scmp.eq.s32.totalorder %s32, 3
      %p88 = por %p86, %p87
      %p89 = scmp.ne.s32.totalorder %s78, %s79
      %p90 = scmp.eq.s32.totalorder %s32, 0
      %p91 = por %p89, %p90
      %p92 = scmp.ne.s32.totalorder %s78, %s79
      %p93 = scmp.eq.s32.totalorder %s33, 3
      %p94 = por %p92, %p93
      %p96 = scmp.ne.s32.totalorder %s79, %s95
      %p97 = scmp.eq.s32.totalorder %s33, 0
      %p98 = por %p96, %p97
      %s100 = sadd.s32 %s99, 1
      %p103 = scmp.eq.s32.totalorder %s27, 3
      %p104 = scmp.ne.s32.totalorder %s99, %s101
      %p105 = scmp.eq.s32.totalorder %s27, 0
      %p106 = por %p104, %p105
      %p107 = scmp.ne.s32.totalorder %s99, %s101
      %p108 = scmp.eq.s32.totalorder %s32, 3
      %p109 = por %p107, %p108
      %p110 = scmp.ne.s32.totalorder %s101, %s102
      %p111 = scmp.eq.s32.totalorder %s32, 0
      %p112 = por %p110, %p111
      %p113 = scmp.ne.s32.totalorder %s101, %s102
      %p114 = scmp.eq.s32.totalorder %s33, 3
      %p115 = por %p113, %p114
      %p117 = scmp.ne.s32.totalorder %s102, %s116
      %p118 = scmp.eq.s32.totalorder %s33, 0
      %p119 = por %p117, %p118
      %s121 = sadd.s32 %s120, 1
      %p124 = scmp.eq.s32.totalorder %s27, 3
      %p125 = scmp.ne.s32.totalorder %s120, %s122
      %p126 = scmp.eq.s32.totalorder %s27, 0
      %p127 = por %p125, %p126
      %p128 = scmp.ne.s32.totalorder %s120, %s122
      %p129 = scmp.eq.s32.totalorder %s32, 3
      %p130 = por %p128, %p129
      %p131 = scmp.ne.s32.totalorder %s122, %s123
      %p132 = scmp.eq.s32.totalorder %s32, 0
      %p133 = por %p131, %p132
      %p134 = scmp.ne.s32.totalorder %s122, %s123
      %p135 = scmp.eq.s32.totalorder %s33, 3
      %p136 = por %p134, %p135
      %p138 = scmp.ne.s32.totalorder %s123, %s137
      %p139 = scmp.eq.s32.totalorder %s33, 0
      %p140 = por %p138, %p139
      %s142 = sadd.s32 %s141, 1
      %p145 = scmp.eq.s32.totalorder %s27, 3
      %p146 = scmp.ne.s32.totalorder %s141, %s143
      %p147 = scmp.eq.s32.totalorder %s27, 0
      %p148 = por %p146, %p147
      %p149 = scmp.ne.s32.totalorder %s141, %s143
      %p150 = scmp.eq.s32.totalorder %s32, 3
      %p151 = por %p149, %p150
      %p152 = scmp.ne.s32.totalorder %s143, %s144
      %p153 = scmp.eq.s32.totalorder %s32, 0
      %p154 = por %p152, %p153
      %p155 = scmp.ne.s32.totalorder %s143, %s144
      %p156 = scmp.eq.s32.totalorder %s33, 3
      %p157 = por %p155, %p156
      %p159 = scmp.ne.s32.totalorder %s144, %s158
      %p160 = scmp.eq.s32.totalorder %s33, 0
      %p161 = por %p159, %p160
      %s163 = sadd.s32 %s162, 1
      %p166 = scmp.eq.s32.totalorder %s27, 3
      %p167 = scmp.ne.s32.totalorder %s162, %s164
      %p168 = scmp.eq.s32.totalorder %s27, 0
      %p169 = por %p167, %p168
      %p170 = scmp.ne.s32.totalorder %s162, %s164
      %p171 = scmp.eq.s32.totalorder %s32, 3
      %p172 = por %p170, %p171
      %p173 = scmp.ne.s32.totalorder %s164, %s165
      %p174 = scmp.eq.s32.totalorder %s32, 0
      %p175 = por %p173, %p174
      %p176 = scmp.ne.s32.totalorder %s164, %s165
      %p177 = scmp.eq.s32.totalorder %s33, 3
      %p178 = por %p176, %p177
      %p180 = scmp.ne.s32.totalorder %s165, %s179
      %p181 = scmp.eq.s32.totalorder %s33, 0
      %p182 = por %p180, %p181
      %s183 = ssub.s32 %s35, %s42
      %p184 = scmp.eq.s32.totalorder %s183, 0
      %s186 = sadd.s32 %s185, 1
      %s187 = scalar_select %p184, %s185, %s186
      %p190 = pneg %p184
      %p191 = scmp.eq.s32.totalorder %s27, 3
      %p192 = por %p190, %p191
      %p193 = scmp.ne.s32.totalorder %s185, %s188
      %p194 = scmp.eq.s32.totalorder %s27, 0
      %p195 = por %p193, %p194
      %p196 = scmp.ne.s32.totalorder %s185, %s188
      %p197 = scmp.eq.s32.totalorder %s32, 3
      %p198 = por %p196, %p197
      %p199 = scmp.ne.s32.totalorder %s188, %s189
      %p200 = scmp.eq.s32.totalorder %s32, 0
      %p201 = por %p199, %p200
      %p202 = scmp.ne.s32.totalorder %s188, %s189
      %p203 = scmp.eq.s32.totalorder %s33, 3
      %p204 = por %p202, %p203
      %p206 = scmp.ne.s32.totalorder %s189, %s205
      %p207 = scmp.eq.s32.totalorder %s33, 0
      %p208 = por %p206, %p207
      %s210 = sadd.s32 %s209, 1
      %p213 = scmp.eq.s32.totalorder %s27, 3
      %p214 = scmp.ne.s32.totalorder %s209, %s211
      %p215 = scmp.eq.s32.totalorder %s27, 0
      %p216 = por %p214, %p215
      %p217 = scmp.ne.s32.totalorder %s209, %s211
      %p218 = scmp.eq.s32.totalorder %s32, 3
      %p219 = por %p217, %p218
      %p220 = scmp.ne.s32.totalorder %s211, %s212
      %p221 = scmp.eq.s32.totalorder %s32, 0
      %p222 = por %p220, %p221
      %p223 = scmp.ne.s32.totalorder %s211, %s212
      %p224 = scmp.eq.s32.totalorder %s33, 3
      %p225 = por %p223, %p224
      %p227 = scmp.ne.s32.totalorder %s212, %s226
      %p228 = scmp.eq.s32.totalorder %s33, 0
      %p229 = por %p227, %p228
      %s231 = sadd.s32 %s230, 1
      %p234 = scmp.eq.s32.totalorder %s27, 3
      %p235 = scmp.ne.s32.totalorder %s230, %s232
      %p236 = scmp.eq.s32.totalorder %s27, 0
      %p237 = por %p235, %p236
      %p238 = scmp.ne.s32.totalorder %s230, %s232
      %p239 = scmp.eq.s32.totalorder %s32, 3
      %p240 = por %p238, %p239
      %p241 = scmp.ne.s32.totalorder %s232, %s233
      %p242 = scmp.eq.s32.totalorder %s32, 0
      %p243 = por %p241, %p242
      %p244 = scmp.ne.s32.totalorder %s232, %s233
      %p245 = scmp.eq.s32.totalorder %s33, 3
      %p246 = por %p244, %p245
      %p248 = scmp.ne.s32.totalorder %s233, %s247
      %p249 = scmp.eq.s32.totalorder %s33, 0
      %p250 = por %p248, %p249
      %s252 = sadd.s32 %s251, 1
      %p255 = scmp.eq.s32.totalorder %s27, 3
      %p256 = scmp.ne.s32.totalorder %s251, %s253
      %p257 = scmp.eq.s32.totalorder %s27, 0
      %p258 = por %p256, %p257
      %p259 = scmp.ne.s32.totalorder %s251, %s253
      %p260 = scmp.eq.s32.totalorder %s32, 3
      %p261 = por %p259, %p260
      %p262 = scmp.ne.s32.totalorder %s253, %s254
      %p263 = scmp.eq.s32.totalorder %s32, 0
      %p264 = por %p262, %p263
      %p265 = scmp.ne.s32.totalorder %s253, %s254
      %p266 = scmp.eq.s32.totalorder %s33, 3
      %p267 = por %p265, %p266
      %p269 = scmp.ne.s32.totalorder %s254, %s268
      %p270 = scmp.eq.s32.totalorder %s33, 0
      %p271 = por %p269, %p270
      %s273 = sadd.s32 %s272, 1
      %p276 = scmp.eq.s32.totalorder %s27, 3
      %p277 = scmp.ne.s32.totalorder %s272, %s274
      %p278 = scmp.eq.s32.totalorder %s27, 0
      %p279 = por %p277, %p278
      %p280 = scmp.ne.s32.totalorder %s272, %s274
      %p281 = scmp.eq.s32.totalorder %s32, 3
      %p282 = por %p280, %p281
      %p283 = scmp.ne.s32.totalorder %s274, %s275
      %p284 = scmp.eq.s32.totalorder %s32, 0
      %p285 = por %p283, %p284
      %p286 = scmp.ne.s32.totalorder %s274, %s275
      %p287 = scmp.eq.s32.totalorder %s33, 3
      %p288 = por %p286, %p287
      %p290 = scmp.ne.s32.totalorder %s275, %s289
      %p291 = scmp.eq.s32.totalorder %s33, 0
      %p292 = por %p290, %p291
      %s294 = sadd.s32 %s293, 1
      %p297 = scmp.eq.s32.totalorder %s27, 3
      %p298 = scmp.ne.s32.totalorder %s293, %s295
      %p299 = scmp.eq.s32.totalorder %s27, 0
      %p300 = por %p298, %p299
      %p301 = scmp.ne.s32.totalorder %s293, %s295
      %p302 = scmp.eq.s32.totalorder %s32, 3
      %p303 = por %p301, %p302
      %p304 = scmp.ne.s32.totalorder %s295, %s296
      %p305 = scmp.eq.s32.totalorder %s32, 0
      %p306 = por %p304, %p305
      %p307 = scmp.ne.s32.totalorder %s295, %s296
      %p308 = scmp.eq.s32.totalorder %s33, 3
      %p309 = por %p307, %p308
      %p311 = scmp.ne.s32.totalorder %s296, %s310
      %p312 = scmp.eq.s32.totalorder %s33, 0
      %p313 = por %p311, %p312
      %s315 = sadd.s32 %s314, 1
      %p318 = scmp.eq.s32.totalorder %s27, 3
      %p319 = scmp.ne.s32.totalorder %s314, %s316
      %p320 = scmp.eq.s32.totalorder %s27, 0
      %p321 = por %p319, %p320
      %p322 = scmp.ne.s32.totalorder %s314, %s316
      %p323 = scmp.eq.s32.totalorder %s32, 3
      %p324 = por %p322, %p323
      %p325 = scmp.ne.s32.totalorder %s316, %s317
      %p326 = scmp.eq.s32.totalorder %s32, 0
      %p327 = por %p325, %p326
      %p328 = scmp.ne.s32.totalorder %s316, %s317
      %p329 = scmp.eq.s32.totalorder %s33, 3
      %p330 = por %p328, %p329
      %p332 = scmp.ne.s32.totalorder %s317, %s331
      %p333 = scmp.eq.s32.totalorder %s33, 0
      %p334 = por %p332, %p333
      %s335 = ssub.s32 %s34, %s46
      %p336 = scmp.eq.s32.totalorder %s335, 0
      %s338 = sadd.s32 %s337, 1
      %s339 = scalar_select %p336, %s337, %s338
      %p342 = pneg %p336
      %p343 = scmp.eq.s32.totalorder %s27, 3
      %p344 = por %p342, %p343
      %p345 = scmp.ne.s32.totalorder %s337, %s340
      %p346 = scmp.eq.s32.totalorder %s27, 0
      %p347 = por %p345, %p346
      %p348 = scmp.ne.s32.totalorder %s337, %s340
      %p349 = scmp.eq.s32.totalorder %s32, 3
      %p350 = por %p348, %p349
      %p351 = scmp.ne.s32.totalorder %s340, %s341
      %p352 = scmp.eq.s32.totalorder %s32, 0
      %p353 = por %p351, %p352
      %p354 = scmp.ne.s32.totalorder %s340, %s341
      %p355 = scmp.eq.s32.totalorder %s33, 3
      %p356 = por %p354, %p355
      %p358 = scmp.ne.s32.totalorder %s341, %s357
      %p359 = scmp.eq.s32.totalorder %s33, 0
      %p360 = por %p358, %p359
      %p361 = scmp.le.s32.totalorder 1, %s27
      %p362 = scmp.lt.s32.totalorder %s27, 5
      %p363 = pnand %p361, %p362
      %p364 = pneg %p363
      // Predicated region
      $region9: #{cge_variant_forward.1} parent=5 // pred_check
        _
      $region10: #{cge_variant_forward.1} parent=5 // pred_check_branch
        %366 = sbr.rel (%p363) target = $region12
      $region11: #{cge_variant_forward.1} parent=5 // pred_region
        %s367 = ssub.s32 %s27, 1
        // Predicated region
        $region13: #{cge_variant_forward.1} parent=11 // pred_check
          %p368 = pneg %p65
        $region14: #{cge_variant_forward.1} parent=11 // pred_check_branch
          %370 = sbr.rel (%p368) target = $region16
        $region15: #{cge_variant_forward.1} parent=11 // pred_region
          %p371 = scmp.lt.s32.totalorder %s36, 0
          %s372 = scalar_select %p371, %s36, 0
          %s373 = smul.addr %s372, 2
          %s374 = smul.addr %s373, 8
          %s375 = scalar_lea.vmem %s0, %s374
        $region16: #{cge_variant_forward.1} parent=11 // pred_fallthru
          _
        // Predicated region
        $region17: #{cge_variant_forward.1} parent=11 // pred_check
          %p376 = pneg %p91
        $region18: #{cge_variant_forward.1} parent=11 // pred_check_branch
          %378 = sbr.rel (%p376) target = $region20
        $region19: #{cge_variant_forward.1} parent=11 // pred_region
          %p379 = scmp.lt.s32.totalorder %s36, 0
          %s380 = scalar_select %p379, %s36, 0
          %s381 = smul.addr %s380, 8
          %s382 = scalar_lea.vmem %s1, %s381
        $region20: #{cge_variant_forward.1} parent=11 // pred_fallthru
          _
        // Predicated region
        $region21: #{cge_variant_forward.1} parent=11 // pred_check
          %p383 = pneg %p112
        $region22: #{cge_variant_forward.1} parent=11 // pred_check_branch
          %385 = sbr.rel (%p383) target = $region24
        $region23: #{cge_variant_forward.1} parent=11 // pred_region
          %s387 = ssub.s32 32, 32
          %388 = vsyncadd [#allocation6], %s387
          %391 = dma.hbm_to_smem %s2, 32, [#allocation4], [#allocation6]
        $region24: #{cge_variant_forward.1} parent=11 // pred_fallthru
          _
        // Predicated region
        $region25: #{cge_variant_forward.1} parent=11 // pred_check
          %p392 = pneg %p133
        $region26: #{cge_variant_forward.1} parent=11 // pred_check_branch
          %394 = sbr.rel (%p392) target = $region28
        $region27: #{cge_variant_forward.1} parent=11 // pred_region
          %s396 = ssub.s32 32, 32
          %397 = vsyncadd [#allocation8], %s396
          %400 = dma.hbm_to_smem %s3, 32, [#allocation7], [#allocation8]
        $region28: #{cge_variant_forward.1} parent=11 // pred_fallthru
          _
        // Predicated region
        $region29: #{cge_variant_forward.1} parent=11 // pred_check
          %p401 = pneg %p154
        $region30: #{cge_variant_forward.1} parent=11 // pred_check_branch
          %403 = sbr.rel (%p401) target = $region32
        $region31: #{cge_variant_forward.1} parent=11 // pred_region
          %s405 = ssub.s32 32, 32
          %406 = vsyncadd [#allocation8], %s405
          %409 = dma.hbm_to_smem %s4, 32, [#allocation9], [#allocation8]
        $region32: #{cge_variant_forward.1} parent=11 // pred_fallthru
          _
        // Predicated region
        $region33: #{cge_variant_forward.1} parent=11 // pred_check
          %p410 = pneg %p175
        $region34: #{cge_variant_forward.1} parent=11 // pred_check_branch
          %412 = sbr.rel (%p410) target = $region36
        $region35: #{cge_variant_forward.1} parent=11 // pred_region
          %s414 = ssub.s32 32, 32
          %415 = vsyncadd [#allocation11], %s414
          %418 = dma.hbm_to_smem %s5, 32, [#allocation10], [#allocation11]
        $region36: #{cge_variant_forward.1} parent=11 // pred_fallthru
          _
        // Predicated region
        $region37: #{cge_variant_forward.1} parent=11 // pred_check
          %p419 = pneg %p222
        $region38: #{cge_variant_forward.1} parent=11 // pred_check_branch
          %421 = sbr.rel (%p419) target = $region40
        $region39: #{cge_variant_forward.1} parent=11 // pred_region
          _
        $region40: #{cge_variant_forward.1} parent=11 // pred_fallthru
          _
        // Predicated region
        $region41: #{cge_variant_forward.1} parent=11 // pred_check
          %p422 = pneg %p243
        $region42: #{cge_variant_forward.1} parent=11 // pred_check_branch
          %424 = sbr.rel (%p422) target = $region44
        $region43: #{cge_variant_forward.1} parent=11 // pred_region
          %s426 = ssub.s32 16, 16
          %427 = vsyncadd [#allocation14], %s426
          %s429 = sshll.u32 [#allocation13], 4
          %s430 = int_to_ptr.vmem [resolvable:$true] %s429
          %432 = dma.hbm_to_vmem [thread:$0]  %s8, 16, %s430, [#allocation14]
        $region44: #{cge_variant_forward.1} parent=11 // pred_fallthru
          _
        // Predicated region
        $region45: #{cge_variant_forward.1} parent=11 // pred_check
          %p433 = pneg %p264
        $region46: #{cge_variant_forward.1} parent=11 // pred_check_branch
          %435 = sbr.rel (%p433) target = $region48
        $region47: #{cge_variant_forward.1} parent=11 // pred_region
          %s437 = ssub.s32 512, 512
          %438 = vsyncadd [#allocation14], %s437
          %s439 = sshll.u32 [#allocation15], 4
          %s440 = int_to_ptr.vmem [resolvable:$true] %s439
          %445 = dma.hbm_to_vmem [thread:$0]  %s9, 512, %s440, [#allocation14], 256, 256, 16
        $region48: #{cge_variant_forward.1} parent=11 // pred_fallthru
          _
        // Predicated region
        $region49: #{cge_variant_forward.1} parent=11 // pred_check
          %p446 = pneg %p285
        $region50: #{cge_variant_forward.1} parent=11 // pred_check_branch
          %448 = sbr.rel (%p446) target = $region52
        $region51: #{cge_variant_forward.1} parent=11 // pred_region
          %s450 = ssub.s32 32, 32
          %451 = vsyncadd [#allocation17], %s450
          %s453 = sshll.u32 [#allocation16], 4
          %s454 = int_to_ptr.vmem [resolvable:$true] %s453
          %456 = dma.hbm_to_vmem [thread:$0]  %s10, 32, %s454, [#allocation17]
        $region52: #{cge_variant_forward.1} parent=11 // pred_fallthru
          _
        // Predicated region
        $region53: #{cge_variant_forward.1} parent=11 // pred_check
          %p457 = pneg %p306
        $region54: #{cge_variant_forward.1} parent=11 // pred_check_branch
          %459 = sbr.rel (%p457) target = $region56
        $region55: #{cge_variant_forward.1} parent=11 // pred_region
          _
        $region56: #{cge_variant_forward.1} parent=11 // pred_fallthru
          _
        // Predicated region
        $region57: #{cge_variant_forward.1} parent=11 // pred_check
          %p460 = pneg %p327
        $region58: #{cge_variant_forward.1} parent=11 // pred_check_branch
          %462 = sbr.rel (%p460) target = $region60
        $region59: #{cge_variant_forward.1} parent=11 // pred_region
          %s464 = ssub.s32 16, 16
          %465 = vsyncadd [#allocation17], %s464
          %s467 = sshll.u32 [#allocation18], 4
          %s468 = int_to_ptr.vmem [resolvable:$true] %s467
          %470 = dma.hbm_to_vmem [thread:$0]  %s12, 16, %s468, [#allocation17]
        $region60: #{cge_variant_forward.1} parent=11 // pred_fallthru
          _
      $region12: #{cge_variant_forward.1} parent=5 // pred_fallthru
        _
      %p471 = scmp.lt.s32.totalorder %s27, 4
      // Predicated region
      $region61: #{cge_variant_forward.1} parent=5 // pred_check
        %p472 = pneg %p471
      $region62: #{cge_variant_forward.1} parent=5 // pred_check_branch
        %474 = sbr.rel (%p472) target = $region64
      $region63: #{cge_variant_forward.1} parent=5 // pred_region
        // Predicated region
        $region65: #{cge_variant_forward.1} parent=63 // pred_check
          %p475 = pneg %p195
        $region66: #{cge_variant_forward.1} parent=63 // pred_check_branch
          %477 = sbr.rel (%p475) target = $region68
        $region67: #{cge_variant_forward.1} parent=63 // pred_region
          %s478 = sand.u32 %s185, 1
          %s479 = scalar_lea.sflag [#allocation5], %s478
          %s480 = sand.u32 %s185, 1
          %s481 = smul.addr %s480, 1600
          %s482 = scalar_lea.vmem [#allocation12], %s481
          %s483 = smul.u32 100, %s35
          %s485 = ssub.s32 25600, 25600
          %486 = vsyncadd %s479, %s485
          %s487 = smul.addr %s483, 128
          %s488 = scalar_lea.hbm %s6, %s487
          %s489 = sshll.u32 %s482, 4
          %s490 = int_to_ptr.vmem [resolvable:$true] %s489
          %495 = dma.hbm_to_vmem [thread:$0]  %s488, 25600, %s490, %s479, 51200, 12800, 800
        $region68: #{cge_variant_forward.1} parent=63 // pred_fallthru
          _
      $region64: #{cge_variant_forward.1} parent=5 // pred_fallthru
        _
      %p496 = scmp.le.s32.totalorder 1, %s27
      %p497 = scmp.lt.s32.totalorder %s27, 5
      %p498 = pnand %p496, %p497
      %p499 = pneg %p498
      // Predicated region
      $region69: #{cge_variant_forward.1} parent=5 // pred_check
        _
      $region70: #{cge_variant_forward.1} parent=5 // pred_check_branch
        %501 = sbr.rel (%p498) target = $region72
      $region71: #{cge_variant_forward.1} parent=5 // pred_region
        %s502 = ssub.s32 %s27, 1
        // Predicated region
        $region73: #{cge_variant_forward.1} parent=71 // pred_check
          %p503 = pneg %p112
        $region74: #{cge_variant_forward.1} parent=71 // pred_check_branch
          %505 = sbr.rel (%p503) target = $region76
        $region75: #{cge_variant_forward.1} parent=71 // pred_region
          %506 = dma.done [#allocation6], 32
        $region76: #{cge_variant_forward.1} parent=71 // pred_fallthru
          _
        // Predicated region
        $region77: #{cge_variant_forward.1} parent=71 // pred_check
          %p507 = pneg %p133
        $region78: #{cge_variant_forward.1} parent=71 // pred_check_branch
          %509 = sbr.rel (%p507) target = $region80
        $region79: #{cge_variant_forward.1} parent=71 // pred_region
          %510 = dma.done [#allocation8], 32
        $region80: #{cge_variant_forward.1} parent=71 // pred_fallthru
          _
        // Predicated region
        $region81: #{cge_variant_forward.1} parent=71 // pred_check
          %p511 = pneg %p154
        $region82: #{cge_variant_forward.1} parent=71 // pred_check_branch
          %513 = sbr.rel (%p511) target = $region84
        $region83: #{cge_variant_forward.1} parent=71 // pred_region
          %514 = dma.done [#allocation8], 32
        $region84: #{cge_variant_forward.1} parent=71 // pred_fallthru
          _
        // Predicated region
        $region85: #{cge_variant_forward.1} parent=71 // pred_check
          %p515 = pneg %p175
        $region86: #{cge_variant_forward.1} parent=71 // pred_check_branch
          %517 = sbr.rel (%p515) target = $region88
        $region87: #{cge_variant_forward.1} parent=71 // pred_region
          %518 = dma.done [#allocation11], 32
        $region88: #{cge_variant_forward.1} parent=71 // pred_fallthru
          _
        %s519 = sand.u32 %s188, 1
        %s520 = scalar_lea.sflag [#allocation5], %s519
        %s521 = sand.u32 %s188, 1
        %s522 = smul.addr %s521, 1600
        %s523 = scalar_lea.vmem [#allocation12], %s522
        // Predicated region
        $region89: #{cge_variant_forward.1} parent=71 // pred_check
          %p524 = pneg %p201
        $region90: #{cge_variant_forward.1} parent=71 // pred_check_branch
          %526 = sbr.rel (%p524) target = $region92
        $region91: #{cge_variant_forward.1} parent=71 // pred_region
          %527 = dma.done %s520, 25600
        $region92: #{cge_variant_forward.1} parent=71 // pred_fallthru
          _
        // Predicated region
        $region93: #{cge_variant_forward.1} parent=71 // pred_check
          %p528 = pneg %p243
        $region94: #{cge_variant_forward.1} parent=71 // pred_check_branch
          %530 = sbr.rel (%p528) target = $region96
        $region95: #{cge_variant_forward.1} parent=71 // pred_region
          %531 = dma.done [#allocation14], 16
        $region96: #{cge_variant_forward.1} parent=71 // pred_fallthru
          _
        // Predicated region
        $region97: #{cge_variant_forward.1} parent=71 // pred_check
          %p532 = pneg %p264
        $region98: #{cge_variant_forward.1} parent=71 // pred_check_branch
          %534 = sbr.rel (%p532) target = $region100
        $region99: #{cge_variant_forward.1} parent=71 // pred_region
          %535 = dma.done [#allocation14], 512
        $region100: #{cge_variant_forward.1} parent=71 // pred_fallthru
          _
        // Predicated region
        $region101: #{cge_variant_forward.1} parent=71 // pred_check
          %p536 = pneg %p285
        $region102: #{cge_variant_forward.1} parent=71 // pred_check_branch
          %538 = sbr.rel (%p536) target = $region104
        $region103: #{cge_variant_forward.1} parent=71 // pred_region
          %539 = dma.done [#allocation17], 32
        $region104: #{cge_variant_forward.1} parent=71 // pred_fallthru
          _
        // Predicated region
        $region105: #{cge_variant_forward.1} parent=71 // pred_check
          %p540 = pneg %p327
        $region106: #{cge_variant_forward.1} parent=71 // pred_check_branch
          %542 = sbr.rel (%p540) target = $region108
        $region107: #{cge_variant_forward.1} parent=71 // pred_region
          %543 = dma.done [#allocation17], 16
        $region108: #{cge_variant_forward.1} parent=71 // pred_fallthru
          _
        %544 = sfence
        %p545 = scmp.lt.s32.totalorder %s36, 0
        %s546 = scalar_select %p545, %s36, 0
        %s547 = smul.addr %s546, 2
        %s548 = smul.addr %s547, 8
        %s549 = scalar_lea.vmem %s0, %s548
        %p550 = pneg %p65
        %p551 = pneg %p62
        %p552 = scmp.lt.s32.totalorder %s36, 0
        %s553 = scalar_select %p552, %s36, 0
        %s554 = smul.addr %s553, 8
        %s555 = scalar_lea.vmem %s1, %s554
        %p556 = pneg %p91
        %p557 = pneg %p88
        %p558 = pneg %p112
        %p559 = pneg %p109
        %p560 = pneg %p133
        %p561 = pneg %p130
        %p562 = pneg %p154
        %p563 = pneg %p151
        %p564 = pneg %p175
        %p565 = pneg %p172
        %s566 = sand.u32 %s188, 1
        %s567 = scalar_lea.sflag [#allocation5], %s566
        %s568 = sand.u32 %s188, 1
        %s569 = smul.addr %s568, 1600
        %s570 = scalar_lea.vmem [#allocation12], %s569
        %p571 = pneg %p201
        %p572 = pneg %p198
        %p573 = pneg %p222
        %p574 = pneg %p219
        %p575 = pneg %p243
        %p576 = pneg %p240
        %p577 = pneg %p264
        %p578 = pneg %p261
        %p579 = pneg %p285
        %p580 = pneg %p282
        %p581 = pneg %p306
        %p582 = pneg %p303
        %p583 = pneg %p327
        %p584 = pneg %p324
        %p585 = pneg %p353
        %p586 = pneg %p350
        %p587 = scmp.lt.s32.totalorder %s36, 0
        %s588 = scalar_select %p587, %s36, 0
        %s589 = smul.addr %s588, 8
        %s590 = scalar_lea.vmem %s13, %s589
        %p591 = scmp.lt.s32.totalorder %s36, 0
        %s592 = scalar_select %p591, %s36, 0
        %s593 = smul.addr %s592, 2
        %s594 = smul.addr %s593, 8
        %s595 = scalar_lea.vmem %s0, %s594
        %p596 = scmp.lt.s32.totalorder %s36, 0
        %s597 = scalar_select %p596, %s36, 0
        %s598 = smul.addr %s597, 8
        %s599 = scalar_lea.vmem %s1, %s598
        %s600 = smul.u32 100, %s37
        %p601 = scmp.lt.s32.totalorder %s36, 0
        %s602 = scalar_select %p601, %s36, 0
        %s603 = smul.addr %s602, 8
        %s604 = scalar_lea.vmem %s13, %s603
        %p605 = scmp.eq.s32.totalorder %s37, 0
        // Predicated region
        $region109: #{cge_variant_forward.1} parent=71 // pred_check
          %p606 = pneg %p605
        $region110: #{cge_variant_forward.1} parent=71 // pred_check_branch
          %608 = sbr.rel (%p606) target = $region112
        $region111: #{cge_variant_forward.1} parent=71 // pred_region
          %v609 = vld [vmem:[%s599] sm:$0xff]
          %v610 = vld [vmem:[#allocation15] sm:$0xff]
          %v611 = vld [vmem:[#allocation15 + $0x8] sm:$0xff]
          %v612 = vld [vmem:[#allocation15 + $0x10] sm:$0x1]
          %v613 = vld [vmem:[#allocation15 + $0x18] sm:$0x1]
          %v614 = vld [vmem:[#allocation16] sm:$0x3]
          %v616 = vlaneseq
          %v617 = vshrl.u32 %v616, 7
          %v618 = vsub.s32 0, %v617
          %v619 = vrot.slane %v614, %v618
          %v620 = vlaneseq
          %v621 = vshrl.u32 %v620, 7
          %v622 = vsub.s32 1, %v621
          %v623 = vrot.slane %v614, %v622
          %vm626 = vcmask 72704
          %v628 = vsel %vm626, %v609, 0
          %vm630 = vcmask 1040384
          %v632 = vsel %vm630, %v612, 0
          %v635 = vsel %vm630, %v613, 0
          %637 = vmatprep.subr.mxu0 %v611
          %638 = vmatpush1.msra.mxu0 %v610
          %639 = vmatprep.subr.mxu0 %v635
          %640 = vmatpush1.msra.mxu0 %v632
          %641 = vmatprep.subr.mxu0 0.0
          %642 = vmatpush1.msra.mxu0 0.0
          %643 = vmatprep.subr.mxu0 0.0
          %644 = vmatpush1.msra.mxu0 0.0
          %645 = vmatprep.subr.mxu0 0.0
          %646 = vmatpush1.msra.mxu0 0.0
          %647 = vmatprep.subr.mxu0 0.0
          %648 = vmatpush1.msra.mxu0 0.0
          %649 = vmatprep.subr.mxu0 0.0
          %650 = vmatpush1.msra.mxu0 0.0
          %651 = vmatprep.subr.mxu0 0.0
          %652 = vmatpush1.msra.mxu0 0.0
          %653 = vmatprep.subr.mxu0 0.0
          %654 = vmatpush1.msra.mxu0 0.0
          %655 = vmatprep.subr.mxu0 0.0
          %656 = vmatpush1.msra.mxu0 0.0
          %657 = vmatprep.subr.mxu0 0.0
          %658 = vmatpush1.msra.mxu0 0.0
          %659 = vmatprep.subr.mxu0 0.0
          %660 = vmatpush1.msra.mxu0 0.0
          %661 = vmatprep.subr.mxu0 0.0
          %662 = vmatpush1.msra.mxu0 0.0
          %663 = vmatprep.subr.mxu0 0.0
          %664 = vmatpush1.msra.mxu0 0.0
          %665 = vmatprep.subr.mxu0 0.0
          %666 = vmatpush1.msra.mxu0 0.0
          %667 = vmatprep.subr.mxu0 0.0
          %668 = vmatpush1.msra.mxu0 0.0
          %669 = vmatprep.subr.mxu0 0.0
          %670 = vmatpush1.msra.mxu0 0.0
          %671 = vmatprep.subr.mxu0 0.0
          %672 = vmatpush1.msra.mxu0 0.0
          %673 = vmatprep.subr.mxu0 0.0
          %674 = vmatpush1.msra.mxu0 0.0
          %675 = vmatprep.subr.mxu0 0.0
          %676 = vmatpush1.msra.mxu0 0.0
          %677 = vmatprep.subr.mxu0 0.0
          %678 = vmatpush1.msra.mxu0 0.0
          %679 = vmatprep.subr.mxu0 0.0
          %680 = vmatpush1.msra.mxu0 0.0
          %681 = vmatprep.subr.mxu0 0.0
          %682 = vmatpush1.msra.mxu0 0.0
          %683 = vmatprep.subr.mxu0 0.0
          %684 = vmatpush1.msra.mxu0 0.0
          %685 = vmatprep.subr.mxu0 0.0
          %686 = vmatpush1.msra.mxu0 0.0
          %687 = vmatprep.subr.mxu0 0.0
          %688 = vmatpush1.msra.mxu0 0.0
          %689 = vmatprep.subr.mxu0 0.0
          %690 = vmatpush1.msra.mxu0 0.0
          %691 = vmatprep.subr.mxu0 0.0
          %692 = vmatpush1.msra.mxu0 0.0
          %693 = vmatprep.subr.mxu0 0.0
          %694 = vmatpush1.msra.mxu0 0.0
          %695 = vmatprep.subr.mxu0 0.0
          %696 = vmatpush1.msra.mxu0 0.0
          %697 = vmatprep.subr.mxu0 0.0
          %698 = vmatpush1.msra.mxu0 0.0
          %699 = vmatprep.subr.mxu0 0.0
          %700 = vmatpush1.msra.mxu0 0.0
          %701 = vmatprep.mubr.f32.mxu0 0.0
          %702 = vmatmul.mubr.f32.gmra.mrb[0].mxu0 %v628
          %v703 = vpop.f32.mrb[0].mxu0
          %v704 = vadd.f32 %v619, %v703
          %v705 = vpop.f32.mrb[0].mxu0
          %v706 = vadd.f32 %v623, %v705
          %707 = vdwg.mxu0
          %v708 = vmax.f32 %v704, 0.0
          %v709 = vmax.f32 %v706, 0.0
          %s710 = scalar_lea.vmem %s599, 8
          %v711 = vld [vmem:[%s710] sm:$0xff]
          %v713 = vsel %vm626, %v711, 0
          %715 = vmatprep.subr.mxu0 %v611
          %716 = vmatpush1.msra.mxu0 %v610
          %717 = vmatprep.subr.mxu0 %v635
          %718 = vmatpush1.msra.mxu0 %v632
          %719 = vmatprep.subr.mxu0 0.0
          %720 = vmatpush1.msra.mxu0 0.0
          %721 = vmatprep.subr.mxu0 0.0
          %722 = vmatpush1.msra.mxu0 0.0
          %723 = vmatprep.subr.mxu0 0.0
          %724 = vmatpush1.msra.mxu0 0.0
          %725 = vmatprep.subr.mxu0 0.0
          %726 = vmatpush1.msra.mxu0 0.0
          %727 = vmatprep.subr.mxu0 0.0
          %728 = vmatpush1.msra.mxu0 0.0
          %729 = vmatprep.subr.mxu0 0.0
          %730 = vmatpush1.msra.mxu0 0.0
          %731 = vmatprep.subr.mxu0 0.0
          %732 = vmatpush1.msra.mxu0 0.0
          %733 = vmatprep.subr.mxu0 0.0
          %734 = vmatpush1.msra.mxu0 0.0
          %735 = vmatprep.subr.mxu0 0.0
          %736 = vmatpush1.msra.mxu0 0.0
          %737 = vmatprep.subr.mxu0 0.0
          %738 = vmatpush1.msra.mxu0 0.0
          %739 = vmatprep.subr.mxu0 0.0
          %740 = vmatpush1.msra.mxu0 0.0
          %741 = vmatprep.subr.mxu0 0.0
          %742 = vmatpush1.msra.mxu0 0.0
          %743 = vmatprep.subr.mxu0 0.0
          %744 = vmatpush1.msra.mxu0 0.0
          %745 = vmatprep.subr.mxu0 0.0
          %746 = vmatpush1.msra.mxu0 0.0
          %747 = vmatprep.subr.mxu0 0.0
          %748 = vmatpush1.msra.mxu0 0.0
          %749 = vmatprep.subr.mxu0 0.0
          %750 = vmatpush1.msra.mxu0 0.0
          %751 = vmatprep.subr.mxu0 0.0
          %752 = vmatpush1.msra.mxu0 0.0
          %753 = vmatprep.subr.mxu0 0.0
          %754 = vmatpush1.msra.mxu0 0.0
          %755 = vmatprep.subr.mxu0 0.0
          %756 = vmatpush1.msra.mxu0 0.0
          %757 = vmatprep.subr.mxu0 0.0
          %758 = vmatpush1.msra.mxu0 0.0
          %759 = vmatprep.subr.mxu0 0.0
          %760 = vmatpush1.msra.mxu0 0.0
          %761 = vmatprep.subr.mxu0 0.0
          %762 = vmatpush1.msra.mxu0 0.0
          %763 = vmatprep.subr.mxu0 0.0
          %764 = vmatpush1.msra.mxu0 0.0
          %765 = vmatprep.subr.mxu0 0.0
          %766 = vmatpush1.msra.mxu0 0.0
          %767 = vmatprep.subr.mxu0 0.0
          %768 = vmatpush1.msra.mxu0 0.0
          %769 = vmatprep.subr.mxu0 0.0
          %770 = vmatpush1.msra.mxu0 0.0
          %771 = vmatprep.subr.mxu0 0.0
          %772 = vmatpush1.msra.mxu0 0.0
          %773 = vmatprep.subr.mxu0 0.0
          %774 = vmatpush1.msra.mxu0 0.0
          %775 = vmatprep.subr.mxu0 0.0
          %776 = vmatpush1.msra.mxu0 0.0
          %777 = vmatprep.subr.mxu0 0.0
          %778 = vmatpush1.msra.mxu0 0.0
          %779 = vmatprep.mubr.f32.mxu0 0.0
          %780 = vmatmul.mubr.f32.gmra.mrb[0].mxu0 %v713
          %v781 = vpop.f32.mrb[0].mxu0
          %v782 = vadd.f32 %v619, %v781
          %v783 = vpop.f32.mrb[0].mxu0
          %v784 = vadd.f32 %v623, %v783
          %785 = vdwg.mxu0
          %v786 = vmax.f32 %v782, 0.0
          %v787 = vmax.f32 %v784, 0.0
          %v788 = vmax.f32 %v708, %v786
          %v789 = vmax.f32 %v709, %v787
          %s790 = scalar_lea.vmem %s599, 16
          %v791 = vld [vmem:[%s790] sm:$0xff]
          %v793 = vsel %vm626, %v791, 0
          %795 = vmatprep.subr.mxu0 %v611
          %796 = vmatpush1.msra.mxu0 %v610
          %797 = vmatprep.subr.mxu0 %v635
          %798 = vmatpush1.msra.mxu0 %v632
          %799 = vmatprep.subr.mxu0 0.0
          %800 = vmatpush1.msra.mxu0 0.0
          %801 = vmatprep.subr.mxu0 0.0
          %802 = vmatpush1.msra.mxu0 0.0
          %803 = vmatprep.subr.mxu0 0.0
          %804 = vmatpush1.msra.mxu0 0.0
          %805 = vmatprep.subr.mxu0 0.0
          %806 = vmatpush1.msra.mxu0 0.0
          %807 = vmatprep.subr.mxu0 0.0
          %808 = vmatpush1.msra.mxu0 0.0
          %809 = vmatprep.subr.mxu0 0.0
          %810 = vmatpush1.msra.mxu0 0.0
          %811 = vmatprep.subr.mxu0 0.0
          %812 = vmatpush1.msra.mxu0 0.0
          %813 = vmatprep.subr.mxu0 0.0
          %814 = vmatpush1.msra.mxu0 0.0
          %815 = vmatprep.subr.mxu0 0.0
          %816 = vmatpush1.msra.mxu0 0.0
          %817 = vmatprep.subr.mxu0 0.0
          %818 = vmatpush1.msra.mxu0 0.0
          %819 = vmatprep.subr.mxu0 0.0
          %820 = vmatpush1.msra.mxu0 0.0
          %821 = vmatprep.subr.mxu0 0.0
          %822 = vmatpush1.msra.mxu0 0.0
          %823 = vmatprep.subr.mxu0 0.0
          %824 = vmatpush1.msra.mxu0 0.0
          %825 = vmatprep.subr.mxu0 0.0
          %826 = vmatpush1.msra.mxu0 0.0
          %827 = vmatprep.subr.mxu0 0.0
          %828 = vmatpush1.msra.mxu0 0.0
          %829 = vmatprep.subr.mxu0 0.0
          %830 = vmatpush1.msra.mxu0 0.0
          %831 = vmatprep.subr.mxu0 0.0
          %832 = vmatpush1.msra.mxu0 0.0
          %833 = vmatprep.subr.mxu0 0.0
          %834 = vmatpush1.msra.mxu0 0.0
          %835 = vmatprep.subr.mxu0 0.0
          %836 = vmatpush1.msra.mxu0 0.0
          %837 = vmatprep.subr.mxu0 0.0
          %838 = vmatpush1.msra.mxu0 0.0
          %839 = vmatprep.subr.mxu0 0.0
          %840 = vmatpush1.msra.mxu0 0.0
          %841 = vmatprep.subr.mxu0 0.0
          %842 = vmatpush1.msra.mxu0 0.0
          %843 = vmatprep.subr.mxu0 0.0
          %844 = vmatpush1.msra.mxu0 0.0
          %845 = vmatprep.subr.mxu0 0.0
          %846 = vmatpush1.msra.mxu0 0.0
          %847 = vmatprep.subr.mxu0 0.0
          %848 = vmatpush1.msra.mxu0 0.0
          %849 = vmatprep.subr.mxu0 0.0
          %850 = vmatpush1.msra.mxu0 0.0
          %851 = vmatprep.subr.mxu0 0.0
          %852 = vmatpush1.msra.mxu0 0.0
          %853 = vmatprep.subr.mxu0 0.0
          %854 = vmatpush1.msra.mxu0 0.0
          %855 = vmatprep.subr.mxu0 0.0
          %856 = vmatpush1.msra.mxu0 0.0
          %857 = vmatprep.subr.mxu0 0.0
          %858 = vmatpush1.msra.mxu0 0.0
          %859 = vmatprep.mubr.f32.mxu0 0.0
          %860 = vmatmul.mubr.f32.gmra.mrb[0].mxu0 %v793
          %v861 = vpop.f32.mrb[0].mxu0
          %v862 = vadd.f32 %v619, %v861
          %v863 = vpop.f32.mrb[0].mxu0
          %v864 = vadd.f32 %v623, %v863
          %865 = vdwg.mxu0
          %v866 = vmax.f32 %v862, 0.0
          %v867 = vmax.f32 %v864, 0.0
          %v868 = vmax.f32 %v788, %v866
          %v869 = vmax.f32 %v789, %v867
          %v870 = vld [vmem:[%s7] sm:$0xff]
          %v871 = vld [vmem:[%s7 + $0x8] sm:$0xff]
          %v872 = vld [vmem:[%s7 + $0x10] sm:$0xff]
          %v873 = vld [vmem:[%s7 + $0x18] sm:$0xff]
          %v874 = vld [vmem:[%s7 + $0x20] sm:$0xff]
          %v875 = vld [vmem:[%s7 + $0x28] sm:$0xff]
          %v876 = vld [vmem:[%s7 + $0x30] sm:$0xff]
          %v877 = vld [vmem:[%s7 + $0x38] sm:$0xff]
          %v878 = vld [vmem:[%s7 + $0x40] sm:$0xff]
          %v879 = vld [vmem:[%s7 + $0x48] sm:$0xff]
          %v880 = vld [vmem:[%s7 + $0x50] sm:$0xff]
          %v881 = vld [vmem:[%s7 + $0x58] sm:$0xff]
          %v882 = vld [vmem:[%s7 + $0x60] sm:$0xff]
          %v883 = vld [vmem:[%s7 + $0x68] sm:$0xff]
          %v884 = vld [vmem:[%s7 + $0x70] sm:$0xff]
          %v885 = vld [vmem:[%s7 + $0x78] sm:$0xff]
          %v886 = vld [vmem:[%s7 + $0x80] sm:$0xff]
          %v887 = vld [vmem:[%s7 + $0x88] sm:$0xff]
          %v888 = vld [vmem:[%s7 + $0x90] sm:$0xff]
          %v889 = vld [vmem:[%s7 + $0x98] sm:$0xff]
          %v890 = vld [vmem:[%s7 + $0xa0] sm:$0xff]
          %v891 = vld [vmem:[%s7 + $0xa8] sm:$0xff]
          %v892 = vld [vmem:[%s7 + $0xb0] sm:$0xff]
          %v893 = vld [vmem:[%s7 + $0xb8] sm:$0xff]
          %v894 = vld [vmem:[%s7 + $0xc0] sm:$0xff]
          %vm895 = vcmask 588800
          %v897 = vsel %vm895, %v869, 0
          %899 = vmatprep.subr.mxu0 0.0
          %900 = vmatpush1.msra.mxu0 %v870
          %901 = vmatprep.subr.mxu0 0.0
          %902 = vmatpush1.msra.mxu0 %v871
          %903 = vmatprep.subr.mxu0 0.0
          %904 = vmatpush1.msra.mxu0 %v872
          %905 = vmatprep.subr.mxu0 0.0
          %906 = vmatpush1.msra.mxu0 %v873
          %907 = vmatprep.subr.mxu0 0.0
          %908 = vmatpush1.msra.mxu0 %v874
          %909 = vmatprep.subr.mxu0 0.0
          %910 = vmatpush1.msra.mxu0 %v875
          %911 = vmatprep.subr.mxu0 0.0
          %912 = vmatpush1.msra.mxu0 %v876
          %913 = vmatprep.subr.mxu0 0.0
          %914 = vmatpush1.msra.mxu0 %v877
          %915 = vmatprep.subr.mxu0 0.0
          %916 = vmatpush1.msra.mxu0 %v878
          %917 = vmatprep.subr.mxu0 0.0
          %918 = vmatpush1.msra.mxu0 %v879
          %919 = vmatprep.subr.mxu0 0.0
          %920 = vmatpush1.msra.mxu0 %v880
          %921 = vmatprep.subr.mxu0 0.0
          %922 = vmatpush1.msra.mxu0 %v881
          %923 = vmatprep.subr.mxu0 0.0
          %924 = vmatpush1.msra.mxu0 %v882
          %925 = vmatprep.subr.mxu0 0.0
          %926 = vmatpush1.msra.mxu0 %v883
          %927 = vmatprep.subr.mxu0 0.0
          %928 = vmatpush1.msra.mxu0 %v884
          %929 = vmatprep.subr.mxu0 0.0
          %930 = vmatpush1.msra.mxu0 %v885
          %931 = vmatprep.subr.mxu0 0.0
          %932 = vmatpush1.msra.mxu0 %v886
          %933 = vmatprep.subr.mxu0 0.0
          %934 = vmatpush1.msra.mxu0 %v887
          %935 = vmatprep.subr.mxu0 0.0
          %936 = vmatpush1.msra.mxu0 %v888
          %937 = vmatprep.subr.mxu0 0.0
          %938 = vmatpush1.msra.mxu0 %v889
          %939 = vmatprep.subr.mxu0 0.0
          %940 = vmatpush1.msra.mxu0 %v890
          %941 = vmatprep.subr.mxu0 0.0
          %942 = vmatpush1.msra.mxu0 %v891
          %943 = vmatprep.subr.mxu0 0.0
          %944 = vmatpush1.msra.mxu0 %v892
          %945 = vmatprep.subr.mxu0 0.0
          %946 = vmatpush1.msra.mxu0 %v893
          %947 = vmatprep.subr.mxu0 0.0
          %948 = vmatpush1.msra.mxu0 %v894
          %949 = vmatprep.subr.mxu0 0.0
          %950 = vmatpush1.msra.mxu0 0.0
          %951 = vmatprep.subr.mxu0 0.0
          %952 = vmatpush1.msra.mxu0 0.0
          %953 = vmatprep.subr.mxu0 0.0
          %954 = vmatpush1.msra.mxu0 0.0
          %955 = vmatprep.subr.mxu0 0.0
          %956 = vmatpush1.msra.mxu0 0.0
          %957 = vmatprep.subr.mxu0 0.0
          %958 = vmatpush1.msra.mxu0 0.0
          %959 = vmatprep.subr.mxu0 0.0
          %960 = vmatpush1.msra.mxu0 0.0
          %961 = vmatprep.subr.mxu0 0.0
          %962 = vmatpush1.msra.mxu0 0.0
          %963 = vmatprep.mubr.f32.mxu0 %v897
          %964 = vmatmul.mubr.f32.gmra.mrb[0].mxu0 %v868
          %v965 = vpop.f32.mrb[0].mxu0
          %v966 = vadd.f32 0.0, %v965
          %v967 = vpop.f32.mrb[0].mxu0
          %968 = vdwg.mxu0
          %vm969 = vcmask 80896
          %970 = vst.msk [vmem:[#allocation2] sm:$0xff] %vm969, %v966
        $region112: #{cge_variant_forward.1} parent=71 // pred_fallthru
          _
        %v971 = vld [vmem:[%s595] sm:$0xff]
        %v972 = vld [vmem:[%s595 + $0x8] sm:$0xff]
        %s973 = scalar_lea.vmem %s595, 16
        %v974 = vld [vmem:[%s973] sm:$0xff]
        %v975 = vld [vmem:[%s973 + $0x8] sm:$0xff]
        %s976 = scalar_lea.vmem %s595, 32
        %v977 = vld [vmem:[%s976] sm:$0xff]
        %v978 = vld [vmem:[%s976 + $0x8] sm:$0xff]
        %s979 = smul.u32 %s37, 50
        %s980 = sld [smem:[#allocation4 + %s979]]
        %v981 = vstv %s980
        %v982 = vmul.f32 %v971, %v981
        %v983 = vmul.f32 %v972, %v981
        %s984 = sld [smem:[#allocation7 + %s979]]
        %v985 = vstv %s984
        %v986 = vmul.f32 %v974, %v985
        %v987 = vmul.f32 %v975, %v985
        %v988 = vadd.f32 %v982, %v986
        %v989 = vadd.f32 %v983, %v987
        %s990 = sld [smem:[#allocation9 + %s979]]
        %v991 = vstv %s990
        %v992 = vmul.f32 %v977, %v991
        %v993 = vmul.f32 %v978, %v991
        %v994 = vadd.f32 %v988, %v992
        %v995 = vadd.f32 %v989, %v993
        %s996 = sld [smem:[#allocation10 + %s979]]
        %v997 = vstv %s996
        %v998 = vadd.f32 %v994, %v997
        %v999 = vadd.f32 %v995, %v997
        %v1000 = vmax.f32 %v998, 0.0
        %v1001 = vmax.f32 %v999, 0.0
        %1002 = vst [vmem:[#allocation3] sm:$0xff] %v1000
        %1003 = vst [vmem:[#allocation3 + $0x8] sm:$0xff] %v1001
        %s1004 = sadd.s32 %s979, 1
        %s1005 = sld [smem:[#allocation4 + %s1004]]
        %v1006 = vstv %s1005
        %v1007 = vmul.f32 %v971, %v1006
        %v1008 = vmul.f32 %v972, %v1006
        %s1009 = sld [smem:[#allocation7 + %s1004]]
        %v1010 = vstv %s1009
        %v1011 = vmul.f32 %v974, %v1010
        %v1012 = vmul.f32 %v975, %v1010
        %v1013 = vadd.f32 %v1007, %v1011
        %v1014 = vadd.f32 %v1008, %v1012
        %s1015 = sld [smem:[#allocation9 + %s1004]]
        %v1016 = vstv %s1015
        %v1017 = vmul.f32 %v977, %v1016
        %v1018 = vmul.f32 %v978, %v1016
        %v1019 = vadd.f32 %v1013, %v1017
        %v1020 = vadd.f32 %v1014, %v1018
        %s1021 = sld [smem:[#allocation10 + %s1004]]
        %v1022 = vstv %s1021
        %v1023 = vadd.f32 %v1019, %v1022
        %v1024 = vadd.f32 %v1020, %v1022
        %v1025 = vmax.f32 %v1023, 0.0
        %v1026 = vmax.f32 %v1024, 0.0
        %1027 = vst [vmem:[#allocation3 + $0x10] sm:$0xff] %v1025
        %1028 = vst [vmem:[#allocation3 + $0x18] sm:$0xff] %v1026
        %s1029 = sadd.s32 %s979, 2
        %s1030 = sld [smem:[#allocation4 + %s1029]]
        %v1031 = vstv %s1030
        %v1032 = vmul.f32 %v971, %v1031
        %v1033 = vmul.f32 %v972, %v1031
        %s1034 = sld [smem:[#allocation7 + %s1029]]
        %v1035 = vstv %s1034
        %v1036 = vmul.f32 %v974, %v1035
        %v1037 = vmul.f32 %v975, %v1035
        %v1038 = vadd.f32 %v1032, %v1036
        %v1039 = vadd.f32 %v1033, %v1037
        %s1040 = sld [smem:[#allocation9 + %s1029]]
        %v1041 = vstv %s1040
        %v1042 = vmul.f32 %v977, %v1041
        %v1043 = vmul.f32 %v978, %v1041
        %v1044 = vadd.f32 %v1038, %v1042
        %v1045 = vadd.f32 %v1039, %v1043
        %s1046 = sld [smem:[#allocation10 + %s1029]]
        %v1047 = vstv %s1046
        %v1048 = vadd.f32 %v1044, %v1047
        %v1049 = vadd.f32 %v1045, %v1047
        %v1050 = vmax.f32 %v1048, 0.0
        %v1051 = vmax.f32 %v1049, 0.0
        %1052 = vst [vmem:[#allocation3 + $0x20] sm:$0xff] %v1050
        %1053 = vst [vmem:[#allocation3 + $0x28] sm:$0xff] %v1051
        %s1054 = sadd.s32 %s979, 3
        %s1055 = sld [smem:[#allocation4 + %s1054]]
        %v1056 = vstv %s1055
        %v1057 = vmul.f32 %v971, %v1056
        %v1058 = vmul.f32 %v972, %v1056
        %s1059 = sld [smem:[#allocation7 + %s1054]]
        %v1060 = vstv %s1059
        %v1061 = vmul.f32 %v974, %v1060
        %v1062 = vmul.f32 %v975, %v1060
        %v1063 = vadd.f32 %v1057, %v1061
        %v1064 = vadd.f32 %v1058, %v1062
        %s1065 = sld [smem:[#allocation9 + %s1054]]
        %v1066 = vstv %s1065
        %v1067 = vmul.f32 %v977, %v1066
        %v1068 = vmul.f32 %v978, %v1066
        %v1069 = vadd.f32 %v1063, %v1067
        %v1070 = vadd.f32 %v1064, %v1068
        %s1071 = sld [smem:[#allocation10 + %s1054]]
        %v1072 = vstv %s1071
        %v1073 = vadd.f32 %v1069, %v1072
        %v1074 = vadd.f32 %v1070, %v1072
        %v1075 = vmax.f32 %v1073, 0.0
        %v1076 = vmax.f32 %v1074, 0.0
        %1077 = vst [vmem:[#allocation3 + $0x30] sm:$0xff] %v1075
        %1078 = vst [vmem:[#allocation3 + $0x38] sm:$0xff] %v1076
        %s1079 = sadd.s32 %s979, 4
        %s1080 = sld [smem:[#allocation4 + %s1079]]
        %v1081 = vstv %s1080
        %v1082 = vmul.f32 %v971, %v1081
        %v1083 = vmul.f32 %v972, %v1081
        %s1084 = sld [smem:[#allocation7 + %s1079]]
        %v1085 = vstv %s1084
        %v1086 = vmul.f32 %v974, %v1085
        %v1087 = vmul.f32 %v975, %v1085
        %v1088 = vadd.f32 %v1082, %v1086
        %v1089 = vadd.f32 %v1083, %v1087
        %s1090 = sld [smem:[#allocation9 + %s1079]]
        %v1091 = vstv %s1090
        %v1092 = vmul.f32 %v977, %v1091
        %v1093 = vmul.f32 %v978, %v1091
        %v1094 = vadd.f32 %v1088, %v1092
        %v1095 = vadd.f32 %v1089, %v1093
        %s1096 = sld [smem:[#allocation10 + %s1079]]
        %v1097 = vstv %s1096
        %v1098 = vadd.f32 %v1094, %v1097
        %v1099 = vadd.f32 %v1095, %v1097
        %v1100 = vmax.f32 %v1098, 0.0
        %v1101 = vmax.f32 %v1099, 0.0
        %1102 = vst [vmem:[#allocation3 + $0x40] sm:$0xff] %v1100
        %1103 = vst [vmem:[#allocation3 + $0x48] sm:$0xff] %v1101
        %s1104 = sadd.s32 %s979, 5
        %s1105 = sld [smem:[#allocation4 + %s1104]]
        %v1106 = vstv %s1105
        %v1107 = vmul.f32 %v971, %v1106
        %v1108 = vmul.f32 %v972, %v1106
        %s1109 = sld [smem:[#allocation7 + %s1104]]
        %v1110 = vstv %s1109
        %v1111 = vmul.f32 %v974, %v1110
        %v1112 = vmul.f32 %v975, %v1110
        %v1113 = vadd.f32 %v1107, %v1111
        %v1114 = vadd.f32 %v1108, %v1112
        %s1115 = sld [smem:[#allocation9 + %s1104]]
        %v1116 = vstv %s1115
        %v1117 = vmul.f32 %v977, %v1116
        %v1118 = vmul.f32 %v978, %v1116
        %v1119 = vadd.f32 %v1113, %v1117
        %v1120 = vadd.f32 %v1114, %v1118
        %s1121 = sld [smem:[#allocation10 + %s1104]]
        %v1122 = vstv %s1121
        %v1123 = vadd.f32 %v1119, %v1122
        %v1124 = vadd.f32 %v1120, %v1122
        %v1125 = vmax.f32 %v1123, 0.0
        %v1126 = vmax.f32 %v1124, 0.0
        %1127 = vst [vmem:[#allocation3 + $0x50] sm:$0xff] %v1125
        %1128 = vst [vmem:[#allocation3 + $0x58] sm:$0xff] %v1126
        %s1129 = sadd.s32 %s979, 6
        %s1130 = sld [smem:[#allocation4 + %s1129]]
        %v1131 = vstv %s1130
        %v1132 = vmul.f32 %v971, %v1131
        %v1133 = vmul.f32 %v972, %v1131
        %s1134 = sld [smem:[#allocation7 + %s1129]]
        %v1135 = vstv %s1134
        %v1136 = vmul.f32 %v974, %v1135
        %v1137 = vmul.f32 %v975, %v1135
        %v1138 = vadd.f32 %v1132, %v1136
        %v1139 = vadd.f32 %v1133, %v1137
        %s1140 = sld [smem:[#allocation9 + %s1129]]
        %v1141 = vstv %s1140
        %v1142 = vmul.f32 %v977, %v1141
        %v1143 = vmul.f32 %v978, %v1141
        %v1144 = vadd.f32 %v1138, %v1142
        %v1145 = vadd.f32 %v1139, %v1143
        %s1146 = sld [smem:[#allocation10 + %s1129]]
        %v1147 = vstv %s1146
        %v1148 = vadd.f32 %v1144, %v1147
        %v1149 = vadd.f32 %v1145, %v1147
        %v1150 = vmax.f32 %v1148, 0.0
        %v1151 = vmax.f32 %v1149, 0.0
        %1152 = vst [vmem:[#allocation3 + $0x60] sm:$0xff] %v1150
        %1153 = vst [vmem:[#allocation3 + $0x68] sm:$0xff] %v1151
        %s1154 = sadd.s32 %s979, 7
        %s1155 = sld [smem:[#allocation4 + %s1154]]
        %v1156 = vstv %s1155
        %v1157 = vmul.f32 %v971, %v1156
        %v1158 = vmul.f32 %v972, %v1156
        %s1159 = sld [smem:[#allocation7 + %s1154]]
        %v1160 = vstv %s1159
        %v1161 = vmul.f32 %v974, %v1160
        %v1162 = vmul.f32 %v975, %v1160
        %v1163 = vadd.f32 %v1157, %v1161
        %v1164 = vadd.f32 %v1158, %v1162
        %s1165 = sld [smem:[#allocation9 + %s1154]]
        %v1166 = vstv %s1165
        %v1167 = vmul.f32 %v977, %v1166
        %v1168 = vmul.f32 %v978, %v1166
        %v1169 = vadd.f32 %v1163, %v1167
        %v1170 = vadd.f32 %v1164, %v1168
        %s1171 = sld [smem:[#allocation10 + %s1154]]
        %v1172 = vstv %s1171
        %v1173 = vadd.f32 %v1169, %v1172
        %v1174 = vadd.f32 %v1170, %v1172
        %v1175 = vmax.f32 %v1173, 0.0
        %v1176 = vmax.f32 %v1174, 0.0
        %1177 = vst [vmem:[#allocation3 + $0x70] sm:$0xff] %v1175
        %1178 = vst [vmem:[#allocation3 + $0x78] sm:$0xff] %v1176
        %s1179 = sadd.s32 %s979, 8
        %s1180 = sld [smem:[#allocation4 + %s1179]]
        %v1181 = vstv %s1180
        %v1182 = vmul.f32 %v971, %v1181
        %v1183 = vmul.f32 %v972, %v1181
        %s1184 = sld [smem:[#allocation7 + %s1179]]
        %v1185 = vstv %s1184
        %v1186 = vmul.f32 %v974, %v1185
        %v1187 = vmul.f32 %v975, %v1185
        %v1188 = vadd.f32 %v1182, %v1186
        %v1189 = vadd.f32 %v1183, %v1187
        %s1190 = sld [smem:[#allocation9 + %s1179]]
        %v1191 = vstv %s1190
        %v1192 = vmul.f32 %v977, %v1191
        %v1193 = vmul.f32 %v978, %v1191
        %v1194 = vadd.f32 %v1188, %v1192
        %v1195 = vadd.f32 %v1189, %v1193
        %s1196 = sld [smem:[#allocation10 + %s1179]]
        %v1197 = vstv %s1196
        %v1198 = vadd.f32 %v1194, %v1197
        %v1199 = vadd.f32 %v1195, %v1197
        %v1200 = vmax.f32 %v1198, 0.0
        %v1201 = vmax.f32 %v1199, 0.0
        %1202 = vst [vmem:[#allocation3 + $0x80] sm:$0xff] %v1200
        %1203 = vst [vmem:[#allocation3 + $0x88] sm:$0xff] %v1201
        %s1204 = sadd.s32 %s979, 9
        %s1205 = sld [smem:[#allocation4 + %s1204]]
        %v1206 = vstv %s1205
        %v1207 = vmul.f32 %v971, %v1206
        %v1208 = vmul.f32 %v972, %v1206
        %s1209 = sld [smem:[#allocation7 + %s1204]]
        %v1210 = vstv %s1209
        %v1211 = vmul.f32 %v974, %v1210
        %v1212 = vmul.f32 %v975, %v1210
        %v1213 = vadd.f32 %v1207, %v1211
        %v1214 = vadd.f32 %v1208, %v1212
        %s1215 = sld [smem:[#allocation9 + %s1204]]
        %v1216 = vstv %s1215
        %v1217 = vmul.f32 %v977, %v1216
        %v1218 = vmul.f32 %v978, %v1216
        %v1219 = vadd.f32 %v1213, %v1217
        %v1220 = vadd.f32 %v1214, %v1218
        %s1221 = sld [smem:[#allocation10 + %s1204]]
        %v1222 = vstv %s1221
        %v1223 = vadd.f32 %v1219, %v1222
        %v1224 = vadd.f32 %v1220, %v1222
        %v1225 = vmax.f32 %v1223, 0.0
        %v1226 = vmax.f32 %v1224, 0.0
        %1227 = vst [vmem:[#allocation3 + $0x90] sm:$0xff] %v1225
        %1228 = vst [vmem:[#allocation3 + $0x98] sm:$0xff] %v1226
        %s1229 = sadd.s32 %s979, 10
        %s1230 = sld [smem:[#allocation4 + %s1229]]
        %v1231 = vstv %s1230
        %v1232 = vmul.f32 %v971, %v1231
        %v1233 = vmul.f32 %v972, %v1231
        %s1234 = sld [smem:[#allocation7 + %s1229]]
        %v1235 = vstv %s1234
        %v1236 = vmul.f32 %v974, %v1235
        %v1237 = vmul.f32 %v975, %v1235
        %v1238 = vadd.f32 %v1232, %v1236
        %v1239 = vadd.f32 %v1233, %v1237
        %s1240 = sld [smem:[#allocation9 + %s1229]]
        %v1241 = vstv %s1240
        %v1242 = vmul.f32 %v977, %v1241
        %v1243 = vmul.f32 %v978, %v1241
        %v1244 = vadd.f32 %v1238, %v1242
        %v1245 = vadd.f32 %v1239, %v1243
        %s1246 = sld [smem:[#allocation10 + %s1229]]
        %v1247 = vstv %s1246
        %v1248 = vadd.f32 %v1244, %v1247
        %v1249 = vadd.f32 %v1245, %v1247
        %v1250 = vmax.f32 %v1248, 0.0
        %v1251 = vmax.f32 %v1249, 0.0
        %1252 = vst [vmem:[#allocation3 + $0xa0] sm:$0xff] %v1250
        %1253 = vst [vmem:[#allocation3 + $0xa8] sm:$0xff] %v1251
        %s1254 = sadd.s32 %s979, 11
        %s1255 = sld [smem:[#allocation4 + %s1254]]
        %v1256 = vstv %s1255
        %v1257 = vmul.f32 %v971, %v1256
        %v1258 = vmul.f32 %v972, %v1256
        %s1259 = sld [smem:[#allocation7 + %s1254]]
        %v1260 = vstv %s1259
        %v1261 = vmul.f32 %v974, %v1260
        %v1262 = vmul.f32 %v975, %v1260
        %v1263 = vadd.f32 %v1257, %v1261
        %v1264 = vadd.f32 %v1258, %v1262
        %s1265 = sld [smem:[#allocation9 + %s1254]]
        %v1266 = vstv %s1265
        %v1267 = vmul.f32 %v977, %v1266
        %v1268 = vmul.f32 %v978, %v1266
        %v1269 = vadd.f32 %v1263, %v1267
        %v1270 = vadd.f32 %v1264, %v1268
        %s1271 = sld [smem:[#allocation10 + %s1254]]
        %v1272 = vstv %s1271
        %v1273 = vadd.f32 %v1269, %v1272
        %v1274 = vadd.f32 %v1270, %v1272
        %v1275 = vmax.f32 %v1273, 0.0
        %v1276 = vmax.f32 %v1274, 0.0
        %1277 = vst [vmem:[#allocation3 + $0xb0] sm:$0xff] %v1275
        %1278 = vst [vmem:[#allocation3 + $0xb8] sm:$0xff] %v1276
        %s1279 = sadd.s32 %s979, 12
        %s1280 = sld [smem:[#allocation4 + %s1279]]
        %v1281 = vstv %s1280
        %v1282 = vmul.f32 %v971, %v1281
        %v1283 = vmul.f32 %v972, %v1281
        %s1284 = sld [smem:[#allocation7 + %s1279]]
        %v1285 = vstv %s1284
        %v1286 = vmul.f32 %v974, %v1285
        %v1287 = vmul.f32 %v975, %v1285
        %v1288 = vadd.f32 %v1282, %v1286
        %v1289 = vadd.f32 %v1283, %v1287
        %s1290 = sld [smem:[#allocation9 + %s1279]]
        %v1291 = vstv %s1290
        %v1292 = vmul.f32 %v977, %v1291
        %v1293 = vmul.f32 %v978, %v1291
        %v1294 = vadd.f32 %v1288, %v1292
        %v1295 = vadd.f32 %v1289, %v1293
        %s1296 = sld [smem:[#allocation10 + %s1279]]
        %v1297 = vstv %s1296
        %v1298 = vadd.f32 %v1294, %v1297
        %v1299 = vadd.f32 %v1295, %v1297
        %v1300 = vmax.f32 %v1298, 0.0
        %v1301 = vmax.f32 %v1299, 0.0
        %1302 = vst [vmem:[#allocation3 + $0xc0] sm:$0xff] %v1300
        %1303 = vst [vmem:[#allocation3 + $0xc8] sm:$0xff] %v1301
        %s1304 = sadd.s32 %s979, 13
        %s1305 = sld [smem:[#allocation4 + %s1304]]
        %v1306 = vstv %s1305
        %v1307 = vmul.f32 %v971, %v1306
        %v1308 = vmul.f32 %v972, %v1306
        %s1309 = sld [smem:[#allocation7 + %s1304]]
        %v1310 = vstv %s1309
        %v1311 = vmul.f32 %v974, %v1310
        %v1312 = vmul.f32 %v975, %v1310
        %v1313 = vadd.f32 %v1307, %v1311
        %v1314 = vadd.f32 %v1308, %v1312
        %s1315 = sld [smem:[#allocation9 + %s1304]]
        %v1316 = vstv %s1315
        %v1317 = vmul.f32 %v977, %v1316
        %v1318 = vmul.f32 %v978, %v1316
        %v1319 = vadd.f32 %v1313, %v1317
        %v1320 = vadd.f32 %v1314, %v1318
        %s1321 = sld [smem:[#allocation10 + %s1304]]
        %v1322 = vstv %s1321
        %v1323 = vadd.f32 %v1319, %v1322
        %v1324 = vadd.f32 %v1320, %v1322
        %v1325 = vmax.f32 %v1323, 0.0
        %v1326 = vmax.f32 %v1324, 0.0
        %1327 = vst [vmem:[#allocation3 + $0xd0] sm:$0xff] %v1325
        %1328 = vst [vmem:[#allocation3 + $0xd8] sm:$0xff] %v1326
        %s1329 = sadd.s32 %s979, 14
        %s1330 = sld [smem:[#allocation4 + %s1329]]
        %v1331 = vstv %s1330
        %v1332 = vmul.f32 %v971, %v1331
        %v1333 = vmul.f32 %v972, %v1331
        %s1334 = sld [smem:[#allocation7 + %s1329]]
        %v1335 = vstv %s1334
        %v1336 = vmul.f32 %v974, %v1335
        %v1337 = vmul.f32 %v975, %v1335
        %v1338 = vadd.f32 %v1332, %v1336
        %v1339 = vadd.f32 %v1333, %v1337
        %s1340 = sld [smem:[#allocation9 + %s1329]]
        %v1341 = vstv %s1340
        %v1342 = vmul.f32 %v977, %v1341
        %v1343 = vmul.f32 %v978, %v1341
        %v1344 = vadd.f32 %v1338, %v1342
        %v1345 = vadd.f32 %v1339, %v1343
        %s1346 = sld [smem:[#allocation10 + %s1329]]
        %v1347 = vstv %s1346
        %v1348 = vadd.f32 %v1344, %v1347
        %v1349 = vadd.f32 %v1345, %v1347
        %v1350 = vmax.f32 %v1348, 0.0
        %v1351 = vmax.f32 %v1349, 0.0
        %1352 = vst [vmem:[#allocation3 + $0xe0] sm:$0xff] %v1350
        %1353 = vst [vmem:[#allocation3 + $0xe8] sm:$0xff] %v1351
        %s1354 = sadd.s32 %s979, 15
        %s1355 = sld [smem:[#allocation4 + %s1354]]
        %v1356 = vstv %s1355
        %v1357 = vmul.f32 %v971, %v1356
        %v1358 = vmul.f32 %v972, %v1356
        %s1359 = sld [smem:[#allocation7 + %s1354]]
        %v1360 = vstv %s1359
        %v1361 = vmul.f32 %v974, %v1360
        %v1362 = vmul.f32 %v975, %v1360
        %v1363 = vadd.f32 %v1357, %v1361
        %v1364 = vadd.f32 %v1358, %v1362
        %s1365 = sld [smem:[#allocation9 + %s1354]]
        %v1366 = vstv %s1365
        %v1367 = vmul.f32 %v977, %v1366
        %v1368 = vmul.f32 %v978, %v1366
        %v1369 = vadd.f32 %v1363, %v1367
        %v1370 = vadd.f32 %v1364, %v1368
        %s1371 = sld [smem:[#allocation10 + %s1354]]
        %v1372 = vstv %s1371
        %v1373 = vadd.f32 %v1369, %v1372
        %v1374 = vadd.f32 %v1370, %v1372
        %v1375 = vmax.f32 %v1373, 0.0
        %v1376 = vmax.f32 %v1374, 0.0
        %1377 = vst [vmem:[#allocation3 + $0xf0] sm:$0xff] %v1375
        %1378 = vst [vmem:[#allocation3 + $0xf8] sm:$0xff] %v1376
        %s1379 = sadd.s32 %s979, 16
        %s1380 = sld [smem:[#allocation4 + %s1379]]
        %v1381 = vstv %s1380
        %v1382 = vmul.f32 %v971, %v1381
        %v1383 = vmul.f32 %v972, %v1381
        %s1384 = sld [smem:[#allocation7 + %s1379]]
        %v1385 = vstv %s1384
        %v1386 = vmul.f32 %v974, %v1385
        %v1387 = vmul.f32 %v975, %v1385
        %v1388 = vadd.f32 %v1382, %v1386
        %v1389 = vadd.f32 %v1383, %v1387
        %s1390 = sld [smem:[#allocation9 + %s1379]]
        %v1391 = vstv %s1390
        %v1392 = vmul.f32 %v977, %v1391
        %v1393 = vmul.f32 %v978, %v1391
        %v1394 = vadd.f32 %v1388, %v1392
        %v1395 = vadd.f32 %v1389, %v1393
        %s1396 = sld [smem:[#allocation10 + %s1379]]
        %v1397 = vstv %s1396
        %v1398 = vadd.f32 %v1394, %v1397
        %v1399 = vadd.f32 %v1395, %v1397
        %v1400 = vmax.f32 %v1398, 0.0
        %v1401 = vmax.f32 %v1399, 0.0
        %1402 = vst [vmem:[#allocation3 + $0x100] sm:$0xff] %v1400
        %1403 = vst [vmem:[#allocation3 + $0x108] sm:$0xff] %v1401
        %s1404 = sadd.s32 %s979, 17
        %s1405 = sld [smem:[#allocation4 + %s1404]]
        %v1406 = vstv %s1405
        %v1407 = vmul.f32 %v971, %v1406
        %v1408 = vmul.f32 %v972, %v1406
        %s1409 = sld [smem:[#allocation7 + %s1404]]
        %v1410 = vstv %s1409
        %v1411 = vmul.f32 %v974, %v1410
        %v1412 = vmul.f32 %v975, %v1410
        %v1413 = vadd.f32 %v1407, %v1411
        %v1414 = vadd.f32 %v1408, %v1412
        %s1415 = sld [smem:[#allocation9 + %s1404]]
        %v1416 = vstv %s1415
        %v1417 = vmul.f32 %v977, %v1416
        %v1418 = vmul.f32 %v978, %v1416
        %v1419 = vadd.f32 %v1413, %v1417
        %v1420 = vadd.f32 %v1414, %v1418
        %s1421 = sld [smem:[#allocation10 + %s1404]]
        %v1422 = vstv %s1421
        %v1423 = vadd.f32 %v1419, %v1422
        %v1424 = vadd.f32 %v1420, %v1422
        %v1425 = vmax.f32 %v1423, 0.0
        %v1426 = vmax.f32 %v1424, 0.0
        %1427 = vst [vmem:[#allocation3 + $0x110] sm:$0xff] %v1425
        %1428 = vst [vmem:[#allocation3 + $0x118] sm:$0xff] %v1426
        %s1429 = sadd.s32 %s979, 18
        %s1430 = sld [smem:[#allocation4 + %s1429]]
        %v1431 = vstv %s1430
        %v1432 = vmul.f32 %v971, %v1431
        %v1433 = vmul.f32 %v972, %v1431
        %s1434 = sld [smem:[#allocation7 + %s1429]]
        %v1435 = vstv %s1434
        %v1436 = vmul.f32 %v974, %v1435
        %v1437 = vmul.f32 %v975, %v1435
        %v1438 = vadd.f32 %v1432, %v1436
        %v1439 = vadd.f32 %v1433, %v1437
        %s1440 = sld [smem:[#allocation9 + %s1429]]
        %v1441 = vstv %s1440
        %v1442 = vmul.f32 %v977, %v1441
        %v1443 = vmul.f32 %v978, %v1441
        %v1444 = vadd.f32 %v1438, %v1442
        %v1445 = vadd.f32 %v1439, %v1443
        %s1446 = sld [smem:[#allocation10 + %s1429]]
        %v1447 = vstv %s1446
        %v1448 = vadd.f32 %v1444, %v1447
        %v1449 = vadd.f32 %v1445, %v1447
        %v1450 = vmax.f32 %v1448, 0.0
        %v1451 = vmax.f32 %v1449, 0.0
        %1452 = vst [vmem:[#allocation3 + $0x120] sm:$0xff] %v1450
        %1453 = vst [vmem:[#allocation3 + $0x128] sm:$0xff] %v1451
        %s1454 = sadd.s32 %s979, 19
        %s1455 = sld [smem:[#allocation4 + %s1454]]
        %v1456 = vstv %s1455
        %v1457 = vmul.f32 %v971, %v1456
        %v1458 = vmul.f32 %v972, %v1456
        %s1459 = sld [smem:[#allocation7 + %s1454]]
        %v1460 = vstv %s1459
        %v1461 = vmul.f32 %v974, %v1460
        %v1462 = vmul.f32 %v975, %v1460
        %v1463 = vadd.f32 %v1457, %v1461
        %v1464 = vadd.f32 %v1458, %v1462
        %s1465 = sld [smem:[#allocation9 + %s1454]]
        %v1466 = vstv %s1465
        %v1467 = vmul.f32 %v977, %v1466
        %v1468 = vmul.f32 %v978, %v1466
        %v1469 = vadd.f32 %v1463, %v1467
        %v1470 = vadd.f32 %v1464, %v1468
        %s1471 = sld [smem:[#allocation10 + %s1454]]
        %v1472 = vstv %s1471
        %v1473 = vadd.f32 %v1469, %v1472
        %v1474 = vadd.f32 %v1470, %v1472
        %v1475 = vmax.f32 %v1473, 0.0
        %v1476 = vmax.f32 %v1474, 0.0
        %1477 = vst [vmem:[#allocation3 + $0x130] sm:$0xff] %v1475
        %1478 = vst [vmem:[#allocation3 + $0x138] sm:$0xff] %v1476
        %s1479 = sadd.s32 %s979, 20
        %s1480 = sld [smem:[#allocation4 + %s1479]]
        %v1481 = vstv %s1480
        %v1482 = vmul.f32 %v971, %v1481
        %v1483 = vmul.f32 %v972, %v1481
        %s1484 = sld [smem:[#allocation7 + %s1479]]
        %v1485 = vstv %s1484
        %v1486 = vmul.f32 %v974, %v1485
        %v1487 = vmul.f32 %v975, %v1485
        %v1488 = vadd.f32 %v1482, %v1486
        %v1489 = vadd.f32 %v1483, %v1487
        %s1490 = sld [smem:[#allocation9 + %s1479]]
        %v1491 = vstv %s1490
        %v1492 = vmul.f32 %v977, %v1491
        %v1493 = vmul.f32 %v978, %v1491
        %v1494 = vadd.f32 %v1488, %v1492
        %v1495 = vadd.f32 %v1489, %v1493
        %s1496 = sld [smem:[#allocation10 + %s1479]]
        %v1497 = vstv %s1496
        %v1498 = vadd.f32 %v1494, %v1497
        %v1499 = vadd.f32 %v1495, %v1497
        %v1500 = vmax.f32 %v1498, 0.0
        %v1501 = vmax.f32 %v1499, 0.0
        %1502 = vst [vmem:[#allocation3 + $0x140] sm:$0xff] %v1500
        %1503 = vst [vmem:[#allocation3 + $0x148] sm:$0xff] %v1501
        %s1504 = sadd.s32 %s979, 21
        %s1505 = sld [smem:[#allocation4 + %s1504]]
        %v1506 = vstv %s1505
        %v1507 = vmul.f32 %v971, %v1506
        %v1508 = vmul.f32 %v972, %v1506
        %s1509 = sld [smem:[#allocation7 + %s1504]]
        %v1510 = vstv %s1509
        %v1511 = vmul.f32 %v974, %v1510
        %v1512 = vmul.f32 %v975, %v1510
        %v1513 = vadd.f32 %v1507, %v1511
        %v1514 = vadd.f32 %v1508, %v1512
        %s1515 = sld [smem:[#allocation9 + %s1504]]
        %v1516 = vstv %s1515
        %v1517 = vmul.f32 %v977, %v1516
        %v1518 = vmul.f32 %v978, %v1516
        %v1519 = vadd.f32 %v1513, %v1517
        %v1520 = vadd.f32 %v1514, %v1518
        %s1521 = sld [smem:[#allocation10 + %s1504]]
        %v1522 = vstv %s1521
        %v1523 = vadd.f32 %v1519, %v1522
        %v1524 = vadd.f32 %v1520, %v1522
        %v1525 = vmax.f32 %v1523, 0.0
        %v1526 = vmax.f32 %v1524, 0.0
        %1527 = vst [vmem:[#allocation3 + $0x150] sm:$0xff] %v1525
        %1528 = vst [vmem:[#allocation3 + $0x158] sm:$0xff] %v1526
        %s1529 = sadd.s32 %s979, 22
        %s1530 = sld [smem:[#allocation4 + %s1529]]
        %v1531 = vstv %s1530
        %v1532 = vmul.f32 %v971, %v1531
        %v1533 = vmul.f32 %v972, %v1531
        %s1534 = sld [smem:[#allocation7 + %s1529]]
        %v1535 = vstv %s1534
        %v1536 = vmul.f32 %v974, %v1535
        %v1537 = vmul.f32 %v975, %v1535
        %v1538 = vadd.f32 %v1532, %v1536
        %v1539 = vadd.f32 %v1533, %v1537
        %s1540 = sld [smem:[#allocation9 + %s1529]]
        %v1541 = vstv %s1540
        %v1542 = vmul.f32 %v977, %v1541
        %v1543 = vmul.f32 %v978, %v1541
        %v1544 = vadd.f32 %v1538, %v1542
        %v1545 = vadd.f32 %v1539, %v1543
        %s1546 = sld [smem:[#allocation10 + %s1529]]
        %v1547 = vstv %s1546
        %v1548 = vadd.f32 %v1544, %v1547
        %v1549 = vadd.f32 %v1545, %v1547
        %v1550 = vmax.f32 %v1548, 0.0
        %v1551 = vmax.f32 %v1549, 0.0
        %1552 = vst [vmem:[#allocation3 + $0x160] sm:$0xff] %v1550
        %1553 = vst [vmem:[#allocation3 + $0x168] sm:$0xff] %v1551
        %s1554 = sadd.s32 %s979, 23
        %s1555 = sld [smem:[#allocation4 + %s1554]]
        %v1556 = vstv %s1555
        %v1557 = vmul.f32 %v971, %v1556
        %v1558 = vmul.f32 %v972, %v1556
        %s1559 = sld [smem:[#allocation7 + %s1554]]
        %v1560 = vstv %s1559
        %v1561 = vmul.f32 %v974, %v1560
        %v1562 = vmul.f32 %v975, %v1560
        %v1563 = vadd.f32 %v1557, %v1561
        %v1564 = vadd.f32 %v1558, %v1562
        %s1565 = sld [smem:[#allocation9 + %s1554]]
        %v1566 = vstv %s1565
        %v1567 = vmul.f32 %v977, %v1566
        %v1568 = vmul.f32 %v978, %v1566
        %v1569 = vadd.f32 %v1563, %v1567
        %v1570 = vadd.f32 %v1564, %v1568
        %s1571 = sld [smem:[#allocation10 + %s1554]]
        %v1572 = vstv %s1571
        %v1573 = vadd.f32 %v1569, %v1572
        %v1574 = vadd.f32 %v1570, %v1572
        %v1575 = vmax.f32 %v1573, 0.0
        %v1576 = vmax.f32 %v1574, 0.0
        %1577 = vst [vmem:[#allocation3 + $0x170] sm:$0xff] %v1575
        %1578 = vst [vmem:[#allocation3 + $0x178] sm:$0xff] %v1576
        %s1579 = sadd.s32 %s979, 24
        %s1580 = sld [smem:[#allocation4 + %s1579]]
        %v1581 = vstv %s1580
        %v1582 = vmul.f32 %v971, %v1581
        %v1583 = vmul.f32 %v972, %v1581
        %s1584 = sld [smem:[#allocation7 + %s1579]]
        %v1585 = vstv %s1584
        %v1586 = vmul.f32 %v974, %v1585
        %v1587 = vmul.f32 %v975, %v1585
        %v1588 = vadd.f32 %v1582, %v1586
        %v1589 = vadd.f32 %v1583, %v1587
        %s1590 = sld [smem:[#allocation9 + %s1579]]
        %v1591 = vstv %s1590
        %v1592 = vmul.f32 %v977, %v1591
        %v1593 = vmul.f32 %v978, %v1591
        %v1594 = vadd.f32 %v1588, %v1592
        %v1595 = vadd.f32 %v1589, %v1593
        %s1596 = sld [smem:[#allocation10 + %s1579]]
        %v1597 = vstv %s1596
        %v1598 = vadd.f32 %v1594, %v1597
        %v1599 = vadd.f32 %v1595, %v1597
        %v1600 = vmax.f32 %v1598, 0.0
        %v1601 = vmax.f32 %v1599, 0.0
        %1602 = vst [vmem:[#allocation3 + $0x180] sm:$0xff] %v1600
        %1603 = vst [vmem:[#allocation3 + $0x188] sm:$0xff] %v1601
        %s1604 = sadd.s32 %s979, 25
        %s1605 = sld [smem:[#allocation4 + %s1604]]
        %v1606 = vstv %s1605
        %v1607 = vmul.f32 %v971, %v1606
        %v1608 = vmul.f32 %v972, %v1606
        %s1609 = sld [smem:[#allocation7 + %s1604]]
        %v1610 = vstv %s1609
        %v1611 = vmul.f32 %v974, %v1610
        %v1612 = vmul.f32 %v975, %v1610
        %v1613 = vadd.f32 %v1607, %v1611
        %v1614 = vadd.f32 %v1608, %v1612
        %s1615 = sld [smem:[#allocation9 + %s1604]]
        %v1616 = vstv %s1615
        %v1617 = vmul.f32 %v977, %v1616
        %v1618 = vmul.f32 %v978, %v1616
        %v1619 = vadd.f32 %v1613, %v1617
        %v1620 = vadd.f32 %v1614, %v1618
        %s1621 = sld [smem:[#allocation10 + %s1604]]
        %v1622 = vstv %s1621
        %v1623 = vadd.f32 %v1619, %v1622
        %v1624 = vadd.f32 %v1620, %v1622
        %v1625 = vmax.f32 %v1623, 0.0
        %v1626 = vmax.f32 %v1624, 0.0
        %1627 = vst [vmem:[#allocation3 + $0x190] sm:$0xff] %v1625
        %1628 = vst [vmem:[#allocation3 + $0x198] sm:$0xff] %v1626
        %s1629 = sadd.s32 %s979, 26
        %s1630 = sld [smem:[#allocation4 + %s1629]]
        %v1631 = vstv %s1630
        %v1632 = vmul.f32 %v971, %v1631
        %v1633 = vmul.f32 %v972, %v1631
        %s1634 = sld [smem:[#allocation7 + %s1629]]
        %v1635 = vstv %s1634
        %v1636 = vmul.f32 %v974, %v1635
        %v1637 = vmul.f32 %v975, %v1635
        %v1638 = vadd.f32 %v1632, %v1636
        %v1639 = vadd.f32 %v1633, %v1637
        %s1640 = sld [smem:[#allocation9 + %s1629]]
        %v1641 = vstv %s1640
        %v1642 = vmul.f32 %v977, %v1641
        %v1643 = vmul.f32 %v978, %v1641
        %v1644 = vadd.f32 %v1638, %v1642
        %v1645 = vadd.f32 %v1639, %v1643
        %s1646 = sld [smem:[#allocation10 + %s1629]]
        %v1647 = vstv %s1646
        %v1648 = vadd.f32 %v1644, %v1647
        %v1649 = vadd.f32 %v1645, %v1647
        %v1650 = vmax.f32 %v1648, 0.0
        %v1651 = vmax.f32 %v1649, 0.0
        %1652 = vst [vmem:[#allocation3 + $0x1a0] sm:$0xff] %v1650
        %1653 = vst [vmem:[#allocation3 + $0x1a8] sm:$0xff] %v1651
        %s1654 = sadd.s32 %s979, 27
        %s1655 = sld [smem:[#allocation4 + %s1654]]
        %v1656 = vstv %s1655
        %v1657 = vmul.f32 %v971, %v1656
        %v1658 = vmul.f32 %v972, %v1656
        %s1659 = sld [smem:[#allocation7 + %s1654]]
        %v1660 = vstv %s1659
        %v1661 = vmul.f32 %v974, %v1660
        %v1662 = vmul.f32 %v975, %v1660
        %v1663 = vadd.f32 %v1657, %v1661
        %v1664 = vadd.f32 %v1658, %v1662
        %s1665 = sld [smem:[#allocation9 + %s1654]]
        %v1666 = vstv %s1665
        %v1667 = vmul.f32 %v977, %v1666
        %v1668 = vmul.f32 %v978, %v1666
        %v1669 = vadd.f32 %v1663, %v1667
        %v1670 = vadd.f32 %v1664, %v1668
        %s1671 = sld [smem:[#allocation10 + %s1654]]
        %v1672 = vstv %s1671
        %v1673 = vadd.f32 %v1669, %v1672
        %v1674 = vadd.f32 %v1670, %v1672
        %v1675 = vmax.f32 %v1673, 0.0
        %v1676 = vmax.f32 %v1674, 0.0
        %1677 = vst [vmem:[#allocation3 + $0x1b0] sm:$0xff] %v1675
        %1678 = vst [vmem:[#allocation3 + $0x1b8] sm:$0xff] %v1676
        %s1679 = sadd.s32 %s979, 28
        %s1680 = sld [smem:[#allocation4 + %s1679]]
        %v1681 = vstv %s1680
        %v1682 = vmul.f32 %v971, %v1681
        %v1683 = vmul.f32 %v972, %v1681
        %s1684 = sld [smem:[#allocation7 + %s1679]]
        %v1685 = vstv %s1684
        %v1686 = vmul.f32 %v974, %v1685
        %v1687 = vmul.f32 %v975, %v1685
        %v1688 = vadd.f32 %v1682, %v1686
        %v1689 = vadd.f32 %v1683, %v1687
        %s1690 = sld [smem:[#allocation9 + %s1679]]
        %v1691 = vstv %s1690
        %v1692 = vmul.f32 %v977, %v1691
        %v1693 = vmul.f32 %v978, %v1691
        %v1694 = vadd.f32 %v1688, %v1692
        %v1695 = vadd.f32 %v1689, %v1693
        %s1696 = sld [smem:[#allocation10 + %s1679]]
        %v1697 = vstv %s1696
        %v1698 = vadd.f32 %v1694, %v1697
        %v1699 = vadd.f32 %v1695, %v1697
        %v1700 = vmax.f32 %v1698, 0.0
        %v1701 = vmax.f32 %v1699, 0.0
        %1702 = vst [vmem:[#allocation3 + $0x1c0] sm:$0xff] %v1700
        %1703 = vst [vmem:[#allocation3 + $0x1c8] sm:$0xff] %v1701
        %s1704 = sadd.s32 %s979, 29
        %s1705 = sld [smem:[#allocation4 + %s1704]]
        %v1706 = vstv %s1705
        %v1707 = vmul.f32 %v971, %v1706
        %v1708 = vmul.f32 %v972, %v1706
        %s1709 = sld [smem:[#allocation7 + %s1704]]
        %v1710 = vstv %s1709
        %v1711 = vmul.f32 %v974, %v1710
        %v1712 = vmul.f32 %v975, %v1710
        %v1713 = vadd.f32 %v1707, %v1711
        %v1714 = vadd.f32 %v1708, %v1712
        %s1715 = sld [smem:[#allocation9 + %s1704]]
        %v1716 = vstv %s1715
        %v1717 = vmul.f32 %v977, %v1716
        %v1718 = vmul.f32 %v978, %v1716
        %v1719 = vadd.f32 %v1713, %v1717
        %v1720 = vadd.f32 %v1714, %v1718
        %s1721 = sld [smem:[#allocation10 + %s1704]]
        %v1722 = vstv %s1721
        %v1723 = vadd.f32 %v1719, %v1722
        %v1724 = vadd.f32 %v1720, %v1722
        %v1725 = vmax.f32 %v1723, 0.0
        %v1726 = vmax.f32 %v1724, 0.0
        %1727 = vst [vmem:[#allocation3 + $0x1d0] sm:$0xff] %v1725
        %1728 = vst [vmem:[#allocation3 + $0x1d8] sm:$0xff] %v1726
        %s1729 = sadd.s32 %s979, 30
        %s1730 = sld [smem:[#allocation4 + %s1729]]
        %v1731 = vstv %s1730
        %v1732 = vmul.f32 %v971, %v1731
        %v1733 = vmul.f32 %v972, %v1731
        %s1734 = sld [smem:[#allocation7 + %s1729]]
        %v1735 = vstv %s1734
        %v1736 = vmul.f32 %v974, %v1735
        %v1737 = vmul.f32 %v975, %v1735
        %v1738 = vadd.f32 %v1732, %v1736
        %v1739 = vadd.f32 %v1733, %v1737
        %s1740 = sld [smem:[#allocation9 + %s1729]]
        %v1741 = vstv %s1740
        %v1742 = vmul.f32 %v977, %v1741
        %v1743 = vmul.f32 %v978, %v1741
        %v1744 = vadd.f32 %v1738, %v1742
        %v1745 = vadd.f32 %v1739, %v1743
        %s1746 = sld [smem:[#allocation10 + %s1729]]
        %v1747 = vstv %s1746
        %v1748 = vadd.f32 %v1744, %v1747
        %v1749 = vadd.f32 %v1745, %v1747
        %v1750 = vmax.f32 %v1748, 0.0
        %v1751 = vmax.f32 %v1749, 0.0
        %1752 = vst [vmem:[#allocation3 + $0x1e0] sm:$0xff] %v1750
        %1753 = vst [vmem:[#allocation3 + $0x1e8] sm:$0xff] %v1751
        %s1754 = sadd.s32 %s979, 31
        %s1755 = sld [smem:[#allocation4 + %s1754]]
        %v1756 = vstv %s1755
        %v1757 = vmul.f32 %v971, %v1756
        %v1758 = vmul.f32 %v972, %v1756
        %s1759 = sld [smem:[#allocation7 + %s1754]]
        %v1760 = vstv %s1759
        %v1761 = vmul.f32 %v974, %v1760
        %v1762 = vmul.f32 %v975, %v1760
        %v1763 = vadd.f32 %v1757, %v1761
        %v1764 = vadd.f32 %v1758, %v1762
        %s1765 = sld [smem:[#allocation9 + %s1754]]
        %v1766 = vstv %s1765
        %v1767 = vmul.f32 %v977, %v1766
        %v1768 = vmul.f32 %v978, %v1766
        %v1769 = vadd.f32 %v1763, %v1767
        %v1770 = vadd.f32 %v1764, %v1768
        %s1771 = sld [smem:[#allocation10 + %s1754]]
        %v1772 = vstv %s1771
        %v1773 = vadd.f32 %v1769, %v1772
        %v1774 = vadd.f32 %v1770, %v1772
        %v1775 = vmax.f32 %v1773, 0.0
        %v1776 = vmax.f32 %v1774, 0.0
        %1777 = vst [vmem:[#allocation3 + $0x1f0] sm:$0xff] %v1775
        %1778 = vst [vmem:[#allocation3 + $0x1f8] sm:$0xff] %v1776
        %s1779 = sadd.s32 %s979, 32
        %s1780 = sld [smem:[#allocation4 + %s1779]]
        %v1781 = vstv %s1780
        %v1782 = vmul.f32 %v971, %v1781
        %v1783 = vmul.f32 %v972, %v1781
        %s1784 = sld [smem:[#allocation7 + %s1779]]
        %v1785 = vstv %s1784
        %v1786 = vmul.f32 %v974, %v1785
        %v1787 = vmul.f32 %v975, %v1785
        %v1788 = vadd.f32 %v1782, %v1786
        %v1789 = vadd.f32 %v1783, %v1787
        %s1790 = sld [smem:[#allocation9 + %s1779]]
        %v1791 = vstv %s1790
        %v1792 = vmul.f32 %v977, %v1791
        %v1793 = vmul.f32 %v978, %v1791
        %v1794 = vadd.f32 %v1788, %v1792
        %v1795 = vadd.f32 %v1789, %v1793
        %s1796 = sld [smem:[#allocation10 + %s1779]]
        %v1797 = vstv %s1796
        %v1798 = vadd.f32 %v1794, %v1797
        %v1799 = vadd.f32 %v1795, %v1797
        %v1800 = vmax.f32 %v1798, 0.0
        %v1801 = vmax.f32 %v1799, 0.0
        %1802 = vst [vmem:[#allocation3 + $0x200] sm:$0xff] %v1800
        %1803 = vst [vmem:[#allocation3 + $0x208] sm:$0xff] %v1801
        %s1804 = sadd.s32 %s979, 33
        %s1805 = sld [smem:[#allocation4 + %s1804]]
        %v1806 = vstv %s1805
        %v1807 = vmul.f32 %v971, %v1806
        %v1808 = vmul.f32 %v972, %v1806
        %s1809 = sld [smem:[#allocation7 + %s1804]]
        %v1810 = vstv %s1809
        %v1811 = vmul.f32 %v974, %v1810
        %v1812 = vmul.f32 %v975, %v1810
        %v1813 = vadd.f32 %v1807, %v1811
        %v1814 = vadd.f32 %v1808, %v1812
        %s1815 = sld [smem:[#allocation9 + %s1804]]
        %v1816 = vstv %s1815
        %v1817 = vmul.f32 %v977, %v1816
        %v1818 = vmul.f32 %v978, %v1816
        %v1819 = vadd.f32 %v1813, %v1817
        %v1820 = vadd.f32 %v1814, %v1818
        %s1821 = sld [smem:[#allocation10 + %s1804]]
        %v1822 = vstv %s1821
        %v1823 = vadd.f32 %v1819, %v1822
        %v1824 = vadd.f32 %v1820, %v1822
        %v1825 = vmax.f32 %v1823, 0.0
        %v1826 = vmax.f32 %v1824, 0.0
        %1827 = vst [vmem:[#allocation3 + $0x210] sm:$0xff] %v1825
        %1828 = vst [vmem:[#allocation3 + $0x218] sm:$0xff] %v1826
        %s1829 = sadd.s32 %s979, 34
        %s1830 = sld [smem:[#allocation4 + %s1829]]
        %v1831 = vstv %s1830
        %v1832 = vmul.f32 %v971, %v1831
        %v1833 = vmul.f32 %v972, %v1831
        %s1834 = sld [smem:[#allocation7 + %s1829]]
        %v1835 = vstv %s1834
        %v1836 = vmul.f32 %v974, %v1835
        %v1837 = vmul.f32 %v975, %v1835
        %v1838 = vadd.f32 %v1832, %v1836
        %v1839 = vadd.f32 %v1833, %v1837
        %s1840 = sld [smem:[#allocation9 + %s1829]]
        %v1841 = vstv %s1840
        %v1842 = vmul.f32 %v977, %v1841
        %v1843 = vmul.f32 %v978, %v1841
        %v1844 = vadd.f32 %v1838, %v1842
        %v1845 = vadd.f32 %v1839, %v1843
        %s1846 = sld [smem:[#allocation10 + %s1829]]
        %v1847 = vstv %s1846
        %v1848 = vadd.f32 %v1844, %v1847
        %v1849 = vadd.f32 %v1845, %v1847
        %v1850 = vmax.f32 %v1848, 0.0
        %v1851 = vmax.f32 %v1849, 0.0
        %1852 = vst [vmem:[#allocation3 + $0x220] sm:$0xff] %v1850
        %1853 = vst [vmem:[#allocation3 + $0x228] sm:$0xff] %v1851
        %s1854 = sadd.s32 %s979, 35
        %s1855 = sld [smem:[#allocation4 + %s1854]]
        %v1856 = vstv %s1855
        %v1857 = vmul.f32 %v971, %v1856
        %v1858 = vmul.f32 %v972, %v1856
        %s1859 = sld [smem:[#allocation7 + %s1854]]
        %v1860 = vstv %s1859
        %v1861 = vmul.f32 %v974, %v1860
        %v1862 = vmul.f32 %v975, %v1860
        %v1863 = vadd.f32 %v1857, %v1861
        %v1864 = vadd.f32 %v1858, %v1862
        %s1865 = sld [smem:[#allocation9 + %s1854]]
        %v1866 = vstv %s1865
        %v1867 = vmul.f32 %v977, %v1866
        %v1868 = vmul.f32 %v978, %v1866
        %v1869 = vadd.f32 %v1863, %v1867
        %v1870 = vadd.f32 %v1864, %v1868
        %s1871 = sld [smem:[#allocation10 + %s1854]]
        %v1872 = vstv %s1871
        %v1873 = vadd.f32 %v1869, %v1872
        %v1874 = vadd.f32 %v1870, %v1872
        %v1875 = vmax.f32 %v1873, 0.0
        %v1876 = vmax.f32 %v1874, 0.0
        %1877 = vst [vmem:[#allocation3 + $0x230] sm:$0xff] %v1875
        %1878 = vst [vmem:[#allocation3 + $0x238] sm:$0xff] %v1876
        %s1879 = sadd.s32 %s979, 36
        %s1880 = sld [smem:[#allocation4 + %s1879]]
        %v1881 = vstv %s1880
        %v1882 = vmul.f32 %v971, %v1881
        %v1883 = vmul.f32 %v972, %v1881
        %s1884 = sld [smem:[#allocation7 + %s1879]]
        %v1885 = vstv %s1884
        %v1886 = vmul.f32 %v974, %v1885
        %v1887 = vmul.f32 %v975, %v1885
        %v1888 = vadd.f32 %v1882, %v1886
        %v1889 = vadd.f32 %v1883, %v1887
        %s1890 = sld [smem:[#allocation9 + %s1879]]
        %v1891 = vstv %s1890
        %v1892 = vmul.f32 %v977, %v1891
        %v1893 = vmul.f32 %v978, %v1891
        %v1894 = vadd.f32 %v1888, %v1892
        %v1895 = vadd.f32 %v1889, %v1893
        %s1896 = sld [smem:[#allocation10 + %s1879]]
        %v1897 = vstv %s1896
        %v1898 = vadd.f32 %v1894, %v1897
        %v1899 = vadd.f32 %v1895, %v1897
        %v1900 = vmax.f32 %v1898, 0.0
        %v1901 = vmax.f32 %v1899, 0.0
        %1902 = vst [vmem:[#allocation3 + $0x240] sm:$0xff] %v1900
        %1903 = vst [vmem:[#allocation3 + $0x248] sm:$0xff] %v1901
        %s1904 = sadd.s32 %s979, 37
        %s1905 = sld [smem:[#allocation4 + %s1904]]
        %v1906 = vstv %s1905
        %v1907 = vmul.f32 %v971, %v1906
        %v1908 = vmul.f32 %v972, %v1906
        %s1909 = sld [smem:[#allocation7 + %s1904]]
        %v1910 = vstv %s1909
        %v1911 = vmul.f32 %v974, %v1910
        %v1912 = vmul.f32 %v975, %v1910
        %v1913 = vadd.f32 %v1907, %v1911
        %v1914 = vadd.f32 %v1908, %v1912
        %s1915 = sld [smem:[#allocation9 + %s1904]]
        %v1916 = vstv %s1915
        %v1917 = vmul.f32 %v977, %v1916
        %v1918 = vmul.f32 %v978, %v1916
        %v1919 = vadd.f32 %v1913, %v1917
        %v1920 = vadd.f32 %v1914, %v1918
        %s1921 = sld [smem:[#allocation10 + %s1904]]
        %v1922 = vstv %s1921
        %v1923 = vadd.f32 %v1919, %v1922
        %v1924 = vadd.f32 %v1920, %v1922
        %v1925 = vmax.f32 %v1923, 0.0
        %v1926 = vmax.f32 %v1924, 0.0
        %1927 = vst [vmem:[#allocation3 + $0x250] sm:$0xff] %v1925
        %1928 = vst [vmem:[#allocation3 + $0x258] sm:$0xff] %v1926
        %s1929 = sadd.s32 %s979, 38
        %s1930 = sld [smem:[#allocation4 + %s1929]]
        %v1931 = vstv %s1930
        %v1932 = vmul.f32 %v971, %v1931
        %v1933 = vmul.f32 %v972, %v1931
        %s1934 = sld [smem:[#allocation7 + %s1929]]
        %v1935 = vstv %s1934
        %v1936 = vmul.f32 %v974, %v1935
        %v1937 = vmul.f32 %v975, %v1935
        %v1938 = vadd.f32 %v1932, %v1936
        %v1939 = vadd.f32 %v1933, %v1937
        %s1940 = sld [smem:[#allocation9 + %s1929]]
        %v1941 = vstv %s1940
        %v1942 = vmul.f32 %v977, %v1941
        %v1943 = vmul.f32 %v978, %v1941
        %v1944 = vadd.f32 %v1938, %v1942
        %v1945 = vadd.f32 %v1939, %v1943
        %s1946 = sld [smem:[#allocation10 + %s1929]]
        %v1947 = vstv %s1946
        %v1948 = vadd.f32 %v1944, %v1947
        %v1949 = vadd.f32 %v1945, %v1947
        %v1950 = vmax.f32 %v1948, 0.0
        %v1951 = vmax.f32 %v1949, 0.0
        %1952 = vst [vmem:[#allocation3 + $0x260] sm:$0xff] %v1950
        %1953 = vst [vmem:[#allocation3 + $0x268] sm:$0xff] %v1951
        %s1954 = sadd.s32 %s979, 39
        %s1955 = sld [smem:[#allocation4 + %s1954]]
        %v1956 = vstv %s1955
        %v1957 = vmul.f32 %v971, %v1956
        %v1958 = vmul.f32 %v972, %v1956
        %s1959 = sld [smem:[#allocation7 + %s1954]]
        %v1960 = vstv %s1959
        %v1961 = vmul.f32 %v974, %v1960
        %v1962 = vmul.f32 %v975, %v1960
        %v1963 = vadd.f32 %v1957, %v1961
        %v1964 = vadd.f32 %v1958, %v1962
        %s1965 = sld [smem:[#allocation9 + %s1954]]
        %v1966 = vstv %s1965
        %v1967 = vmul.f32 %v977, %v1966
        %v1968 = vmul.f32 %v978, %v1966
        %v1969 = vadd.f32 %v1963, %v1967
        %v1970 = vadd.f32 %v1964, %v1968
        %s1971 = sld [smem:[#allocation10 + %s1954]]
        %v1972 = vstv %s1971
        %v1973 = vadd.f32 %v1969, %v1972
        %v1974 = vadd.f32 %v1970, %v1972
        %v1975 = vmax.f32 %v1973, 0.0
        %v1976 = vmax.f32 %v1974, 0.0
        %1977 = vst [vmem:[#allocation3 + $0x270] sm:$0xff] %v1975
        %1978 = vst [vmem:[#allocation3 + $0x278] sm:$0xff] %v1976
        %s1979 = sadd.s32 %s979, 40
        %s1980 = sld [smem:[#allocation4 + %s1979]]
        %v1981 = vstv %s1980
        %v1982 = vmul.f32 %v971, %v1981
        %v1983 = vmul.f32 %v972, %v1981
        %s1984 = sld [smem:[#allocation7 + %s1979]]
        %v1985 = vstv %s1984
        %v1986 = vmul.f32 %v974, %v1985
        %v1987 = vmul.f32 %v975, %v1985
        %v1988 = vadd.f32 %v1982, %v1986
        %v1989 = vadd.f32 %v1983, %v1987
        %s1990 = sld [smem:[#allocation9 + %s1979]]
        %v1991 = vstv %s1990
        %v1992 = vmul.f32 %v977, %v1991
        %v1993 = vmul.f32 %v978, %v1991
        %v1994 = vadd.f32 %v1988, %v1992
        %v1995 = vadd.f32 %v1989, %v1993
        %s1996 = sld [smem:[#allocation10 + %s1979]]
        %v1997 = vstv %s1996
        %v1998 = vadd.f32 %v1994, %v1997
        %v1999 = vadd.f32 %v1995, %v1997
        %v2000 = vmax.f32 %v1998, 0.0
        %v2001 = vmax.f32 %v1999, 0.0
        %2002 = vst [vmem:[#allocation3 + $0x280] sm:$0xff] %v2000
        %2003 = vst [vmem:[#allocation3 + $0x288] sm:$0xff] %v2001
        %s2004 = sadd.s32 %s979, 41
        %s2005 = sld [smem:[#allocation4 + %s2004]]
        %v2006 = vstv %s2005
        %v2007 = vmul.f32 %v971, %v2006
        %v2008 = vmul.f32 %v972, %v2006
        %s2009 = sld [smem:[#allocation7 + %s2004]]
        %v2010 = vstv %s2009
        %v2011 = vmul.f32 %v974, %v2010
        %v2012 = vmul.f32 %v975, %v2010
        %v2013 = vadd.f32 %v2007, %v2011
        %v2014 = vadd.f32 %v2008, %v2012
        %s2015 = sld [smem:[#allocation9 + %s2004]]
        %v2016 = vstv %s2015
        %v2017 = vmul.f32 %v977, %v2016
        %v2018 = vmul.f32 %v978, %v2016
        %v2019 = vadd.f32 %v2013, %v2017
        %v2020 = vadd.f32 %v2014, %v2018
        %s2021 = sld [smem:[#allocation10 + %s2004]]
        %v2022 = vstv %s2021
        %v2023 = vadd.f32 %v2019, %v2022
        %v2024 = vadd.f32 %v2020, %v2022
        %v2025 = vmax.f32 %v2023, 0.0
        %v2026 = vmax.f32 %v2024, 0.0
        %2027 = vst [vmem:[#allocation3 + $0x290] sm:$0xff] %v2025
        %2028 = vst [vmem:[#allocation3 + $0x298] sm:$0xff] %v2026
        %s2029 = sadd.s32 %s979, 42
        %s2030 = sld [smem:[#allocation4 + %s2029]]
        %v2031 = vstv %s2030
        %v2032 = vmul.f32 %v971, %v2031
        %v2033 = vmul.f32 %v972, %v2031
        %s2034 = sld [smem:[#allocation7 + %s2029]]
        %v2035 = vstv %s2034
        %v2036 = vmul.f32 %v974, %v2035
        %v2037 = vmul.f32 %v975, %v2035
        %v2038 = vadd.f32 %v2032, %v2036
        %v2039 = vadd.f32 %v2033, %v2037
        %s2040 = sld [smem:[#allocation9 + %s2029]]
        %v2041 = vstv %s2040
        %v2042 = vmul.f32 %v977, %v2041
        %v2043 = vmul.f32 %v978, %v2041
        %v2044 = vadd.f32 %v2038, %v2042
        %v2045 = vadd.f32 %v2039, %v2043
        %s2046 = sld [smem:[#allocation10 + %s2029]]
        %v2047 = vstv %s2046
        %v2048 = vadd.f32 %v2044, %v2047
        %v2049 = vadd.f32 %v2045, %v2047
        %v2050 = vmax.f32 %v2048, 0.0
        %v2051 = vmax.f32 %v2049, 0.0
        %2052 = vst [vmem:[#allocation3 + $0x2a0] sm:$0xff] %v2050
        %2053 = vst [vmem:[#allocation3 + $0x2a8] sm:$0xff] %v2051
        %s2054 = sadd.s32 %s979, 43
        %s2055 = sld [smem:[#allocation4 + %s2054]]
        %v2056 = vstv %s2055
        %v2057 = vmul.f32 %v971, %v2056
        %v2058 = vmul.f32 %v972, %v2056
        %s2059 = sld [smem:[#allocation7 + %s2054]]
        %v2060 = vstv %s2059
        %v2061 = vmul.f32 %v974, %v2060
        %v2062 = vmul.f32 %v975, %v2060
        %v2063 = vadd.f32 %v2057, %v2061
        %v2064 = vadd.f32 %v2058, %v2062
        %s2065 = sld [smem:[#allocation9 + %s2054]]
        %v2066 = vstv %s2065
        %v2067 = vmul.f32 %v977, %v2066
        %v2068 = vmul.f32 %v978, %v2066
        %v2069 = vadd.f32 %v2063, %v2067
        %v2070 = vadd.f32 %v2064, %v2068
        %s2071 = sld [smem:[#allocation10 + %s2054]]
        %v2072 = vstv %s2071
        %v2073 = vadd.f32 %v2069, %v2072
        %v2074 = vadd.f32 %v2070, %v2072
        %v2075 = vmax.f32 %v2073, 0.0
        %v2076 = vmax.f32 %v2074, 0.0
        %2077 = vst [vmem:[#allocation3 + $0x2b0] sm:$0xff] %v2075
        %2078 = vst [vmem:[#allocation3 + $0x2b8] sm:$0xff] %v2076
        %s2079 = sadd.s32 %s979, 44
        %s2080 = sld [smem:[#allocation4 + %s2079]]
        %v2081 = vstv %s2080
        %v2082 = vmul.f32 %v971, %v2081
        %v2083 = vmul.f32 %v972, %v2081
        %s2084 = sld [smem:[#allocation7 + %s2079]]
        %v2085 = vstv %s2084
        %v2086 = vmul.f32 %v974, %v2085
        %v2087 = vmul.f32 %v975, %v2085
        %v2088 = vadd.f32 %v2082, %v2086
        %v2089 = vadd.f32 %v2083, %v2087
        %s2090 = sld [smem:[#allocation9 + %s2079]]
        %v2091 = vstv %s2090
        %v2092 = vmul.f32 %v977, %v2091
        %v2093 = vmul.f32 %v978, %v2091
        %v2094 = vadd.f32 %v2088, %v2092
        %v2095 = vadd.f32 %v2089, %v2093
        %s2096 = sld [smem:[#allocation10 + %s2079]]
        %v2097 = vstv %s2096
        %v2098 = vadd.f32 %v2094, %v2097
        %v2099 = vadd.f32 %v2095, %v2097
        %v2100 = vmax.f32 %v2098, 0.0
        %v2101 = vmax.f32 %v2099, 0.0
        %2102 = vst [vmem:[#allocation3 + $0x2c0] sm:$0xff] %v2100
        %2103 = vst [vmem:[#allocation3 + $0x2c8] sm:$0xff] %v2101
        %s2104 = sadd.s32 %s979, 45
        %s2105 = sld [smem:[#allocation4 + %s2104]]
        %v2106 = vstv %s2105
        %v2107 = vmul.f32 %v971, %v2106
        %v2108 = vmul.f32 %v972, %v2106
        %s2109 = sld [smem:[#allocation7 + %s2104]]
        %v2110 = vstv %s2109
        %v2111 = vmul.f32 %v974, %v2110
        %v2112 = vmul.f32 %v975, %v2110
        %v2113 = vadd.f32 %v2107, %v2111
        %v2114 = vadd.f32 %v2108, %v2112
        %s2115 = sld [smem:[#allocation9 + %s2104]]
        %v2116 = vstv %s2115
        %v2117 = vmul.f32 %v977, %v2116
        %v2118 = vmul.f32 %v978, %v2116
        %v2119 = vadd.f32 %v2113, %v2117
        %v2120 = vadd.f32 %v2114, %v2118
        %s2121 = sld [smem:[#allocation10 + %s2104]]
        %v2122 = vstv %s2121
        %v2123 = vadd.f32 %v2119, %v2122
        %v2124 = vadd.f32 %v2120, %v2122
        %v2125 = vmax.f32 %v2123, 0.0
        %v2126 = vmax.f32 %v2124, 0.0
        %2127 = vst [vmem:[#allocation3 + $0x2d0] sm:$0xff] %v2125
        %2128 = vst [vmem:[#allocation3 + $0x2d8] sm:$0xff] %v2126
        %s2129 = sadd.s32 %s979, 46
        %s2130 = sld [smem:[#allocation4 + %s2129]]
        %v2131 = vstv %s2130
        %v2132 = vmul.f32 %v971, %v2131
        %v2133 = vmul.f32 %v972, %v2131
        %s2134 = sld [smem:[#allocation7 + %s2129]]
        %v2135 = vstv %s2134
        %v2136 = vmul.f32 %v974, %v2135
        %v2137 = vmul.f32 %v975, %v2135
        %v2138 = vadd.f32 %v2132, %v2136
        %v2139 = vadd.f32 %v2133, %v2137
        %s2140 = sld [smem:[#allocation9 + %s2129]]
        %v2141 = vstv %s2140
        %v2142 = vmul.f32 %v977, %v2141
        %v2143 = vmul.f32 %v978, %v2141
        %v2144 = vadd.f32 %v2138, %v2142
        %v2145 = vadd.f32 %v2139, %v2143
        %s2146 = sld [smem:[#allocation10 + %s2129]]
        %v2147 = vstv %s2146
        %v2148 = vadd.f32 %v2144, %v2147
        %v2149 = vadd.f32 %v2145, %v2147
        %v2150 = vmax.f32 %v2148, 0.0
        %v2151 = vmax.f32 %v2149, 0.0
        %2152 = vst [vmem:[#allocation3 + $0x2e0] sm:$0xff] %v2150
        %2153 = vst [vmem:[#allocation3 + $0x2e8] sm:$0xff] %v2151
        %s2154 = sadd.s32 %s979, 47
        %s2155 = sld [smem:[#allocation4 + %s2154]]
        %v2156 = vstv %s2155
        %v2157 = vmul.f32 %v971, %v2156
        %v2158 = vmul.f32 %v972, %v2156
        %s2159 = sld [smem:[#allocation7 + %s2154]]
        %v2160 = vstv %s2159
        %v2161 = vmul.f32 %v974, %v2160
        %v2162 = vmul.f32 %v975, %v2160
        %v2163 = vadd.f32 %v2157, %v2161
        %v2164 = vadd.f32 %v2158, %v2162
        %s2165 = sld [smem:[#allocation9 + %s2154]]
        %v2166 = vstv %s2165
        %v2167 = vmul.f32 %v977, %v2166
        %v2168 = vmul.f32 %v978, %v2166
        %v2169 = vadd.f32 %v2163, %v2167
        %v2170 = vadd.f32 %v2164, %v2168
        %s2171 = sld [smem:[#allocation10 + %s2154]]
        %v2172 = vstv %s2171
        %v2173 = vadd.f32 %v2169, %v2172
        %v2174 = vadd.f32 %v2170, %v2172
        %v2175 = vmax.f32 %v2173, 0.0
        %v2176 = vmax.f32 %v2174, 0.0
        %2177 = vst [vmem:[#allocation3 + $0x2f0] sm:$0xff] %v2175
        %2178 = vst [vmem:[#allocation3 + $0x2f8] sm:$0xff] %v2176
        %s2179 = sadd.s32 %s979, 48
        %s2180 = sld [smem:[#allocation4 + %s2179]]
        %v2181 = vstv %s2180
        %v2182 = vmul.f32 %v971, %v2181
        %v2183 = vmul.f32 %v972, %v2181
        %s2184 = sld [smem:[#allocation7 + %s2179]]
        %v2185 = vstv %s2184
        %v2186 = vmul.f32 %v974, %v2185
        %v2187 = vmul.f32 %v975, %v2185
        %v2188 = vadd.f32 %v2182, %v2186
        %v2189 = vadd.f32 %v2183, %v2187
        %s2190 = sld [smem:[#allocation9 + %s2179]]
        %v2191 = vstv %s2190
        %v2192 = vmul.f32 %v977, %v2191
        %v2193 = vmul.f32 %v978, %v2191
        %v2194 = vadd.f32 %v2188, %v2192
        %v2195 = vadd.f32 %v2189, %v2193
        %s2196 = sld [smem:[#allocation10 + %s2179]]
        %v2197 = vstv %s2196
        %v2198 = vadd.f32 %v2194, %v2197
        %v2199 = vadd.f32 %v2195, %v2197
        %v2200 = vmax.f32 %v2198, 0.0
        %v2201 = vmax.f32 %v2199, 0.0
        %2202 = vst [vmem:[#allocation3 + $0x300] sm:$0xff] %v2200
        %2203 = vst [vmem:[#allocation3 + $0x308] sm:$0xff] %v2201
        %s2204 = sadd.s32 %s979, 49
        %s2205 = sld [smem:[#allocation4 + %s2204]]
        %v2206 = vstv %s2205
        %v2207 = vmul.f32 %v971, %v2206
        %v2208 = vmul.f32 %v972, %v2206
        %s2209 = sld [smem:[#allocation7 + %s2204]]
        %v2210 = vstv %s2209
        %v2211 = vmul.f32 %v974, %v2210
        %v2212 = vmul.f32 %v975, %v2210
        %v2213 = vadd.f32 %v2207, %v2211
        %v2214 = vadd.f32 %v2208, %v2212
        %s2215 = sld [smem:[#allocation9 + %s2204]]
        %v2216 = vstv %s2215
        %v2217 = vmul.f32 %v977, %v2216
        %v2218 = vmul.f32 %v978, %v2216
        %v2219 = vadd.f32 %v2213, %v2217
        %v2220 = vadd.f32 %v2214, %v2218
        %s2221 = sld [smem:[#allocation10 + %s2204]]
        %v2222 = vstv %s2221
        %v2223 = vadd.f32 %v2219, %v2222
        %v2224 = vadd.f32 %v2220, %v2222
        %v2225 = vmax.f32 %v2223, 0.0
        %v2226 = vmax.f32 %v2224, 0.0
        %2227 = vst [vmem:[#allocation3 + $0x310] sm:$0xff] %v2225
        %2228 = vst [vmem:[#allocation3 + $0x318] sm:$0xff] %v2226
        %v2229 = vld [vmem:[#allocation2] sm:$0xff]
        %v2230 = vld [vmem:[#allocation3] sm:$0xff]
        %v2231 = vld [vmem:[#allocation3 + $0x8] sm:$0xff]
        %v2232 = vld [vmem:[#allocation3 + $0x10] sm:$0xff]
        %v2233 = vld [vmem:[#allocation3 + $0x18] sm:$0xff]
        %v2234 = vld [vmem:[#allocation3 + $0x20] sm:$0xff]
        %v2235 = vld [vmem:[#allocation3 + $0x28] sm:$0xff]
        %v2236 = vld [vmem:[#allocation3 + $0x30] sm:$0xff]
        %v2237 = vld [vmem:[#allocation3 + $0x38] sm:$0xff]
        %v2238 = vld [vmem:[#allocation3 + $0x40] sm:$0xff]
        %v2239 = vld [vmem:[#allocation3 + $0x48] sm:$0xff]
        %v2240 = vld [vmem:[#allocation3 + $0x50] sm:$0xff]
        %v2241 = vld [vmem:[#allocation3 + $0x58] sm:$0xff]
        %v2242 = vld [vmem:[#allocation3 + $0x60] sm:$0xff]
        %v2243 = vld [vmem:[#allocation3 + $0x68] sm:$0xff]
        %v2244 = vld [vmem:[#allocation3 + $0x70] sm:$0xff]
        %v2245 = vld [vmem:[#allocation3 + $0x78] sm:$0xff]
        %v2246 = vld [vmem:[#allocation3 + $0x80] sm:$0xff]
        %v2247 = vld [vmem:[#allocation3 + $0x88] sm:$0xff]
        %v2248 = vld [vmem:[#allocation3 + $0x90] sm:$0xff]
        %v2249 = vld [vmem:[#allocation3 + $0x98] sm:$0xff]
        %v2250 = vld [vmem:[#allocation3 + $0xa0] sm:$0xff]
        %v2251 = vld [vmem:[#allocation3 + $0xa8] sm:$0xff]
        %v2252 = vld [vmem:[#allocation3 + $0xb0] sm:$0xff]
        %v2253 = vld [vmem:[#allocation3 + $0xb8] sm:$0xff]
        %v2254 = vld [vmem:[#allocation3 + $0xc0] sm:$0xff]
        %v2255 = vld [vmem:[#allocation3 + $0xc8] sm:$0xff]
        %v2256 = vld [vmem:[#allocation3 + $0xd0] sm:$0xff]
        %v2257 = vld [vmem:[#allocation3 + $0xd8] sm:$0xff]
        %v2258 = vld [vmem:[#allocation3 + $0xe0] sm:$0xff]
        %v2259 = vld [vmem:[#allocation3 + $0xe8] sm:$0xff]
        %v2260 = vld [vmem:[#allocation3 + $0xf0] sm:$0xff]
        %v2261 = vld [vmem:[#allocation3 + $0xf8] sm:$0xff]
        %v2262 = vld [vmem:[#allocation3 + $0x100] sm:$0xff]
        %v2263 = vld [vmem:[#allocation3 + $0x108] sm:$0xff]
        %v2264 = vld [vmem:[#allocation3 + $0x110] sm:$0xff]
        %v2265 = vld [vmem:[#allocation3 + $0x118] sm:$0xff]
        %v2266 = vld [vmem:[#allocation3 + $0x120] sm:$0xff]
        %v2267 = vld [vmem:[#allocation3 + $0x128] sm:$0xff]
        %v2268 = vld [vmem:[#allocation3 + $0x130] sm:$0xff]
        %v2269 = vld [vmem:[#allocation3 + $0x138] sm:$0xff]
        %v2270 = vld [vmem:[#allocation3 + $0x140] sm:$0xff]
        %v2271 = vld [vmem:[#allocation3 + $0x148] sm:$0xff]
        %v2272 = vld [vmem:[#allocation3 + $0x150] sm:$0xff]
        %v2273 = vld [vmem:[#allocation3 + $0x158] sm:$0xff]
        %v2274 = vld [vmem:[#allocation3 + $0x160] sm:$0xff]
        %v2275 = vld [vmem:[#allocation3 + $0x168] sm:$0xff]
        %v2276 = vld [vmem:[#allocation3 + $0x170] sm:$0xff]
        %v2277 = vld [vmem:[#allocation3 + $0x178] sm:$0xff]
        %v2278 = vld [vmem:[#allocation3 + $0x180] sm:$0xff]
        %v2279 = vld [vmem:[#allocation3 + $0x188] sm:$0xff]
        %v2280 = vld [vmem:[#allocation3 + $0x190] sm:$0xff]
        %v2281 = vld [vmem:[#allocation3 + $0x198] sm:$0xff]
        %v2282 = vld [vmem:[#allocation3 + $0x1a0] sm:$0xff]
        %v2283 = vld [vmem:[#allocation3 + $0x1a8] sm:$0xff]
        %v2284 = vld [vmem:[#allocation3 + $0x1b0] sm:$0xff]
        %v2285 = vld [vmem:[#allocation3 + $0x1b8] sm:$0xff]
        %v2286 = vld [vmem:[#allocation3 + $0x1c0] sm:$0xff]
        %v2287 = vld [vmem:[#allocation3 + $0x1c8] sm:$0xff]
        %v2288 = vld [vmem:[#allocation3 + $0x1d0] sm:$0xff]
        %v2289 = vld [vmem:[#allocation3 + $0x1d8] sm:$0xff]
        %v2290 = vld [vmem:[#allocation3 + $0x1e0] sm:$0xff]
        %v2291 = vld [vmem:[#allocation3 + $0x1e8] sm:$0xff]
        %v2292 = vld [vmem:[#allocation3 + $0x1f0] sm:$0xff]
        %v2293 = vld [vmem:[#allocation3 + $0x1f8] sm:$0xff]
        %v2294 = vld [vmem:[#allocation3 + $0x200] sm:$0xff]
        %v2295 = vld [vmem:[#allocation3 + $0x208] sm:$0xff]
        %v2296 = vld [vmem:[#allocation3 + $0x210] sm:$0xff]
        %v2297 = vld [vmem:[#allocation3 + $0x218] sm:$0xff]
        %v2298 = vld [vmem:[#allocation3 + $0x220] sm:$0xff]
        %v2299 = vld [vmem:[#allocation3 + $0x228] sm:$0xff]
        %v2300 = vld [vmem:[#allocation3 + $0x230] sm:$0xff]
        %v2301 = vld [vmem:[#allocation3 + $0x238] sm:$0xff]
        %v2302 = vld [vmem:[#allocation3 + $0x240] sm:$0xff]
        %v2303 = vld [vmem:[#allocation3 + $0x248] sm:$0xff]
        %v2304 = vld [vmem:[#allocation3 + $0x250] sm:$0xff]
        %v2305 = vld [vmem:[#allocation3 + $0x258] sm:$0xff]
        %v2306 = vld [vmem:[#allocation3 + $0x260] sm:$0xff]
        %v2307 = vld [vmem:[#allocation3 + $0x268] sm:$0xff]
        %v2308 = vld [vmem:[#allocation3 + $0x270] sm:$0xff]
        %v2309 = vld [vmem:[#allocation3 + $0x278] sm:$0xff]
        %v2310 = vld [vmem:[#allocation3 + $0x280] sm:$0xff]
        %v2311 = vld [vmem:[#allocation3 + $0x288] sm:$0xff]
        %v2312 = vld [vmem:[#allocation3 + $0x290] sm:$0xff]
        %v2313 = vld [vmem:[#allocation3 + $0x298] sm:$0xff]
        %v2314 = vld [vmem:[#allocation3 + $0x2a0] sm:$0xff]
        %v2315 = vld [vmem:[#allocation3 + $0x2a8] sm:$0xff]
        %v2316 = vld [vmem:[#allocation3 + $0x2b0] sm:$0xff]
        %v2317 = vld [vmem:[#allocation3 + $0x2b8] sm:$0xff]
        %v2318 = vld [vmem:[#allocation3 + $0x2c0] sm:$0xff]
        %v2319 = vld [vmem:[#allocation3 + $0x2c8] sm:$0xff]
        %v2320 = vld [vmem:[#allocation3 + $0x2d0] sm:$0xff]
        %v2321 = vld [vmem:[#allocation3 + $0x2d8] sm:$0xff]
        %v2322 = vld [vmem:[#allocation3 + $0x2e0] sm:$0xff]
        %v2323 = vld [vmem:[#allocation3 + $0x2e8] sm:$0xff]
        %v2324 = vld [vmem:[#allocation3 + $0x2f0] sm:$0xff]
        %v2325 = vld [vmem:[#allocation3 + $0x2f8] sm:$0xff]
        %v2326 = vld [vmem:[#allocation3 + $0x300] sm:$0xff]
        %v2327 = vld [vmem:[#allocation3 + $0x308] sm:$0xff]
        %v2328 = vld [vmem:[#allocation3 + $0x310] sm:$0xff]
        %v2329 = vld [vmem:[#allocation3 + $0x318] sm:$0xff]
        %v2330 = vld [vmem:[%s523] sm:$0xff]
        %v2331 = vld [vmem:[%s523 + $0x8] sm:$0xff]
        %v2332 = vld [vmem:[%s523 + $0x10] sm:$0xff]
        %v2333 = vld [vmem:[%s523 + $0x18] sm:$0xff]
        %v2334 = vld [vmem:[%s523 + $0x20] sm:$0xff]
        %v2335 = vld [vmem:[%s523 + $0x28] sm:$0xff]
        %v2336 = vld [vmem:[%s523 + $0x30] sm:$0xff]
        %v2337 = vld [vmem:[%s523 + $0x38] sm:$0xff]
        %v2338 = vld [vmem:[%s523 + $0x40] sm:$0xff]
        %v2339 = vld [vmem:[%s523 + $0x48] sm:$0xff]
        %v2340 = vld [vmem:[%s523 + $0x50] sm:$0xff]
        %v2341 = vld [vmem:[%s523 + $0x58] sm:$0xff]
        %v2342 = vld [vmem:[%s523 + $0x60] sm:$0xff]
        %v2343 = vld [vmem:[%s523 + $0x68] sm:$0xff]
        %v2344 = vld [vmem:[%s523 + $0x70] sm:$0xff]
        %v2345 = vld [vmem:[%s523 + $0x78] sm:$0xff]
        %v2346 = vld [vmem:[%s523 + $0x80] sm:$0xff]
        %v2347 = vld [vmem:[%s523 + $0x88] sm:$0xff]
        %v2348 = vld [vmem:[%s523 + $0x90] sm:$0xff]
        %v2349 = vld [vmem:[%s523 + $0x98] sm:$0xff]
        %v2350 = vld [vmem:[%s523 + $0xa0] sm:$0xff]
        %v2351 = vld [vmem:[%s523 + $0xa8] sm:$0xff]
        %v2352 = vld [vmem:[%s523 + $0xb0] sm:$0xff]
        %v2353 = vld [vmem:[%s523 + $0xb8] sm:$0xff]
        %v2354 = vld [vmem:[%s523 + $0xc0] sm:$0xff]
        %v2355 = vld [vmem:[%s523 + $0xc8] sm:$0xff]
        %v2356 = vld [vmem:[%s523 + $0xd0] sm:$0xff]
        %v2357 = vld [vmem:[%s523 + $0xd8] sm:$0xff]
        %v2358 = vld [vmem:[%s523 + $0xe0] sm:$0xff]
        %v2359 = vld [vmem:[%s523 + $0xe8] sm:$0xff]
        %v2360 = vld [vmem:[%s523 + $0xf0] sm:$0xff]
        %v2361 = vld [vmem:[%s523 + $0xf8] sm:$0xff]
        %v2362 = vld [vmem:[%s523 + $0x100] sm:$0xff]
        %v2363 = vld [vmem:[%s523 + $0x108] sm:$0xff]
        %v2364 = vld [vmem:[%s523 + $0x110] sm:$0xff]
        %v2365 = vld [vmem:[%s523 + $0x118] sm:$0xff]
        %v2366 = vld [vmem:[%s523 + $0x120] sm:$0xff]
        %v2367 = vld [vmem:[%s523 + $0x128] sm:$0xff]
        %v2368 = vld [vmem:[%s523 + $0x130] sm:$0xff]
        %v2369 = vld [vmem:[%s523 + $0x138] sm:$0xff]
        %v2370 = vld [vmem:[%s523 + $0x140] sm:$0xff]
        %v2371 = vld [vmem:[%s523 + $0x148] sm:$0xff]
        %v2372 = vld [vmem:[%s523 + $0x150] sm:$0xff]
        %v2373 = vld [vmem:[%s523 + $0x158] sm:$0xff]
        %v2374 = vld [vmem:[%s523 + $0x160] sm:$0xff]
        %v2375 = vld [vmem:[%s523 + $0x168] sm:$0xff]
        %v2376 = vld [vmem:[%s523 + $0x170] sm:$0xff]
        %v2377 = vld [vmem:[%s523 + $0x178] sm:$0xff]
        %v2378 = vld [vmem:[%s523 + $0x180] sm:$0xff]
        %v2379 = vld [vmem:[%s523 + $0x188] sm:$0xff]
        %v2380 = vld [vmem:[%s523 + $0x190] sm:$0xff]
        %v2381 = vld [vmem:[%s523 + $0x198] sm:$0xff]
        %v2382 = vld [vmem:[%s523 + $0x1a0] sm:$0xff]
        %v2383 = vld [vmem:[%s523 + $0x1a8] sm:$0xff]
        %v2384 = vld [vmem:[%s523 + $0x1b0] sm:$0xff]
        %v2385 = vld [vmem:[%s523 + $0x1b8] sm:$0xff]
        %v2386 = vld [vmem:[%s523 + $0x1c0] sm:$0xff]
        %v2387 = vld [vmem:[%s523 + $0x1c8] sm:$0xff]
        %v2388 = vld [vmem:[%s523 + $0x1d0] sm:$0xff]
        %v2389 = vld [vmem:[%s523 + $0x1d8] sm:$0xff]
        %v2390 = vld [vmem:[%s523 + $0x1e0] sm:$0xff]
        %v2391 = vld [vmem:[%s523 + $0x1e8] sm:$0xff]
        %v2392 = vld [vmem:[%s523 + $0x1f0] sm:$0xff]
        %v2393 = vld [vmem:[%s523 + $0x1f8] sm:$0xff]
        %v2394 = vld [vmem:[%s523 + $0x200] sm:$0xff]
        %v2395 = vld [vmem:[%s523 + $0x208] sm:$0xff]
        %v2396 = vld [vmem:[%s523 + $0x210] sm:$0xff]
        %v2397 = vld [vmem:[%s523 + $0x218] sm:$0xff]
        %v2398 = vld [vmem:[%s523 + $0x220] sm:$0xff]
        %v2399 = vld [vmem:[%s523 + $0x228] sm:$0xff]
        %v2400 = vld [vmem:[%s523 + $0x230] sm:$0xff]
        %v2401 = vld [vmem:[%s523 + $0x238] sm:$0xff]
        %v2402 = vld [vmem:[%s523 + $0x240] sm:$0xff]
        %v2403 = vld [vmem:[%s523 + $0x248] sm:$0xff]
        %v2404 = vld [vmem:[%s523 + $0x250] sm:$0xff]
        %v2405 = vld [vmem:[%s523 + $0x258] sm:$0xff]
        %v2406 = vld [vmem:[%s523 + $0x260] sm:$0xff]
        %v2407 = vld [vmem:[%s523 + $0x268] sm:$0xff]
        %v2408 = vld [vmem:[%s523 + $0x270] sm:$0xff]
        %v2409 = vld [vmem:[%s523 + $0x278] sm:$0xff]
        %v2410 = vld [vmem:[%s523 + $0x280] sm:$0xff]
        %v2411 = vld [vmem:[%s523 + $0x288] sm:$0xff]
        %v2412 = vld [vmem:[%s523 + $0x290] sm:$0xff]
        %v2413 = vld [vmem:[%s523 + $0x298] sm:$0xff]
        %v2414 = vld [vmem:[%s523 + $0x2a0] sm:$0xff]
        %v2415 = vld [vmem:[%s523 + $0x2a8] sm:$0xff]
        %v2416 = vld [vmem:[%s523 + $0x2b0] sm:$0xff]
        %v2417 = vld [vmem:[%s523 + $0x2b8] sm:$0xff]
        %v2418 = vld [vmem:[%s523 + $0x2c0] sm:$0xff]
        %v2419 = vld [vmem:[%s523 + $0x2c8] sm:$0xff]
        %v2420 = vld [vmem:[%s523 + $0x2d0] sm:$0xff]
        %v2421 = vld [vmem:[%s523 + $0x2d8] sm:$0xff]
        %v2422 = vld [vmem:[%s523 + $0x2e0] sm:$0xff]
        %v2423 = vld [vmem:[%s523 + $0x2e8] sm:$0xff]
        %v2424 = vld [vmem:[%s523 + $0x2f0] sm:$0xff]
        %v2425 = vld [vmem:[%s523 + $0x2f8] sm:$0xff]
        %v2426 = vld [vmem:[%s523 + $0x300] sm:$0xff]
        %v2427 = vld [vmem:[%s523 + $0x308] sm:$0xff]
        %v2428 = vld [vmem:[%s523 + $0x310] sm:$0xff]
        %v2429 = vld [vmem:[%s523 + $0x318] sm:$0xff]
        %v2430 = vld [vmem:[%s523 + $0x320] sm:$0x3]
        %v2431 = vld [vmem:[%s523 + $0x328] sm:$0x3]
        %v2432 = vld [vmem:[%s523 + $0x330] sm:$0x3]
        %v2433 = vld [vmem:[%s523 + $0x338] sm:$0x3]
        %v2434 = vld [vmem:[%s523 + $0x340] sm:$0x3]
        %v2435 = vld [vmem:[%s523 + $0x348] sm:$0x3]
        %v2436 = vld [vmem:[%s523 + $0x350] sm:$0x3]
        %v2437 = vld [vmem:[%s523 + $0x358] sm:$0x3]
        %v2438 = vld [vmem:[%s523 + $0x360] sm:$0x3]
        %v2439 = vld [vmem:[%s523 + $0x368] sm:$0x3]
        %v2440 = vld [vmem:[%s523 + $0x370] sm:$0x3]
        %v2441 = vld [vmem:[%s523 + $0x378] sm:$0x3]
        %v2442 = vld [vmem:[%s523 + $0x380] sm:$0x3]
        %v2443 = vld [vmem:[%s523 + $0x388] sm:$0x3]
        %v2444 = vld [vmem:[%s523 + $0x390] sm:$0x3]
        %v2445 = vld [vmem:[%s523 + $0x398] sm:$0x3]
        %v2446 = vld [vmem:[%s523 + $0x3a0] sm:$0x3]
        %v2447 = vld [vmem:[%s523 + $0x3a8] sm:$0x3]
        %v2448 = vld [vmem:[%s523 + $0x3b0] sm:$0x3]
        %v2449 = vld [vmem:[%s523 + $0x3b8] sm:$0x3]
        %v2450 = vld [vmem:[%s523 + $0x3c0] sm:$0x3]
        %v2451 = vld [vmem:[%s523 + $0x3c8] sm:$0x3]
        %v2452 = vld [vmem:[%s523 + $0x3d0] sm:$0x3]
        %v2453 = vld [vmem:[%s523 + $0x3d8] sm:$0x3]
        %v2454 = vld [vmem:[%s523 + $0x3e0] sm:$0x3]
        %v2455 = vld [vmem:[%s523 + $0x3e8] sm:$0x3]
        %v2456 = vld [vmem:[%s523 + $0x3f0] sm:$0x3]
        %v2457 = vld [vmem:[%s523 + $0x3f8] sm:$0x3]
        %v2458 = vld [vmem:[%s523 + $0x400] sm:$0x3]
        %v2459 = vld [vmem:[%s523 + $0x408] sm:$0x3]
        %v2460 = vld [vmem:[%s523 + $0x410] sm:$0x3]
        %v2461 = vld [vmem:[%s523 + $0x418] sm:$0x3]
        %v2462 = vld [vmem:[%s523 + $0x420] sm:$0x3]
        %v2463 = vld [vmem:[%s523 + $0x428] sm:$0x3]
        %v2464 = vld [vmem:[%s523 + $0x430] sm:$0x3]
        %v2465 = vld [vmem:[%s523 + $0x438] sm:$0x3]
        %v2466 = vld [vmem:[%s523 + $0x440] sm:$0x3]
        %v2467 = vld [vmem:[%s523 + $0x448] sm:$0x3]
        %v2468 = vld [vmem:[%s523 + $0x450] sm:$0x3]
        %v2469 = vld [vmem:[%s523 + $0x458] sm:$0x3]
        %v2470 = vld [vmem:[%s523 + $0x460] sm:$0x3]
        %v2471 = vld [vmem:[%s523 + $0x468] sm:$0x3]
        %v2472 = vld [vmem:[%s523 + $0x470] sm:$0x3]
        %v2473 = vld [vmem:[%s523 + $0x478] sm:$0x3]
        %v2474 = vld [vmem:[%s523 + $0x480] sm:$0x3]
        %v2475 = vld [vmem:[%s523 + $0x488] sm:$0x3]
        %v2476 = vld [vmem:[%s523 + $0x490] sm:$0x3]
        %v2477 = vld [vmem:[%s523 + $0x498] sm:$0x3]
        %v2478 = vld [vmem:[%s523 + $0x4a0] sm:$0x3]
        %v2479 = vld [vmem:[%s523 + $0x4a8] sm:$0x3]
        %v2480 = vld [vmem:[%s523 + $0x4b0] sm:$0x3]
        %v2481 = vld [vmem:[%s523 + $0x4b8] sm:$0x3]
        %v2482 = vld [vmem:[%s523 + $0x4c0] sm:$0x3]
        %v2483 = vld [vmem:[%s523 + $0x4c8] sm:$0x3]
        %v2484 = vld [vmem:[%s523 + $0x4d0] sm:$0x3]
        %v2485 = vld [vmem:[%s523 + $0x4d8] sm:$0x3]
        %v2486 = vld [vmem:[%s523 + $0x4e0] sm:$0x3]
        %v2487 = vld [vmem:[%s523 + $0x4e8] sm:$0x3]
        %v2488 = vld [vmem:[%s523 + $0x4f0] sm:$0x3]
        %v2489 = vld [vmem:[%s523 + $0x4f8] sm:$0x3]
        %v2490 = vld [vmem:[%s523 + $0x500] sm:$0x3]
        %v2491 = vld [vmem:[%s523 + $0x508] sm:$0x3]
        %v2492 = vld [vmem:[%s523 + $0x510] sm:$0x3]
        %v2493 = vld [vmem:[%s523 + $0x518] sm:$0x3]
        %v2494 = vld [vmem:[%s523 + $0x520] sm:$0x3]
        %v2495 = vld [vmem:[%s523 + $0x528] sm:$0x3]
        %v2496 = vld [vmem:[%s523 + $0x530] sm:$0x3]
        %v2497 = vld [vmem:[%s523 + $0x538] sm:$0x3]
        %v2498 = vld [vmem:[%s523 + $0x540] sm:$0x3]
        %v2499 = vld [vmem:[%s523 + $0x548] sm:$0x3]
        %v2500 = vld [vmem:[%s523 + $0x550] sm:$0x3]
        %v2501 = vld [vmem:[%s523 + $0x558] sm:$0x3]
        %v2502 = vld [vmem:[%s523 + $0x560] sm:$0x3]
        %v2503 = vld [vmem:[%s523 + $0x568] sm:$0x3]
        %v2504 = vld [vmem:[%s523 + $0x570] sm:$0x3]
        %v2505 = vld [vmem:[%s523 + $0x578] sm:$0x3]
        %v2506 = vld [vmem:[%s523 + $0x580] sm:$0x3]
        %v2507 = vld [vmem:[%s523 + $0x588] sm:$0x3]
        %v2508 = vld [vmem:[%s523 + $0x590] sm:$0x3]
        %v2509 = vld [vmem:[%s523 + $0x598] sm:$0x3]
        %v2510 = vld [vmem:[%s523 + $0x5a0] sm:$0x3]
        %v2511 = vld [vmem:[%s523 + $0x5a8] sm:$0x3]
        %v2512 = vld [vmem:[%s523 + $0x5b0] sm:$0x3]
        %v2513 = vld [vmem:[%s523 + $0x5b8] sm:$0x3]
        %v2514 = vld [vmem:[%s523 + $0x5c0] sm:$0x3]
        %v2515 = vld [vmem:[%s523 + $0x5c8] sm:$0x3]
        %v2516 = vld [vmem:[%s523 + $0x5d0] sm:$0x3]
        %v2517 = vld [vmem:[%s523 + $0x5d8] sm:$0x3]
        %v2518 = vld [vmem:[%s523 + $0x5e0] sm:$0x3]
        %v2519 = vld [vmem:[%s523 + $0x5e8] sm:$0x3]
        %v2520 = vld [vmem:[%s523 + $0x5f0] sm:$0x3]
        %v2521 = vld [vmem:[%s523 + $0x5f8] sm:$0x3]
        %v2522 = vld [vmem:[%s523 + $0x600] sm:$0x3]
        %v2523 = vld [vmem:[%s523 + $0x608] sm:$0x3]
        %v2524 = vld [vmem:[%s523 + $0x610] sm:$0x3]
        %v2525 = vld [vmem:[%s523 + $0x618] sm:$0x3]
        %v2526 = vld [vmem:[%s523 + $0x620] sm:$0x3]
        %v2527 = vld [vmem:[%s523 + $0x628] sm:$0x3]
        %v2528 = vld [vmem:[%s523 + $0x630] sm:$0x3]
        %v2529 = vld [vmem:[%s523 + $0x638] sm:$0x3]
        %2530 = vmatprep.subr.mxu0 %v2331
        %2531 = vmatpush1.xpose.msra.mxu0 %v2330
        %2532 = vmatprep.subr.mxu0 %v2431
        %2533 = vmatpush1.xpose.msra.mxu0 %v2430
        %2534 = vmatprep.subr.mxu0 0.0
        %2535 = vmatpush1.xpose.msra.mxu0 0.0
        %2536 = vmatprep.subr.mxu0 0.0
        %2537 = vmatpush1.xpose.msra.mxu0 0.0
        %2538 = vmatprep.subr.mxu0 0.0
        %2539 = vmatpush1.xpose.msra.mxu0 0.0
        %2540 = vmatprep.subr.mxu0 0.0
        %2541 = vmatpush1.xpose.msra.mxu0 0.0
        %2542 = vmatprep.subr.mxu0 0.0
        %2543 = vmatpush1.xpose.msra.mxu0 0.0
        %2544 = vmatprep.subr.mxu0 0.0
        %2545 = vmatpush1.xpose.msra.mxu0 0.0
        %2546 = vmatprep.subr.mxu0 0.0
        %2547 = vmatpush1.xpose.msra.mxu0 0.0
        %2548 = vmatprep.subr.mxu0 0.0
        %2549 = vmatpush1.xpose.msra.mxu0 0.0
        %2550 = vmatprep.subr.mxu0 0.0
        %2551 = vmatpush1.xpose.msra.mxu0 0.0
        %2552 = vmatprep.subr.mxu0 0.0
        %2553 = vmatpush1.xpose.msra.mxu0 0.0
        %2554 = vmatprep.subr.mxu0 0.0
        %2555 = vmatpush1.xpose.msra.mxu0 0.0
        %2556 = vmatprep.subr.mxu0 0.0
        %2557 = vmatpush1.xpose.msra.mxu0 0.0
        %2558 = vmatprep.subr.mxu0 0.0
        %2559 = vmatpush1.xpose.msra.mxu0 0.0
        %2560 = vmatprep.subr.mxu0 0.0
        %2561 = vmatpush1.xpose.msra.mxu0 0.0
        %2562 = vmatprep.subr.mxu0 0.0
        %2563 = vmatpush1.xpose.msra.mxu0 0.0
        %2564 = vmatprep.subr.mxu0 0.0
        %2565 = vmatpush1.xpose.msra.mxu0 0.0
        %2566 = vmatprep.subr.mxu0 0.0
        %2567 = vmatpush1.xpose.msra.mxu0 0.0
        %2568 = vmatprep.subr.mxu0 0.0
        %2569 = vmatpush1.xpose.msra.mxu0 0.0
        %2570 = vmatprep.subr.mxu0 0.0
        %2571 = vmatpush1.xpose.msra.mxu0 0.0
        %2572 = vmatprep.subr.mxu0 0.0
        %2573 = vmatpush1.xpose.msra.mxu0 0.0
        %2574 = vmatprep.subr.mxu0 0.0
        %2575 = vmatpush1.xpose.msra.mxu0 0.0
        %2576 = vmatprep.subr.mxu0 0.0
        %2577 = vmatpush1.xpose.msra.mxu0 0.0
        %2578 = vmatprep.subr.mxu0 0.0
        %2579 = vmatpush1.xpose.msra.mxu0 0.0
        %2580 = vmatprep.subr.mxu0 0.0
        %2581 = vmatpush1.xpose.msra.mxu0 0.0
        %2582 = vmatprep.subr.mxu0 0.0
        %2583 = vmatpush1.xpose.msra.mxu0 0.0
        %2584 = vmatprep.subr.mxu0 0.0
        %2585 = vmatpush1.xpose.msra.mxu0 0.0
        %2586 = vmatprep.subr.mxu0 0.0
        %2587 = vmatpush1.xpose.msra.mxu0 0.0
        %2588 = vmatprep.subr.mxu0 0.0
        %2589 = vmatpush1.xpose.msra.mxu0 0.0
        %2590 = vmatprep.subr.mxu0 0.0
        %2591 = vmatpush1.xpose.msra.mxu0 0.0
        %2592 = vmatprep.subr.mxu0 0.0
        %2593 = vmatpush1.xpose.msra.mxu0 0.0
        %2594 = vmatprep.mubr.f32.mxu0 %v2231
        %2595 = vmatmul.mubr.f32.gmra.mrb[0].mxu0 %v2230
        %v2596 = vpop.f32.mrb[0].mxu0
        %v2597 = vadd.f32 0.0, %v2596
        %v2598 = vpop.f32.mrb[0].mxu0
        %2599 = vdwg.mxu0
        %2600 = vmatprep.subr.mxu0 %v2333
        %2601 = vmatpush1.xpose.msra.mxu0 %v2332
        %2602 = vmatprep.subr.mxu0 %v2433
        %2603 = vmatpush1.xpose.msra.mxu0 %v2432
        %2604 = vmatprep.subr.mxu0 0.0
        %2605 = vmatpush1.xpose.msra.mxu0 0.0
        %2606 = vmatprep.subr.mxu0 0.0
        %2607 = vmatpush1.xpose.msra.mxu0 0.0
        %2608 = vmatprep.subr.mxu0 0.0
        %2609 = vmatpush1.xpose.msra.mxu0 0.0
        %2610 = vmatprep.subr.mxu0 0.0
        %2611 = vmatpush1.xpose.msra.mxu0 0.0
        %2612 = vmatprep.subr.mxu0 0.0
        %2613 = vmatpush1.xpose.msra.mxu0 0.0
        %2614 = vmatprep.subr.mxu0 0.0
        %2615 = vmatpush1.xpose.msra.mxu0 0.0
        %2616 = vmatprep.subr.mxu0 0.0
        %2617 = vmatpush1.xpose.msra.mxu0 0.0
        %2618 = vmatprep.subr.mxu0 0.0
        %2619 = vmatpush1.xpose.msra.mxu0 0.0
        %2620 = vmatprep.subr.mxu0 0.0
        %2621 = vmatpush1.xpose.msra.mxu0 0.0
        %2622 = vmatprep.subr.mxu0 0.0
        %2623 = vmatpush1.xpose.msra.mxu0 0.0
        %2624 = vmatprep.subr.mxu0 0.0
        %2625 = vmatpush1.xpose.msra.mxu0 0.0
        %2626 = vmatprep.subr.mxu0 0.0
        %2627 = vmatpush1.xpose.msra.mxu0 0.0
        %2628 = vmatprep.subr.mxu0 0.0
        %2629 = vmatpush1.xpose.msra.mxu0 0.0
        %2630 = vmatprep.subr.mxu0 0.0
        %2631 = vmatpush1.xpose.msra.mxu0 0.0
        %2632 = vmatprep.subr.mxu0 0.0
        %2633 = vmatpush1.xpose.msra.mxu0 0.0
        %2634 = vmatprep.subr.mxu0 0.0
        %2635 = vmatpush1.xpose.msra.mxu0 0.0
        %2636 = vmatprep.subr.mxu0 0.0
        %2637 = vmatpush1.xpose.msra.mxu0 0.0
        %2638 = vmatprep.subr.mxu0 0.0
        %2639 = vmatpush1.xpose.msra.mxu0 0.0
        %2640 = vmatprep.subr.mxu0 0.0
        %2641 = vmatpush1.xpose.msra.mxu0 0.0
        %2642 = vmatprep.subr.mxu0 0.0
        %2643 = vmatpush1.xpose.msra.mxu0 0.0
        %2644 = vmatprep.subr.mxu0 0.0
        %2645 = vmatpush1.xpose.msra.mxu0 0.0
        %2646 = vmatprep.subr.mxu0 0.0
        %2647 = vmatpush1.xpose.msra.mxu0 0.0
        %2648 = vmatprep.subr.mxu0 0.0
        %2649 = vmatpush1.xpose.msra.mxu0 0.0
        %2650 = vmatprep.subr.mxu0 0.0
        %2651 = vmatpush1.xpose.msra.mxu0 0.0
        %2652 = vmatprep.subr.mxu0 0.0
        %2653 = vmatpush1.xpose.msra.mxu0 0.0
        %2654 = vmatprep.subr.mxu0 0.0
        %2655 = vmatpush1.xpose.msra.mxu0 0.0
        %2656 = vmatprep.subr.mxu0 0.0
        %2657 = vmatpush1.xpose.msra.mxu0 0.0
        %2658 = vmatprep.subr.mxu0 0.0
        %2659 = vmatpush1.xpose.msra.mxu0 0.0
        %2660 = vmatprep.subr.mxu0 0.0
        %2661 = vmatpush1.xpose.msra.mxu0 0.0
        %2662 = vmatprep.subr.mxu0 0.0
        %2663 = vmatpush1.xpose.msra.mxu0 0.0
        %2664 = vmatprep.mubr.f32.mxu0 %v2233
        %2665 = vmatmul.mubr.f32.gmra.mrb[0].mxu0 %v2232
        %v2666 = vpop.f32.mrb[0].mxu0
        %v2667 = vadd.f32 %v2597, %v2666
        %v2668 = vpop.f32.mrb[0].mxu0
        %2669 = vdwg.mxu0
        %2670 = vmatprep.subr.mxu0 %v2335
        %2671 = vmatpush1.xpose.msra.mxu0 %v2334
        %2672 = vmatprep.subr.mxu0 %v2435
        %2673 = vmatpush1.xpose.msra.mxu0 %v2434
        %2674 = vmatprep.subr.mxu0 0.0
        %2675 = vmatpush1.xpose.msra.mxu0 0.0
        %2676 = vmatprep.subr.mxu0 0.0
        %2677 = vmatpush1.xpose.msra.mxu0 0.0
        %2678 = vmatprep.subr.mxu0 0.0
        %2679 = vmatpush1.xpose.msra.mxu0 0.0
        %2680 = vmatprep.subr.mxu0 0.0
        %2681 = vmatpush1.xpose.msra.mxu0 0.0
        %2682 = vmatprep.subr.mxu0 0.0
        %2683 = vmatpush1.xpose.msra.mxu0 0.0
        %2684 = vmatprep.subr.mxu0 0.0
        %2685 = vmatpush1.xpose.msra.mxu0 0.0
        %2686 = vmatprep.subr.mxu0 0.0
        %2687 = vmatpush1.xpose.msra.mxu0 0.0
        %2688 = vmatprep.subr.mxu0 0.0
        %2689 = vmatpush1.xpose.msra.mxu0 0.0
        %2690 = vmatprep.subr.mxu0 0.0
        %2691 = vmatpush1.xpose.msra.mxu0 0.0
        %2692 = vmatprep.subr.mxu0 0.0
        %2693 = vmatpush1.xpose.msra.mxu0 0.0
        %2694 = vmatprep.subr.mxu0 0.0
        %2695 = vmatpush1.xpose.msra.mxu0 0.0
        %2696 = vmatprep.subr.mxu0 0.0
        %2697 = vmatpush1.xpose.msra.mxu0 0.0
        %2698 = vmatprep.subr.mxu0 0.0
        %2699 = vmatpush1.xpose.msra.mxu0 0.0
        %2700 = vmatprep.subr.mxu0 0.0
        %2701 = vmatpush1.xpose.msra.mxu0 0.0
        %2702 = vmatprep.subr.mxu0 0.0
        %2703 = vmatpush1.xpose.msra.mxu0 0.0
        %2704 = vmatprep.subr.mxu0 0.0
        %2705 = vmatpush1.xpose.msra.mxu0 0.0
        %2706 = vmatprep.subr.mxu0 0.0
        %2707 = vmatpush1.xpose.msra.mxu0 0.0
        %2708 = vmatprep.subr.mxu0 0.0
        %2709 = vmatpush1.xpose.msra.mxu0 0.0
        %2710 = vmatprep.subr.mxu0 0.0
        %2711 = vmatpush1.xpose.msra.mxu0 0.0
        %2712 = vmatprep.subr.mxu0 0.0
        %2713 = vmatpush1.xpose.msra.mxu0 0.0
        %2714 = vmatprep.subr.mxu0 0.0
        %2715 = vmatpush1.xpose.msra.mxu0 0.0
        %2716 = vmatprep.subr.mxu0 0.0
        %2717 = vmatpush1.xpose.msra.mxu0 0.0
        %2718 = vmatprep.subr.mxu0 0.0
        %2719 = vmatpush1.xpose.msra.mxu0 0.0
        %2720 = vmatprep.subr.mxu0 0.0
        %2721 = vmatpush1.xpose.msra.mxu0 0.0
        %2722 = vmatprep.subr.mxu0 0.0
        %2723 = vmatpush1.xpose.msra.mxu0 0.0
        %2724 = vmatprep.subr.mxu0 0.0
        %2725 = vmatpush1.xpose.msra.mxu0 0.0
        %2726 = vmatprep.subr.mxu0 0.0
        %2727 = vmatpush1.xpose.msra.mxu0 0.0
        %2728 = vmatprep.subr.mxu0 0.0
        %2729 = vmatpush1.xpose.msra.mxu0 0.0
        %2730 = vmatprep.subr.mxu0 0.0
        %2731 = vmatpush1.xpose.msra.mxu0 0.0
        %2732 = vmatprep.subr.mxu0 0.0
        %2733 = vmatpush1.xpose.msra.mxu0 0.0
        %2734 = vmatprep.mubr.f32.mxu0 %v2235
        %2735 = vmatmul.mubr.f32.gmra.mrb[0].mxu0 %v2234
        %v2736 = vpop.f32.mrb[0].mxu0
        %v2737 = vadd.f32 %v2667, %v2736
        %v2738 = vpop.f32.mrb[0].mxu0
        %2739 = vdwg.mxu0
        %2740 = vmatprep.subr.mxu0 %v2337
        %2741 = vmatpush1.xpose.msra.mxu0 %v2336
        %2742 = vmatprep.subr.mxu0 %v2437
        %2743 = vmatpush1.xpose.msra.mxu0 %v2436
        %2744 = vmatprep.subr.mxu0 0.0
        %2745 = vmatpush1.xpose.msra.mxu0 0.0
        %2746 = vmatprep.subr.mxu0 0.0
        %2747 = vmatpush1.xpose.msra.mxu0 0.0
        %2748 = vmatprep.subr.mxu0 0.0
        %2749 = vmatpush1.xpose.msra.mxu0 0.0
        %2750 = vmatprep.subr.mxu0 0.0
        %2751 = vmatpush1.xpose.msra.mxu0 0.0
        %2752 = vmatprep.subr.mxu0 0.0
        %2753 = vmatpush1.xpose.msra.mxu0 0.0
        %2754 = vmatprep.subr.mxu0 0.0
        %2755 = vmatpush1.xpose.msra.mxu0 0.0
        %2756 = vmatprep.subr.mxu0 0.0
        %2757 = vmatpush1.xpose.msra.mxu0 0.0
        %2758 = vmatprep.subr.mxu0 0.0
        %2759 = vmatpush1.xpose.msra.mxu0 0.0
        %2760 = vmatprep.subr.mxu0 0.0
        %2761 = vmatpush1.xpose.msra.mxu0 0.0
        %2762 = vmatprep.subr.mxu0 0.0
        %2763 = vmatpush1.xpose.msra.mxu0 0.0
        %2764 = vmatprep.subr.mxu0 0.0
        %2765 = vmatpush1.xpose.msra.mxu0 0.0
        %2766 = vmatprep.subr.mxu0 0.0
        %2767 = vmatpush1.xpose.msra.mxu0 0.0
        %2768 = vmatprep.subr.mxu0 0.0
        %2769 = vmatpush1.xpose.msra.mxu0 0.0
        %2770 = vmatprep.subr.mxu0 0.0
        %2771 = vmatpush1.xpose.msra.mxu0 0.0
        %2772 = vmatprep.subr.mxu0 0.0
        %2773 = vmatpush1.xpose.msra.mxu0 0.0
        %2774 = vmatprep.subr.mxu0 0.0
        %2775 = vmatpush1.xpose.msra.mxu0 0.0
        %2776 = vmatprep.subr.mxu0 0.0
        %2777 = vmatpush1.xpose.msra.mxu0 0.0
        %2778 = vmatprep.subr.mxu0 0.0
        %2779 = vmatpush1.xpose.msra.mxu0 0.0
        %2780 = vmatprep.subr.mxu0 0.0
        %2781 = vmatpush1.xpose.msra.mxu0 0.0
        %2782 = vmatprep.subr.mxu0 0.0
        %2783 = vmatpush1.xpose.msra.mxu0 0.0
        %2784 = vmatprep.subr.mxu0 0.0
        %2785 = vmatpush1.xpose.msra.mxu0 0.0
        %2786 = vmatprep.subr.mxu0 0.0
        %2787 = vmatpush1.xpose.msra.mxu0 0.0
        %2788 = vmatprep.subr.mxu0 0.0
        %2789 = vmatpush1.xpose.msra.mxu0 0.0
        %2790 = vmatprep.subr.mxu0 0.0
        %2791 = vmatpush1.xpose.msra.mxu0 0.0
        %2792 = vmatprep.subr.mxu0 0.0
        %2793 = vmatpush1.xpose.msra.mxu0 0.0
        %2794 = vmatprep.subr.mxu0 0.0
        %2795 = vmatpush1.xpose.msra.mxu0 0.0
        %2796 = vmatprep.subr.mxu0 0.0
        %2797 = vmatpush1.xpose.msra.mxu0 0.0
        %2798 = vmatprep.subr.mxu0 0.0
        %2799 = vmatpush1.xpose.msra.mxu0 0.0
        %2800 = vmatprep.subr.mxu0 0.0
        %2801 = vmatpush1.xpose.msra.mxu0 0.0
        %2802 = vmatprep.subr.mxu0 0.0
        %2803 = vmatpush1.xpose.msra.mxu0 0.0
        %2804 = vmatprep.mubr.f32.mxu0 %v2237
        %2805 = vmatmul.mubr.f32.gmra.mrb[0].mxu0 %v2236
        %v2806 = vpop.f32.mrb[0].mxu0
        %v2807 = vadd.f32 %v2737, %v2806
        %v2808 = vpop.f32.mrb[0].mxu0
        %2809 = vdwg.mxu0
        %2810 = vmatprep.subr.mxu0 %v2339
        %2811 = vmatpush1.xpose.msra.mxu0 %v2338
        %2812 = vmatprep.subr.mxu0 %v2439
        %2813 = vmatpush1.xpose.msra.mxu0 %v2438
        %2814 = vmatprep.subr.mxu0 0.0
        %2815 = vmatpush1.xpose.msra.mxu0 0.0
        %2816 = vmatprep.subr.mxu0 0.0
        %2817 = vmatpush1.xpose.msra.mxu0 0.0
        %2818 = vmatprep.subr.mxu0 0.0
        %2819 = vmatpush1.xpose.msra.mxu0 0.0
        %2820 = vmatprep.subr.mxu0 0.0
        %2821 = vmatpush1.xpose.msra.mxu0 0.0
        %2822 = vmatprep.subr.mxu0 0.0
        %2823 = vmatpush1.xpose.msra.mxu0 0.0
        %2824 = vmatprep.subr.mxu0 0.0
        %2825 = vmatpush1.xpose.msra.mxu0 0.0
        %2826 = vmatprep.subr.mxu0 0.0
        %2827 = vmatpush1.xpose.msra.mxu0 0.0
        %2828 = vmatprep.subr.mxu0 0.0
        %2829 = vmatpush1.xpose.msra.mxu0 0.0
        %2830 = vmatprep.subr.mxu0 0.0
        %2831 = vmatpush1.xpose.msra.mxu0 0.0
        %2832 = vmatprep.subr.mxu0 0.0
        %2833 = vmatpush1.xpose.msra.mxu0 0.0
        %2834 = vmatprep.subr.mxu0 0.0
        %2835 = vmatpush1.xpose.msra.mxu0 0.0
        %2836 = vmatprep.subr.mxu0 0.0
        %2837 = vmatpush1.xpose.msra.mxu0 0.0
        %2838 = vmatprep.subr.mxu0 0.0
        %2839 = vmatpush1.xpose.msra.mxu0 0.0
        %2840 = vmatprep.subr.mxu0 0.0
        %2841 = vmatpush1.xpose.msra.mxu0 0.0
        %2842 = vmatprep.subr.mxu0 0.0
        %2843 = vmatpush1.xpose.msra.mxu0 0.0
        %2844 = vmatprep.subr.mxu0 0.0
        %2845 = vmatpush1.xpose.msra.mxu0 0.0
        %2846 = vmatprep.subr.mxu0 0.0
        %2847 = vmatpush1.xpose.msra.mxu0 0.0
        %2848 = vmatprep.subr.mxu0 0.0
        %2849 = vmatpush1.xpose.msra.mxu0 0.0
        %2850 = vmatprep.subr.mxu0 0.0
        %2851 = vmatpush1.xpose.msra.mxu0 0.0
        %2852 = vmatprep.subr.mxu0 0.0
        %2853 = vmatpush1.xpose.msra.mxu0 0.0
        %2854 = vmatprep.subr.mxu0 0.0
        %2855 = vmatpush1.xpose.msra.mxu0 0.0
        %2856 = vmatprep.subr.mxu0 0.0
        %2857 = vmatpush1.xpose.msra.mxu0 0.0
        %2858 = vmatprep.subr.mxu0 0.0
        %2859 = vmatpush1.xpose.msra.mxu0 0.0
        %2860 = vmatprep.subr.mxu0 0.0
        %2861 = vmatpush1.xpose.msra.mxu0 0.0
        %2862 = vmatprep.subr.mxu0 0.0
        %2863 = vmatpush1.xpose.msra.mxu0 0.0
        %2864 = vmatprep.subr.mxu0 0.0
        %2865 = vmatpush1.xpose.msra.mxu0 0.0
        %2866 = vmatprep.subr.mxu0 0.0
        %2867 = vmatpush1.xpose.msra.mxu0 0.0
        %2868 = vmatprep.subr.mxu0 0.0
        %2869 = vmatpush1.xpose.msra.mxu0 0.0
        %2870 = vmatprep.subr.mxu0 0.0
        %2871 = vmatpush1.xpose.msra.mxu0 0.0
        %2872 = vmatprep.subr.mxu0 0.0
        %2873 = vmatpush1.xpose.msra.mxu0 0.0
        %2874 = vmatprep.mubr.f32.mxu0 %v2239
        %2875 = vmatmul.mubr.f32.gmra.mrb[0].mxu0 %v2238
        %v2876 = vpop.f32.mrb[0].mxu0
        %v2877 = vadd.f32 %v2807, %v2876
        %v2878 = vpop.f32.mrb[0].mxu0
        %2879 = vdwg.mxu0
        %2880 = vmatprep.subr.mxu0 %v2341
        %2881 = vmatpush1.xpose.msra.mxu0 %v2340
        %2882 = vmatprep.subr.mxu0 %v2441
        %2883 = vmatpush1.xpose.msra.mxu0 %v2440
        %2884 = vmatprep.subr.mxu0 0.0
        %2885 = vmatpush1.xpose.msra.mxu0 0.0
        %2886 = vmatprep.subr.mxu0 0.0
        %2887 = vmatpush1.xpose.msra.mxu0 0.0
        %2888 = vmatprep.subr.mxu0 0.0
        %2889 = vmatpush1.xpose.msra.mxu0 0.0
        %2890 = vmatprep.subr.mxu0 0.0
        %2891 = vmatpush1.xpose.msra.mxu0 0.0
        %2892 = vmatprep.subr.mxu0 0.0
        %2893 = vmatpush1.xpose.msra.mxu0 0.0
        %2894 = vmatprep.subr.mxu0 0.0
        %2895 = vmatpush1.xpose.msra.mxu0 0.0
        %2896 = vmatprep.subr.mxu0 0.0
        %2897 = vmatpush1.xpose.msra.mxu0 0.0
        %2898 = vmatprep.subr.mxu0 0.0
        %2899 = vmatpush1.xpose.msra.mxu0 0.0
        %2900 = vmatprep.subr.mxu0 0.0
        %2901 = vmatpush1.xpose.msra.mxu0 0.0
        %2902 = vmatprep.subr.mxu0 0.0
        %2903 = vmatpush1.xpose.msra.mxu0 0.0
        %2904 = vmatprep.subr.mxu0 0.0
        %2905 = vmatpush1.xpose.msra.mxu0 0.0
        %2906 = vmatprep.subr.mxu0 0.0
        %2907 = vmatpush1.xpose.msra.mxu0 0.0
        %2908 = vmatprep.subr.mxu0 0.0
        %2909 = vmatpush1.xpose.msra.mxu0 0.0
        %2910 = vmatprep.subr.mxu0 0.0
        %2911 = vmatpush1.xpose.msra.mxu0 0.0
        %2912 = vmatprep.subr.mxu0 0.0
        %2913 = vmatpush1.xpose.msra.mxu0 0.0
        %2914 = vmatprep.subr.mxu0 0.0
        %2915 = vmatpush1.xpose.msra.mxu0 0.0
        %2916 = vmatprep.subr.mxu0 0.0
        %2917 = vmatpush1.xpose.msra.mxu0 0.0
        %2918 = vmatprep.subr.mxu0 0.0
        %2919 = vmatpush1.xpose.msra.mxu0 0.0
        %2920 = vmatprep.subr.mxu0 0.0
        %2921 = vmatpush1.xpose.msra.mxu0 0.0
        %2922 = vmatprep.subr.mxu0 0.0
        %2923 = vmatpush1.xpose.msra.mxu0 0.0
        %2924 = vmatprep.subr.mxu0 0.0
        %2925 = vmatpush1.xpose.msra.mxu0 0.0
        %2926 = vmatprep.subr.mxu0 0.0
        %2927 = vmatpush1.xpose.msra.mxu0 0.0
        %2928 = vmatprep.subr.mxu0 0.0
        %2929 = vmatpush1.xpose.msra.mxu0 0.0
        %2930 = vmatprep.subr.mxu0 0.0
        %2931 = vmatpush1.xpose.msra.mxu0 0.0
        %2932 = vmatprep.subr.mxu0 0.0
        %2933 = vmatpush1.xpose.msra.mxu0 0.0
        %2934 = vmatprep.subr.mxu0 0.0
        %2935 = vmatpush1.xpose.msra.mxu0 0.0
        %2936 = vmatprep.subr.mxu0 0.0
        %2937 = vmatpush1.xpose.msra.mxu0 0.0
        %2938 = vmatprep.subr.mxu0 0.0
        %2939 = vmatpush1.xpose.msra.mxu0 0.0
        %2940 = vmatprep.subr.mxu0 0.0
        %2941 = vmatpush1.xpose.msra.mxu0 0.0
        %2942 = vmatprep.subr.mxu0 0.0
        %2943 = vmatpush1.xpose.msra.mxu0 0.0
        %2944 = vmatprep.mubr.f32.mxu0 %v2241
        %2945 = vmatmul.mubr.f32.gmra.mrb[0].mxu0 %v2240
        %v2946 = vpop.f32.mrb[0].mxu0
        %v2947 = vadd.f32 %v2877, %v2946
        %v2948 = vpop.f32.mrb[0].mxu0
        %2949 = vdwg.mxu0
        %2950 = vmatprep.subr.mxu0 %v2343
        %2951 = vmatpush1.xpose.msra.mxu0 %v2342
        %2952 = vmatprep.subr.mxu0 %v2443
        %2953 = vmatpush1.xpose.msra.mxu0 %v2442
        %2954 = vmatprep.subr.mxu0 0.0
        %2955 = vmatpush1.xpose.msra.mxu0 0.0
        %2956 = vmatprep.subr.mxu0 0.0
        %2957 = vmatpush1.xpose.msra.mxu0 0.0
        %2958 = vmatprep.subr.mxu0 0.0
        %2959 = vmatpush1.xpose.msra.mxu0 0.0
        %2960 = vmatprep.subr.mxu0 0.0
        %2961 = vmatpush1.xpose.msra.mxu0 0.0
        %2962 = vmatprep.subr.mxu0 0.0
        %2963 = vmatpush1.xpose.msra.mxu0 0.0
        %2964 = vmatprep.subr.mxu0 0.0
        %2965 = vmatpush1.xpose.msra.mxu0 0.0
        %2966 = vmatprep.subr.mxu0 0.0
        %2967 = vmatpush1.xpose.msra.mxu0 0.0
        %2968 = vmatprep.subr.mxu0 0.0
        %2969 = vmatpush1.xpose.msra.mxu0 0.0
        %2970 = vmatprep.subr.mxu0 0.0
        %2971 = vmatpush1.xpose.msra.mxu0 0.0
        %2972 = vmatprep.subr.mxu0 0.0
        %2973 = vmatpush1.xpose.msra.mxu0 0.0
        %2974 = vmatprep.subr.mxu0 0.0
        %2975 = vmatpush1.xpose.msra.mxu0 0.0
        %2976 = vmatprep.subr.mxu0 0.0
        %2977 = vmatpush1.xpose.msra.mxu0 0.0
        %2978 = vmatprep.subr.mxu0 0.0
        %2979 = vmatpush1.xpose.msra.mxu0 0.0
        %2980 = vmatprep.subr.mxu0 0.0
        %2981 = vmatpush1.xpose.msra.mxu0 0.0
        %2982 = vmatprep.subr.mxu0 0.0
        %2983 = vmatpush1.xpose.msra.mxu0 0.0
        %2984 = vmatprep.subr.mxu0 0.0
        %2985 = vmatpush1.xpose.msra.mxu0 0.0
        %2986 = vmatprep.subr.mxu0 0.0
        %2987 = vmatpush1.xpose.msra.mxu0 0.0
        %2988 = vmatprep.subr.mxu0 0.0
        %2989 = vmatpush1.xpose.msra.mxu0 0.0
        %2990 = vmatprep.subr.mxu0 0.0
        %2991 = vmatpush1.xpose.msra.mxu0 0.0
        %2992 = vmatprep.subr.mxu0 0.0
        %2993 = vmatpush1.xpose.msra.mxu0 0.0
        %2994 = vmatprep.subr.mxu0 0.0
        %2995 = vmatpush1.xpose.msra.mxu0 0.0
        %2996 = vmatprep.subr.mxu0 0.0
        %2997 = vmatpush1.xpose.msra.mxu0 0.0
        %2998 = vmatprep.subr.mxu0 0.0
        %2999 = vmatpush1.xpose.msra.mxu0 0.0
        %3000 = vmatprep.subr.mxu0 0.0
        %3001 = vmatpush1.xpose.msra.mxu0 0.0
        %3002 = vmatprep.subr.mxu0 0.0
        %3003 = vmatpush1.xpose.msra.mxu0 0.0
        %3004 = vmatprep.subr.mxu0 0.0
        %3005 = vmatpush1.xpose.msra.mxu0 0.0
        %3006 = vmatprep.subr.mxu0 0.0
        %3007 = vmatpush1.xpose.msra.mxu0 0.0
        %3008 = vmatprep.subr.mxu0 0.0
        %3009 = vmatpush1.xpose.msra.mxu0 0.0
        %3010 = vmatprep.subr.mxu0 0.0
        %3011 = vmatpush1.xpose.msra.mxu0 0.0
        %3012 = vmatprep.subr.mxu0 0.0
        %3013 = vmatpush1.xpose.msra.mxu0 0.0
        %3014 = vmatprep.mubr.f32.mxu0 %v2243
        %3015 = vmatmul.mubr.f32.gmra.mrb[0].mxu0 %v2242
        %v3016 = vpop.f32.mrb[0].mxu0
        %v3017 = vadd.f32 %v2947, %v3016
        %v3018 = vpop.f32.mrb[0].mxu0
        %3019 = vdwg.mxu0
        %3020 = vmatprep.subr.mxu0 %v2345
        %3021 = vmatpush1.xpose.msra.mxu0 %v2344
        %3022 = vmatprep.subr.mxu0 %v2445
        %3023 = vmatpush1.xpose.msra.mxu0 %v2444
        %3024 = vmatprep.subr.mxu0 0.0
        %3025 = vmatpush1.xpose.msra.mxu0 0.0
        %3026 = vmatprep.subr.mxu0 0.0
        %3027 = vmatpush1.xpose.msra.mxu0 0.0
        %3028 = vmatprep.subr.mxu0 0.0
        %3029 = vmatpush1.xpose.msra.mxu0 0.0
        %3030 = vmatprep.subr.mxu0 0.0
        %3031 = vmatpush1.xpose.msra.mxu0 0.0
        %3032 = vmatprep.subr.mxu0 0.0
        %3033 = vmatpush1.xpose.msra.mxu0 0.0
        %3034 = vmatprep.subr.mxu0 0.0
        %3035 = vmatpush1.xpose.msra.mxu0 0.0
        %3036 = vmatprep.subr.mxu0 0.0
        %3037 = vmatpush1.xpose.msra.mxu0 0.0
        %3038 = vmatprep.subr.mxu0 0.0
        %3039 = vmatpush1.xpose.msra.mxu0 0.0
        %3040 = vmatprep.subr.mxu0 0.0
        %3041 = vmatpush1.xpose.msra.mxu0 0.0
        %3042 = vmatprep.subr.mxu0 0.0
        %3043 = vmatpush1.xpose.msra.mxu0 0.0
        %3044 = vmatprep.subr.mxu0 0.0
        %3045 = vmatpush1.xpose.msra.mxu0 0.0
        %3046 = vmatprep.subr.mxu0 0.0
        %3047 = vmatpush1.xpose.msra.mxu0 0.0
        %3048 = vmatprep.subr.mxu0 0.0
        %3049 = vmatpush1.xpose.msra.mxu0 0.0
        %3050 = vmatprep.subr.mxu0 0.0
        %3051 = vmatpush1.xpose.msra.mxu0 0.0
        %3052 = vmatprep.subr.mxu0 0.0
        %3053 = vmatpush1.xpose.msra.mxu0 0.0
        %3054 = vmatprep.subr.mxu0 0.0
        %3055 = vmatpush1.xpose.msra.mxu0 0.0
        %3056 = vmatprep.subr.mxu0 0.0
        %3057 = vmatpush1.xpose.msra.mxu0 0.0
        %3058 = vmatprep.subr.mxu0 0.0
        %3059 = vmatpush1.xpose.msra.mxu0 0.0
        %3060 = vmatprep.subr.mxu0 0.0
        %3061 = vmatpush1.xpose.msra.mxu0 0.0
        %3062 = vmatprep.subr.mxu0 0.0
        %3063 = vmatpush1.xpose.msra.mxu0 0.0
        %3064 = vmatprep.subr.mxu0 0.0
        %3065 = vmatpush1.xpose.msra.mxu0 0.0
        %3066 = vmatprep.subr.mxu0 0.0
        %3067 = vmatpush1.xpose.msra.mxu0 0.0
        %3068 = vmatprep.subr.mxu0 0.0
        %3069 = vmatpush1.xpose.msra.mxu0 0.0
        %3070 = vmatprep.subr.mxu0 0.0
        %3071 = vmatpush1.xpose.msra.mxu0 0.0
        %3072 = vmatprep.subr.mxu0 0.0
        %3073 = vmatpush1.xpose.msra.mxu0 0.0
        %3074 = vmatprep.subr.mxu0 0.0
        %3075 = vmatpush1.xpose.msra.mxu0 0.0
        %3076 = vmatprep.subr.mxu0 0.0
        %3077 = vmatpush1.xpose.msra.mxu0 0.0
        %3078 = vmatprep.subr.mxu0 0.0
        %3079 = vmatpush1.xpose.msra.mxu0 0.0
        %3080 = vmatprep.subr.mxu0 0.0
        %3081 = vmatpush1.xpose.msra.mxu0 0.0
        %3082 = vmatprep.subr.mxu0 0.0
        %3083 = vmatpush1.xpose.msra.mxu0 0.0
        %3084 = vmatprep.mubr.f32.mxu0 %v2245
        %3085 = vmatmul.mubr.f32.gmra.mrb[0].mxu0 %v2244
        %v3086 = vpop.f32.mrb[0].mxu0
        %v3087 = vadd.f32 %v3017, %v3086
        %v3088 = vpop.f32.mrb[0].mxu0
        %3089 = vdwg.mxu0
        %3090 = vmatprep.subr.mxu0 %v2347
        %3091 = vmatpush1.xpose.msra.mxu0 %v2346
        %3092 = vmatprep.subr.mxu0 %v2447
        %3093 = vmatpush1.xpose.msra.mxu0 %v2446
        %3094 = vmatprep.subr.mxu0 0.0
        %3095 = vmatpush1.xpose.msra.mxu0 0.0
        %3096 = vmatprep.subr.mxu0 0.0
        %3097 = vmatpush1.xpose.msra.mxu0 0.0
        %3098 = vmatprep.subr.mxu0 0.0
        %3099 = vmatpush1.xpose.msra.mxu0 0.0
        %3100 = vmatprep.subr.mxu0 0.0
        %3101 = vmatpush1.xpose.msra.mxu0 0.0
        %3102 = vmatprep.subr.mxu0 0.0
        %3103 = vmatpush1.xpose.msra.mxu0 0.0
        %3104 = vmatprep.subr.mxu0 0.0
        %3105 = vmatpush1.xpose.msra.mxu0 0.0
        %3106 = vmatprep.subr.mxu0 0.0
        %3107 = vmatpush1.xpose.msra.mxu0 0.0
        %3108 = vmatprep.subr.mxu0 0.0
        %3109 = vmatpush1.xpose.msra.mxu0 0.0
        %3110 = vmatprep.subr.mxu0 0.0
        %3111 = vmatpush1.xpose.msra.mxu0 0.0
        %3112 = vmatprep.subr.mxu0 0.0
        %3113 = vmatpush1.xpose.msra.mxu0 0.0
        %3114 = vmatprep.subr.mxu0 0.0
        %3115 = vmatpush1.xpose.msra.mxu0 0.0
        %3116 = vmatprep.subr.mxu0 0.0
        %3117 = vmatpush1.xpose.msra.mxu0 0.0
        %3118 = vmatprep.subr.mxu0 0.0
        %3119 = vmatpush1.xpose.msra.mxu0 0.0
        %3120 = vmatprep.subr.mxu0 0.0
        %3121 = vmatpush1.xpose.msra.mxu0 0.0
        %3122 = vmatprep.subr.mxu0 0.0
        %3123 = vmatpush1.xpose.msra.mxu0 0.0
        %3124 = vmatprep.subr.mxu0 0.0
        %3125 = vmatpush1.xpose.msra.mxu0 0.0
        %3126 = vmatprep.subr.mxu0 0.0
        %3127 = vmatpush1.xpose.msra.mxu0 0.0
        %3128 = vmatprep.subr.mxu0 0.0
        %3129 = vmatpush1.xpose.msra.mxu0 0.0
        %3130 = vmatprep.subr.mxu0 0.0
        %3131 = vmatpush1.xpose.msra.mxu0 0.0
        %3132 = vmatprep.subr.mxu0 0.0
        %3133 = vmatpush1.xpose.msra.mxu0 0.0
        %3134 = vmatprep.subr.mxu0 0.0
        %3135 = vmatpush1.xpose.msra.mxu0 0.0
        %3136 = vmatprep.subr.mxu0 0.0
        %3137 = vmatpush1.xpose.msra.mxu0 0.0
        %3138 = vmatprep.subr.mxu0 0.0
        %3139 = vmatpush1.xpose.msra.mxu0 0.0
        %3140 = vmatprep.subr.mxu0 0.0
        %3141 = vmatpush1.xpose.msra.mxu0 0.0
        %3142 = vmatprep.subr.mxu0 0.0
        %3143 = vmatpush1.xpose.msra.mxu0 0.0
        %3144 = vmatprep.subr.mxu0 0.0
        %3145 = vmatpush1.xpose.msra.mxu0 0.0
        %3146 = vmatprep.subr.mxu0 0.0
        %3147 = vmatpush1.xpose.msra.mxu0 0.0
        %3148 = vmatprep.subr.mxu0 0.0
        %3149 = vmatpush1.xpose.msra.mxu0 0.0
        %3150 = vmatprep.subr.mxu0 0.0
        %3151 = vmatpush1.xpose.msra.mxu0 0.0
        %3152 = vmatprep.subr.mxu0 0.0
        %3153 = vmatpush1.xpose.msra.mxu0 0.0
        %3154 = vmatprep.mubr.f32.mxu0 %v2247
        %3155 = vmatmul.mubr.f32.gmra.mrb[0].mxu0 %v2246
        %v3156 = vpop.f32.mrb[0].mxu0
        %v3157 = vadd.f32 %v3087, %v3156
        %v3158 = vpop.f32.mrb[0].mxu0
        %3159 = vdwg.mxu0
        %3160 = vmatprep.subr.mxu0 %v2349
        %3161 = vmatpush1.xpose.msra.mxu0 %v2348
        %3162 = vmatprep.subr.mxu0 %v2449
        %3163 = vmatpush1.xpose.msra.mxu0 %v2448
        %3164 = vmatprep.subr.mxu0 0.0
        %3165 = vmatpush1.xpose.msra.mxu0 0.0
        %3166 = vmatprep.subr.mxu0 0.0
        %3167 = vmatpush1.xpose.msra.mxu0 0.0
        %3168 = vmatprep.subr.mxu0 0.0
        %3169 = vmatpush1.xpose.msra.mxu0 0.0
        %3170 = vmatprep.subr.mxu0 0.0
        %3171 = vmatpush1.xpose.msra.mxu0 0.0
        %3172 = vmatprep.subr.mxu0 0.0
        %3173 = vmatpush1.xpose.msra.mxu0 0.0
        %3174 = vmatprep.subr.mxu0 0.0
        %3175 = vmatpush1.xpose.msra.mxu0 0.0
        %3176 = vmatprep.subr.mxu0 0.0
        %3177 = vmatpush1.xpose.msra.mxu0 0.0
        %3178 = vmatprep.subr.mxu0 0.0
        %3179 = vmatpush1.xpose.msra.mxu0 0.0
        %3180 = vmatprep.subr.mxu0 0.0
        %3181 = vmatpush1.xpose.msra.mxu0 0.0
        %3182 = vmatprep.subr.mxu0 0.0
        %3183 = vmatpush1.xpose.msra.mxu0 0.0
        %3184 = vmatprep.subr.mxu0 0.0
        %3185 = vmatpush1.xpose.msra.mxu0 0.0
        %3186 = vmatprep.subr.mxu0 0.0
        %3187 = vmatpush1.xpose.msra.mxu0 0.0
        %3188 = vmatprep.subr.mxu0 0.0
        %3189 = vmatpush1.xpose.msra.mxu0 0.0
        %3190 = vmatprep.subr.mxu0 0.0
        %3191 = vmatpush1.xpose.msra.mxu0 0.0
        %3192 = vmatprep.subr.mxu0 0.0
        %3193 = vmatpush1.xpose.msra.mxu0 0.0
        %3194 = vmatprep.subr.mxu0 0.0
        %3195 = vmatpush1.xpose.msra.mxu0 0.0
        %3196 = vmatprep.subr.mxu0 0.0
        %3197 = vmatpush1.xpose.msra.mxu0 0.0
        %3198 = vmatprep.subr.mxu0 0.0
        %3199 = vmatpush1.xpose.msra.mxu0 0.0
        %3200 = vmatprep.subr.mxu0 0.0
        %3201 = vmatpush1.xpose.msra.mxu0 0.0
        %3202 = vmatprep.subr.mxu0 0.0
        %3203 = vmatpush1.xpose.msra.mxu0 0.0
        %3204 = vmatprep.subr.mxu0 0.0
        %3205 = vmatpush1.xpose.msra.mxu0 0.0
        %3206 = vmatprep.subr.mxu0 0.0
        %3207 = vmatpush1.xpose.msra.mxu0 0.0
        %3208 = vmatprep.subr.mxu0 0.0
        %3209 = vmatpush1.xpose.msra.mxu0 0.0
        %3210 = vmatprep.subr.mxu0 0.0
        %3211 = vmatpush1.xpose.msra.mxu0 0.0
        %3212 = vmatprep.subr.mxu0 0.0
        %3213 = vmatpush1.xpose.msra.mxu0 0.0
        %3214 = vmatprep.subr.mxu0 0.0
        %3215 = vmatpush1.xpose.msra.mxu0 0.0
        %3216 = vmatprep.subr.mxu0 0.0
        %3217 = vmatpush1.xpose.msra.mxu0 0.0
        %3218 = vmatprep.subr.mxu0 0.0
        %3219 = vmatpush1.xpose.msra.mxu0 0.0
        %3220 = vmatprep.subr.mxu0 0.0
        %3221 = vmatpush1.xpose.msra.mxu0 0.0
        %3222 = vmatprep.subr.mxu0 0.0
        %3223 = vmatpush1.xpose.msra.mxu0 0.0
        %3224 = vmatprep.mubr.f32.mxu0 %v2249
        %3225 = vmatmul.mubr.f32.gmra.mrb[0].mxu0 %v2248
        %v3226 = vpop.f32.mrb[0].mxu0
        %v3227 = vadd.f32 %v3157, %v3226
        %v3228 = vpop.f32.mrb[0].mxu0
        %3229 = vdwg.mxu0
        %3230 = vmatprep.subr.mxu0 %v2351
        %3231 = vmatpush1.xpose.msra.mxu0 %v2350
        %3232 = vmatprep.subr.mxu0 %v2451
        %3233 = vmatpush1.xpose.msra.mxu0 %v2450
        %3234 = vmatprep.subr.mxu0 0.0
        %3235 = vmatpush1.xpose.msra.mxu0 0.0
        %3236 = vmatprep.subr.mxu0 0.0
        %3237 = vmatpush1.xpose.msra.mxu0 0.0
        %3238 = vmatprep.subr.mxu0 0.0
        %3239 = vmatpush1.xpose.msra.mxu0 0.0
        %3240 = vmatprep.subr.mxu0 0.0
        %3241 = vmatpush1.xpose.msra.mxu0 0.0
        %3242 = vmatprep.subr.mxu0 0.0
        %3243 = vmatpush1.xpose.msra.mxu0 0.0
        %3244 = vmatprep.subr.mxu0 0.0
        %3245 = vmatpush1.xpose.msra.mxu0 0.0
        %3246 = vmatprep.subr.mxu0 0.0
        %3247 = vmatpush1.xpose.msra.mxu0 0.0
        %3248 = vmatprep.subr.mxu0 0.0
        %3249 = vmatpush1.xpose.msra.mxu0 0.0
        %3250 = vmatprep.subr.mxu0 0.0
        %3251 = vmatpush1.xpose.msra.mxu0 0.0
        %3252 = vmatprep.subr.mxu0 0.0
        %3253 = vmatpush1.xpose.msra.mxu0 0.0
        %3254 = vmatprep.subr.mxu0 0.0
        %3255 = vmatpush1.xpose.msra.mxu0 0.0
        %3256 = vmatprep.subr.mxu0 0.0
        %3257 = vmatpush1.xpose.msra.mxu0 0.0
        %3258 = vmatprep.subr.mxu0 0.0
        %3259 = vmatpush1.xpose.msra.mxu0 0.0
        %3260 = vmatprep.subr.mxu0 0.0
        %3261 = vmatpush1.xpose.msra.mxu0 0.0
        %3262 = vmatprep.subr.mxu0 0.0
        %3263 = vmatpush1.xpose.msra.mxu0 0.0
        %3264 = vmatprep.subr.mxu0 0.0
        %3265 = vmatpush1.xpose.msra.mxu0 0.0
        %3266 = vmatprep.subr.mxu0 0.0
        %3267 = vmatpush1.xpose.msra.mxu0 0.0
        %3268 = vmatprep.subr.mxu0 0.0
        %3269 = vmatpush1.xpose.msra.mxu0 0.0
        %3270 = vmatprep.subr.mxu0 0.0
        %3271 = vmatpush1.xpose.msra.mxu0 0.0
        %3272 = vmatprep.subr.mxu0 0.0
        %3273 = vmatpush1.xpose.msra.mxu0 0.0
        %3274 = vmatprep.subr.mxu0 0.0
        %3275 = vmatpush1.xpose.msra.mxu0 0.0
        %3276 = vmatprep.subr.mxu0 0.0
        %3277 = vmatpush1.xpose.msra.mxu0 0.0
        %3278 = vmatprep.subr.mxu0 0.0
        %3279 = vmatpush1.xpose.msra.mxu0 0.0
        %3280 = vmatprep.subr.mxu0 0.0
        %3281 = vmatpush1.xpose.msra.mxu0 0.0
        %3282 = vmatprep.subr.mxu0 0.0
        %3283 = vmatpush1.xpose.msra.mxu0 0.0
        %3284 = vmatprep.subr.mxu0 0.0
        %3285 = vmatpush1.xpose.msra.mxu0 0.0
        %3286 = vmatprep.subr.mxu0 0.0
        %3287 = vmatpush1.xpose.msra.mxu0 0.0
        %3288 = vmatprep.subr.mxu0 0.0
        %3289 = vmatpush1.xpose.msra.mxu0 0.0
        %3290 = vmatprep.subr.mxu0 0.0
        %3291 = vmatpush1.xpose.msra.mxu0 0.0
        %3292 = vmatprep.subr.mxu0 0.0
        %3293 = vmatpush1.xpose.msra.mxu0 0.0
        %3294 = vmatprep.mubr.f32.mxu0 %v2251
        %3295 = vmatmul.mubr.f32.gmra.mrb[0].mxu0 %v2250
        %v3296 = vpop.f32.mrb[0].mxu0
        %v3297 = vadd.f32 %v3227, %v3296
        %v3298 = vpop.f32.mrb[0].mxu0
        %3299 = vdwg.mxu0
        %3300 = vmatprep.subr.mxu0 %v2353
        %3301 = vmatpush1.xpose.msra.mxu0 %v2352
        %3302 = vmatprep.subr.mxu0 %v2453
        %3303 = vmatpush1.xpose.msra.mxu0 %v2452
        %3304 = vmatprep.subr.mxu0 0.0
        %3305 = vmatpush1.xpose.msra.mxu0 0.0
        %3306 = vmatprep.subr.mxu0 0.0
        %3307 = vmatpush1.xpose.msra.mxu0 0.0
        %3308 = vmatprep.subr.mxu0 0.0
        %3309 = vmatpush1.xpose.msra.mxu0 0.0
        %3310 = vmatprep.subr.mxu0 0.0
        %3311 = vmatpush1.xpose.msra.mxu0 0.0
        %3312 = vmatprep.subr.mxu0 0.0
        %3313 = vmatpush1.xpose.msra.mxu0 0.0
        %3314 = vmatprep.subr.mxu0 0.0
        %3315 = vmatpush1.xpose.msra.mxu0 0.0
        %3316 = vmatprep.subr.mxu0 0.0
        %3317 = vmatpush1.xpose.msra.mxu0 0.0
        %3318 = vmatprep.subr.mxu0 0.0
        %3319 = vmatpush1.xpose.msra.mxu0 0.0
        %3320 = vmatprep.subr.mxu0 0.0
        %3321 = vmatpush1.xpose.msra.mxu0 0.0
        %3322 = vmatprep.subr.mxu0 0.0
        %3323 = vmatpush1.xpose.msra.mxu0 0.0
        %3324 = vmatprep.subr.mxu0 0.0
        %3325 = vmatpush1.xpose.msra.mxu0 0.0
        %3326 = vmatprep.subr.mxu0 0.0
        %3327 = vmatpush1.xpose.msra.mxu0 0.0
        %3328 = vmatprep.subr.mxu0 0.0
        %3329 = vmatpush1.xpose.msra.mxu0 0.0
        %3330 = vmatprep.subr.mxu0 0.0
        %3331 = vmatpush1.xpose.msra.mxu0 0.0
        %3332 = vmatprep.subr.mxu0 0.0
        %3333 = vmatpush1.xpose.msra.mxu0 0.0
        %3334 = vmatprep.subr.mxu0 0.0
        %3335 = vmatpush1.xpose.msra.mxu0 0.0
        %3336 = vmatprep.subr.mxu0 0.0
        %3337 = vmatpush1.xpose.msra.mxu0 0.0
        %3338 = vmatprep.subr.mxu0 0.0
        %3339 = vmatpush1.xpose.msra.mxu0 0.0
        %3340 = vmatprep.subr.mxu0 0.0
        %3341 = vmatpush1.xpose.msra.mxu0 0.0
        %3342 = vmatprep.subr.mxu0 0.0
        %3343 = vmatpush1.xpose.msra.mxu0 0.0
        %3344 = vmatprep.subr.mxu0 0.0
        %3345 = vmatpush1.xpose.msra.mxu0 0.0
        %3346 = vmatprep.subr.mxu0 0.0
        %3347 = vmatpush1.xpose.msra.mxu0 0.0
        %3348 = vmatprep.subr.mxu0 0.0
        %3349 = vmatpush1.xpose.msra.mxu0 0.0
        %3350 = vmatprep.subr.mxu0 0.0
        %3351 = vmatpush1.xpose.msra.mxu0 0.0
        %3352 = vmatprep.subr.mxu0 0.0
        %3353 = vmatpush1.xpose.msra.mxu0 0.0
        %3354 = vmatprep.subr.mxu0 0.0
        %3355 = vmatpush1.xpose.msra.mxu0 0.0
        %3356 = vmatprep.subr.mxu0 0.0
        %3357 = vmatpush1.xpose.msra.mxu0 0.0
        %3358 = vmatprep.subr.mxu0 0.0
        %3359 = vmatpush1.xpose.msra.mxu0 0.0
        %3360 = vmatprep.subr.mxu0 0.0
        %3361 = vmatpush1.xpose.msra.mxu0 0.0
        %3362 = vmatprep.subr.mxu0 0.0
        %3363 = vmatpush1.xpose.msra.mxu0 0.0
        %3364 = vmatprep.mubr.f32.mxu0 %v2253
        %3365 = vmatmul.mubr.f32.gmra.mrb[0].mxu0 %v2252
        %v3366 = vpop.f32.mrb[0].mxu0
        %v3367 = vadd.f32 %v3297, %v3366
        %v3368 = vpop.f32.mrb[0].mxu0
        %3369 = vdwg.mxu0
        %3370 = vmatprep.subr.mxu0 %v2355
        %3371 = vmatpush1.xpose.msra.mxu0 %v2354
        %3372 = vmatprep.subr.mxu0 %v2455
        %3373 = vmatpush1.xpose.msra.mxu0 %v2454
        %3374 = vmatprep.subr.mxu0 0.0
        %3375 = vmatpush1.xpose.msra.mxu0 0.0
        %3376 = vmatprep.subr.mxu0 0.0
        %3377 = vmatpush1.xpose.msra.mxu0 0.0
        %3378 = vmatprep.subr.mxu0 0.0
        %3379 = vmatpush1.xpose.msra.mxu0 0.0
        %3380 = vmatprep.subr.mxu0 0.0
        %3381 = vmatpush1.xpose.msra.mxu0 0.0
        %3382 = vmatprep.subr.mxu0 0.0
        %3383 = vmatpush1.xpose.msra.mxu0 0.0
        %3384 = vmatprep.subr.mxu0 0.0
        %3385 = vmatpush1.xpose.msra.mxu0 0.0
        %3386 = vmatprep.subr.mxu0 0.0
        %3387 = vmatpush1.xpose.msra.mxu0 0.0
        %3388 = vmatprep.subr.mxu0 0.0
        %3389 = vmatpush1.xpose.msra.mxu0 0.0
        %3390 = vmatprep.subr.mxu0 0.0
        %3391 = vmatpush1.xpose.msra.mxu0 0.0
        %3392 = vmatprep.subr.mxu0 0.0
        %3393 = vmatpush1.xpose.msra.mxu0 0.0
        %3394 = vmatprep.subr.mxu0 0.0
        %3395 = vmatpush1.xpose.msra.mxu0 0.0
        %3396 = vmatprep.subr.mxu0 0.0
        %3397 = vmatpush1.xpose.msra.mxu0 0.0
        %3398 = vmatprep.subr.mxu0 0.0
        %3399 = vmatpush1.xpose.msra.mxu0 0.0
        %3400 = vmatprep.subr.mxu0 0.0
        %3401 = vmatpush1.xpose.msra.mxu0 0.0
        %3402 = vmatprep.subr.mxu0 0.0
        %3403 = vmatpush1.xpose.msra.mxu0 0.0
        %3404 = vmatprep.subr.mxu0 0.0
        %3405 = vmatpush1.xpose.msra.mxu0 0.0
        %3406 = vmatprep.subr.mxu0 0.0
        %3407 = vmatpush1.xpose.msra.mxu0 0.0
        %3408 = vmatprep.subr.mxu0 0.0
        %3409 = vmatpush1.xpose.msra.mxu0 0.0
        %3410 = vmatprep.subr.mxu0 0.0
        %3411 = vmatpush1.xpose.msra.mxu0 0.0
        %3412 = vmatprep.subr.mxu0 0.0
        %3413 = vmatpush1.xpose.msra.mxu0 0.0
        %3414 = vmatprep.subr.mxu0 0.0
        %3415 = vmatpush1.xpose.msra.mxu0 0.0
        %3416 = vmatprep.subr.mxu0 0.0
        %3417 = vmatpush1.xpose.msra.mxu0 0.0
        %3418 = vmatprep.subr.mxu0 0.0
        %3419 = vmatpush1.xpose.msra.mxu0 0.0
        %3420 = vmatprep.subr.mxu0 0.0
        %3421 = vmatpush1.xpose.msra.mxu0 0.0
        %3422 = vmatprep.subr.mxu0 0.0
        %3423 = vmatpush1.xpose.msra.mxu0 0.0
        %3424 = vmatprep.subr.mxu0 0.0
        %3425 = vmatpush1.xpose.msra.mxu0 0.0
        %3426 = vmatprep.subr.mxu0 0.0
        %3427 = vmatpush1.xpose.msra.mxu0 0.0
        %3428 = vmatprep.subr.mxu0 0.0
        %3429 = vmatpush1.xpose.msra.mxu0 0.0
        %3430 = vmatprep.subr.mxu0 0.0
        %3431 = vmatpush1.xpose.msra.mxu0 0.0
        %3432 = vmatprep.subr.mxu0 0.0
        %3433 = vmatpush1.xpose.msra.mxu0 0.0
        %3434 = vmatprep.mubr.f32.mxu0 %v2255
        %3435 = vmatmul.mubr.f32.gmra.mrb[0].mxu0 %v2254
        %v3436 = vpop.f32.mrb[0].mxu0
        %v3437 = vadd.f32 %v3367, %v3436
        %v3438 = vpop.f32.mrb[0].mxu0
        %3439 = vdwg.mxu0
        %3440 = vmatprep.subr.mxu0 %v2357
        %3441 = vmatpush1.xpose.msra.mxu0 %v2356
        %3442 = vmatprep.subr.mxu0 %v2457
        %3443 = vmatpush1.xpose.msra.mxu0 %v2456
        %3444 = vmatprep.subr.mxu0 0.0
        %3445 = vmatpush1.xpose.msra.mxu0 0.0
        %3446 = vmatprep.subr.mxu0 0.0
        %3447 = vmatpush1.xpose.msra.mxu0 0.0
        %3448 = vmatprep.subr.mxu0 0.0
        %3449 = vmatpush1.xpose.msra.mxu0 0.0
        %3450 = vmatprep.subr.mxu0 0.0
        %3451 = vmatpush1.xpose.msra.mxu0 0.0
        %3452 = vmatprep.subr.mxu0 0.0
        %3453 = vmatpush1.xpose.msra.mxu0 0.0
        %3454 = vmatprep.subr.mxu0 0.0
        %3455 = vmatpush1.xpose.msra.mxu0 0.0
        %3456 = vmatprep.subr.mxu0 0.0
        %3457 = vmatpush1.xpose.msra.mxu0 0.0
        %3458 = vmatprep.subr.mxu0 0.0
        %3459 = vmatpush1.xpose.msra.mxu0 0.0
        %3460 = vmatprep.subr.mxu0 0.0
        %3461 = vmatpush1.xpose.msra.mxu0 0.0
        %3462 = vmatprep.subr.mxu0 0.0
        %3463 = vmatpush1.xpose.msra.mxu0 0.0
        %3464 = vmatprep.subr.mxu0 0.0
        %3465 = vmatpush1.xpose.msra.mxu0 0.0
        %3466 = vmatprep.subr.mxu0 0.0
        %3467 = vmatpush1.xpose.msra.mxu0 0.0
        %3468 = vmatprep.subr.mxu0 0.0
        %3469 = vmatpush1.xpose.msra.mxu0 0.0
        %3470 = vmatprep.subr.mxu0 0.0
        %3471 = vmatpush1.xpose.msra.mxu0 0.0
        %3472 = vmatprep.subr.mxu0 0.0
        %3473 = vmatpush1.xpose.msra.mxu0 0.0
        %3474 = vmatprep.subr.mxu0 0.0
        %3475 = vmatpush1.xpose.msra.mxu0 0.0
        %3476 = vmatprep.subr.mxu0 0.0
        %3477 = vmatpush1.xpose.msra.mxu0 0.0
        %3478 = vmatprep.subr.mxu0 0.0
        %3479 = vmatpush1.xpose.msra.mxu0 0.0
        %3480 = vmatprep.subr.mxu0 0.0
        %3481 = vmatpush1.xpose.msra.mxu0 0.0
        %3482 = vmatprep.subr.mxu0 0.0
        %3483 = vmatpush1.xpose.msra.mxu0 0.0
        %3484 = vmatprep.subr.mxu0 0.0
        %3485 = vmatpush1.xpose.msra.mxu0 0.0
        %3486 = vmatprep.subr.mxu0 0.0
        %3487 = vmatpush1.xpose.msra.mxu0 0.0
        %3488 = vmatprep.subr.mxu0 0.0
        %3489 = vmatpush1.xpose.msra.mxu0 0.0
        %3490 = vmatprep.subr.mxu0 0.0
        %3491 = vmatpush1.xpose.msra.mxu0 0.0
        %3492 = vmatprep.subr.mxu0 0.0
        %3493 = vmatpush1.xpose.msra.mxu0 0.0
        %3494 = vmatprep.subr.mxu0 0.0
        %3495 = vmatpush1.xpose.msra.mxu0 0.0
        %3496 = vmatprep.subr.mxu0 0.0
        %3497 = vmatpush1.xpose.msra.mxu0 0.0
        %3498 = vmatprep.subr.mxu0 0.0
        %3499 = vmatpush1.xpose.msra.mxu0 0.0
        %3500 = vmatprep.subr.mxu0 0.0
        %3501 = vmatpush1.xpose.msra.mxu0 0.0
        %3502 = vmatprep.subr.mxu0 0.0
        %3503 = vmatpush1.xpose.msra.mxu0 0.0
        %3504 = vmatprep.mubr.f32.mxu0 %v2257
        %3505 = vmatmul.mubr.f32.gmra.mrb[0].mxu0 %v2256
        %v3506 = vpop.f32.mrb[0].mxu0
        %v3507 = vadd.f32 %v3437, %v3506
        %v3508 = vpop.f32.mrb[0].mxu0
        %3509 = vdwg.mxu0
        %3510 = vmatprep.subr.mxu0 %v2359
        %3511 = vmatpush1.xpose.msra.mxu0 %v2358
        %3512 = vmatprep.subr.mxu0 %v2459
        %3513 = vmatpush1.xpose.msra.mxu0 %v2458
        %3514 = vmatprep.subr.mxu0 0.0
        %3515 = vmatpush1.xpose.msra.mxu0 0.0
        %3516 = vmatprep.subr.mxu0 0.0
        %3517 = vmatpush1.xpose.msra.mxu0 0.0
        %3518 = vmatprep.subr.mxu0 0.0
        %3519 = vmatpush1.xpose.msra.mxu0 0.0
        %3520 = vmatprep.subr.mxu0 0.0
        %3521 = vmatpush1.xpose.msra.mxu0 0.0
        %3522 = vmatprep.subr.mxu0 0.0
        %3523 = vmatpush1.xpose.msra.mxu0 0.0
        %3524 = vmatprep.subr.mxu0 0.0
        %3525 = vmatpush1.xpose.msra.mxu0 0.0
        %3526 = vmatprep.subr.mxu0 0.0
        %3527 = vmatpush1.xpose.msra.mxu0 0.0
        %3528 = vmatprep.subr.mxu0 0.0
        %3529 = vmatpush1.xpose.msra.mxu0 0.0
        %3530 = vmatprep.subr.mxu0 0.0
        %3531 = vmatpush1.xpose.msra.mxu0 0.0
        %3532 = vmatprep.subr.mxu0 0.0
        %3533 = vmatpush1.xpose.msra.mxu0 0.0
        %3534 = vmatprep.subr.mxu0 0.0
        %3535 = vmatpush1.xpose.msra.mxu0 0.0
        %3536 = vmatprep.subr.mxu0 0.0
        %3537 = vmatpush1.xpose.msra.mxu0 0.0
        %3538 = vmatprep.subr.mxu0 0.0
        %3539 = vmatpush1.xpose.msra.mxu0 0.0
        %3540 = vmatprep.subr.mxu0 0.0
        %3541 = vmatpush1.xpose.msra.mxu0 0.0
        %3542 = vmatprep.subr.mxu0 0.0
        %3543 = vmatpush1.xpose.msra.mxu0 0.0
        %3544 = vmatprep.subr.mxu0 0.0
        %3545 = vmatpush1.xpose.msra.mxu0 0.0
        %3546 = vmatprep.subr.mxu0 0.0
        %3547 = vmatpush1.xpose.msra.mxu0 0.0
        %3548 = vmatprep.subr.mxu0 0.0
        %3549 = vmatpush1.xpose.msra.mxu0 0.0
        %3550 = vmatprep.subr.mxu0 0.0
        %3551 = vmatpush1.xpose.msra.mxu0 0.0
        %3552 = vmatprep.subr.mxu0 0.0
        %3553 = vmatpush1.xpose.msra.mxu0 0.0
        %3554 = vmatprep.subr.mxu0 0.0
        %3555 = vmatpush1.xpose.msra.mxu0 0.0
        %3556 = vmatprep.subr.mxu0 0.0
        %3557 = vmatpush1.xpose.msra.mxu0 0.0
        %3558 = vmatprep.subr.mxu0 0.0
        %3559 = vmatpush1.xpose.msra.mxu0 0.0
        %3560 = vmatprep.subr.mxu0 0.0
        %3561 = vmatpush1.xpose.msra.mxu0 0.0
        %3562 = vmatprep.subr.mxu0 0.0
        %3563 = vmatpush1.xpose.msra.mxu0 0.0
        %3564 = vmatprep.subr.mxu0 0.0
        %3565 = vmatpush1.xpose.msra.mxu0 0.0
        %3566 = vmatprep.subr.mxu0 0.0
        %3567 = vmatpush1.xpose.msra.mxu0 0.0
        %3568 = vmatprep.subr.mxu0 0.0
        %3569 = vmatpush1.xpose.msra.mxu0 0.0
        %3570 = vmatprep.subr.mxu0 0.0
        %3571 = vmatpush1.xpose.msra.mxu0 0.0
        %3572 = vmatprep.subr.mxu0 0.0
        %3573 = vmatpush1.xpose.msra.mxu0 0.0
        %3574 = vmatprep.mubr.f32.mxu0 %v2259
        %3575 = vmatmul.mubr.f32.gmra.mrb[0].mxu0 %v2258
        %v3576 = vpop.f32.mrb[0].mxu0
        %v3577 = vadd.f32 %v3507, %v3576
        %v3578 = vpop.f32.mrb[0].mxu0
        %3579 = vdwg.mxu0
        %3580 = vmatprep.subr.mxu0 %v2361
        %3581 = vmatpush1.xpose.msra.mxu0 %v2360
        %3582 = vmatprep.subr.mxu0 %v2461
        %3583 = vmatpush1.xpose.msra.mxu0 %v2460
        %3584 = vmatprep.subr.mxu0 0.0
        %3585 = vmatpush1.xpose.msra.mxu0 0.0
        %3586 = vmatprep.subr.mxu0 0.0
        %3587 = vmatpush1.xpose.msra.mxu0 0.0
        %3588 = vmatprep.subr.mxu0 0.0
        %3589 = vmatpush1.xpose.msra.mxu0 0.0
        %3590 = vmatprep.subr.mxu0 0.0
        %3591 = vmatpush1.xpose.msra.mxu0 0.0
        %3592 = vmatprep.subr.mxu0 0.0
        %3593 = vmatpush1.xpose.msra.mxu0 0.0
        %3594 = vmatprep.subr.mxu0 0.0
        %3595 = vmatpush1.xpose.msra.mxu0 0.0
        %3596 = vmatprep.subr.mxu0 0.0
        %3597 = vmatpush1.xpose.msra.mxu0 0.0
        %3598 = vmatprep.subr.mxu0 0.0
        %3599 = vmatpush1.xpose.msra.mxu0 0.0
        %3600 = vmatprep.subr.mxu0 0.0
        %3601 = vmatpush1.xpose.msra.mxu0 0.0
        %3602 = vmatprep.subr.mxu0 0.0
        %3603 = vmatpush1.xpose.msra.mxu0 0.0
        %3604 = vmatprep.subr.mxu0 0.0
        %3605 = vmatpush1.xpose.msra.mxu0 0.0
        %3606 = vmatprep.subr.mxu0 0.0
        %3607 = vmatpush1.xpose.msra.mxu0 0.0
        %3608 = vmatprep.subr.mxu0 0.0
        %3609 = vmatpush1.xpose.msra.mxu0 0.0
        %3610 = vmatprep.subr.mxu0 0.0
        %3611 = vmatpush1.xpose.msra.mxu0 0.0
        %3612 = vmatprep.subr.mxu0 0.0
        %3613 = vmatpush1.xpose.msra.mxu0 0.0
        %3614 = vmatprep.subr.mxu0 0.0
        %3615 = vmatpush1.xpose.msra.mxu0 0.0
        %3616 = vmatprep.subr.mxu0 0.0
        %3617 = vmatpush1.xpose.msra.mxu0 0.0
        %3618 = vmatprep.subr.mxu0 0.0
        %3619 = vmatpush1.xpose.msra.mxu0 0.0
        %3620 = vmatprep.subr.mxu0 0.0
        %3621 = vmatpush1.xpose.msra.mxu0 0.0
        %3622 = vmatprep.subr.mxu0 0.0
        %3623 = vmatpush1.xpose.msra.mxu0 0.0
        %3624 = vmatprep.subr.mxu0 0.0
        %3625 = vmatpush1.xpose.msra.mxu0 0.0
        %3626 = vmatprep.subr.mxu0 0.0
        %3627 = vmatpush1.xpose.msra.mxu0 0.0
        %3628 = vmatprep.subr.mxu0 0.0
        %3629 = vmatpush1.xpose.msra.mxu0 0.0
        %3630 = vmatprep.subr.mxu0 0.0
        %3631 = vmatpush1.xpose.msra.mxu0 0.0
        %3632 = vmatprep.subr.mxu0 0.0
        %3633 = vmatpush1.xpose.msra.mxu0 0.0
        %3634 = vmatprep.subr.mxu0 0.0
        %3635 = vmatpush1.xpose.msra.mxu0 0.0
        %3636 = vmatprep.subr.mxu0 0.0
        %3637 = vmatpush1.xpose.msra.mxu0 0.0
        %3638 = vmatprep.subr.mxu0 0.0
        %3639 = vmatpush1.xpose.msra.mxu0 0.0
        %3640 = vmatprep.subr.mxu0 0.0
        %3641 = vmatpush1.xpose.msra.mxu0 0.0
        %3642 = vmatprep.subr.mxu0 0.0
        %3643 = vmatpush1.xpose.msra.mxu0 0.0
        %3644 = vmatprep.mubr.f32.mxu0 %v2261
        %3645 = vmatmul.mubr.f32.gmra.mrb[0].mxu0 %v2260
        %v3646 = vpop.f32.mrb[0].mxu0
        %v3647 = vadd.f32 %v3577, %v3646
        %v3648 = vpop.f32.mrb[0].mxu0
        %3649 = vdwg.mxu0
        %3650 = vmatprep.subr.mxu0 %v2363
        %3651 = vmatpush1.xpose.msra.mxu0 %v2362
        %3652 = vmatprep.subr.mxu0 %v2463
        %3653 = vmatpush1.xpose.msra.mxu0 %v2462
        %3654 = vmatprep.subr.mxu0 0.0
        %3655 = vmatpush1.xpose.msra.mxu0 0.0
        %3656 = vmatprep.subr.mxu0 0.0
        %3657 = vmatpush1.xpose.msra.mxu0 0.0
        %3658 = vmatprep.subr.mxu0 0.0
        %3659 = vmatpush1.xpose.msra.mxu0 0.0
        %3660 = vmatprep.subr.mxu0 0.0
        %3661 = vmatpush1.xpose.msra.mxu0 0.0
        %3662 = vmatprep.subr.mxu0 0.0
        %3663 = vmatpush1.xpose.msra.mxu0 0.0
        %3664 = vmatprep.subr.mxu0 0.0
        %3665 = vmatpush1.xpose.msra.mxu0 0.0
        %3666 = vmatprep.subr.mxu0 0.0
        %3667 = vmatpush1.xpose.msra.mxu0 0.0
        %3668 = vmatprep.subr.mxu0 0.0
        %3669 = vmatpush1.xpose.msra.mxu0 0.0
        %3670 = vmatprep.subr.mxu0 0.0
        %3671 = vmatpush1.xpose.msra.mxu0 0.0
        %3672 = vmatprep.subr.mxu0 0.0
        %3673 = vmatpush1.xpose.msra.mxu0 0.0
        %3674 = vmatprep.subr.mxu0 0.0
        %3675 = vmatpush1.xpose.msra.mxu0 0.0
        %3676 = vmatprep.subr.mxu0 0.0
        %3677 = vmatpush1.xpose.msra.mxu0 0.0
        %3678 = vmatprep.subr.mxu0 0.0
        %3679 = vmatpush1.xpose.msra.mxu0 0.0
        %3680 = vmatprep.subr.mxu0 0.0
        %3681 = vmatpush1.xpose.msra.mxu0 0.0
        %3682 = vmatprep.subr.mxu0 0.0
        %3683 = vmatpush1.xpose.msra.mxu0 0.0
        %3684 = vmatprep.subr.mxu0 0.0
        %3685 = vmatpush1.xpose.msra.mxu0 0.0
        %3686 = vmatprep.subr.mxu0 0.0
        %3687 = vmatpush1.xpose.msra.mxu0 0.0
        %3688 = vmatprep.subr.mxu0 0.0
        %3689 = vmatpush1.xpose.msra.mxu0 0.0
        %3690 = vmatprep.subr.mxu0 0.0
        %3691 = vmatpush1.xpose.msra.mxu0 0.0
        %3692 = vmatprep.subr.mxu0 0.0
        %3693 = vmatpush1.xpose.msra.mxu0 0.0
        %3694 = vmatprep.subr.mxu0 0.0
        %3695 = vmatpush1.xpose.msra.mxu0 0.0
        %3696 = vmatprep.subr.mxu0 0.0
        %3697 = vmatpush1.xpose.msra.mxu0 0.0
        %3698 = vmatprep.subr.mxu0 0.0
        %3699 = vmatpush1.xpose.msra.mxu0 0.0
        %3700 = vmatprep.subr.mxu0 0.0
        %3701 = vmatpush1.xpose.msra.mxu0 0.0
        %3702 = vmatprep.subr.mxu0 0.0
        %3703 = vmatpush1.xpose.msra.mxu0 0.0
        %3704 = vmatprep.subr.mxu0 0.0
        %3705 = vmatpush1.xpose.msra.mxu0 0.0
        %3706 = vmatprep.subr.mxu0 0.0
        %3707 = vmatpush1.xpose.msra.mxu0 0.0
        %3708 = vmatprep.subr.mxu0 0.0
        %3709 = vmatpush1.xpose.msra.mxu0 0.0
        %3710 = vmatprep.subr.mxu0 0.0
        %3711 = vmatpush1.xpose.msra.mxu0 0.0
        %3712 = vmatprep.subr.mxu0 0.0
        %3713 = vmatpush1.xpose.msra.mxu0 0.0
        %3714 = vmatprep.mubr.f32.mxu0 %v2263
        %3715 = vmatmul.mubr.f32.gmra.mrb[0].mxu0 %v2262
        %v3716 = vpop.f32.mrb[0].mxu0
        %v3717 = vadd.f32 %v3647, %v3716
        %v3718 = vpop.f32.mrb[0].mxu0
        %3719 = vdwg.mxu0
        %3720 = vmatprep.subr.mxu0 %v2365
        %3721 = vmatpush1.xpose.msra.mxu0 %v2364
        %3722 = vmatprep.subr.mxu0 %v2465
        %3723 = vmatpush1.xpose.msra.mxu0 %v2464
        %3724 = vmatprep.subr.mxu0 0.0
        %3725 = vmatpush1.xpose.msra.mxu0 0.0
        %3726 = vmatprep.subr.mxu0 0.0
        %3727 = vmatpush1.xpose.msra.mxu0 0.0
        %3728 = vmatprep.subr.mxu0 0.0
        %3729 = vmatpush1.xpose.msra.mxu0 0.0
        %3730 = vmatprep.subr.mxu0 0.0
        %3731 = vmatpush1.xpose.msra.mxu0 0.0
        %3732 = vmatprep.subr.mxu0 0.0
        %3733 = vmatpush1.xpose.msra.mxu0 0.0
        %3734 = vmatprep.subr.mxu0 0.0
        %3735 = vmatpush1.xpose.msra.mxu0 0.0
        %3736 = vmatprep.subr.mxu0 0.0
        %3737 = vmatpush1.xpose.msra.mxu0 0.0
        %3738 = vmatprep.subr.mxu0 0.0
        %3739 = vmatpush1.xpose.msra.mxu0 0.0
        %3740 = vmatprep.subr.mxu0 0.0
        %3741 = vmatpush1.xpose.msra.mxu0 0.0
        %3742 = vmatprep.subr.mxu0 0.0
        %3743 = vmatpush1.xpose.msra.mxu0 0.0
        %3744 = vmatprep.subr.mxu0 0.0
        %3745 = vmatpush1.xpose.msra.mxu0 0.0
        %3746 = vmatprep.subr.mxu0 0.0
        %3747 = vmatpush1.xpose.msra.mxu0 0.0
        %3748 = vmatprep.subr.mxu0 0.0
        %3749 = vmatpush1.xpose.msra.mxu0 0.0
        %3750 = vmatprep.subr.mxu0 0.0
        %3751 = vmatpush1.xpose.msra.mxu0 0.0
        %3752 = vmatprep.subr.mxu0 0.0
        %3753 = vmatpush1.xpose.msra.mxu0 0.0
        %3754 = vmatprep.subr.mxu0 0.0
        %3755 = vmatpush1.xpose.msra.mxu0 0.0
        %3756 = vmatprep.subr.mxu0 0.0
        %3757 = vmatpush1.xpose.msra.mxu0 0.0
        %3758 = vmatprep.subr.mxu0 0.0
        %3759 = vmatpush1.xpose.msra.mxu0 0.0
        %3760 = vmatprep.subr.mxu0 0.0
        %3761 = vmatpush1.xpose.msra.mxu0 0.0
        %3762 = vmatprep.subr.mxu0 0.0
        %3763 = vmatpush1.xpose.msra.mxu0 0.0
        %3764 = vmatprep.subr.mxu0 0.0
        %3765 = vmatpush1.xpose.msra.mxu0 0.0
        %3766 = vmatprep.subr.mxu0 0.0
        %3767 = vmatpush1.xpose.msra.mxu0 0.0
        %3768 = vmatprep.subr.mxu0 0.0
        %3769 = vmatpush1.xpose.msra.mxu0 0.0
        %3770 = vmatprep.subr.mxu0 0.0
        %3771 = vmatpush1.xpose.msra.mxu0 0.0
        %3772 = vmatprep.subr.mxu0 0.0
        %3773 = vmatpush1.xpose.msra.mxu0 0.0
        %3774 = vmatprep.subr.mxu0 0.0
        %3775 = vmatpush1.xpose.msra.mxu0 0.0
        %3776 = vmatprep.subr.mxu0 0.0
        %3777 = vmatpush1.xpose.msra.mxu0 0.0
        %3778 = vmatprep.subr.mxu0 0.0
        %3779 = vmatpush1.xpose.msra.mxu0 0.0
        %3780 = vmatprep.subr.mxu0 0.0
        %3781 = vmatpush1.xpose.msra.mxu0 0.0
        %3782 = vmatprep.subr.mxu0 0.0
        %3783 = vmatpush1.xpose.msra.mxu0 0.0
        %3784 = vmatprep.mubr.f32.mxu0 %v2265
        %3785 = vmatmul.mubr.f32.gmra.mrb[0].mxu0 %v2264
        %v3786 = vpop.f32.mrb[0].mxu0
        %v3787 = vadd.f32 %v3717, %v3786
        %v3788 = vpop.f32.mrb[0].mxu0
        %3789 = vdwg.mxu0
        %3790 = vmatprep.subr.mxu0 %v2367
        %3791 = vmatpush1.xpose.msra.mxu0 %v2366
        %3792 = vmatprep.subr.mxu0 %v2467
        %3793 = vmatpush1.xpose.msra.mxu0 %v2466
        %3794 = vmatprep.subr.mxu0 0.0
        %3795 = vmatpush1.xpose.msra.mxu0 0.0
        %3796 = vmatprep.subr.mxu0 0.0
        %3797 = vmatpush1.xpose.msra.mxu0 0.0
        %3798 = vmatprep.subr.mxu0 0.0
        %3799 = vmatpush1.xpose.msra.mxu0 0.0
        %3800 = vmatprep.subr.mxu0 0.0
        %3801 = vmatpush1.xpose.msra.mxu0 0.0
        %3802 = vmatprep.subr.mxu0 0.0
        %3803 = vmatpush1.xpose.msra.mxu0 0.0
        %3804 = vmatprep.subr.mxu0 0.0
        %3805 = vmatpush1.xpose.msra.mxu0 0.0
        %3806 = vmatprep.subr.mxu0 0.0
        %3807 = vmatpush1.xpose.msra.mxu0 0.0
        %3808 = vmatprep.subr.mxu0 0.0
        %3809 = vmatpush1.xpose.msra.mxu0 0.0
        %3810 = vmatprep.subr.mxu0 0.0
        %3811 = vmatpush1.xpose.msra.mxu0 0.0
        %3812 = vmatprep.subr.mxu0 0.0
        %3813 = vmatpush1.xpose.msra.mxu0 0.0
        %3814 = vmatprep.subr.mxu0 0.0
        %3815 = vmatpush1.xpose.msra.mxu0 0.0
        %3816 = vmatprep.subr.mxu0 0.0
        %3817 = vmatpush1.xpose.msra.mxu0 0.0
        %3818 = vmatprep.subr.mxu0 0.0
        %3819 = vmatpush1.xpose.msra.mxu0 0.0
        %3820 = vmatprep.subr.mxu0 0.0
        %3821 = vmatpush1.xpose.msra.mxu0 0.0
        %3822 = vmatprep.subr.mxu0 0.0
        %3823 = vmatpush1.xpose.msra.mxu0 0.0
        %3824 = vmatprep.subr.mxu0 0.0
        %3825 = vmatpush1.xpose.msra.mxu0 0.0
        %3826 = vmatprep.subr.mxu0 0.0
        %3827 = vmatpush1.xpose.msra.mxu0 0.0
        %3828 = vmatprep.subr.mxu0 0.0
        %3829 = vmatpush1.xpose.msra.mxu0 0.0
        %3830 = vmatprep.subr.mxu0 0.0
        %3831 = vmatpush1.xpose.msra.mxu0 0.0
        %3832 = vmatprep.subr.mxu0 0.0
        %3833 = vmatpush1.xpose.msra.mxu0 0.0
        %3834 = vmatprep.subr.mxu0 0.0
        %3835 = vmatpush1.xpose.msra.mxu0 0.0
        %3836 = vmatprep.subr.mxu0 0.0
        %3837 = vmatpush1.xpose.msra.mxu0 0.0
        %3838 = vmatprep.subr.mxu0 0.0
        %3839 = vmatpush1.xpose.msra.mxu0 0.0
        %3840 = vmatprep.subr.mxu0 0.0
        %3841 = vmatpush1.xpose.msra.mxu0 0.0
        %3842 = vmatprep.subr.mxu0 0.0
        %3843 = vmatpush1.xpose.msra.mxu0 0.0
        %3844 = vmatprep.subr.mxu0 0.0
        %3845 = vmatpush1.xpose.msra.mxu0 0.0
        %3846 = vmatprep.subr.mxu0 0.0
        %3847 = vmatpush1.xpose.msra.mxu0 0.0
        %3848 = vmatprep.subr.mxu0 0.0
        %3849 = vmatpush1.xpose.msra.mxu0 0.0
        %3850 = vmatprep.subr.mxu0 0.0
        %3851 = vmatpush1.xpose.msra.mxu0 0.0
        %3852 = vmatprep.subr.mxu0 0.0
        %3853 = vmatpush1.xpose.msra.mxu0 0.0
        %3854 = vmatprep.mubr.f32.mxu0 %v2267
        %3855 = vmatmul.mubr.f32.gmra.mrb[0].mxu0 %v2266
        %v3856 = vpop.f32.mrb[0].mxu0
        %v3857 = vadd.f32 %v3787, %v3856
        %v3858 = vpop.f32.mrb[0].mxu0
        %3859 = vdwg.mxu0
        %3860 = vmatprep.subr.mxu0 %v2369
        %3861 = vmatpush1.xpose.msra.mxu0 %v2368
        %3862 = vmatprep.subr.mxu0 %v2469
        %3863 = vmatpush1.xpose.msra.mxu0 %v2468
        %3864 = vmatprep.subr.mxu0 0.0
        %3865 = vmatpush1.xpose.msra.mxu0 0.0
        %3866 = vmatprep.subr.mxu0 0.0
        %3867 = vmatpush1.xpose.msra.mxu0 0.0
        %3868 = vmatprep.subr.mxu0 0.0
        %3869 = vmatpush1.xpose.msra.mxu0 0.0
        %3870 = vmatprep.subr.mxu0 0.0
        %3871 = vmatpush1.xpose.msra.mxu0 0.0
        %3872 = vmatprep.subr.mxu0 0.0
        %3873 = vmatpush1.xpose.msra.mxu0 0.0
        %3874 = vmatprep.subr.mxu0 0.0
        %3875 = vmatpush1.xpose.msra.mxu0 0.0
        %3876 = vmatprep.subr.mxu0 0.0
        %3877 = vmatpush1.xpose.msra.mxu0 0.0
        %3878 = vmatprep.subr.mxu0 0.0
        %3879 = vmatpush1.xpose.msra.mxu0 0.0
        %3880 = vmatprep.subr.mxu0 0.0
        %3881 = vmatpush1.xpose.msra.mxu0 0.0
        %3882 = vmatprep.subr.mxu0 0.0
        %3883 = vmatpush1.xpose.msra.mxu0 0.0
        %3884 = vmatprep.subr.mxu0 0.0
        %3885 = vmatpush1.xpose.msra.mxu0 0.0
        %3886 = vmatprep.subr.mxu0 0.0
        %3887 = vmatpush1.xpose.msra.mxu0 0.0
        %3888 = vmatprep.subr.mxu0 0.0
        %3889 = vmatpush1.xpose.msra.mxu0 0.0
        %3890 = vmatprep.subr.mxu0 0.0
        %3891 = vmatpush1.xpose.msra.mxu0 0.0
        %3892 = vmatprep.subr.mxu0 0.0
        %3893 = vmatpush1.xpose.msra.mxu0 0.0
        %3894 = vmatprep.subr.mxu0 0.0
        %3895 = vmatpush1.xpose.msra.mxu0 0.0
        %3896 = vmatprep.subr.mxu0 0.0
        %3897 = vmatpush1.xpose.msra.mxu0 0.0
        %3898 = vmatprep.subr.mxu0 0.0
        %3899 = vmatpush1.xpose.msra.mxu0 0.0
        %3900 = vmatprep.subr.mxu0 0.0
        %3901 = vmatpush1.xpose.msra.mxu0 0.0
        %3902 = vmatprep.subr.mxu0 0.0
        %3903 = vmatpush1.xpose.msra.mxu0 0.0
        %3904 = vmatprep.subr.mxu0 0.0
        %3905 = vmatpush1.xpose.msra.mxu0 0.0
        %3906 = vmatprep.subr.mxu0 0.0
        %3907 = vmatpush1.xpose.msra.mxu0 0.0
        %3908 = vmatprep.subr.mxu0 0.0
        %3909 = vmatpush1.xpose.msra.mxu0 0.0
        %3910 = vmatprep.subr.mxu0 0.0
        %3911 = vmatpush1.xpose.msra.mxu0 0.0
        %3912 = vmatprep.subr.mxu0 0.0
        %3913 = vmatpush1.xpose.msra.mxu0 0.0
        %3914 = vmatprep.subr.mxu0 0.0
        %3915 = vmatpush1.xpose.msra.mxu0 0.0
        %3916 = vmatprep.subr.mxu0 0.0
        %3917 = vmatpush1.xpose.msra.mxu0 0.0
        %3918 = vmatprep.subr.mxu0 0.0
        %3919 = vmatpush1.xpose.msra.mxu0 0.0
        %3920 = vmatprep.subr.mxu0 0.0
        %3921 = vmatpush1.xpose.msra.mxu0 0.0
        %3922 = vmatprep.subr.mxu0 0.0
        %3923 = vmatpush1.xpose.msra.mxu0 0.0
        %3924 = vmatprep.mubr.f32.mxu0 %v2269
        %3925 = vmatmul.mubr.f32.gmra.mrb[0].mxu0 %v2268
        %v3926 = vpop.f32.mrb[0].mxu0
        %v3927 = vadd.f32 %v3857, %v3926
        %v3928 = vpop.f32.mrb[0].mxu0
        %3929 = vdwg.mxu0
        %3930 = vmatprep.subr.mxu0 %v2371
        %3931 = vmatpush1.xpose.msra.mxu0 %v2370
        %3932 = vmatprep.subr.mxu0 %v2471
        %3933 = vmatpush1.xpose.msra.mxu0 %v2470
        %3934 = vmatprep.subr.mxu0 0.0
        %3935 = vmatpush1.xpose.msra.mxu0 0.0
        %3936 = vmatprep.subr.mxu0 0.0
        %3937 = vmatpush1.xpose.msra.mxu0 0.0
        %3938 = vmatprep.subr.mxu0 0.0
        %3939 = vmatpush1.xpose.msra.mxu0 0.0
        %3940 = vmatprep.subr.mxu0 0.0
        %3941 = vmatpush1.xpose.msra.mxu0 0.0
        %3942 = vmatprep.subr.mxu0 0.0
        %3943 = vmatpush1.xpose.msra.mxu0 0.0
        %3944 = vmatprep.subr.mxu0 0.0
        %3945 = vmatpush1.xpose.msra.mxu0 0.0
        %3946 = vmatprep.subr.mxu0 0.0
        %3947 = vmatpush1.xpose.msra.mxu0 0.0
        %3948 = vmatprep.subr.mxu0 0.0
        %3949 = vmatpush1.xpose.msra.mxu0 0.0
        %3950 = vmatprep.subr.mxu0 0.0
        %3951 = vmatpush1.xpose.msra.mxu0 0.0
        %3952 = vmatprep.subr.mxu0 0.0
        %3953 = vmatpush1.xpose.msra.mxu0 0.0
        %3954 = vmatprep.subr.mxu0 0.0
        %3955 = vmatpush1.xpose.msra.mxu0 0.0
        %3956 = vmatprep.subr.mxu0 0.0
        %3957 = vmatpush1.xpose.msra.mxu0 0.0
        %3958 = vmatprep.subr.mxu0 0.0
        %3959 = vmatpush1.xpose.msra.mxu0 0.0
        %3960 = vmatprep.subr.mxu0 0.0
        %3961 = vmatpush1.xpose.msra.mxu0 0.0
        %3962 = vmatprep.subr.mxu0 0.0
        %3963 = vmatpush1.xpose.msra.mxu0 0.0
        %3964 = vmatprep.subr.mxu0 0.0
        %3965 = vmatpush1.xpose.msra.mxu0 0.0
        %3966 = vmatprep.subr.mxu0 0.0
        %3967 = vmatpush1.xpose.msra.mxu0 0.0
        %3968 = vmatprep.subr.mxu0 0.0
        %3969 = vmatpush1.xpose.msra.mxu0 0.0
        %3970 = vmatprep.subr.mxu0 0.0
        %3971 = vmatpush1.xpose.msra.mxu0 0.0
        %3972 = vmatprep.subr.mxu0 0.0
        %3973 = vmatpush1.xpose.msra.mxu0 0.0
        %3974 = vmatprep.subr.mxu0 0.0
        %3975 = vmatpush1.xpose.msra.mxu0 0.0
        %3976 = vmatprep.subr.mxu0 0.0
        %3977 = vmatpush1.xpose.msra.mxu0 0.0
        %3978 = vmatprep.subr.mxu0 0.0
        %3979 = vmatpush1.xpose.msra.mxu0 0.0
        %3980 = vmatprep.subr.mxu0 0.0
        %3981 = vmatpush1.xpose.msra.mxu0 0.0
        %3982 = vmatprep.subr.mxu0 0.0
        %3983 = vmatpush1.xpose.msra.mxu0 0.0
        %3984 = vmatprep.subr.mxu0 0.0
        %3985 = vmatpush1.xpose.msra.mxu0 0.0
        %3986 = vmatprep.subr.mxu0 0.0
        %3987 = vmatpush1.xpose.msra.mxu0 0.0
        %3988 = vmatprep.subr.mxu0 0.0
        %3989 = vmatpush1.xpose.msra.mxu0 0.0
        %3990 = vmatprep.subr.mxu0 0.0
        %3991 = vmatpush1.xpose.msra.mxu0 0.0
        %3992 = vmatprep.subr.mxu0 0.0
        %3993 = vmatpush1.xpose.msra.mxu0 0.0
        %3994 = vmatprep.mubr.f32.mxu0 %v2271
        %3995 = vmatmul.mubr.f32.gmra.mrb[0].mxu0 %v2270
        %v3996 = vpop.f32.mrb[0].mxu0
        %v3997 = vadd.f32 %v3927, %v3996
        %v3998 = vpop.f32.mrb[0].mxu0
        %3999 = vdwg.mxu0
        %4000 = vmatprep.subr.mxu0 %v2373
        %4001 = vmatpush1.xpose.msra.mxu0 %v2372
        %4002 = vmatprep.subr.mxu0 %v2473
        %4003 = vmatpush1.xpose.msra.mxu0 %v2472
        %4004 = vmatprep.subr.mxu0 0.0
        %4005 = vmatpush1.xpose.msra.mxu0 0.0
        %4006 = vmatprep.subr.mxu0 0.0
        %4007 = vmatpush1.xpose.msra.mxu0 0.0
        %4008 = vmatprep.subr.mxu0 0.0
        %4009 = vmatpush1.xpose.msra.mxu0 0.0
        %4010 = vmatprep.subr.mxu0 0.0
        %4011 = vmatpush1.xpose.msra.mxu0 0.0
        %4012 = vmatprep.subr.mxu0 0.0
        %4013 = vmatpush1.xpose.msra.mxu0 0.0
        %4014 = vmatprep.subr.mxu0 0.0
        %4015 = vmatpush1.xpose.msra.mxu0 0.0
        %4016 = vmatprep.subr.mxu0 0.0
        %4017 = vmatpush1.xpose.msra.mxu0 0.0
        %4018 = vmatprep.subr.mxu0 0.0
        %4019 = vmatpush1.xpose.msra.mxu0 0.0
        %4020 = vmatprep.subr.mxu0 0.0
        %4021 = vmatpush1.xpose.msra.mxu0 0.0
        %4022 = vmatprep.subr.mxu0 0.0
        %4023 = vmatpush1.xpose.msra.mxu0 0.0
        %4024 = vmatprep.subr.mxu0 0.0
        %4025 = vmatpush1.xpose.msra.mxu0 0.0
        %4026 = vmatprep.subr.mxu0 0.0
        %4027 = vmatpush1.xpose.msra.mxu0 0.0
        %4028 = vmatprep.subr.mxu0 0.0
        %4029 = vmatpush1.xpose.msra.mxu0 0.0
        %4030 = vmatprep.subr.mxu0 0.0
        %4031 = vmatpush1.xpose.msra.mxu0 0.0
        %4032 = vmatprep.subr.mxu0 0.0
        %4033 = vmatpush1.xpose.msra.mxu0 0.0
        %4034 = vmatprep.subr.mxu0 0.0
        %4035 = vmatpush1.xpose.msra.mxu0 0.0
        %4036 = vmatprep.subr.mxu0 0.0
        %4037 = vmatpush1.xpose.msra.mxu0 0.0
        %4038 = vmatprep.subr.mxu0 0.0
        %4039 = vmatpush1.xpose.msra.mxu0 0.0
        %4040 = vmatprep.subr.mxu0 0.0
        %4041 = vmatpush1.xpose.msra.mxu0 0.0
        %4042 = vmatprep.subr.mxu0 0.0
        %4043 = vmatpush1.xpose.msra.mxu0 0.0
        %4044 = vmatprep.subr.mxu0 0.0
        %4045 = vmatpush1.xpose.msra.mxu0 0.0
        %4046 = vmatprep.subr.mxu0 0.0
        %4047 = vmatpush1.xpose.msra.mxu0 0.0
        %4048 = vmatprep.subr.mxu0 0.0
        %4049 = vmatpush1.xpose.msra.mxu0 0.0
        %4050 = vmatprep.subr.mxu0 0.0
        %4051 = vmatpush1.xpose.msra.mxu0 0.0
        %4052 = vmatprep.subr.mxu0 0.0
        %4053 = vmatpush1.xpose.msra.mxu0 0.0
        %4054 = vmatprep.subr.mxu0 0.0
        %4055 = vmatpush1.xpose.msra.mxu0 0.0
        %4056 = vmatprep.subr.mxu0 0.0
        %4057 = vmatpush1.xpose.msra.mxu0 0.0
        %4058 = vmatprep.subr.mxu0 0.0
        %4059 = vmatpush1.xpose.msra.mxu0 0.0
        %4060 = vmatprep.subr.mxu0 0.0
        %4061 = vmatpush1.xpose.msra.mxu0 0.0
        %4062 = vmatprep.subr.mxu0 0.0
        %4063 = vmatpush1.xpose.msra.mxu0 0.0
        %4064 = vmatprep.mubr.f32.mxu0 %v2273
        %4065 = vmatmul.mubr.f32.gmra.mrb[0].mxu0 %v2272
        %v4066 = vpop.f32.mrb[0].mxu0
        %v4067 = vadd.f32 %v3997, %v4066
        %v4068 = vpop.f32.mrb[0].mxu0
        %4069 = vdwg.mxu0
        %4070 = vmatprep.subr.mxu0 %v2375
        %4071 = vmatpush1.xpose.msra.mxu0 %v2374
        %4072 = vmatprep.subr.mxu0 %v2475
        %4073 = vmatpush1.xpose.msra.mxu0 %v2474
        %4074 = vmatprep.subr.mxu0 0.0
        %4075 = vmatpush1.xpose.msra.mxu0 0.0
        %4076 = vmatprep.subr.mxu0 0.0
        %4077 = vmatpush1.xpose.msra.mxu0 0.0
        %4078 = vmatprep.subr.mxu0 0.0
        %4079 = vmatpush1.xpose.msra.mxu0 0.0
        %4080 = vmatprep.subr.mxu0 0.0
        %4081 = vmatpush1.xpose.msra.mxu0 0.0
        %4082 = vmatprep.subr.mxu0 0.0
        %4083 = vmatpush1.xpose.msra.mxu0 0.0
        %4084 = vmatprep.subr.mxu0 0.0
        %4085 = vmatpush1.xpose.msra.mxu0 0.0
        %4086 = vmatprep.subr.mxu0 0.0
        %4087 = vmatpush1.xpose.msra.mxu0 0.0
        %4088 = vmatprep.subr.mxu0 0.0
        %4089 = vmatpush1.xpose.msra.mxu0 0.0
        %4090 = vmatprep.subr.mxu0 0.0
        %4091 = vmatpush1.xpose.msra.mxu0 0.0
        %4092 = vmatprep.subr.mxu0 0.0
        %4093 = vmatpush1.xpose.msra.mxu0 0.0
        %4094 = vmatprep.subr.mxu0 0.0
        %4095 = vmatpush1.xpose.msra.mxu0 0.0
        %4096 = vmatprep.subr.mxu0 0.0
        %4097 = vmatpush1.xpose.msra.mxu0 0.0
        %4098 = vmatprep.subr.mxu0 0.0
        %4099 = vmatpush1.xpose.msra.mxu0 0.0
        %4100 = vmatprep.subr.mxu0 0.0
        %4101 = vmatpush1.xpose.msra.mxu0 0.0
        %4102 = vmatprep.subr.mxu0 0.0
        %4103 = vmatpush1.xpose.msra.mxu0 0.0
        %4104 = vmatprep.subr.mxu0 0.0
        %4105 = vmatpush1.xpose.msra.mxu0 0.0
        %4106 = vmatprep.subr.mxu0 0.0
        %4107 = vmatpush1.xpose.msra.mxu0 0.0
        %4108 = vmatprep.subr.mxu0 0.0
        %4109 = vmatpush1.xpose.msra.mxu0 0.0
        %4110 = vmatprep.subr.mxu0 0.0
        %4111 = vmatpush1.xpose.msra.mxu0 0.0
        %4112 = vmatprep.subr.mxu0 0.0
        %4113 = vmatpush1.xpose.msra.mxu0 0.0
        %4114 = vmatprep.subr.mxu0 0.0
        %4115 = vmatpush1.xpose.msra.mxu0 0.0
        %4116 = vmatprep.subr.mxu0 0.0
        %4117 = vmatpush1.xpose.msra.mxu0 0.0
        %4118 = vmatprep.subr.mxu0 0.0
        %4119 = vmatpush1.xpose.msra.mxu0 0.0
        %4120 = vmatprep.subr.mxu0 0.0
        %4121 = vmatpush1.xpose.msra.mxu0 0.0
        %4122 = vmatprep.subr.mxu0 0.0
        %4123 = vmatpush1.xpose.msra.mxu0 0.0
        %4124 = vmatprep.subr.mxu0 0.0
        %4125 = vmatpush1.xpose.msra.mxu0 0.0
        %4126 = vmatprep.subr.mxu0 0.0
        %4127 = vmatpush1.xpose.msra.mxu0 0.0
        %4128 = vmatprep.subr.mxu0 0.0
        %4129 = vmatpush1.xpose.msra.mxu0 0.0
        %4130 = vmatprep.subr.mxu0 0.0
        %4131 = vmatpush1.xpose.msra.mxu0 0.0
        %4132 = vmatprep.subr.mxu0 0.0
        %4133 = vmatpush1.xpose.msra.mxu0 0.0
        %4134 = vmatprep.mubr.f32.mxu0 %v2275
        %4135 = vmatmul.mubr.f32.gmra.mrb[0].mxu0 %v2274
        %v4136 = vpop.f32.mrb[0].mxu0
        %v4137 = vadd.f32 %v4067, %v4136
        %v4138 = vpop.f32.mrb[0].mxu0
        %4139 = vdwg.mxu0
        %4140 = vmatprep.subr.mxu0 %v2377
        %4141 = vmatpush1.xpose.msra.mxu0 %v2376
        %4142 = vmatprep.subr.mxu0 %v2477
        %4143 = vmatpush1.xpose.msra.mxu0 %v2476
        %4144 = vmatprep.subr.mxu0 0.0
        %4145 = vmatpush1.xpose.msra.mxu0 0.0
        %4146 = vmatprep.subr.mxu0 0.0
        %4147 = vmatpush1.xpose.msra.mxu0 0.0
        %4148 = vmatprep.subr.mxu0 0.0
        %4149 = vmatpush1.xpose.msra.mxu0 0.0
        %4150 = vmatprep.subr.mxu0 0.0
        %4151 = vmatpush1.xpose.msra.mxu0 0.0
        %4152 = vmatprep.subr.mxu0 0.0
        %4153 = vmatpush1.xpose.msra.mxu0 0.0
        %4154 = vmatprep.subr.mxu0 0.0
        %4155 = vmatpush1.xpose.msra.mxu0 0.0
        %4156 = vmatprep.subr.mxu0 0.0
        %4157 = vmatpush1.xpose.msra.mxu0 0.0
        %4158 = vmatprep.subr.mxu0 0.0
        %4159 = vmatpush1.xpose.msra.mxu0 0.0
        %4160 = vmatprep.subr.mxu0 0.0
        %4161 = vmatpush1.xpose.msra.mxu0 0.0
        %4162 = vmatprep.subr.mxu0 0.0
        %4163 = vmatpush1.xpose.msra.mxu0 0.0
        %4164 = vmatprep.subr.mxu0 0.0
        %4165 = vmatpush1.xpose.msra.mxu0 0.0
        %4166 = vmatprep.subr.mxu0 0.0
        %4167 = vmatpush1.xpose.msra.mxu0 0.0
        %4168 = vmatprep.subr.mxu0 0.0
        %4169 = vmatpush1.xpose.msra.mxu0 0.0
        %4170 = vmatprep.subr.mxu0 0.0
        %4171 = vmatpush1.xpose.msra.mxu0 0.0
        %4172 = vmatprep.subr.mxu0 0.0
        %4173 = vmatpush1.xpose.msra.mxu0 0.0
        %4174 = vmatprep.subr.mxu0 0.0
        %4175 = vmatpush1.xpose.msra.mxu0 0.0
        %4176 = vmatprep.subr.mxu0 0.0
        %4177 = vmatpush1.xpose.msra.mxu0 0.0
        %4178 = vmatprep.subr.mxu0 0.0
        %4179 = vmatpush1.xpose.msra.mxu0 0.0
        %4180 = vmatprep.subr.mxu0 0.0
        %4181 = vmatpush1.xpose.msra.mxu0 0.0
        %4182 = vmatprep.subr.mxu0 0.0
        %4183 = vmatpush1.xpose.msra.mxu0 0.0
        %4184 = vmatprep.subr.mxu0 0.0
        %4185 = vmatpush1.xpose.msra.mxu0 0.0
        %4186 = vmatprep.subr.mxu0 0.0
        %4187 = vmatpush1.xpose.msra.mxu0 0.0
        %4188 = vmatprep.subr.mxu0 0.0
        %4189 = vmatpush1.xpose.msra.mxu0 0.0
        %4190 = vmatprep.subr.mxu0 0.0
        %4191 = vmatpush1.xpose.msra.mxu0 0.0
        %4192 = vmatprep.subr.mxu0 0.0
        %4193 = vmatpush1.xpose.msra.mxu0 0.0
        %4194 = vmatprep.subr.mxu0 0.0
        %4195 = vmatpush1.xpose.msra.mxu0 0.0
        %4196 = vmatprep.subr.mxu0 0.0
        %4197 = vmatpush1.xpose.msra.mxu0 0.0
        %4198 = vmatprep.subr.mxu0 0.0
        %4199 = vmatpush1.xpose.msra.mxu0 0.0
        %4200 = vmatprep.subr.mxu0 0.0
        %4201 = vmatpush1.xpose.msra.mxu0 0.0
        %4202 = vmatprep.subr.mxu0 0.0
        %4203 = vmatpush1.xpose.msra.mxu0 0.0
        %4204 = vmatprep.mubr.f32.mxu0 %v2277
        %4205 = vmatmul.mubr.f32.gmra.mrb[0].mxu0 %v2276
        %v4206 = vpop.f32.mrb[0].mxu0
        %v4207 = vadd.f32 %v4137, %v4206
        %v4208 = vpop.f32.mrb[0].mxu0
        %4209 = vdwg.mxu0
        %4210 = vmatprep.subr.mxu0 %v2379
        %4211 = vmatpush1.xpose.msra.mxu0 %v2378
        %4212 = vmatprep.subr.mxu0 %v2479
        %4213 = vmatpush1.xpose.msra.mxu0 %v2478
        %4214 = vmatprep.subr.mxu0 0.0
        %4215 = vmatpush1.xpose.msra.mxu0 0.0
        %4216 = vmatprep.subr.mxu0 0.0
        %4217 = vmatpush1.xpose.msra.mxu0 0.0
        %4218 = vmatprep.subr.mxu0 0.0
        %4219 = vmatpush1.xpose.msra.mxu0 0.0
        %4220 = vmatprep.subr.mxu0 0.0
        %4221 = vmatpush1.xpose.msra.mxu0 0.0
        %4222 = vmatprep.subr.mxu0 0.0
        %4223 = vmatpush1.xpose.msra.mxu0 0.0
        %4224 = vmatprep.subr.mxu0 0.0
        %4225 = vmatpush1.xpose.msra.mxu0 0.0
        %4226 = vmatprep.subr.mxu0 0.0
        %4227 = vmatpush1.xpose.msra.mxu0 0.0
        %4228 = vmatprep.subr.mxu0 0.0
        %4229 = vmatpush1.xpose.msra.mxu0 0.0
        %4230 = vmatprep.subr.mxu0 0.0
        %4231 = vmatpush1.xpose.msra.mxu0 0.0
        %4232 = vmatprep.subr.mxu0 0.0
        %4233 = vmatpush1.xpose.msra.mxu0 0.0
        %4234 = vmatprep.subr.mxu0 0.0
        %4235 = vmatpush1.xpose.msra.mxu0 0.0
        %4236 = vmatprep.subr.mxu0 0.0
        %4237 = vmatpush1.xpose.msra.mxu0 0.0
        %4238 = vmatprep.subr.mxu0 0.0
        %4239 = vmatpush1.xpose.msra.mxu0 0.0
        %4240 = vmatprep.subr.mxu0 0.0
        %4241 = vmatpush1.xpose.msra.mxu0 0.0
        %4242 = vmatprep.subr.mxu0 0.0
        %4243 = vmatpush1.xpose.msra.mxu0 0.0
        %4244 = vmatprep.subr.mxu0 0.0
        %4245 = vmatpush1.xpose.msra.mxu0 0.0
        %4246 = vmatprep.subr.mxu0 0.0
        %4247 = vmatpush1.xpose.msra.mxu0 0.0
        %4248 = vmatprep.subr.mxu0 0.0
        %4249 = vmatpush1.xpose.msra.mxu0 0.0
        %4250 = vmatprep.subr.mxu0 0.0
        %4251 = vmatpush1.xpose.msra.mxu0 0.0
        %4252 = vmatprep.subr.mxu0 0.0
        %4253 = vmatpush1.xpose.msra.mxu0 0.0
        %4254 = vmatprep.subr.mxu0 0.0
        %4255 = vmatpush1.xpose.msra.mxu0 0.0
        %4256 = vmatprep.subr.mxu0 0.0
        %4257 = vmatpush1.xpose.msra.mxu0 0.0
        %4258 = vmatprep.subr.mxu0 0.0
        %4259 = vmatpush1.xpose.msra.mxu0 0.0
        %4260 = vmatprep.subr.mxu0 0.0
        %4261 = vmatpush1.xpose.msra.mxu0 0.0
        %4262 = vmatprep.subr.mxu0 0.0
        %4263 = vmatpush1.xpose.msra.mxu0 0.0
        %4264 = vmatprep.subr.mxu0 0.0
        %4265 = vmatpush1.xpose.msra.mxu0 0.0
        %4266 = vmatprep.subr.mxu0 0.0
        %4267 = vmatpush1.xpose.msra.mxu0 0.0
        %4268 = vmatprep.subr.mxu0 0.0
        %4269 = vmatpush1.xpose.msra.mxu0 0.0
        %4270 = vmatprep.subr.mxu0 0.0
        %4271 = vmatpush1.xpose.msra.mxu0 0.0
        %4272 = vmatprep.subr.mxu0 0.0
        %4273 = vmatpush1.xpose.msra.mxu0 0.0
        %4274 = vmatprep.mubr.f32.mxu0 %v2279
        %4275 = vmatmul.mubr.f32.gmra.mrb[0].mxu0 %v2278
        %v4276 = vpop.f32.mrb[0].mxu0
        %v4277 = vadd.f32 %v4207, %v4276
        %v4278 = vpop.f32.mrb[0].mxu0
        %4279 = vdwg.mxu0
        %4280 = vmatprep.subr.mxu0 %v2381
        %4281 = vmatpush1.xpose.msra.mxu0 %v2380
        %4282 = vmatprep.subr.mxu0 %v2481
        %4283 = vmatpush1.xpose.msra.mxu0 %v2480
        %4284 = vmatprep.subr.mxu0 0.0
        %4285 = vmatpush1.xpose.msra.mxu0 0.0
        %4286 = vmatprep.subr.mxu0 0.0
        %4287 = vmatpush1.xpose.msra.mxu0 0.0
        %4288 = vmatprep.subr.mxu0 0.0
        %4289 = vmatpush1.xpose.msra.mxu0 0.0
        %4290 = vmatprep.subr.mxu0 0.0
        %4291 = vmatpush1.xpose.msra.mxu0 0.0
        %4292 = vmatprep.subr.mxu0 0.0
        %4293 = vmatpush1.xpose.msra.mxu0 0.0
        %4294 = vmatprep.subr.mxu0 0.0
        %4295 = vmatpush1.xpose.msra.mxu0 0.0
        %4296 = vmatprep.subr.mxu0 0.0
        %4297 = vmatpush1.xpose.msra.mxu0 0.0
        %4298 = vmatprep.subr.mxu0 0.0
        %4299 = vmatpush1.xpose.msra.mxu0 0.0
        %4300 = vmatprep.subr.mxu0 0.0
        %4301 = vmatpush1.xpose.msra.mxu0 0.0
        %4302 = vmatprep.subr.mxu0 0.0
        %4303 = vmatpush1.xpose.msra.mxu0 0.0
        %4304 = vmatprep.subr.mxu0 0.0
        %4305 = vmatpush1.xpose.msra.mxu0 0.0
        %4306 = vmatprep.subr.mxu0 0.0
        %4307 = vmatpush1.xpose.msra.mxu0 0.0
        %4308 = vmatprep.subr.mxu0 0.0
        %4309 = vmatpush1.xpose.msra.mxu0 0.0
        %4310 = vmatprep.subr.mxu0 0.0
        %4311 = vmatpush1.xpose.msra.mxu0 0.0
        %4312 = vmatprep.subr.mxu0 0.0
        %4313 = vmatpush1.xpose.msra.mxu0 0.0
        %4314 = vmatprep.subr.mxu0 0.0
        %4315 = vmatpush1.xpose.msra.mxu0 0.0
        %4316 = vmatprep.subr.mxu0 0.0
        %4317 = vmatpush1.xpose.msra.mxu0 0.0
        %4318 = vmatprep.subr.mxu0 0.0
        %4319 = vmatpush1.xpose.msra.mxu0 0.0
        %4320 = vmatprep.subr.mxu0 0.0
        %4321 = vmatpush1.xpose.msra.mxu0 0.0
        %4322 = vmatprep.subr.mxu0 0.0
        %4323 = vmatpush1.xpose.msra.mxu0 0.0
        %4324 = vmatprep.subr.mxu0 0.0
        %4325 = vmatpush1.xpose.msra.mxu0 0.0
        %4326 = vmatprep.subr.mxu0 0.0
        %4327 = vmatpush1.xpose.msra.mxu0 0.0
        %4328 = vmatprep.subr.mxu0 0.0
        %4329 = vmatpush1.xpose.msra.mxu0 0.0
        %4330 = vmatprep.subr.mxu0 0.0
        %4331 = vmatpush1.xpose.msra.mxu0 0.0
        %4332 = vmatprep.subr.mxu0 0.0
        %4333 = vmatpush1.xpose.msra.mxu0 0.0
        %4334 = vmatprep.subr.mxu0 0.0
        %4335 = vmatpush1.xpose.msra.mxu0 0.0
        %4336 = vmatprep.subr.mxu0 0.0
        %4337 = vmatpush1.xpose.msra.mxu0 0.0
        %4338 = vmatprep.subr.mxu0 0.0
        %4339 = vmatpush1.xpose.msra.mxu0 0.0
        %4340 = vmatprep.subr.mxu0 0.0
        %4341 = vmatpush1.xpose.msra.mxu0 0.0
        %4342 = vmatprep.subr.mxu0 0.0
        %4343 = vmatpush1.xpose.msra.mxu0 0.0
        %4344 = vmatprep.mubr.f32.mxu0 %v2281
        %4345 = vmatmul.mubr.f32.gmra.mrb[0].mxu0 %v2280
        %v4346 = vpop.f32.mrb[0].mxu0
        %v4347 = vadd.f32 %v4277, %v4346
        %v4348 = vpop.f32.mrb[0].mxu0
        %4349 = vdwg.mxu0
        %4350 = vmatprep.subr.mxu0 %v2383
        %4351 = vmatpush1.xpose.msra.mxu0 %v2382
        %4352 = vmatprep.subr.mxu0 %v2483
        %4353 = vmatpush1.xpose.msra.mxu0 %v2482
        %4354 = vmatprep.subr.mxu0 0.0
        %4355 = vmatpush1.xpose.msra.mxu0 0.0
        %4356 = vmatprep.subr.mxu0 0.0
        %4357 = vmatpush1.xpose.msra.mxu0 0.0
        %4358 = vmatprep.subr.mxu0 0.0
        %4359 = vmatpush1.xpose.msra.mxu0 0.0
        %4360 = vmatprep.subr.mxu0 0.0
        %4361 = vmatpush1.xpose.msra.mxu0 0.0
        %4362 = vmatprep.subr.mxu0 0.0
        %4363 = vmatpush1.xpose.msra.mxu0 0.0
        %4364 = vmatprep.subr.mxu0 0.0
        %4365 = vmatpush1.xpose.msra.mxu0 0.0
        %4366 = vmatprep.subr.mxu0 0.0
        %4367 = vmatpush1.xpose.msra.mxu0 0.0
        %4368 = vmatprep.subr.mxu0 0.0
        %4369 = vmatpush1.xpose.msra.mxu0 0.0
        %4370 = vmatprep.subr.mxu0 0.0
        %4371 = vmatpush1.xpose.msra.mxu0 0.0
        %4372 = vmatprep.subr.mxu0 0.0
        %4373 = vmatpush1.xpose.msra.mxu0 0.0
        %4374 = vmatprep.subr.mxu0 0.0
        %4375 = vmatpush1.xpose.msra.mxu0 0.0
        %4376 = vmatprep.subr.mxu0 0.0
        %4377 = vmatpush1.xpose.msra.mxu0 0.0
        %4378 = vmatprep.subr.mxu0 0.0
        %4379 = vmatpush1.xpose.msra.mxu0 0.0
        %4380 = vmatprep.subr.mxu0 0.0
        %4381 = vmatpush1.xpose.msra.mxu0 0.0
        %4382 = vmatprep.subr.mxu0 0.0
        %4383 = vmatpush1.xpose.msra.mxu0 0.0
        %4384 = vmatprep.subr.mxu0 0.0
        %4385 = vmatpush1.xpose.msra.mxu0 0.0
        %4386 = vmatprep.subr.mxu0 0.0
        %4387 = vmatpush1.xpose.msra.mxu0 0.0
        %4388 = vmatprep.subr.mxu0 0.0
        %4389 = vmatpush1.xpose.msra.mxu0 0.0
        %4390 = vmatprep.subr.mxu0 0.0
        %4391 = vmatpush1.xpose.msra.mxu0 0.0
        %4392 = vmatprep.subr.mxu0 0.0
        %4393 = vmatpush1.xpose.msra.mxu0 0.0
        %4394 = vmatprep.subr.mxu0 0.0
        %4395 = vmatpush1.xpose.msra.mxu0 0.0
        %4396 = vmatprep.subr.mxu0 0.0
        %4397 = vmatpush1.xpose.msra.mxu0 0.0
        %4398 = vmatprep.subr.mxu0 0.0
        %4399 = vmatpush1.xpose.msra.mxu0 0.0
        %4400 = vmatprep.subr.mxu0 0.0
        %4401 = vmatpush1.xpose.msra.mxu0 0.0
        %4402 = vmatprep.subr.mxu0 0.0
        %4403 = vmatpush1.xpose.msra.mxu0 0.0
        %4404 = vmatprep.subr.mxu0 0.0
        %4405 = vmatpush1.xpose.msra.mxu0 0.0
        %4406 = vmatprep.subr.mxu0 0.0
        %4407 = vmatpush1.xpose.msra.mxu0 0.0
        %4408 = vmatprep.subr.mxu0 0.0
        %4409 = vmatpush1.xpose.msra.mxu0 0.0
        %4410 = vmatprep.subr.mxu0 0.0
        %4411 = vmatpush1.xpose.msra.mxu0 0.0
        %4412 = vmatprep.subr.mxu0 0.0
        %4413 = vmatpush1.xpose.msra.mxu0 0.0
        %4414 = vmatprep.mubr.f32.mxu0 %v2283
        %4415 = vmatmul.mubr.f32.gmra.mrb[0].mxu0 %v2282
        %v4416 = vpop.f32.mrb[0].mxu0
        %v4417 = vadd.f32 %v4347, %v4416
        %v4418 = vpop.f32.mrb[0].mxu0
        %4419 = vdwg.mxu0
        %4420 = vmatprep.subr.mxu0 %v2385
        %4421 = vmatpush1.xpose.msra.mxu0 %v2384
        %4422 = vmatprep.subr.mxu0 %v2485
        %4423 = vmatpush1.xpose.msra.mxu0 %v2484
        %4424 = vmatprep.subr.mxu0 0.0
        %4425 = vmatpush1.xpose.msra.mxu0 0.0
        %4426 = vmatprep.subr.mxu0 0.0
        %4427 = vmatpush1.xpose.msra.mxu0 0.0
        %4428 = vmatprep.subr.mxu0 0.0
        %4429 = vmatpush1.xpose.msra.mxu0 0.0
        %4430 = vmatprep.subr.mxu0 0.0
        %4431 = vmatpush1.xpose.msra.mxu0 0.0
        %4432 = vmatprep.subr.mxu0 0.0
        %4433 = vmatpush1.xpose.msra.mxu0 0.0
        %4434 = vmatprep.subr.mxu0 0.0
        %4435 = vmatpush1.xpose.msra.mxu0 0.0
        %4436 = vmatprep.subr.mxu0 0.0
        %4437 = vmatpush1.xpose.msra.mxu0 0.0
        %4438 = vmatprep.subr.mxu0 0.0
        %4439 = vmatpush1.xpose.msra.mxu0 0.0
        %4440 = vmatprep.subr.mxu0 0.0
        %4441 = vmatpush1.xpose.msra.mxu0 0.0
        %4442 = vmatprep.subr.mxu0 0.0
        %4443 = vmatpush1.xpose.msra.mxu0 0.0
        %4444 = vmatprep.subr.mxu0 0.0
        %4445 = vmatpush1.xpose.msra.mxu0 0.0
        %4446 = vmatprep.subr.mxu0 0.0
        %4447 = vmatpush1.xpose.msra.mxu0 0.0
        %4448 = vmatprep.subr.mxu0 0.0
        %4449 = vmatpush1.xpose.msra.mxu0 0.0
        %4450 = vmatprep.subr.mxu0 0.0
        %4451 = vmatpush1.xpose.msra.mxu0 0.0
        %4452 = vmatprep.subr.mxu0 0.0
        %4453 = vmatpush1.xpose.msra.mxu0 0.0
        %4454 = vmatprep.subr.mxu0 0.0
        %4455 = vmatpush1.xpose.msra.mxu0 0.0
        %4456 = vmatprep.subr.mxu0 0.0
        %4457 = vmatpush1.xpose.msra.mxu0 0.0
        %4458 = vmatprep.subr.mxu0 0.0
        %4459 = vmatpush1.xpose.msra.mxu0 0.0
        %4460 = vmatprep.subr.mxu0 0.0
        %4461 = vmatpush1.xpose.msra.mxu0 0.0
        %4462 = vmatprep.subr.mxu0 0.0
        %4463 = vmatpush1.xpose.msra.mxu0 0.0
        %4464 = vmatprep.subr.mxu0 0.0
        %4465 = vmatpush1.xpose.msra.mxu0 0.0
        %4466 = vmatprep.subr.mxu0 0.0
        %4467 = vmatpush1.xpose.msra.mxu0 0.0
        %4468 = vmatprep.subr.mxu0 0.0
        %4469 = vmatpush1.xpose.msra.mxu0 0.0
        %4470 = vmatprep.subr.mxu0 0.0
        %4471 = vmatpush1.xpose.msra.mxu0 0.0
        %4472 = vmatprep.subr.mxu0 0.0
        %4473 = vmatpush1.xpose.msra.mxu0 0.0
        %4474 = vmatprep.subr.mxu0 0.0
        %4475 = vmatpush1.xpose.msra.mxu0 0.0
        %4476 = vmatprep.subr.mxu0 0.0
        %4477 = vmatpush1.xpose.msra.mxu0 0.0
        %4478 = vmatprep.subr.mxu0 0.0
        %4479 = vmatpush1.xpose.msra.mxu0 0.0
        %4480 = vmatprep.subr.mxu0 0.0
        %4481 = vmatpush1.xpose.msra.mxu0 0.0
        %4482 = vmatprep.subr.mxu0 0.0
        %4483 = vmatpush1.xpose.msra.mxu0 0.0
        %4484 = vmatprep.mubr.f32.mxu0 %v2285
        %4485 = vmatmul.mubr.f32.gmra.mrb[0].mxu0 %v2284
        %v4486 = vpop.f32.mrb[0].mxu0
        %v4487 = vadd.f32 %v4417, %v4486
        %v4488 = vpop.f32.mrb[0].mxu0
        %4489 = vdwg.mxu0
        %4490 = vmatprep.subr.mxu0 %v2387
        %4491 = vmatpush1.xpose.msra.mxu0 %v2386
        %4492 = vmatprep.subr.mxu0 %v2487
        %4493 = vmatpush1.xpose.msra.mxu0 %v2486
        %4494 = vmatprep.subr.mxu0 0.0
        %4495 = vmatpush1.xpose.msra.mxu0 0.0
        %4496 = vmatprep.subr.mxu0 0.0
        %4497 = vmatpush1.xpose.msra.mxu0 0.0
        %4498 = vmatprep.subr.mxu0 0.0
        %4499 = vmatpush1.xpose.msra.mxu0 0.0
        %4500 = vmatprep.subr.mxu0 0.0
        %4501 = vmatpush1.xpose.msra.mxu0 0.0
        %4502 = vmatprep.subr.mxu0 0.0
        %4503 = vmatpush1.xpose.msra.mxu0 0.0
        %4504 = vmatprep.subr.mxu0 0.0
        %4505 = vmatpush1.xpose.msra.mxu0 0.0
        %4506 = vmatprep.subr.mxu0 0.0
        %4507 = vmatpush1.xpose.msra.mxu0 0.0
        %4508 = vmatprep.subr.mxu0 0.0
        %4509 = vmatpush1.xpose.msra.mxu0 0.0
        %4510 = vmatprep.subr.mxu0 0.0
        %4511 = vmatpush1.xpose.msra.mxu0 0.0
        %4512 = vmatprep.subr.mxu0 0.0
        %4513 = vmatpush1.xpose.msra.mxu0 0.0
        %4514 = vmatprep.subr.mxu0 0.0
        %4515 = vmatpush1.xpose.msra.mxu0 0.0
        %4516 = vmatprep.subr.mxu0 0.0
        %4517 = vmatpush1.xpose.msra.mxu0 0.0
        %4518 = vmatprep.subr.mxu0 0.0
        %4519 = vmatpush1.xpose.msra.mxu0 0.0
        %4520 = vmatprep.subr.mxu0 0.0
        %4521 = vmatpush1.xpose.msra.mxu0 0.0
        %4522 = vmatprep.subr.mxu0 0.0
        %4523 = vmatpush1.xpose.msra.mxu0 0.0
        %4524 = vmatprep.subr.mxu0 0.0
        %4525 = vmatpush1.xpose.msra.mxu0 0.0
        %4526 = vmatprep.subr.mxu0 0.0
        %4527 = vmatpush1.xpose.msra.mxu0 0.0
        %4528 = vmatprep.subr.mxu0 0.0
        %4529 = vmatpush1.xpose.msra.mxu0 0.0
        %4530 = vmatprep.subr.mxu0 0.0
        %4531 = vmatpush1.xpose.msra.mxu0 0.0
        %4532 = vmatprep.subr.mxu0 0.0
        %4533 = vmatpush1.xpose.msra.mxu0 0.0
        %4534 = vmatprep.subr.mxu0 0.0
        %4535 = vmatpush1.xpose.msra.mxu0 0.0
        %4536 = vmatprep.subr.mxu0 0.0
        %4537 = vmatpush1.xpose.msra.mxu0 0.0
        %4538 = vmatprep.subr.mxu0 0.0
        %4539 = vmatpush1.xpose.msra.mxu0 0.0
        %4540 = vmatprep.subr.mxu0 0.0
        %4541 = vmatpush1.xpose.msra.mxu0 0.0
        %4542 = vmatprep.subr.mxu0 0.0
        %4543 = vmatpush1.xpose.msra.mxu0 0.0
        %4544 = vmatprep.subr.mxu0 0.0
        %4545 = vmatpush1.xpose.msra.mxu0 0.0
        %4546 = vmatprep.subr.mxu0 0.0
        %4547 = vmatpush1.xpose.msra.mxu0 0.0
        %4548 = vmatprep.subr.mxu0 0.0
        %4549 = vmatpush1.xpose.msra.mxu0 0.0
        %4550 = vmatprep.subr.mxu0 0.0
        %4551 = vmatpush1.xpose.msra.mxu0 0.0
        %4552 = vmatprep.subr.mxu0 0.0
        %4553 = vmatpush1.xpose.msra.mxu0 0.0
        %4554 = vmatprep.mubr.f32.mxu0 %v2287
        %4555 = vmatmul.mubr.f32.gmra.mrb[0].mxu0 %v2286
        %v4556 = vpop.f32.mrb[0].mxu0
        %v4557 = vadd.f32 %v4487, %v4556
        %v4558 = vpop.f32.mrb[0].mxu0
        %4559 = vdwg.mxu0
        %4560 = vmatprep.subr.mxu0 %v2389
        %4561 = vmatpush1.xpose.msra.mxu0 %v2388
        %4562 = vmatprep.subr.mxu0 %v2489
        %4563 = vmatpush1.xpose.msra.mxu0 %v2488
        %4564 = vmatprep.subr.mxu0 0.0
        %4565 = vmatpush1.xpose.msra.mxu0 0.0
        %4566 = vmatprep.subr.mxu0 0.0
        %4567 = vmatpush1.xpose.msra.mxu0 0.0
        %4568 = vmatprep.subr.mxu0 0.0
        %4569 = vmatpush1.xpose.msra.mxu0 0.0
        %4570 = vmatprep.subr.mxu0 0.0
        %4571 = vmatpush1.xpose.msra.mxu0 0.0
        %4572 = vmatprep.subr.mxu0 0.0
        %4573 = vmatpush1.xpose.msra.mxu0 0.0
        %4574 = vmatprep.subr.mxu0 0.0
        %4575 = vmatpush1.xpose.msra.mxu0 0.0
        %4576 = vmatprep.subr.mxu0 0.0
        %4577 = vmatpush1.xpose.msra.mxu0 0.0
        %4578 = vmatprep.subr.mxu0 0.0
        %4579 = vmatpush1.xpose.msra.mxu0 0.0
        %4580 = vmatprep.subr.mxu0 0.0
        %4581 = vmatpush1.xpose.msra.mxu0 0.0
        %4582 = vmatprep.subr.mxu0 0.0
        %4583 = vmatpush1.xpose.msra.mxu0 0.0
        %4584 = vmatprep.subr.mxu0 0.0
        %4585 = vmatpush1.xpose.msra.mxu0 0.0
        %4586 = vmatprep.subr.mxu0 0.0
        %4587 = vmatpush1.xpose.msra.mxu0 0.0
        %4588 = vmatprep.subr.mxu0 0.0
        %4589 = vmatpush1.xpose.msra.mxu0 0.0
        %4590 = vmatprep.subr.mxu0 0.0
        %4591 = vmatpush1.xpose.msra.mxu0 0.0
        %4592 = vmatprep.subr.mxu0 0.0
        %4593 = vmatpush1.xpose.msra.mxu0 0.0
        %4594 = vmatprep.subr.mxu0 0.0
        %4595 = vmatpush1.xpose.msra.mxu0 0.0
        %4596 = vmatprep.subr.mxu0 0.0
        %4597 = vmatpush1.xpose.msra.mxu0 0.0
        %4598 = vmatprep.subr.mxu0 0.0
        %4599 = vmatpush1.xpose.msra.mxu0 0.0
        %4600 = vmatprep.subr.mxu0 0.0
        %4601 = vmatpush1.xpose.msra.mxu0 0.0
        %4602 = vmatprep.subr.mxu0 0.0
        %4603 = vmatpush1.xpose.msra.mxu0 0.0
        %4604 = vmatprep.subr.mxu0 0.0
        %4605 = vmatpush1.xpose.msra.mxu0 0.0
        %4606 = vmatprep.subr.mxu0 0.0
        %4607 = vmatpush1.xpose.msra.mxu0 0.0
        %4608 = vmatprep.subr.mxu0 0.0
        %4609 = vmatpush1.xpose.msra.mxu0 0.0
        %4610 = vmatprep.subr.mxu0 0.0
        %4611 = vmatpush1.xpose.msra.mxu0 0.0
        %4612 = vmatprep.subr.mxu0 0.0
        %4613 = vmatpush1.xpose.msra.mxu0 0.0
        %4614 = vmatprep.subr.mxu0 0.0
        %4615 = vmatpush1.xpose.msra.mxu0 0.0
        %4616 = vmatprep.subr.mxu0 0.0
        %4617 = vmatpush1.xpose.msra.mxu0 0.0
        %4618 = vmatprep.subr.mxu0 0.0
        %4619 = vmatpush1.xpose.msra.mxu0 0.0
        %4620 = vmatprep.subr.mxu0 0.0
        %4621 = vmatpush1.xpose.msra.mxu0 0.0
        %4622 = vmatprep.subr.mxu0 0.0
        %4623 = vmatpush1.xpose.msra.mxu0 0.0
        %4624 = vmatprep.mubr.f32.mxu0 %v2289
        %4625 = vmatmul.mubr.f32.gmra.mrb[0].mxu0 %v2288
        %v4626 = vpop.f32.mrb[0].mxu0
        %v4627 = vadd.f32 %v4557, %v4626
        %v4628 = vpop.f32.mrb[0].mxu0
        %4629 = vdwg.mxu0
        %4630 = vmatprep.subr.mxu0 %v2391
        %4631 = vmatpush1.xpose.msra.mxu0 %v2390
        %4632 = vmatprep.subr.mxu0 %v2491
        %4633 = vmatpush1.xpose.msra.mxu0 %v2490
        %4634 = vmatprep.subr.mxu0 0.0
        %4635 = vmatpush1.xpose.msra.mxu0 0.0
        %4636 = vmatprep.subr.mxu0 0.0
        %4637 = vmatpush1.xpose.msra.mxu0 0.0
        %4638 = vmatprep.subr.mxu0 0.0
        %4639 = vmatpush1.xpose.msra.mxu0 0.0
        %4640 = vmatprep.subr.mxu0 0.0
        %4641 = vmatpush1.xpose.msra.mxu0 0.0
        %4642 = vmatprep.subr.mxu0 0.0
        %4643 = vmatpush1.xpose.msra.mxu0 0.0
        %4644 = vmatprep.subr.mxu0 0.0
        %4645 = vmatpush1.xpose.msra.mxu0 0.0
        %4646 = vmatprep.subr.mxu0 0.0
        %4647 = vmatpush1.xpose.msra.mxu0 0.0
        %4648 = vmatprep.subr.mxu0 0.0
        %4649 = vmatpush1.xpose.msra.mxu0 0.0
        %4650 = vmatprep.subr.mxu0 0.0
        %4651 = vmatpush1.xpose.msra.mxu0 0.0
        %4652 = vmatprep.subr.mxu0 0.0
        %4653 = vmatpush1.xpose.msra.mxu0 0.0
        %4654 = vmatprep.subr.mxu0 0.0
        %4655 = vmatpush1.xpose.msra.mxu0 0.0
        %4656 = vmatprep.subr.mxu0 0.0
        %4657 = vmatpush1.xpose.msra.mxu0 0.0
        %4658 = vmatprep.subr.mxu0 0.0
        %4659 = vmatpush1.xpose.msra.mxu0 0.0
        %4660 = vmatprep.subr.mxu0 0.0
        %4661 = vmatpush1.xpose.msra.mxu0 0.0
        %4662 = vmatprep.subr.mxu0 0.0
        %4663 = vmatpush1.xpose.msra.mxu0 0.0
        %4664 = vmatprep.subr.mxu0 0.0
        %4665 = vmatpush1.xpose.msra.mxu0 0.0
        %4666 = vmatprep.subr.mxu0 0.0
        %4667 = vmatpush1.xpose.msra.mxu0 0.0
        %4668 = vmatprep.subr.mxu0 0.0
        %4669 = vmatpush1.xpose.msra.mxu0 0.0
        %4670 = vmatprep.subr.mxu0 0.0
        %4671 = vmatpush1.xpose.msra.mxu0 0.0
        %4672 = vmatprep.subr.mxu0 0.0
        %4673 = vmatpush1.xpose.msra.mxu0 0.0
        %4674 = vmatprep.subr.mxu0 0.0
        %4675 = vmatpush1.xpose.msra.mxu0 0.0
        %4676 = vmatprep.subr.mxu0 0.0
        %4677 = vmatpush1.xpose.msra.mxu0 0.0
        %4678 = vmatprep.subr.mxu0 0.0
        %4679 = vmatpush1.xpose.msra.mxu0 0.0
        %4680 = vmatprep.subr.mxu0 0.0
        %4681 = vmatpush1.xpose.msra.mxu0 0.0
        %4682 = vmatprep.subr.mxu0 0.0
        %4683 = vmatpush1.xpose.msra.mxu0 0.0
        %4684 = vmatprep.subr.mxu0 0.0
        %4685 = vmatpush1.xpose.msra.mxu0 0.0
        %4686 = vmatprep.subr.mxu0 0.0
        %4687 = vmatpush1.xpose.msra.mxu0 0.0
        %4688 = vmatprep.subr.mxu0 0.0
        %4689 = vmatpush1.xpose.msra.mxu0 0.0
        %4690 = vmatprep.subr.mxu0 0.0
        %4691 = vmatpush1.xpose.msra.mxu0 0.0
        %4692 = vmatprep.subr.mxu0 0.0
        %4693 = vmatpush1.xpose.msra.mxu0 0.0
        %4694 = vmatprep.mubr.f32.mxu0 %v2291
        %4695 = vmatmul.mubr.f32.gmra.mrb[0].mxu0 %v2290
        %v4696 = vpop.f32.mrb[0].mxu0
        %v4697 = vadd.f32 %v4627, %v4696
        %v4698 = vpop.f32.mrb[0].mxu0
        %4699 = vdwg.mxu0
        %4700 = vmatprep.subr.mxu0 %v2393
        %4701 = vmatpush1.xpose.msra.mxu0 %v2392
        %4702 = vmatprep.subr.mxu0 %v2493
        %4703 = vmatpush1.xpose.msra.mxu0 %v2492
        %4704 = vmatprep.subr.mxu0 0.0
        %4705 = vmatpush1.xpose.msra.mxu0 0.0
        %4706 = vmatprep.subr.mxu0 0.0
        %4707 = vmatpush1.xpose.msra.mxu0 0.0
        %4708 = vmatprep.subr.mxu0 0.0
        %4709 = vmatpush1.xpose.msra.mxu0 0.0
        %4710 = vmatprep.subr.mxu0 0.0
        %4711 = vmatpush1.xpose.msra.mxu0 0.0
        %4712 = vmatprep.subr.mxu0 0.0
        %4713 = vmatpush1.xpose.msra.mxu0 0.0
        %4714 = vmatprep.subr.mxu0 0.0
        %4715 = vmatpush1.xpose.msra.mxu0 0.0
        %4716 = vmatprep.subr.mxu0 0.0
        %4717 = vmatpush1.xpose.msra.mxu0 0.0
        %4718 = vmatprep.subr.mxu0 0.0
        %4719 = vmatpush1.xpose.msra.mxu0 0.0
        %4720 = vmatprep.subr.mxu0 0.0
        %4721 = vmatpush1.xpose.msra.mxu0 0.0
        %4722 = vmatprep.subr.mxu0 0.0
        %4723 = vmatpush1.xpose.msra.mxu0 0.0
        %4724 = vmatprep.subr.mxu0 0.0
        %4725 = vmatpush1.xpose.msra.mxu0 0.0
        %4726 = vmatprep.subr.mxu0 0.0
        %4727 = vmatpush1.xpose.msra.mxu0 0.0
        %4728 = vmatprep.subr.mxu0 0.0
        %4729 = vmatpush1.xpose.msra.mxu0 0.0
        %4730 = vmatprep.subr.mxu0 0.0
        %4731 = vmatpush1.xpose.msra.mxu0 0.0
        %4732 = vmatprep.subr.mxu0 0.0
        %4733 = vmatpush1.xpose.msra.mxu0 0.0
        %4734 = vmatprep.subr.mxu0 0.0
        %4735 = vmatpush1.xpose.msra.mxu0 0.0
        %4736 = vmatprep.subr.mxu0 0.0
        %4737 = vmatpush1.xpose.msra.mxu0 0.0
        %4738 = vmatprep.subr.mxu0 0.0
        %4739 = vmatpush1.xpose.msra.mxu0 0.0
        %4740 = vmatprep.subr.mxu0 0.0
        %4741 = vmatpush1.xpose.msra.mxu0 0.0
        %4742 = vmatprep.subr.mxu0 0.0
        %4743 = vmatpush1.xpose.msra.mxu0 0.0
        %4744 = vmatprep.subr.mxu0 0.0
        %4745 = vmatpush1.xpose.msra.mxu0 0.0
        %4746 = vmatprep.subr.mxu0 0.0
        %4747 = vmatpush1.xpose.msra.mxu0 0.0
        %4748 = vmatprep.subr.mxu0 0.0
        %4749 = vmatpush1.xpose.msra.mxu0 0.0
        %4750 = vmatprep.subr.mxu0 0.0
        %4751 = vmatpush1.xpose.msra.mxu0 0.0
        %4752 = vmatprep.subr.mxu0 0.0
        %4753 = vmatpush1.xpose.msra.mxu0 0.0
        %4754 = vmatprep.subr.mxu0 0.0
        %4755 = vmatpush1.xpose.msra.mxu0 0.0
        %4756 = vmatprep.subr.mxu0 0.0
        %4757 = vmatpush1.xpose.msra.mxu0 0.0
        %4758 = vmatprep.subr.mxu0 0.0
        %4759 = vmatpush1.xpose.msra.mxu0 0.0
        %4760 = vmatprep.subr.mxu0 0.0
        %4761 = vmatpush1.xpose.msra.mxu0 0.0
        %4762 = vmatprep.subr.mxu0 0.0
        %4763 = vmatpush1.xpose.msra.mxu0 0.0
        %4764 = vmatprep.mubr.f32.mxu0 %v2293
        %4765 = vmatmul.mubr.f32.gmra.mrb[0].mxu0 %v2292
        %v4766 = vpop.f32.mrb[0].mxu0
        %v4767 = vadd.f32 %v4697, %v4766
        %v4768 = vpop.f32.mrb[0].mxu0
        %4769 = vdwg.mxu0
        %4770 = vmatprep.subr.mxu0 %v2395
        %4771 = vmatpush1.xpose.msra.mxu0 %v2394
        %4772 = vmatprep.subr.mxu0 %v2495
        %4773 = vmatpush1.xpose.msra.mxu0 %v2494
        %4774 = vmatprep.subr.mxu0 0.0
        %4775 = vmatpush1.xpose.msra.mxu0 0.0
        %4776 = vmatprep.subr.mxu0 0.0
        %4777 = vmatpush1.xpose.msra.mxu0 0.0
        %4778 = vmatprep.subr.mxu0 0.0
        %4779 = vmatpush1.xpose.msra.mxu0 0.0
        %4780 = vmatprep.subr.mxu0 0.0
        %4781 = vmatpush1.xpose.msra.mxu0 0.0
        %4782 = vmatprep.subr.mxu0 0.0
        %4783 = vmatpush1.xpose.msra.mxu0 0.0
        %4784 = vmatprep.subr.mxu0 0.0
        %4785 = vmatpush1.xpose.msra.mxu0 0.0
        %4786 = vmatprep.subr.mxu0 0.0
        %4787 = vmatpush1.xpose.msra.mxu0 0.0
        %4788 = vmatprep.subr.mxu0 0.0
        %4789 = vmatpush1.xpose.msra.mxu0 0.0
        %4790 = vmatprep.subr.mxu0 0.0
        %4791 = vmatpush1.xpose.msra.mxu0 0.0
        %4792 = vmatprep.subr.mxu0 0.0
        %4793 = vmatpush1.xpose.msra.mxu0 0.0
        %4794 = vmatprep.subr.mxu0 0.0
        %4795 = vmatpush1.xpose.msra.mxu0 0.0
        %4796 = vmatprep.subr.mxu0 0.0
        %4797 = vmatpush1.xpose.msra.mxu0 0.0
        %4798 = vmatprep.subr.mxu0 0.0
        %4799 = vmatpush1.xpose.msra.mxu0 0.0
        %4800 = vmatprep.subr.mxu0 0.0
        %4801 = vmatpush1.xpose.msra.mxu0 0.0
        %4802 = vmatprep.subr.mxu0 0.0
        %4803 = vmatpush1.xpose.msra.mxu0 0.0
        %4804 = vmatprep.subr.mxu0 0.0
        %4805 = vmatpush1.xpose.msra.mxu0 0.0
        %4806 = vmatprep.subr.mxu0 0.0
        %4807 = vmatpush1.xpose.msra.mxu0 0.0
        %4808 = vmatprep.subr.mxu0 0.0
        %4809 = vmatpush1.xpose.msra.mxu0 0.0
        %4810 = vmatprep.subr.mxu0 0.0
        %4811 = vmatpush1.xpose.msra.mxu0 0.0
        %4812 = vmatprep.subr.mxu0 0.0
        %4813 = vmatpush1.xpose.msra.mxu0 0.0
        %4814 = vmatprep.subr.mxu0 0.0
        %4815 = vmatpush1.xpose.msra.mxu0 0.0
        %4816 = vmatprep.subr.mxu0 0.0
        %4817 = vmatpush1.xpose.msra.mxu0 0.0
        %4818 = vmatprep.subr.mxu0 0.0
        %4819 = vmatpush1.xpose.msra.mxu0 0.0
        %4820 = vmatprep.subr.mxu0 0.0
        %4821 = vmatpush1.xpose.msra.mxu0 0.0
        %4822 = vmatprep.subr.mxu0 0.0
        %4823 = vmatpush1.xpose.msra.mxu0 0.0
        %4824 = vmatprep.subr.mxu0 0.0
        %4825 = vmatpush1.xpose.msra.mxu0 0.0
        %4826 = vmatprep.subr.mxu0 0.0
        %4827 = vmatpush1.xpose.msra.mxu0 0.0
        %4828 = vmatprep.subr.mxu0 0.0
        %4829 = vmatpush1.xpose.msra.mxu0 0.0
        %4830 = vmatprep.subr.mxu0 0.0
        %4831 = vmatpush1.xpose.msra.mxu0 0.0
        %4832 = vmatprep.subr.mxu0 0.0
        %4833 = vmatpush1.xpose.msra.mxu0 0.0
        %4834 = vmatprep.mubr.f32.mxu0 %v2295
        %4835 = vmatmul.mubr.f32.gmra.mrb[0].mxu0 %v2294
        %v4836 = vpop.f32.mrb[0].mxu0
        %v4837 = vadd.f32 %v4767, %v4836
        %v4838 = vpop.f32.mrb[0].mxu0
        %4839 = vdwg.mxu0
        %4840 = vmatprep.subr.mxu0 %v2397
        %4841 = vmatpush1.xpose.msra.mxu0 %v2396
        %4842 = vmatprep.subr.mxu0 %v2497
        %4843 = vmatpush1.xpose.msra.mxu0 %v2496
        %4844 = vmatprep.subr.mxu0 0.0
        %4845 = vmatpush1.xpose.msra.mxu0 0.0
        %4846 = vmatprep.subr.mxu0 0.0
        %4847 = vmatpush1.xpose.msra.mxu0 0.0
        %4848 = vmatprep.subr.mxu0 0.0
        %4849 = vmatpush1.xpose.msra.mxu0 0.0
        %4850 = vmatprep.subr.mxu0 0.0
        %4851 = vmatpush1.xpose.msra.mxu0 0.0
        %4852 = vmatprep.subr.mxu0 0.0
        %4853 = vmatpush1.xpose.msra.mxu0 0.0
        %4854 = vmatprep.subr.mxu0 0.0
        %4855 = vmatpush1.xpose.msra.mxu0 0.0
        %4856 = vmatprep.subr.mxu0 0.0
        %4857 = vmatpush1.xpose.msra.mxu0 0.0
        %4858 = vmatprep.subr.mxu0 0.0
        %4859 = vmatpush1.xpose.msra.mxu0 0.0
        %4860 = vmatprep.subr.mxu0 0.0
        %4861 = vmatpush1.xpose.msra.mxu0 0.0
        %4862 = vmatprep.subr.mxu0 0.0
        %4863 = vmatpush1.xpose.msra.mxu0 0.0
        %4864 = vmatprep.subr.mxu0 0.0
        %4865 = vmatpush1.xpose.msra.mxu0 0.0
        %4866 = vmatprep.subr.mxu0 0.0
        %4867 = vmatpush1.xpose.msra.mxu0 0.0
        %4868 = vmatprep.subr.mxu0 0.0
        %4869 = vmatpush1.xpose.msra.mxu0 0.0
        %4870 = vmatprep.subr.mxu0 0.0
        %4871 = vmatpush1.xpose.msra.mxu0 0.0
        %4872 = vmatprep.subr.mxu0 0.0
        %4873 = vmatpush1.xpose.msra.mxu0 0.0
        %4874 = vmatprep.subr.mxu0 0.0
        %4875 = vmatpush1.xpose.msra.mxu0 0.0
        %4876 = vmatprep.subr.mxu0 0.0
        %4877 = vmatpush1.xpose.msra.mxu0 0.0
        %4878 = vmatprep.subr.mxu0 0.0
        %4879 = vmatpush1.xpose.msra.mxu0 0.0
        %4880 = vmatprep.subr.mxu0 0.0
        %4881 = vmatpush1.xpose.msra.mxu0 0.0
        %4882 = vmatprep.subr.mxu0 0.0
        %4883 = vmatpush1.xpose.msra.mxu0 0.0
        %4884 = vmatprep.subr.mxu0 0.0
        %4885 = vmatpush1.xpose.msra.mxu0 0.0
        %4886 = vmatprep.subr.mxu0 0.0
        %4887 = vmatpush1.xpose.msra.mxu0 0.0
        %4888 = vmatprep.subr.mxu0 0.0
        %4889 = vmatpush1.xpose.msra.mxu0 0.0
        %4890 = vmatprep.subr.mxu0 0.0
        %4891 = vmatpush1.xpose.msra.mxu0 0.0
        %4892 = vmatprep.subr.mxu0 0.0
        %4893 = vmatpush1.xpose.msra.mxu0 0.0
        %4894 = vmatprep.subr.mxu0 0.0
        %4895 = vmatpush1.xpose.msra.mxu0 0.0
        %4896 = vmatprep.subr.mxu0 0.0
        %4897 = vmatpush1.xpose.msra.mxu0 0.0
        %4898 = vmatprep.subr.mxu0 0.0
        %4899 = vmatpush1.xpose.msra.mxu0 0.0
        %4900 = vmatprep.subr.mxu0 0.0
        %4901 = vmatpush1.xpose.msra.mxu0 0.0
        %4902 = vmatprep.subr.mxu0 0.0
        %4903 = vmatpush1.xpose.msra.mxu0 0.0
        %4904 = vmatprep.mubr.f32.mxu0 %v2297
        %4905 = vmatmul.mubr.f32.gmra.mrb[0].mxu0 %v2296
        %v4906 = vpop.f32.mrb[0].mxu0
        %v4907 = vadd.f32 %v4837, %v4906
        %v4908 = vpop.f32.mrb[0].mxu0
        %4909 = vdwg.mxu0
        %4910 = vmatprep.subr.mxu0 %v2399
        %4911 = vmatpush1.xpose.msra.mxu0 %v2398
        %4912 = vmatprep.subr.mxu0 %v2499
        %4913 = vmatpush1.xpose.msra.mxu0 %v2498
        %4914 = vmatprep.subr.mxu0 0.0
        %4915 = vmatpush1.xpose.msra.mxu0 0.0
        %4916 = vmatprep.subr.mxu0 0.0
        %4917 = vmatpush1.xpose.msra.mxu0 0.0
        %4918 = vmatprep.subr.mxu0 0.0
        %4919 = vmatpush1.xpose.msra.mxu0 0.0
        %4920 = vmatprep.subr.mxu0 0.0
        %4921 = vmatpush1.xpose.msra.mxu0 0.0
        %4922 = vmatprep.subr.mxu0 0.0
        %4923 = vmatpush1.xpose.msra.mxu0 0.0
        %4924 = vmatprep.subr.mxu0 0.0
        %4925 = vmatpush1.xpose.msra.mxu0 0.0
        %4926 = vmatprep.subr.mxu0 0.0
        %4927 = vmatpush1.xpose.msra.mxu0 0.0
        %4928 = vmatprep.subr.mxu0 0.0
        %4929 = vmatpush1.xpose.msra.mxu0 0.0
        %4930 = vmatprep.subr.mxu0 0.0
        %4931 = vmatpush1.xpose.msra.mxu0 0.0
        %4932 = vmatprep.subr.mxu0 0.0
        %4933 = vmatpush1.xpose.msra.mxu0 0.0
        %4934 = vmatprep.subr.mxu0 0.0
        %4935 = vmatpush1.xpose.msra.mxu0 0.0
        %4936 = vmatprep.subr.mxu0 0.0
        %4937 = vmatpush1.xpose.msra.mxu0 0.0
        %4938 = vmatprep.subr.mxu0 0.0
        %4939 = vmatpush1.xpose.msra.mxu0 0.0
        %4940 = vmatprep.subr.mxu0 0.0
        %4941 = vmatpush1.xpose.msra.mxu0 0.0
        %4942 = vmatprep.subr.mxu0 0.0
        %4943 = vmatpush1.xpose.msra.mxu0 0.0
        %4944 = vmatprep.subr.mxu0 0.0
        %4945 = vmatpush1.xpose.msra.mxu0 0.0
        %4946 = vmatprep.subr.mxu0 0.0
        %4947 = vmatpush1.xpose.msra.mxu0 0.0
        %4948 = vmatprep.subr.mxu0 0.0
        %4949 = vmatpush1.xpose.msra.mxu0 0.0
        %4950 = vmatprep.subr.mxu0 0.0
        %4951 = vmatpush1.xpose.msra.mxu0 0.0
        %4952 = vmatprep.subr.mxu0 0.0
        %4953 = vmatpush1.xpose.msra.mxu0 0.0
        %4954 = vmatprep.subr.mxu0 0.0
        %4955 = vmatpush1.xpose.msra.mxu0 0.0
        %4956 = vmatprep.subr.mxu0 0.0
        %4957 = vmatpush1.xpose.msra.mxu0 0.0
        %4958 = vmatprep.subr.mxu0 0.0
        %4959 = vmatpush1.xpose.msra.mxu0 0.0
        %4960 = vmatprep.subr.mxu0 0.0
        %4961 = vmatpush1.xpose.msra.mxu0 0.0
        %4962 = vmatprep.subr.mxu0 0.0
        %4963 = vmatpush1.xpose.msra.mxu0 0.0
        %4964 = vmatprep.subr.mxu0 0.0
        %4965 = vmatpush1.xpose.msra.mxu0 0.0
        %4966 = vmatprep.subr.mxu0 0.0
        %4967 = vmatpush1.xpose.msra.mxu0 0.0
        %4968 = vmatprep.subr.mxu0 0.0
        %4969 = vmatpush1.xpose.msra.mxu0 0.0
        %4970 = vmatprep.subr.mxu0 0.0
        %4971 = vmatpush1.xpose.msra.mxu0 0.0
        %4972 = vmatprep.subr.mxu0 0.0
        %4973 = vmatpush1.xpose.msra.mxu0 0.0
        %4974 = vmatprep.mubr.f32.mxu0 %v2299
        %4975 = vmatmul.mubr.f32.gmra.mrb[0].mxu0 %v2298
        %v4976 = vpop.f32.mrb[0].mxu0
        %v4977 = vadd.f32 %v4907, %v4976
        %v4978 = vpop.f32.mrb[0].mxu0
        %4979 = vdwg.mxu0
        %4980 = vmatprep.subr.mxu0 %v2401
        %4981 = vmatpush1.xpose.msra.mxu0 %v2400
        %4982 = vmatprep.subr.mxu0 %v2501
        %4983 = vmatpush1.xpose.msra.mxu0 %v2500
        %4984 = vmatprep.subr.mxu0 0.0
        %4985 = vmatpush1.xpose.msra.mxu0 0.0
        %4986 = vmatprep.subr.mxu0 0.0
        %4987 = vmatpush1.xpose.msra.mxu0 0.0
        %4988 = vmatprep.subr.mxu0 0.0
        %4989 = vmatpush1.xpose.msra.mxu0 0.0
        %4990 = vmatprep.subr.mxu0 0.0
        %4991 = vmatpush1.xpose.msra.mxu0 0.0
        %4992 = vmatprep.subr.mxu0 0.0
        %4993 = vmatpush1.xpose.msra.mxu0 0.0
        %4994 = vmatprep.subr.mxu0 0.0
        %4995 = vmatpush1.xpose.msra.mxu0 0.0
        %4996 = vmatprep.subr.mxu0 0.0
        %4997 = vmatpush1.xpose.msra.mxu0 0.0
        %4998 = vmatprep.subr.mxu0 0.0
        %4999 = vmatpush1.xpose.msra.mxu0 0.0
        %5000 = vmatprep.subr.mxu0 0.0
        %5001 = vmatpush1.xpose.msra.mxu0 0.0
        %5002 = vmatprep.subr.mxu0 0.0
        %5003 = vmatpush1.xpose.msra.mxu0 0.0
        %5004 = vmatprep.subr.mxu0 0.0
        %5005 = vmatpush1.xpose.msra.mxu0 0.0
        %5006 = vmatprep.subr.mxu0 0.0
        %5007 = vmatpush1.xpose.msra.mxu0 0.0
        %5008 = vmatprep.subr.mxu0 0.0
        %5009 = vmatpush1.xpose.msra.mxu0 0.0
        %5010 = vmatprep.subr.mxu0 0.0
        %5011 = vmatpush1.xpose.msra.mxu0 0.0
        %5012 = vmatprep.subr.mxu0 0.0
        %5013 = vmatpush1.xpose.msra.mxu0 0.0
        %5014 = vmatprep.subr.mxu0 0.0
        %5015 = vmatpush1.xpose.msra.mxu0 0.0
        %5016 = vmatprep.subr.mxu0 0.0
        %5017 = vmatpush1.xpose.msra.mxu0 0.0
        %5018 = vmatprep.subr.mxu0 0.0
        %5019 = vmatpush1.xpose.msra.mxu0 0.0
        %5020 = vmatprep.subr.mxu0 0.0
        %5021 = vmatpush1.xpose.msra.mxu0 0.0
        %5022 = vmatprep.subr.mxu0 0.0
        %5023 = vmatpush1.xpose.msra.mxu0 0.0
        %5024 = vmatprep.subr.mxu0 0.0
        %5025 = vmatpush1.xpose.msra.mxu0 0.0
        %5026 = vmatprep.subr.mxu0 0.0
        %5027 = vmatpush1.xpose.msra.mxu0 0.0
        %5028 = vmatprep.subr.mxu0 0.0
        %5029 = vmatpush1.xpose.msra.mxu0 0.0
        %5030 = vmatprep.subr.mxu0 0.0
        %5031 = vmatpush1.xpose.msra.mxu0 0.0
        %5032 = vmatprep.subr.mxu0 0.0
        %5033 = vmatpush1.xpose.msra.mxu0 0.0
        %5034 = vmatprep.subr.mxu0 0.0
        %5035 = vmatpush1.xpose.msra.mxu0 0.0
        %5036 = vmatprep.subr.mxu0 0.0
        %5037 = vmatpush1.xpose.msra.mxu0 0.0
        %5038 = vmatprep.subr.mxu0 0.0
        %5039 = vmatpush1.xpose.msra.mxu0 0.0
        %5040 = vmatprep.subr.mxu0 0.0
        %5041 = vmatpush1.xpose.msra.mxu0 0.0
        %5042 = vmatprep.subr.mxu0 0.0
        %5043 = vmatpush1.xpose.msra.mxu0 0.0
        %5044 = vmatprep.mubr.f32.mxu0 %v2301
        %5045 = vmatmul.mubr.f32.gmra.mrb[0].mxu0 %v2300
        %v5046 = vpop.f32.mrb[0].mxu0
        %v5047 = vadd.f32 %v4977, %v5046
        %v5048 = vpop.f32.mrb[0].mxu0
        %5049 = vdwg.mxu0
        %5050 = vmatprep.subr.mxu0 %v2403
        %5051 = vmatpush1.xpose.msra.mxu0 %v2402
        %5052 = vmatprep.subr.mxu0 %v2503
        %5053 = vmatpush1.xpose.msra.mxu0 %v2502
        %5054 = vmatprep.subr.mxu0 0.0
        %5055 = vmatpush1.xpose.msra.mxu0 0.0
        %5056 = vmatprep.subr.mxu0 0.0
        %5057 = vmatpush1.xpose.msra.mxu0 0.0
        %5058 = vmatprep.subr.mxu0 0.0
        %5059 = vmatpush1.xpose.msra.mxu0 0.0
        %5060 = vmatprep.subr.mxu0 0.0
        %5061 = vmatpush1.xpose.msra.mxu0 0.0
        %5062 = vmatprep.subr.mxu0 0.0
        %5063 = vmatpush1.xpose.msra.mxu0 0.0
        %5064 = vmatprep.subr.mxu0 0.0
        %5065 = vmatpush1.xpose.msra.mxu0 0.0
        %5066 = vmatprep.subr.mxu0 0.0
        %5067 = vmatpush1.xpose.msra.mxu0 0.0
        %5068 = vmatprep.subr.mxu0 0.0
        %5069 = vmatpush1.xpose.msra.mxu0 0.0
        %5070 = vmatprep.subr.mxu0 0.0
        %5071 = vmatpush1.xpose.msra.mxu0 0.0
        %5072 = vmatprep.subr.mxu0 0.0
        %5073 = vmatpush1.xpose.msra.mxu0 0.0
        %5074 = vmatprep.subr.mxu0 0.0
        %5075 = vmatpush1.xpose.msra.mxu0 0.0
        %5076 = vmatprep.subr.mxu0 0.0
        %5077 = vmatpush1.xpose.msra.mxu0 0.0
        %5078 = vmatprep.subr.mxu0 0.0
        %5079 = vmatpush1.xpose.msra.mxu0 0.0
        %5080 = vmatprep.subr.mxu0 0.0
        %5081 = vmatpush1.xpose.msra.mxu0 0.0
        %5082 = vmatprep.subr.mxu0 0.0
        %5083 = vmatpush1.xpose.msra.mxu0 0.0
        %5084 = vmatprep.subr.mxu0 0.0
        %5085 = vmatpush1.xpose.msra.mxu0 0.0
        %5086 = vmatprep.subr.mxu0 0.0
        %5087 = vmatpush1.xpose.msra.mxu0 0.0
        %5088 = vmatprep.subr.mxu0 0.0
        %5089 = vmatpush1.xpose.msra.mxu0 0.0
        %5090 = vmatprep.subr.mxu0 0.0
        %5091 = vmatpush1.xpose.msra.mxu0 0.0
        %5092 = vmatprep.subr.mxu0 0.0
        %5093 = vmatpush1.xpose.msra.mxu0 0.0
        %5094 = vmatprep.subr.mxu0 0.0
        %5095 = vmatpush1.xpose.msra.mxu0 0.0
        %5096 = vmatprep.subr.mxu0 0.0
        %5097 = vmatpush1.xpose.msra.mxu0 0.0
        %5098 = vmatprep.subr.mxu0 0.0
        %5099 = vmatpush1.xpose.msra.mxu0 0.0
        %5100 = vmatprep.subr.mxu0 0.0
        %5101 = vmatpush1.xpose.msra.mxu0 0.0
        %5102 = vmatprep.subr.mxu0 0.0
        %5103 = vmatpush1.xpose.msra.mxu0 0.0
        %5104 = vmatprep.subr.mxu0 0.0
        %5105 = vmatpush1.xpose.msra.mxu0 0.0
        %5106 = vmatprep.subr.mxu0 0.0
        %5107 = vmatpush1.xpose.msra.mxu0 0.0
        %5108 = vmatprep.subr.mxu0 0.0
        %5109 = vmatpush1.xpose.msra.mxu0 0.0
        %5110 = vmatprep.subr.mxu0 0.0
        %5111 = vmatpush1.xpose.msra.mxu0 0.0
        %5112 = vmatprep.subr.mxu0 0.0
        %5113 = vmatpush1.xpose.msra.mxu0 0.0
        %5114 = vmatprep.mubr.f32.mxu0 %v2303
        %5115 = vmatmul.mubr.f32.gmra.mrb[0].mxu0 %v2302
        %v5116 = vpop.f32.mrb[0].mxu0
        %v5117 = vadd.f32 %v5047, %v5116
        %v5118 = vpop.f32.mrb[0].mxu0
        %5119 = vdwg.mxu0
        %5120 = vmatprep.subr.mxu0 %v2405
        %5121 = vmatpush1.xpose.msra.mxu0 %v2404
        %5122 = vmatprep.subr.mxu0 %v2505
        %5123 = vmatpush1.xpose.msra.mxu0 %v2504
        %5124 = vmatprep.subr.mxu0 0.0
        %5125 = vmatpush1.xpose.msra.mxu0 0.0
        %5126 = vmatprep.subr.mxu0 0.0
        %5127 = vmatpush1.xpose.msra.mxu0 0.0
        %5128 = vmatprep.subr.mxu0 0.0
        %5129 = vmatpush1.xpose.msra.mxu0 0.0
        %5130 = vmatprep.subr.mxu0 0.0
        %5131 = vmatpush1.xpose.msra.mxu0 0.0
        %5132 = vmatprep.subr.mxu0 0.0
        %5133 = vmatpush1.xpose.msra.mxu0 0.0
        %5134 = vmatprep.subr.mxu0 0.0
        %5135 = vmatpush1.xpose.msra.mxu0 0.0
        %5136 = vmatprep.subr.mxu0 0.0
        %5137 = vmatpush1.xpose.msra.mxu0 0.0
        %5138 = vmatprep.subr.mxu0 0.0
        %5139 = vmatpush1.xpose.msra.mxu0 0.0
        %5140 = vmatprep.subr.mxu0 0.0
        %5141 = vmatpush1.xpose.msra.mxu0 0.0
        %5142 = vmatprep.subr.mxu0 0.0
        %5143 = vmatpush1.xpose.msra.mxu0 0.0
        %5144 = vmatprep.subr.mxu0 0.0
        %5145 = vmatpush1.xpose.msra.mxu0 0.0
        %5146 = vmatprep.subr.mxu0 0.0
        %5147 = vmatpush1.xpose.msra.mxu0 0.0
        %5148 = vmatprep.subr.mxu0 0.0
        %5149 = vmatpush1.xpose.msra.mxu0 0.0
        %5150 = vmatprep.subr.mxu0 0.0
        %5151 = vmatpush1.xpose.msra.mxu0 0.0
        %5152 = vmatprep.subr.mxu0 0.0
        %5153 = vmatpush1.xpose.msra.mxu0 0.0
        %5154 = vmatprep.subr.mxu0 0.0
        %5155 = vmatpush1.xpose.msra.mxu0 0.0
        %5156 = vmatprep.subr.mxu0 0.0
        %5157 = vmatpush1.xpose.msra.mxu0 0.0
        %5158 = vmatprep.subr.mxu0 0.0
        %5159 = vmatpush1.xpose.msra.mxu0 0.0
        %5160 = vmatprep.subr.mxu0 0.0
        %5161 = vmatpush1.xpose.msra.mxu0 0.0
        %5162 = vmatprep.subr.mxu0 0.0
        %5163 = vmatpush1.xpose.msra.mxu0 0.0
        %5164 = vmatprep.subr.mxu0 0.0
        %5165 = vmatpush1.xpose.msra.mxu0 0.0
        %5166 = vmatprep.subr.mxu0 0.0
        %5167 = vmatpush1.xpose.msra.mxu0 0.0
        %5168 = vmatprep.subr.mxu0 0.0
        %5169 = vmatpush1.xpose.msra.mxu0 0.0
        %5170 = vmatprep.subr.mxu0 0.0
        %5171 = vmatpush1.xpose.msra.mxu0 0.0
        %5172 = vmatprep.subr.mxu0 0.0
        %5173 = vmatpush1.xpose.msra.mxu0 0.0
        %5174 = vmatprep.subr.mxu0 0.0
        %5175 = vmatpush1.xpose.msra.mxu0 0.0
        %5176 = vmatprep.subr.mxu0 0.0
        %5177 = vmatpush1.xpose.msra.mxu0 0.0
        %5178 = vmatprep.subr.mxu0 0.0
        %5179 = vmatpush1.xpose.msra.mxu0 0.0
        %5180 = vmatprep.subr.mxu0 0.0
        %5181 = vmatpush1.xpose.msra.mxu0 0.0
        %5182 = vmatprep.subr.mxu0 0.0
        %5183 = vmatpush1.xpose.msra.mxu0 0.0
        %5184 = vmatprep.mubr.f32.mxu0 %v2305
        %5185 = vmatmul.mubr.f32.gmra.mrb[0].mxu0 %v2304
        %v5186 = vpop.f32.mrb[0].mxu0
        %v5187 = vadd.f32 %v5117, %v5186
        %v5188 = vpop.f32.mrb[0].mxu0
        %5189 = vdwg.mxu0
        %5190 = vmatprep.subr.mxu0 %v2407
        %5191 = vmatpush1.xpose.msra.mxu0 %v2406
        %5192 = vmatprep.subr.mxu0 %v2507
        %5193 = vmatpush1.xpose.msra.mxu0 %v2506
        %5194 = vmatprep.subr.mxu0 0.0
        %5195 = vmatpush1.xpose.msra.mxu0 0.0
        %5196 = vmatprep.subr.mxu0 0.0
        %5197 = vmatpush1.xpose.msra.mxu0 0.0
        %5198 = vmatprep.subr.mxu0 0.0
        %5199 = vmatpush1.xpose.msra.mxu0 0.0
        %5200 = vmatprep.subr.mxu0 0.0
        %5201 = vmatpush1.xpose.msra.mxu0 0.0
        %5202 = vmatprep.subr.mxu0 0.0
        %5203 = vmatpush1.xpose.msra.mxu0 0.0
        %5204 = vmatprep.subr.mxu0 0.0
        %5205 = vmatpush1.xpose.msra.mxu0 0.0
        %5206 = vmatprep.subr.mxu0 0.0
        %5207 = vmatpush1.xpose.msra.mxu0 0.0
        %5208 = vmatprep.subr.mxu0 0.0
        %5209 = vmatpush1.xpose.msra.mxu0 0.0
        %5210 = vmatprep.subr.mxu0 0.0
        %5211 = vmatpush1.xpose.msra.mxu0 0.0
        %5212 = vmatprep.subr.mxu0 0.0
        %5213 = vmatpush1.xpose.msra.mxu0 0.0
        %5214 = vmatprep.subr.mxu0 0.0
        %5215 = vmatpush1.xpose.msra.mxu0 0.0
        %5216 = vmatprep.subr.mxu0 0.0
        %5217 = vmatpush1.xpose.msra.mxu0 0.0
        %5218 = vmatprep.subr.mxu0 0.0
        %5219 = vmatpush1.xpose.msra.mxu0 0.0
        %5220 = vmatprep.subr.mxu0 0.0
        %5221 = vmatpush1.xpose.msra.mxu0 0.0
        %5222 = vmatprep.subr.mxu0 0.0
        %5223 = vmatpush1.xpose.msra.mxu0 0.0
        %5224 = vmatprep.subr.mxu0 0.0
        %5225 = vmatpush1.xpose.msra.mxu0 0.0
        %5226 = vmatprep.subr.mxu0 0.0
        %5227 = vmatpush1.xpose.msra.mxu0 0.0
        %5228 = vmatprep.subr.mxu0 0.0
        %5229 = vmatpush1.xpose.msra.mxu0 0.0
        %5230 = vmatprep.subr.mxu0 0.0
        %5231 = vmatpush1.xpose.msra.mxu0 0.0
        %5232 = vmatprep.subr.mxu0 0.0
        %5233 = vmatpush1.xpose.msra.mxu0 0.0
        %5234 = vmatprep.subr.mxu0 0.0
        %5235 = vmatpush1.xpose.msra.mxu0 0.0
        %5236 = vmatprep.subr.mxu0 0.0
        %5237 = vmatpush1.xpose.msra.mxu0 0.0
        %5238 = vmatprep.subr.mxu0 0.0
        %5239 = vmatpush1.xpose.msra.mxu0 0.0
        %5240 = vmatprep.subr.mxu0 0.0
        %5241 = vmatpush1.xpose.msra.mxu0 0.0
        %5242 = vmatprep.subr.mxu0 0.0
        %5243 = vmatpush1.xpose.msra.mxu0 0.0
        %5244 = vmatprep.subr.mxu0 0.0
        %5245 = vmatpush1.xpose.msra.mxu0 0.0
        %5246 = vmatprep.subr.mxu0 0.0
        %5247 = vmatpush1.xpose.msra.mxu0 0.0
        %5248 = vmatprep.subr.mxu0 0.0
        %5249 = vmatpush1.xpose.msra.mxu0 0.0
        %5250 = vmatprep.subr.mxu0 0.0
        %5251 = vmatpush1.xpose.msra.mxu0 0.0
        %5252 = vmatprep.subr.mxu0 0.0
        %5253 = vmatpush1.xpose.msra.mxu0 0.0
        %5254 = vmatprep.mubr.f32.mxu0 %v2307
        %5255 = vmatmul.mubr.f32.gmra.mrb[0].mxu0 %v2306
        %v5256 = vpop.f32.mrb[0].mxu0
        %v5257 = vadd.f32 %v5187, %v5256
        %v5258 = vpop.f32.mrb[0].mxu0
        %5259 = vdwg.mxu0
        %5260 = vmatprep.subr.mxu0 %v2409
        %5261 = vmatpush1.xpose.msra.mxu0 %v2408
        %5262 = vmatprep.subr.mxu0 %v2509
        %5263 = vmatpush1.xpose.msra.mxu0 %v2508
        %5264 = vmatprep.subr.mxu0 0.0
        %5265 = vmatpush1.xpose.msra.mxu0 0.0
        %5266 = vmatprep.subr.mxu0 0.0
        %5267 = vmatpush1.xpose.msra.mxu0 0.0
        %5268 = vmatprep.subr.mxu0 0.0
        %5269 = vmatpush1.xpose.msra.mxu0 0.0
        %5270 = vmatprep.subr.mxu0 0.0
        %5271 = vmatpush1.xpose.msra.mxu0 0.0
        %5272 = vmatprep.subr.mxu0 0.0
        %5273 = vmatpush1.xpose.msra.mxu0 0.0
        %5274 = vmatprep.subr.mxu0 0.0
        %5275 = vmatpush1.xpose.msra.mxu0 0.0
        %5276 = vmatprep.subr.mxu0 0.0
        %5277 = vmatpush1.xpose.msra.mxu0 0.0
        %5278 = vmatprep.subr.mxu0 0.0
        %5279 = vmatpush1.xpose.msra.mxu0 0.0
        %5280 = vmatprep.subr.mxu0 0.0
        %5281 = vmatpush1.xpose.msra.mxu0 0.0
        %5282 = vmatprep.subr.mxu0 0.0
        %5283 = vmatpush1.xpose.msra.mxu0 0.0
        %5284 = vmatprep.subr.mxu0 0.0
        %5285 = vmatpush1.xpose.msra.mxu0 0.0
        %5286 = vmatprep.subr.mxu0 0.0
        %5287 = vmatpush1.xpose.msra.mxu0 0.0
        %5288 = vmatprep.subr.mxu0 0.0
        %5289 = vmatpush1.xpose.msra.mxu0 0.0
        %5290 = vmatprep.subr.mxu0 0.0
        %5291 = vmatpush1.xpose.msra.mxu0 0.0
        %5292 = vmatprep.subr.mxu0 0.0
        %5293 = vmatpush1.xpose.msra.mxu0 0.0
        %5294 = vmatprep.subr.mxu0 0.0
        %5295 = vmatpush1.xpose.msra.mxu0 0.0
        %5296 = vmatprep.subr.mxu0 0.0
        %5297 = vmatpush1.xpose.msra.mxu0 0.0
        %5298 = vmatprep.subr.mxu0 0.0
        %5299 = vmatpush1.xpose.msra.mxu0 0.0
        %5300 = vmatprep.subr.mxu0 0.0
        %5301 = vmatpush1.xpose.msra.mxu0 0.0
        %5302 = vmatprep.subr.mxu0 0.0
        %5303 = vmatpush1.xpose.msra.mxu0 0.0
        %5304 = vmatprep.subr.mxu0 0.0
        %5305 = vmatpush1.xpose.msra.mxu0 0.0
        %5306 = vmatprep.subr.mxu0 0.0
        %5307 = vmatpush1.xpose.msra.mxu0 0.0
        %5308 = vmatprep.subr.mxu0 0.0
        %5309 = vmatpush1.xpose.msra.mxu0 0.0
        %5310 = vmatprep.subr.mxu0 0.0
        %5311 = vmatpush1.xpose.msra.mxu0 0.0
        %5312 = vmatprep.subr.mxu0 0.0
        %5313 = vmatpush1.xpose.msra.mxu0 0.0
        %5314 = vmatprep.subr.mxu0 0.0
        %5315 = vmatpush1.xpose.msra.mxu0 0.0
        %5316 = vmatprep.subr.mxu0 0.0
        %5317 = vmatpush1.xpose.msra.mxu0 0.0
        %5318 = vmatprep.subr.mxu0 0.0
        %5319 = vmatpush1.xpose.msra.mxu0 0.0
        %5320 = vmatprep.subr.mxu0 0.0
        %5321 = vmatpush1.xpose.msra.mxu0 0.0
        %5322 = vmatprep.subr.mxu0 0.0
        %5323 = vmatpush1.xpose.msra.mxu0 0.0
        %5324 = vmatprep.mubr.f32.mxu0 %v2309
        %5325 = vmatmul.mubr.f32.gmra.mrb[0].mxu0 %v2308
        %v5326 = vpop.f32.mrb[0].mxu0
        %v5327 = vadd.f32 %v5257, %v5326
        %v5328 = vpop.f32.mrb[0].mxu0
        %5329 = vdwg.mxu0
        %5330 = vmatprep.subr.mxu0 %v2411
        %5331 = vmatpush1.xpose.msra.mxu0 %v2410
        %5332 = vmatprep.subr.mxu0 %v2511
        %5333 = vmatpush1.xpose.msra.mxu0 %v2510
        %5334 = vmatprep.subr.mxu0 0.0
        %5335 = vmatpush1.xpose.msra.mxu0 0.0
        %5336 = vmatprep.subr.mxu0 0.0
        %5337 = vmatpush1.xpose.msra.mxu0 0.0
        %5338 = vmatprep.subr.mxu0 0.0
        %5339 = vmatpush1.xpose.msra.mxu0 0.0
        %5340 = vmatprep.subr.mxu0 0.0
        %5341 = vmatpush1.xpose.msra.mxu0 0.0
        %5342 = vmatprep.subr.mxu0 0.0
        %5343 = vmatpush1.xpose.msra.mxu0 0.0
        %5344 = vmatprep.subr.mxu0 0.0
        %5345 = vmatpush1.xpose.msra.mxu0 0.0
        %5346 = vmatprep.subr.mxu0 0.0
        %5347 = vmatpush1.xpose.msra.mxu0 0.0
        %5348 = vmatprep.subr.mxu0 0.0
        %5349 = vmatpush1.xpose.msra.mxu0 0.0
        %5350 = vmatprep.subr.mxu0 0.0
        %5351 = vmatpush1.xpose.msra.mxu0 0.0
        %5352 = vmatprep.subr.mxu0 0.0
        %5353 = vmatpush1.xpose.msra.mxu0 0.0
        %5354 = vmatprep.subr.mxu0 0.0
        %5355 = vmatpush1.xpose.msra.mxu0 0.0
        %5356 = vmatprep.subr.mxu0 0.0
        %5357 = vmatpush1.xpose.msra.mxu0 0.0
        %5358 = vmatprep.subr.mxu0 0.0
        %5359 = vmatpush1.xpose.msra.mxu0 0.0
        %5360 = vmatprep.subr.mxu0 0.0
        %5361 = vmatpush1.xpose.msra.mxu0 0.0
        %5362 = vmatprep.subr.mxu0 0.0
        %5363 = vmatpush1.xpose.msra.mxu0 0.0
        %5364 = vmatprep.subr.mxu0 0.0
        %5365 = vmatpush1.xpose.msra.mxu0 0.0
        %5366 = vmatprep.subr.mxu0 0.0
        %5367 = vmatpush1.xpose.msra.mxu0 0.0
        %5368 = vmatprep.subr.mxu0 0.0
        %5369 = vmatpush1.xpose.msra.mxu0 0.0
        %5370 = vmatprep.subr.mxu0 0.0
        %5371 = vmatpush1.xpose.msra.mxu0 0.0
        %5372 = vmatprep.subr.mxu0 0.0
        %5373 = vmatpush1.xpose.msra.mxu0 0.0
        %5374 = vmatprep.subr.mxu0 0.0
        %5375 = vmatpush1.xpose.msra.mxu0 0.0
        %5376 = vmatprep.subr.mxu0 0.0
        %5377 = vmatpush1.xpose.msra.mxu0 0.0
        %5378 = vmatprep.subr.mxu0 0.0
        %5379 = vmatpush1.xpose.msra.mxu0 0.0
        %5380 = vmatprep.subr.mxu0 0.0
        %5381 = vmatpush1.xpose.msra.mxu0 0.0
        %5382 = vmatprep.subr.mxu0 0.0
        %5383 = vmatpush1.xpose.msra.mxu0 0.0
        %5384 = vmatprep.subr.mxu0 0.0
        %5385 = vmatpush1.xpose.msra.mxu0 0.0
        %5386 = vmatprep.subr.mxu0 0.0
        %5387 = vmatpush1.xpose.msra.mxu0 0.0
        %5388 = vmatprep.subr.mxu0 0.0
        %5389 = vmatpush1.xpose.msra.mxu0 0.0
        %5390 = vmatprep.subr.mxu0 0.0
        %5391 = vmatpush1.xpose.msra.mxu0 0.0
        %5392 = vmatprep.subr.mxu0 0.0
        %5393 = vmatpush1.xpose.msra.mxu0 0.0
        %5394 = vmatprep.mubr.f32.mxu0 %v2311
        %5395 = vmatmul.mubr.f32.gmra.mrb[0].mxu0 %v2310
        %v5396 = vpop.f32.mrb[0].mxu0
        %v5397 = vadd.f32 %v5327, %v5396
        %v5398 = vpop.f32.mrb[0].mxu0
        %5399 = vdwg.mxu0
        %5400 = vmatprep.subr.mxu0 %v2413
        %5401 = vmatpush1.xpose.msra.mxu0 %v2412
        %5402 = vmatprep.subr.mxu0 %v2513
        %5403 = vmatpush1.xpose.msra.mxu0 %v2512
        %5404 = vmatprep.subr.mxu0 0.0
        %5405 = vmatpush1.xpose.msra.mxu0 0.0
        %5406 = vmatprep.subr.mxu0 0.0
        %5407 = vmatpush1.xpose.msra.mxu0 0.0
        %5408 = vmatprep.subr.mxu0 0.0
        %5409 = vmatpush1.xpose.msra.mxu0 0.0
        %5410 = vmatprep.subr.mxu0 0.0
        %5411 = vmatpush1.xpose.msra.mxu0 0.0
        %5412 = vmatprep.subr.mxu0 0.0
        %5413 = vmatpush1.xpose.msra.mxu0 0.0
        %5414 = vmatprep.subr.mxu0 0.0
        %5415 = vmatpush1.xpose.msra.mxu0 0.0
        %5416 = vmatprep.subr.mxu0 0.0
        %5417 = vmatpush1.xpose.msra.mxu0 0.0
        %5418 = vmatprep.subr.mxu0 0.0
        %5419 = vmatpush1.xpose.msra.mxu0 0.0
        %5420 = vmatprep.subr.mxu0 0.0
        %5421 = vmatpush1.xpose.msra.mxu0 0.0
        %5422 = vmatprep.subr.mxu0 0.0
        %5423 = vmatpush1.xpose.msra.mxu0 0.0
        %5424 = vmatprep.subr.mxu0 0.0
        %5425 = vmatpush1.xpose.msra.mxu0 0.0
        %5426 = vmatprep.subr.mxu0 0.0
        %5427 = vmatpush1.xpose.msra.mxu0 0.0
        %5428 = vmatprep.subr.mxu0 0.0
        %5429 = vmatpush1.xpose.msra.mxu0 0.0
        %5430 = vmatprep.subr.mxu0 0.0
        %5431 = vmatpush1.xpose.msra.mxu0 0.0
        %5432 = vmatprep.subr.mxu0 0.0
        %5433 = vmatpush1.xpose.msra.mxu0 0.0
        %5434 = vmatprep.subr.mxu0 0.0
        %5435 = vmatpush1.xpose.msra.mxu0 0.0
        %5436 = vmatprep.subr.mxu0 0.0
        %5437 = vmatpush1.xpose.msra.mxu0 0.0
        %5438 = vmatprep.subr.mxu0 0.0
        %5439 = vmatpush1.xpose.msra.mxu0 0.0
        %5440 = vmatprep.subr.mxu0 0.0
        %5441 = vmatpush1.xpose.msra.mxu0 0.0
        %5442 = vmatprep.subr.mxu0 0.0
        %5443 = vmatpush1.xpose.msra.mxu0 0.0
        %5444 = vmatprep.subr.mxu0 0.0
        %5445 = vmatpush1.xpose.msra.mxu0 0.0
        %5446 = vmatprep.subr.mxu0 0.0
        %5447 = vmatpush1.xpose.msra.mxu0 0.0
        %5448 = vmatprep.subr.mxu0 0.0
        %5449 = vmatpush1.xpose.msra.mxu0 0.0
        %5450 = vmatprep.subr.mxu0 0.0
        %5451 = vmatpush1.xpose.msra.mxu0 0.0
        %5452 = vmatprep.subr.mxu0 0.0
        %5453 = vmatpush1.xpose.msra.mxu0 0.0
        %5454 = vmatprep.subr.mxu0 0.0
        %5455 = vmatpush1.xpose.msra.mxu0 0.0
        %5456 = vmatprep.subr.mxu0 0.0
        %5457 = vmatpush1.xpose.msra.mxu0 0.0
        %5458 = vmatprep.subr.mxu0 0.0
        %5459 = vmatpush1.xpose.msra.mxu0 0.0
        %5460 = vmatprep.subr.mxu0 0.0
        %5461 = vmatpush1.xpose.msra.mxu0 0.0
        %5462 = vmatprep.subr.mxu0 0.0
        %5463 = vmatpush1.xpose.msra.mxu0 0.0
        %5464 = vmatprep.mubr.f32.mxu0 %v2313
        %5465 = vmatmul.mubr.f32.gmra.mrb[0].mxu0 %v2312
        %v5466 = vpop.f32.mrb[0].mxu0
        %v5467 = vadd.f32 %v5397, %v5466
        %v5468 = vpop.f32.mrb[0].mxu0
        %5469 = vdwg.mxu0
        %5470 = vmatprep.subr.mxu0 %v2415
        %5471 = vmatpush1.xpose.msra.mxu0 %v2414
        %5472 = vmatprep.subr.mxu0 %v2515
        %5473 = vmatpush1.xpose.msra.mxu0 %v2514
        %5474 = vmatprep.subr.mxu0 0.0
        %5475 = vmatpush1.xpose.msra.mxu0 0.0
        %5476 = vmatprep.subr.mxu0 0.0
        %5477 = vmatpush1.xpose.msra.mxu0 0.0
        %5478 = vmatprep.subr.mxu0 0.0
        %5479 = vmatpush1.xpose.msra.mxu0 0.0
        %5480 = vmatprep.subr.mxu0 0.0
        %5481 = vmatpush1.xpose.msra.mxu0 0.0
        %5482 = vmatprep.subr.mxu0 0.0
        %5483 = vmatpush1.xpose.msra.mxu0 0.0
        %5484 = vmatprep.subr.mxu0 0.0
        %5485 = vmatpush1.xpose.msra.mxu0 0.0
        %5486 = vmatprep.subr.mxu0 0.0
        %5487 = vmatpush1.xpose.msra.mxu0 0.0
        %5488 = vmatprep.subr.mxu0 0.0
        %5489 = vmatpush1.xpose.msra.mxu0 0.0
        %5490 = vmatprep.subr.mxu0 0.0
        %5491 = vmatpush1.xpose.msra.mxu0 0.0
        %5492 = vmatprep.subr.mxu0 0.0
        %5493 = vmatpush1.xpose.msra.mxu0 0.0
        %5494 = vmatprep.subr.mxu0 0.0
        %5495 = vmatpush1.xpose.msra.mxu0 0.0
        %5496 = vmatprep.subr.mxu0 0.0
        %5497 = vmatpush1.xpose.msra.mxu0 0.0
        %5498 = vmatprep.subr.mxu0 0.0
        %5499 = vmatpush1.xpose.msra.mxu0 0.0
        %5500 = vmatprep.subr.mxu0 0.0
        %5501 = vmatpush1.xpose.msra.mxu0 0.0
        %5502 = vmatprep.subr.mxu0 0.0
        %5503 = vmatpush1.xpose.msra.mxu0 0.0
        %5504 = vmatprep.subr.mxu0 0.0
        %5505 = vmatpush1.xpose.msra.mxu0 0.0
        %5506 = vmatprep.subr.mxu0 0.0
        %5507 = vmatpush1.xpose.msra.mxu0 0.0
        %5508 = vmatprep.subr.mxu0 0.0
        %5509 = vmatpush1.xpose.msra.mxu0 0.0
        %5510 = vmatprep.subr.mxu0 0.0
        %5511 = vmatpush1.xpose.msra.mxu0 0.0
        %5512 = vmatprep.subr.mxu0 0.0
        %5513 = vmatpush1.xpose.msra.mxu0 0.0
        %5514 = vmatprep.subr.mxu0 0.0
        %5515 = vmatpush1.xpose.msra.mxu0 0.0
        %5516 = vmatprep.subr.mxu0 0.0
        %5517 = vmatpush1.xpose.msra.mxu0 0.0
        %5518 = vmatprep.subr.mxu0 0.0
        %5519 = vmatpush1.xpose.msra.mxu0 0.0
        %5520 = vmatprep.subr.mxu0 0.0
        %5521 = vmatpush1.xpose.msra.mxu0 0.0
        %5522 = vmatprep.subr.mxu0 0.0
        %5523 = vmatpush1.xpose.msra.mxu0 0.0
        %5524 = vmatprep.subr.mxu0 0.0
        %5525 = vmatpush1.xpose.msra.mxu0 0.0
        %5526 = vmatprep.subr.mxu0 0.0
        %5527 = vmatpush1.xpose.msra.mxu0 0.0
        %5528 = vmatprep.subr.mxu0 0.0
        %5529 = vmatpush1.xpose.msra.mxu0 0.0
        %5530 = vmatprep.subr.mxu0 0.0
        %5531 = vmatpush1.xpose.msra.mxu0 0.0
        %5532 = vmatprep.subr.mxu0 0.0
        %5533 = vmatpush1.xpose.msra.mxu0 0.0
        %5534 = vmatprep.mubr.f32.mxu0 %v2315
        %5535 = vmatmul.mubr.f32.gmra.mrb[0].mxu0 %v2314
        %v5536 = vpop.f32.mrb[0].mxu0
        %v5537 = vadd.f32 %v5467, %v5536
        %v5538 = vpop.f32.mrb[0].mxu0
        %5539 = vdwg.mxu0
        %5540 = vmatprep.subr.mxu0 %v2417
        %5541 = vmatpush1.xpose.msra.mxu0 %v2416
        %5542 = vmatprep.subr.mxu0 %v2517
        %5543 = vmatpush1.xpose.msra.mxu0 %v2516
        %5544 = vmatprep.subr.mxu0 0.0
        %5545 = vmatpush1.xpose.msra.mxu0 0.0
        %5546 = vmatprep.subr.mxu0 0.0
        %5547 = vmatpush1.xpose.msra.mxu0 0.0
        %5548 = vmatprep.subr.mxu0 0.0
        %5549 = vmatpush1.xpose.msra.mxu0 0.0
        %5550 = vmatprep.subr.mxu0 0.0
        %5551 = vmatpush1.xpose.msra.mxu0 0.0
        %5552 = vmatprep.subr.mxu0 0.0
        %5553 = vmatpush1.xpose.msra.mxu0 0.0
        %5554 = vmatprep.subr.mxu0 0.0
        %5555 = vmatpush1.xpose.msra.mxu0 0.0
        %5556 = vmatprep.subr.mxu0 0.0
        %5557 = vmatpush1.xpose.msra.mxu0 0.0
        %5558 = vmatprep.subr.mxu0 0.0
        %5559 = vmatpush1.xpose.msra.mxu0 0.0
        %5560 = vmatprep.subr.mxu0 0.0
        %5561 = vmatpush1.xpose.msra.mxu0 0.0
        %5562 = vmatprep.subr.mxu0 0.0
        %5563 = vmatpush1.xpose.msra.mxu0 0.0
        %5564 = vmatprep.subr.mxu0 0.0
        %5565 = vmatpush1.xpose.msra.mxu0 0.0
        %5566 = vmatprep.subr.mxu0 0.0
        %5567 = vmatpush1.xpose.msra.mxu0 0.0
        %5568 = vmatprep.subr.mxu0 0.0
        %5569 = vmatpush1.xpose.msra.mxu0 0.0
        %5570 = vmatprep.subr.mxu0 0.0
        %5571 = vmatpush1.xpose.msra.mxu0 0.0
        %5572 = vmatprep.subr.mxu0 0.0
        %5573 = vmatpush1.xpose.msra.mxu0 0.0
        %5574 = vmatprep.subr.mxu0 0.0
        %5575 = vmatpush1.xpose.msra.mxu0 0.0
        %5576 = vmatprep.subr.mxu0 0.0
        %5577 = vmatpush1.xpose.msra.mxu0 0.0
        %5578 = vmatprep.subr.mxu0 0.0
        %5579 = vmatpush1.xpose.msra.mxu0 0.0
        %5580 = vmatprep.subr.mxu0 0.0
        %5581 = vmatpush1.xpose.msra.mxu0 0.0
        %5582 = vmatprep.subr.mxu0 0.0
        %5583 = vmatpush1.xpose.msra.mxu0 0.0
        %5584 = vmatprep.subr.mxu0 0.0
        %5585 = vmatpush1.xpose.msra.mxu0 0.0
        %5586 = vmatprep.subr.mxu0 0.0
        %5587 = vmatpush1.xpose.msra.mxu0 0.0
        %5588 = vmatprep.subr.mxu0 0.0
        %5589 = vmatpush1.xpose.msra.mxu0 0.0
        %5590 = vmatprep.subr.mxu0 0.0
        %5591 = vmatpush1.xpose.msra.mxu0 0.0
        %5592 = vmatprep.subr.mxu0 0.0
        %5593 = vmatpush1.xpose.msra.mxu0 0.0
        %5594 = vmatprep.subr.mxu0 0.0
        %5595 = vmatpush1.xpose.msra.mxu0 0.0
        %5596 = vmatprep.subr.mxu0 0.0
        %5597 = vmatpush1.xpose.msra.mxu0 0.0
        %5598 = vmatprep.subr.mxu0 0.0
        %5599 = vmatpush1.xpose.msra.mxu0 0.0
        %5600 = vmatprep.subr.mxu0 0.0
        %5601 = vmatpush1.xpose.msra.mxu0 0.0
        %5602 = vmatprep.subr.mxu0 0.0
        %5603 = vmatpush1.xpose.msra.mxu0 0.0
        %5604 = vmatprep.mubr.f32.mxu0 %v2317
        %5605 = vmatmul.mubr.f32.gmra.mrb[0].mxu0 %v2316
        %v5606 = vpop.f32.mrb[0].mxu0
        %v5607 = vadd.f32 %v5537, %v5606
        %v5608 = vpop.f32.mrb[0].mxu0
        %5609 = vdwg.mxu0
        %5610 = vmatprep.subr.mxu0 %v2419
        %5611 = vmatpush1.xpose.msra.mxu0 %v2418
        %5612 = vmatprep.subr.mxu0 %v2519
        %5613 = vmatpush1.xpose.msra.mxu0 %v2518
        %5614 = vmatprep.subr.mxu0 0.0
        %5615 = vmatpush1.xpose.msra.mxu0 0.0
        %5616 = vmatprep.subr.mxu0 0.0
        %5617 = vmatpush1.xpose.msra.mxu0 0.0
        %5618 = vmatprep.subr.mxu0 0.0
        %5619 = vmatpush1.xpose.msra.mxu0 0.0
        %5620 = vmatprep.subr.mxu0 0.0
        %5621 = vmatpush1.xpose.msra.mxu0 0.0
        %5622 = vmatprep.subr.mxu0 0.0
        %5623 = vmatpush1.xpose.msra.mxu0 0.0
        %5624 = vmatprep.subr.mxu0 0.0
        %5625 = vmatpush1.xpose.msra.mxu0 0.0
        %5626 = vmatprep.subr.mxu0 0.0
        %5627 = vmatpush1.xpose.msra.mxu0 0.0
        %5628 = vmatprep.subr.mxu0 0.0
        %5629 = vmatpush1.xpose.msra.mxu0 0.0
        %5630 = vmatprep.subr.mxu0 0.0
        %5631 = vmatpush1.xpose.msra.mxu0 0.0
        %5632 = vmatprep.subr.mxu0 0.0
        %5633 = vmatpush1.xpose.msra.mxu0 0.0
        %5634 = vmatprep.subr.mxu0 0.0
        %5635 = vmatpush1.xpose.msra.mxu0 0.0
        %5636 = vmatprep.subr.mxu0 0.0
        %5637 = vmatpush1.xpose.msra.mxu0 0.0
        %5638 = vmatprep.subr.mxu0 0.0
        %5639 = vmatpush1.xpose.msra.mxu0 0.0
        %5640 = vmatprep.subr.mxu0 0.0
        %5641 = vmatpush1.xpose.msra.mxu0 0.0
        %5642 = vmatprep.subr.mxu0 0.0
        %5643 = vmatpush1.xpose.msra.mxu0 0.0
        %5644 = vmatprep.subr.mxu0 0.0
        %5645 = vmatpush1.xpose.msra.mxu0 0.0
        %5646 = vmatprep.subr.mxu0 0.0
        %5647 = vmatpush1.xpose.msra.mxu0 0.0
        %5648 = vmatprep.subr.mxu0 0.0
        %5649 = vmatpush1.xpose.msra.mxu0 0.0
        %5650 = vmatprep.subr.mxu0 0.0
        %5651 = vmatpush1.xpose.msra.mxu0 0.0
        %5652 = vmatprep.subr.mxu0 0.0
        %5653 = vmatpush1.xpose.msra.mxu0 0.0
        %5654 = vmatprep.subr.mxu0 0.0
        %5655 = vmatpush1.xpose.msra.mxu0 0.0
        %5656 = vmatprep.subr.mxu0 0.0
        %5657 = vmatpush1.xpose.msra.mxu0 0.0
        %5658 = vmatprep.subr.mxu0 0.0
        %5659 = vmatpush1.xpose.msra.mxu0 0.0
        %5660 = vmatprep.subr.mxu0 0.0
        %5661 = vmatpush1.xpose.msra.mxu0 0.0
        %5662 = vmatprep.subr.mxu0 0.0
        %5663 = vmatpush1.xpose.msra.mxu0 0.0
        %5664 = vmatprep.subr.mxu0 0.0
        %5665 = vmatpush1.xpose.msra.mxu0 0.0
        %5666 = vmatprep.subr.mxu0 0.0
        %5667 = vmatpush1.xpose.msra.mxu0 0.0
        %5668 = vmatprep.subr.mxu0 0.0
        %5669 = vmatpush1.xpose.msra.mxu0 0.0
        %5670 = vmatprep.subr.mxu0 0.0
        %5671 = vmatpush1.xpose.msra.mxu0 0.0
        %5672 = vmatprep.subr.mxu0 0.0
        %5673 = vmatpush1.xpose.msra.mxu0 0.0
        %5674 = vmatprep.mubr.f32.mxu0 %v2319
        %5675 = vmatmul.mubr.f32.gmra.mrb[0].mxu0 %v2318
        %v5676 = vpop.f32.mrb[0].mxu0
        %v5677 = vadd.f32 %v5607, %v5676
        %v5678 = vpop.f32.mrb[0].mxu0
        %5679 = vdwg.mxu0
        %5680 = vmatprep.subr.mxu0 %v2421
        %5681 = vmatpush1.xpose.msra.mxu0 %v2420
        %5682 = vmatprep.subr.mxu0 %v2521
        %5683 = vmatpush1.xpose.msra.mxu0 %v2520
        %5684 = vmatprep.subr.mxu0 0.0
        %5685 = vmatpush1.xpose.msra.mxu0 0.0
        %5686 = vmatprep.subr.mxu0 0.0
        %5687 = vmatpush1.xpose.msra.mxu0 0.0
        %5688 = vmatprep.subr.mxu0 0.0
        %5689 = vmatpush1.xpose.msra.mxu0 0.0
        %5690 = vmatprep.subr.mxu0 0.0
        %5691 = vmatpush1.xpose.msra.mxu0 0.0
        %5692 = vmatprep.subr.mxu0 0.0
        %5693 = vmatpush1.xpose.msra.mxu0 0.0
        %5694 = vmatprep.subr.mxu0 0.0
        %5695 = vmatpush1.xpose.msra.mxu0 0.0
        %5696 = vmatprep.subr.mxu0 0.0
        %5697 = vmatpush1.xpose.msra.mxu0 0.0
        %5698 = vmatprep.subr.mxu0 0.0
        %5699 = vmatpush1.xpose.msra.mxu0 0.0
        %5700 = vmatprep.subr.mxu0 0.0
        %5701 = vmatpush1.xpose.msra.mxu0 0.0
        %5702 = vmatprep.subr.mxu0 0.0
        %5703 = vmatpush1.xpose.msra.mxu0 0.0
        %5704 = vmatprep.subr.mxu0 0.0
        %5705 = vmatpush1.xpose.msra.mxu0 0.0
        %5706 = vmatprep.subr.mxu0 0.0
        %5707 = vmatpush1.xpose.msra.mxu0 0.0
        %5708 = vmatprep.subr.mxu0 0.0
        %5709 = vmatpush1.xpose.msra.mxu0 0.0
        %5710 = vmatprep.subr.mxu0 0.0
        %5711 = vmatpush1.xpose.msra.mxu0 0.0
        %5712 = vmatprep.subr.mxu0 0.0
        %5713 = vmatpush1.xpose.msra.mxu0 0.0
        %5714 = vmatprep.subr.mxu0 0.0
        %5715 = vmatpush1.xpose.msra.mxu0 0.0
        %5716 = vmatprep.subr.mxu0 0.0
        %5717 = vmatpush1.xpose.msra.mxu0 0.0
        %5718 = vmatprep.subr.mxu0 0.0
        %5719 = vmatpush1.xpose.msra.mxu0 0.0
        %5720 = vmatprep.subr.mxu0 0.0
        %5721 = vmatpush1.xpose.msra.mxu0 0.0
        %5722 = vmatprep.subr.mxu0 0.0
        %5723 = vmatpush1.xpose.msra.mxu0 0.0
        %5724 = vmatprep.subr.mxu0 0.0
        %5725 = vmatpush1.xpose.msra.mxu0 0.0
        %5726 = vmatprep.subr.mxu0 0.0
        %5727 = vmatpush1.xpose.msra.mxu0 0.0
        %5728 = vmatprep.subr.mxu0 0.0
        %5729 = vmatpush1.xpose.msra.mxu0 0.0
        %5730 = vmatprep.subr.mxu0 0.0
        %5731 = vmatpush1.xpose.msra.mxu0 0.0
        %5732 = vmatprep.subr.mxu0 0.0
        %5733 = vmatpush1.xpose.msra.mxu0 0.0
        %5734 = vmatprep.subr.mxu0 0.0
        %5735 = vmatpush1.xpose.msra.mxu0 0.0
        %5736 = vmatprep.subr.mxu0 0.0
        %5737 = vmatpush1.xpose.msra.mxu0 0.0
        %5738 = vmatprep.subr.mxu0 0.0
        %5739 = vmatpush1.xpose.msra.mxu0 0.0
        %5740 = vmatprep.subr.mxu0 0.0
        %5741 = vmatpush1.xpose.msra.mxu0 0.0
        %5742 = vmatprep.subr.mxu0 0.0
        %5743 = vmatpush1.xpose.msra.mxu0 0.0
        %5744 = vmatprep.mubr.f32.mxu0 %v2321
        %5745 = vmatmul.mubr.f32.gmra.mrb[0].mxu0 %v2320
        %v5746 = vpop.f32.mrb[0].mxu0
        %v5747 = vadd.f32 %v5677, %v5746
        %v5748 = vpop.f32.mrb[0].mxu0
        %5749 = vdwg.mxu0
        %5750 = vmatprep.subr.mxu0 %v2423
        %5751 = vmatpush1.xpose.msra.mxu0 %v2422
        %5752 = vmatprep.subr.mxu0 %v2523
        %5753 = vmatpush1.xpose.msra.mxu0 %v2522
        %5754 = vmatprep.subr.mxu0 0.0
        %5755 = vmatpush1.xpose.msra.mxu0 0.0
        %5756 = vmatprep.subr.mxu0 0.0
        %5757 = vmatpush1.xpose.msra.mxu0 0.0
        %5758 = vmatprep.subr.mxu0 0.0
        %5759 = vmatpush1.xpose.msra.mxu0 0.0
        %5760 = vmatprep.subr.mxu0 0.0
        %5761 = vmatpush1.xpose.msra.mxu0 0.0
        %5762 = vmatprep.subr.mxu0 0.0
        %5763 = vmatpush1.xpose.msra.mxu0 0.0
        %5764 = vmatprep.subr.mxu0 0.0
        %5765 = vmatpush1.xpose.msra.mxu0 0.0
        %5766 = vmatprep.subr.mxu0 0.0
        %5767 = vmatpush1.xpose.msra.mxu0 0.0
        %5768 = vmatprep.subr.mxu0 0.0
        %5769 = vmatpush1.xpose.msra.mxu0 0.0
        %5770 = vmatprep.subr.mxu0 0.0
        %5771 = vmatpush1.xpose.msra.mxu0 0.0
        %5772 = vmatprep.subr.mxu0 0.0
        %5773 = vmatpush1.xpose.msra.mxu0 0.0
        %5774 = vmatprep.subr.mxu0 0.0
        %5775 = vmatpush1.xpose.msra.mxu0 0.0
        %5776 = vmatprep.subr.mxu0 0.0
        %5777 = vmatpush1.xpose.msra.mxu0 0.0
        %5778 = vmatprep.subr.mxu0 0.0
        %5779 = vmatpush1.xpose.msra.mxu0 0.0
        %5780 = vmatprep.subr.mxu0 0.0
        %5781 = vmatpush1.xpose.msra.mxu0 0.0
        %5782 = vmatprep.subr.mxu0 0.0
        %5783 = vmatpush1.xpose.msra.mxu0 0.0
        %5784 = vmatprep.subr.mxu0 0.0
        %5785 = vmatpush1.xpose.msra.mxu0 0.0
        %5786 = vmatprep.subr.mxu0 0.0
        %5787 = vmatpush1.xpose.msra.mxu0 0.0
        %5788 = vmatprep.subr.mxu0 0.0
        %5789 = vmatpush1.xpose.msra.mxu0 0.0
        %5790 = vmatprep.subr.mxu0 0.0
        %5791 = vmatpush1.xpose.msra.mxu0 0.0
        %5792 = vmatprep.subr.mxu0 0.0
        %5793 = vmatpush1.xpose.msra.mxu0 0.0
        %5794 = vmatprep.subr.mxu0 0.0
        %5795 = vmatpush1.xpose.msra.mxu0 0.0
        %5796 = vmatprep.subr.mxu0 0.0
        %5797 = vmatpush1.xpose.msra.mxu0 0.0
        %5798 = vmatprep.subr.mxu0 0.0
        %5799 = vmatpush1.xpose.msra.mxu0 0.0
        %5800 = vmatprep.subr.mxu0 0.0
        %5801 = vmatpush1.xpose.msra.mxu0 0.0
        %5802 = vmatprep.subr.mxu0 0.0
        %5803 = vmatpush1.xpose.msra.mxu0 0.0
        %5804 = vmatprep.subr.mxu0 0.0
        %5805 = vmatpush1.xpose.msra.mxu0 0.0
        %5806 = vmatprep.subr.mxu0 0.0
        %5807 = vmatpush1.xpose.msra.mxu0 0.0
        %5808 = vmatprep.subr.mxu0 0.0
        %5809 = vmatpush1.xpose.msra.mxu0 0.0
        %5810 = vmatprep.subr.mxu0 0.0
        %5811 = vmatpush1.xpose.msra.mxu0 0.0
        %5812 = vmatprep.subr.mxu0 0.0
        %5813 = vmatpush1.xpose.msra.mxu0 0.0
        %5814 = vmatprep.mubr.f32.mxu0 %v2323
        %5815 = vmatmul.mubr.f32.gmra.mrb[0].mxu0 %v2322
        %v5816 = vpop.f32.mrb[0].mxu0
        %v5817 = vadd.f32 %v5747, %v5816
        %v5818 = vpop.f32.mrb[0].mxu0
        %5819 = vdwg.mxu0
        %5820 = vmatprep.subr.mxu0 %v2425
        %5821 = vmatpush1.xpose.msra.mxu0 %v2424
        %5822 = vmatprep.subr.mxu0 %v2525
        %5823 = vmatpush1.xpose.msra.mxu0 %v2524
        %5824 = vmatprep.subr.mxu0 0.0
        %5825 = vmatpush1.xpose.msra.mxu0 0.0
        %5826 = vmatprep.subr.mxu0 0.0
        %5827 = vmatpush1.xpose.msra.mxu0 0.0
        %5828 = vmatprep.subr.mxu0 0.0
        %5829 = vmatpush1.xpose.msra.mxu0 0.0
        %5830 = vmatprep.subr.mxu0 0.0
        %5831 = vmatpush1.xpose.msra.mxu0 0.0
        %5832 = vmatprep.subr.mxu0 0.0
        %5833 = vmatpush1.xpose.msra.mxu0 0.0
        %5834 = vmatprep.subr.mxu0 0.0
        %5835 = vmatpush1.xpose.msra.mxu0 0.0
        %5836 = vmatprep.subr.mxu0 0.0
        %5837 = vmatpush1.xpose.msra.mxu0 0.0
        %5838 = vmatprep.subr.mxu0 0.0
        %5839 = vmatpush1.xpose.msra.mxu0 0.0
        %5840 = vmatprep.subr.mxu0 0.0
        %5841 = vmatpush1.xpose.msra.mxu0 0.0
        %5842 = vmatprep.subr.mxu0 0.0
        %5843 = vmatpush1.xpose.msra.mxu0 0.0
        %5844 = vmatprep.subr.mxu0 0.0
        %5845 = vmatpush1.xpose.msra.mxu0 0.0
        %5846 = vmatprep.subr.mxu0 0.0
        %5847 = vmatpush1.xpose.msra.mxu0 0.0
        %5848 = vmatprep.subr.mxu0 0.0
        %5849 = vmatpush1.xpose.msra.mxu0 0.0
        %5850 = vmatprep.subr.mxu0 0.0
        %5851 = vmatpush1.xpose.msra.mxu0 0.0
        %5852 = vmatprep.subr.mxu0 0.0
        %5853 = vmatpush1.xpose.msra.mxu0 0.0
        %5854 = vmatprep.subr.mxu0 0.0
        %5855 = vmatpush1.xpose.msra.mxu0 0.0
        %5856 = vmatprep.subr.mxu0 0.0
        %5857 = vmatpush1.xpose.msra.mxu0 0.0
        %5858 = vmatprep.subr.mxu0 0.0
        %5859 = vmatpush1.xpose.msra.mxu0 0.0
        %5860 = vmatprep.subr.mxu0 0.0
        %5861 = vmatpush1.xpose.msra.mxu0 0.0
        %5862 = vmatprep.subr.mxu0 0.0
        %5863 = vmatpush1.xpose.msra.mxu0 0.0
        %5864 = vmatprep.subr.mxu0 0.0
        %5865 = vmatpush1.xpose.msra.mxu0 0.0
        %5866 = vmatprep.subr.mxu0 0.0
        %5867 = vmatpush1.xpose.msra.mxu0 0.0
        %5868 = vmatprep.subr.mxu0 0.0
        %5869 = vmatpush1.xpose.msra.mxu0 0.0
        %5870 = vmatprep.subr.mxu0 0.0
        %5871 = vmatpush1.xpose.msra.mxu0 0.0
        %5872 = vmatprep.subr.mxu0 0.0
        %5873 = vmatpush1.xpose.msra.mxu0 0.0
        %5874 = vmatprep.subr.mxu0 0.0
        %5875 = vmatpush1.xpose.msra.mxu0 0.0
        %5876 = vmatprep.subr.mxu0 0.0
        %5877 = vmatpush1.xpose.msra.mxu0 0.0
        %5878 = vmatprep.subr.mxu0 0.0
        %5879 = vmatpush1.xpose.msra.mxu0 0.0
        %5880 = vmatprep.subr.mxu0 0.0
        %5881 = vmatpush1.xpose.msra.mxu0 0.0
        %5882 = vmatprep.subr.mxu0 0.0
        %5883 = vmatpush1.xpose.msra.mxu0 0.0
        %5884 = vmatprep.mubr.f32.mxu0 %v2325
        %5885 = vmatmul.mubr.f32.gmra.mrb[0].mxu0 %v2324
        %v5886 = vpop.f32.mrb[0].mxu0
        %v5887 = vadd.f32 %v5817, %v5886
        %v5888 = vpop.f32.mrb[0].mxu0
        %5889 = vdwg.mxu0
        %5890 = vmatprep.subr.mxu0 %v2427
        %5891 = vmatpush1.xpose.msra.mxu0 %v2426
        %5892 = vmatprep.subr.mxu0 %v2527
        %5893 = vmatpush1.xpose.msra.mxu0 %v2526
        %5894 = vmatprep.subr.mxu0 0.0
        %5895 = vmatpush1.xpose.msra.mxu0 0.0
        %5896 = vmatprep.subr.mxu0 0.0
        %5897 = vmatpush1.xpose.msra.mxu0 0.0
        %5898 = vmatprep.subr.mxu0 0.0
        %5899 = vmatpush1.xpose.msra.mxu0 0.0
        %5900 = vmatprep.subr.mxu0 0.0
        %5901 = vmatpush1.xpose.msra.mxu0 0.0
        %5902 = vmatprep.subr.mxu0 0.0
        %5903 = vmatpush1.xpose.msra.mxu0 0.0
        %5904 = vmatprep.subr.mxu0 0.0
        %5905 = vmatpush1.xpose.msra.mxu0 0.0
        %5906 = vmatprep.subr.mxu0 0.0
        %5907 = vmatpush1.xpose.msra.mxu0 0.0
        %5908 = vmatprep.subr.mxu0 0.0
        %5909 = vmatpush1.xpose.msra.mxu0 0.0
        %5910 = vmatprep.subr.mxu0 0.0
        %5911 = vmatpush1.xpose.msra.mxu0 0.0
        %5912 = vmatprep.subr.mxu0 0.0
        %5913 = vmatpush1.xpose.msra.mxu0 0.0
        %5914 = vmatprep.subr.mxu0 0.0
        %5915 = vmatpush1.xpose.msra.mxu0 0.0
        %5916 = vmatprep.subr.mxu0 0.0
        %5917 = vmatpush1.xpose.msra.mxu0 0.0
        %5918 = vmatprep.subr.mxu0 0.0
        %5919 = vmatpush1.xpose.msra.mxu0 0.0
        %5920 = vmatprep.subr.mxu0 0.0
        %5921 = vmatpush1.xpose.msra.mxu0 0.0
        %5922 = vmatprep.subr.mxu0 0.0
        %5923 = vmatpush1.xpose.msra.mxu0 0.0
        %5924 = vmatprep.subr.mxu0 0.0
        %5925 = vmatpush1.xpose.msra.mxu0 0.0
        %5926 = vmatprep.subr.mxu0 0.0
        %5927 = vmatpush1.xpose.msra.mxu0 0.0
        %5928 = vmatprep.subr.mxu0 0.0
        %5929 = vmatpush1.xpose.msra.mxu0 0.0
        %5930 = vmatprep.subr.mxu0 0.0
        %5931 = vmatpush1.xpose.msra.mxu0 0.0
        %5932 = vmatprep.subr.mxu0 0.0
        %5933 = vmatpush1.xpose.msra.mxu0 0.0
        %5934 = vmatprep.subr.mxu0 0.0
        %5935 = vmatpush1.xpose.msra.mxu0 0.0
        %5936 = vmatprep.subr.mxu0 0.0
        %5937 = vmatpush1.xpose.msra.mxu0 0.0
        %5938 = vmatprep.subr.mxu0 0.0
        %5939 = vmatpush1.xpose.msra.mxu0 0.0
        %5940 = vmatprep.subr.mxu0 0.0
        %5941 = vmatpush1.xpose.msra.mxu0 0.0
        %5942 = vmatprep.subr.mxu0 0.0
        %5943 = vmatpush1.xpose.msra.mxu0 0.0
        %5944 = vmatprep.subr.mxu0 0.0
        %5945 = vmatpush1.xpose.msra.mxu0 0.0
        %5946 = vmatprep.subr.mxu0 0.0
        %5947 = vmatpush1.xpose.msra.mxu0 0.0
        %5948 = vmatprep.subr.mxu0 0.0
        %5949 = vmatpush1.xpose.msra.mxu0 0.0
        %5950 = vmatprep.subr.mxu0 0.0
        %5951 = vmatpush1.xpose.msra.mxu0 0.0
        %5952 = vmatprep.subr.mxu0 0.0
        %5953 = vmatpush1.xpose.msra.mxu0 0.0
        %5954 = vmatprep.mubr.f32.mxu0 %v2327
        %5955 = vmatmul.mubr.f32.gmra.mrb[0].mxu0 %v2326
        %v5956 = vpop.f32.mrb[0].mxu0
        %v5957 = vadd.f32 %v5887, %v5956
        %v5958 = vpop.f32.mrb[0].mxu0
        %5959 = vdwg.mxu0
        %5960 = vmatprep.subr.mxu0 %v2429
        %5961 = vmatpush1.xpose.msra.mxu0 %v2428
        %5962 = vmatprep.subr.mxu0 %v2529
        %5963 = vmatpush1.xpose.msra.mxu0 %v2528
        %5964 = vmatprep.subr.mxu0 0.0
        %5965 = vmatpush1.xpose.msra.mxu0 0.0
        %5966 = vmatprep.subr.mxu0 0.0
        %5967 = vmatpush1.xpose.msra.mxu0 0.0
        %5968 = vmatprep.subr.mxu0 0.0
        %5969 = vmatpush1.xpose.msra.mxu0 0.0
        %5970 = vmatprep.subr.mxu0 0.0
        %5971 = vmatpush1.xpose.msra.mxu0 0.0
        %5972 = vmatprep.subr.mxu0 0.0
        %5973 = vmatpush1.xpose.msra.mxu0 0.0
        %5974 = vmatprep.subr.mxu0 0.0
        %5975 = vmatpush1.xpose.msra.mxu0 0.0
        %5976 = vmatprep.subr.mxu0 0.0
        %5977 = vmatpush1.xpose.msra.mxu0 0.0
        %5978 = vmatprep.subr.mxu0 0.0
        %5979 = vmatpush1.xpose.msra.mxu0 0.0
        %5980 = vmatprep.subr.mxu0 0.0
        %5981 = vmatpush1.xpose.msra.mxu0 0.0
        %5982 = vmatprep.subr.mxu0 0.0
        %5983 = vmatpush1.xpose.msra.mxu0 0.0
        %5984 = vmatprep.subr.mxu0 0.0
        %5985 = vmatpush1.xpose.msra.mxu0 0.0
        %5986 = vmatprep.subr.mxu0 0.0
        %5987 = vmatpush1.xpose.msra.mxu0 0.0
        %5988 = vmatprep.subr.mxu0 0.0
        %5989 = vmatpush1.xpose.msra.mxu0 0.0
        %5990 = vmatprep.subr.mxu0 0.0
        %5991 = vmatpush1.xpose.msra.mxu0 0.0
        %5992 = vmatprep.subr.mxu0 0.0
        %5993 = vmatpush1.xpose.msra.mxu0 0.0
        %5994 = vmatprep.subr.mxu0 0.0
        %5995 = vmatpush1.xpose.msra.mxu0 0.0
        %5996 = vmatprep.subr.mxu0 0.0
        %5997 = vmatpush1.xpose.msra.mxu0 0.0
        %5998 = vmatprep.subr.mxu0 0.0
        %5999 = vmatpush1.xpose.msra.mxu0 0.0
        %6000 = vmatprep.subr.mxu0 0.0
        %6001 = vmatpush1.xpose.msra.mxu0 0.0
        %6002 = vmatprep.subr.mxu0 0.0
        %6003 = vmatpush1.xpose.msra.mxu0 0.0
        %6004 = vmatprep.subr.mxu0 0.0
        %6005 = vmatpush1.xpose.msra.mxu0 0.0
        %6006 = vmatprep.subr.mxu0 0.0
        %6007 = vmatpush1.xpose.msra.mxu0 0.0
        %6008 = vmatprep.subr.mxu0 0.0
        %6009 = vmatpush1.xpose.msra.mxu0 0.0
        %6010 = vmatprep.subr.mxu0 0.0
        %6011 = vmatpush1.xpose.msra.mxu0 0.0
        %6012 = vmatprep.subr.mxu0 0.0
        %6013 = vmatpush1.xpose.msra.mxu0 0.0
        %6014 = vmatprep.subr.mxu0 0.0
        %6015 = vmatpush1.xpose.msra.mxu0 0.0
        %6016 = vmatprep.subr.mxu0 0.0
        %6017 = vmatpush1.xpose.msra.mxu0 0.0
        %6018 = vmatprep.subr.mxu0 0.0
        %6019 = vmatpush1.xpose.msra.mxu0 0.0
        %6020 = vmatprep.subr.mxu0 0.0
        %6021 = vmatpush1.xpose.msra.mxu0 0.0
        %6022 = vmatprep.subr.mxu0 0.0
        %6023 = vmatpush1.xpose.msra.mxu0 0.0
        %6024 = vmatprep.mubr.f32.mxu0 %v2329
        %6025 = vmatmul.mubr.f32.gmra.mrb[0].mxu0 %v2328
        %v6026 = vpop.f32.mrb[0].mxu0
        %v6027 = vadd.f32 %v5957, %v6026
        %v6028 = vpop.f32.mrb[0].mxu0
        %6029 = vdwg.mxu0
        %v6030 = vadd.f32 %v2229, %v6027
        %vm6031 = vcmask 80896
        %6032 = vst.msk [vmem:[#allocation2] sm:$0xff] %vm6031, %v6030
        %p6033 = scmp.eq.s32.totalorder %s37, 3
        // Predicated region
        $region113: #{cge_variant_forward.1} parent=71 // pred_check
          %p6034 = pneg %p6033
        $region114: #{cge_variant_forward.1} parent=71 // pred_check_branch
          %6036 = sbr.rel (%p6034) target = $region116
        $region115: #{cge_variant_forward.1} parent=71 // pred_region
          %v6037 = vld [vmem:[#allocation2] sm:$0xff]
          %v6038 = vld [vmem:[#allocation13] sm:$0x1]
          %v6040 = vlaneseq
          %v6041 = vshrl.u32 %v6040, 7
          %v6042 = vsub.s32 0, %v6041
          %v6043 = vrot.slane %v6038, %v6042
          %v6045 = vadd.f32 %v6037, %v6043
          %v6046 = vmax.f32 %v6045, 0.0
          %v6047 = vld [vmem:[%s11] sm:$0xff]
          %v6048 = vld [vmem:[%s11 + $0x8] sm:$0x3]
          %v6049 = vld [vmem:[#allocation18] sm:$0x1]
          %v6051 = vlaneseq
          %v6052 = vshrl.u32 %v6051, 7
          %v6053 = vsub.s32 0, %v6052
          %v6054 = vrot.slane %v6049, %v6053
          %v6057 = vsel %vm6031, %v6046, 0
          %vm6059 = vcmask 1041408
          %v6061 = vsel %vm6059, %v6048, 0
          %6063 = vmatprep.subr.mxu0 0.0
          %6064 = vmatpush1.msra.mxu0 %v6047
          %6065 = vmatprep.subr.mxu0 0.0
          %6066 = vmatpush1.msra.mxu0 %v6061
          %6067 = vmatprep.subr.mxu0 0.0
          %6068 = vmatpush1.msra.mxu0 0.0
          %6069 = vmatprep.subr.mxu0 0.0
          %6070 = vmatpush1.msra.mxu0 0.0
          %6071 = vmatprep.subr.mxu0 0.0
          %6072 = vmatpush1.msra.mxu0 0.0
          %6073 = vmatprep.subr.mxu0 0.0
          %6074 = vmatpush1.msra.mxu0 0.0
          %6075 = vmatprep.subr.mxu0 0.0
          %6076 = vmatpush1.msra.mxu0 0.0
          %6077 = vmatprep.subr.mxu0 0.0
          %6078 = vmatpush1.msra.mxu0 0.0
          %6079 = vmatprep.subr.mxu0 0.0
          %6080 = vmatpush1.msra.mxu0 0.0
          %6081 = vmatprep.subr.mxu0 0.0
          %6082 = vmatpush1.msra.mxu0 0.0
          %6083 = vmatprep.subr.mxu0 0.0
          %6084 = vmatpush1.msra.mxu0 0.0
          %6085 = vmatprep.subr.mxu0 0.0
          %6086 = vmatpush1.msra.mxu0 0.0
          %6087 = vmatprep.subr.mxu0 0.0
          %6088 = vmatpush1.msra.mxu0 0.0
          %6089 = vmatprep.subr.mxu0 0.0
          %6090 = vmatpush1.msra.mxu0 0.0
          %6091 = vmatprep.subr.mxu0 0.0
          %6092 = vmatpush1.msra.mxu0 0.0
          %6093 = vmatprep.subr.mxu0 0.0
          %6094 = vmatpush1.msra.mxu0 0.0
          %6095 = vmatprep.subr.mxu0 0.0
          %6096 = vmatpush1.msra.mxu0 0.0
          %6097 = vmatprep.subr.mxu0 0.0
          %6098 = vmatpush1.msra.mxu0 0.0
          %6099 = vmatprep.subr.mxu0 0.0
          %6100 = vmatpush1.msra.mxu0 0.0
          %6101 = vmatprep.subr.mxu0 0.0
          %6102 = vmatpush1.msra.mxu0 0.0
          %6103 = vmatprep.subr.mxu0 0.0
          %6104 = vmatpush1.msra.mxu0 0.0
          %6105 = vmatprep.subr.mxu0 0.0
          %6106 = vmatpush1.msra.mxu0 0.0
          %6107 = vmatprep.subr.mxu0 0.0
          %6108 = vmatpush1.msra.mxu0 0.0
          %6109 = vmatprep.subr.mxu0 0.0
          %6110 = vmatpush1.msra.mxu0 0.0
          %6111 = vmatprep.subr.mxu0 0.0
          %6112 = vmatpush1.msra.mxu0 0.0
          %6113 = vmatprep.subr.mxu0 0.0
          %6114 = vmatpush1.msra.mxu0 0.0
          %6115 = vmatprep.subr.mxu0 0.0
          %6116 = vmatpush1.msra.mxu0 0.0
          %6117 = vmatprep.subr.mxu0 0.0
          %6118 = vmatpush1.msra.mxu0 0.0
          %6119 = vmatprep.subr.mxu0 0.0
          %6120 = vmatpush1.msra.mxu0 0.0
          %6121 = vmatprep.subr.mxu0 0.0
          %6122 = vmatpush1.msra.mxu0 0.0
          %6123 = vmatprep.subr.mxu0 0.0
          %6124 = vmatpush1.msra.mxu0 0.0
          %6125 = vmatprep.subr.mxu0 0.0
          %6126 = vmatpush1.msra.mxu0 0.0
          %6127 = vmatprep.mubr.f32.mxu0 0.0
          %6128 = vmatmul.mubr.f32.gmra.mrb[0].mxu0 %v6057
          %v6129 = vpop.f32.mrb[0].mxu0
          %v6130 = vadd.f32 %v6054, %v6129
          %v6131 = vpop.f32.mrb[0].mxu0
          %6132 = vdwg.mxu0
          %vm6133 = vcmask 15360
          %6134 = vst.msk [vmem:[%s604] sm:$0xff] %vm6133, %v6130
        $region116: #{cge_variant_forward.1} parent=71 // pred_fallthru
          _
        %p6135 = scmp.lt.s32.totalorder %s36, 0
        %s6136 = scalar_select %p6135, %s36, 0
        %s6137 = smul.addr %s6136, 8
        %s6138 = scalar_lea.vmem %s13, %s6137
        // Predicated region
        $region117: #{cge_variant_forward.1} parent=71 // pred_check
          %p6139 = pneg %p350
        $region118: #{cge_variant_forward.1} parent=71 // pred_check_branch
          %6141 = sbr.rel (%p6139) target = $region120
        $region119: #{cge_variant_forward.1} parent=71 // pred_region
          _
        $region120: #{cge_variant_forward.1} parent=71 // pred_fallthru
          _
        // Predicated region
        $region121: #{cge_variant_forward.1} parent=71 // pred_check
          %p6142 = pneg %p350
        $region122: #{cge_variant_forward.1} parent=71 // pred_check_branch
          %6144 = sbr.rel (%p6142) target = $region124
        $region123: #{cge_variant_forward.1} parent=71 // pred_region
          %p6145 = scmp.lt.s32.totalorder %s36, 0
          %s6146 = scalar_select %p6145, %s36, 0
          %s6147 = smul.addr %s6146, 8
          %s6148 = scalar_lea.vmem %s13, %s6147
        $region124: #{cge_variant_forward.1} parent=71 // pred_fallthru
          _
      $region72: #{cge_variant_forward.1} parent=5 // pred_fallthru
        _
      %p6149 = scmp.le.s32.totalorder 2, %s27
      // Predicated region
      $region125: #{cge_variant_forward.1} parent=5 // pred_check
        %p6150 = pneg %p6149
      $region126: #{cge_variant_forward.1} parent=5 // pred_check_branch
        %6152 = sbr.rel (%p6150) target = $region128
      $region127: #{cge_variant_forward.1} parent=5 // pred_region
        %s6153 = ssub.s32 %s27, 2
      $region128: #{cge_variant_forward.1} parent=5 // pred_fallthru
        _
    $region6: #{cge_variant_forward.1} parent=1 // loop_footer
      %s31 = sadd.s32 1, %s27
    $region7: #{cge_variant_forward.1} parent=1 // loop_footer_branch
      %26 = sbr.rel target = $region3
    $region8: #{cge_variant_forward.1} parent=1 // loop_exit
      _
    %6154 = vsyncpa [#allocation5], 1
    %s6155 = scalar_lea.sflag [#allocation5], 1
    %6156 = vsyncpa %s6155, 1
    %6157 = vsyncpa [#allocation14], 1
    %6158 = vsyncpa [#allocation17], 1
    %6159 = vsyncpa [#allocation6], 1
    %s6160 = scalar_lea.sflag [#allocation6], 1
    %6161 = vsyncpa %s6160, 1
    %6162 = vsyncpa [#allocation8], 1
    %6163 = vsyncpa [#allocation11], 1

</llo_original>
